<compile_context>
chip_gen: v7x
topology: tpu7x:2x2x1
jax: 0.10.0
libtpu: 0.0.40
codegen_flags: <defaults>
</compile_context>

<pallas_src>
import jax
import jax.numpy as jnp
from jax import lax
from jax.experimental import pallas as pl
from jax.experimental.pallas import tpu as pltpu

DEPTH = 3
KSIZE = 3


def reverse_attention_kernel(x_ref, map_ref, w_in_ref, w_mid_ref, w_out_ref,
                             xout_ref, out_ref, hp_ref):
    """One batch element per grid step, NHWC layout (C on lanes).

    x_ref    : (1, H, W, Cin)   bf16
    map_ref  : (1, H, W)        f32  (already bilinearly resized, lane-dense)
    w_in_ref : (Cin, C)         bf16 (1x1 conv)
    w_mid_ref: (DEPTH, 9*C, C)  bf16 (3x3 convs, im2col layout, (ky,kx,cin))
    w_out_ref: (9, C)           f32  (3x3 conv -> 1 channel)
    xout_ref : (1, H, W, C)     f32
    out_ref  : (1, H, W)        f32  (lane-dense, no trailing 1)
    hp_ref   : VMEM scratch (H+2, W+2, C) f32 — zero-padded activations
    """
    _, H, W, Cin = x_ref.shape
    C = w_in_ref.shape[1]

    # Zero only the 1-px halo; the interior is fully overwritten every layer.
    # Done per grid step so it stays correct when the batch axis is sharded
    # across TensorCores ("parallel" semantics => per-core scratch).
    hp_ref[0:1, :, :] = jnp.zeros((1, W + 2, C), hp_ref.dtype)
    hp_ref[H + 1:H + 2, :, :] = jnp.zeros((1, W + 2, C), hp_ref.dtype)
    hp_ref[:, 0:1, :] = jnp.zeros((H + 2, 1, C), hp_ref.dtype)
    hp_ref[:, W + 1:W + 2, :] = jnp.zeros((H + 2, 1, C), hp_ref.dtype)

    # reverse-attention gating: x * (1 - sigmoid(map)), f32 on the VPU.
    m = map_ref[0]                                          # (H, W) f32
    rmap = 1.0 - jax.nn.sigmoid(m)
    x = x_ref[0].astype(jnp.float32) * rmap[:, :, None]     # (H, W, Cin) f32

    # conv_in: 1x1 conv == channel matmul (bf16 into MXU, f32 accumulate).
    h = jnp.dot(x.reshape(H * W, Cin).astype(jnp.bfloat16), w_in_ref[...],
                preferred_element_type=jnp.float32)         # (H*W, C) f32

    # depth x (3x3 conv + relu): im2col -> one big MXU matmul per layer.
    for d in range(DEPTH):
        hp_ref[1:H + 1, 1:W + 1, :] = h.reshape(H, W, C)
        patches = jnp.concatenate(
            [hp_ref[dy:dy + H, dx:dx + W, :]
             for dy in range(3) for dx in range(3)],
            axis=-1).reshape(H * W, 9 * C)                  # (H*W, 9C) f32
        h = jnp.maximum(
            jnp.dot(patches.astype(jnp.bfloat16), w_mid_ref[d],
                    preferred_element_type=jnp.float32), 0.0)

    h_hwc = h.reshape(H, W, C)
    xout_ref[...] = h_hwc[None].astype(xout_ref.dtype)

    # conv_out: 3x3 -> 1 channel.  Cout=1 would waste the MXU, so do it on the
    # VPU: per-tap FMA over (H, W, C) then one lane-reduce over C.  The result
    # is produced directly in the lane-dense (H, W) layout of out_ref.
    hp_ref[1:H + 1, 1:W + 1, :] = h_hwc
    w_out_v = w_out_ref[...]                                # (9, C) f32
    acc = jnp.zeros((H, W, C), jnp.float32)
    t = 0
    for dy in range(3):
        for dx in range(3):
            acc = acc + hp_ref[dy:dy + H, dx:dx + W, :] * w_out_v[t].reshape(1, 1, C)
            t += 1
    out_ref[...] = (jnp.sum(acc, axis=-1) + m)[None]        # residual: + map


@jax.jit
def reverse_attention_forward(x_nchw, map_nchw, w_in, w_mid, w_out):
    B, Cin, H, W = x_nchw.shape
    C = w_in.shape[1]

    # F.interpolate(map, size=x.shape[-2:], mode='bilinear', align_corners=False)
    map_r = jax.image.resize(map_nchw.astype(jnp.float32),
                             (B, map_nchw.shape[1], H, W), method="bilinear")

    # Lane-dense layouts: x NHWC in bf16 (C on lanes), map/out as (B, H, W).
    x = jnp.transpose(x_nchw, (0, 2, 3, 1)).astype(jnp.bfloat16)
    m = jnp.transpose(map_r, (0, 2, 3, 1))[..., 0].astype(jnp.float32)

    # Weight packing done ONCE here, not in-kernel: im2col layout for the 3x3s.
    w_in_k = w_in.astype(jnp.bfloat16)                          # (Cin, C)
    w_mid_k = w_mid.reshape(DEPTH, 9 * C, C).astype(jnp.bfloat16)
    w_out_k = w_out.reshape(9, C).astype(jnp.float32)           # (9, C)

    # Explicit scoped-VMEM budget (v5e's default is only 16 MiB).
    blk_bytes = (
        2 * (H * W * Cin * 2 + H * W * C * 4 + 2 * H * W * 4)       # dbl-buffered I/O
        + 2 * (Cin * C * 2 + DEPTH * 9 * C * C * 2 + 9 * C * 4)     # weights
        + (H + 2) * (W + 2) * C * 4                                 # padded scratch
        + H * W * (9 * C * 4 + 4 * C * 4))                          # live temporaries
    vmem_limit = int(min(64 << 20, max(32 << 20, 2 * blk_bytes + (4 << 20))))

    grid_spec = pltpu.PrefetchScalarGridSpec(
        num_scalar_prefetch=0,
        grid=(B,),
        in_specs=[
            pl.BlockSpec((1, H, W, Cin), lambda b: (b, 0, 0, 0)),
            pl.BlockSpec((1, H, W), lambda b: (b, 0, 0)),
            pl.BlockSpec((Cin, C), lambda b: (0, 0)),
            pl.BlockSpec((DEPTH, 9 * C, C), lambda b: (0, 0, 0)),
            pl.BlockSpec((9, C), lambda b: (0, 0)),
        ],
        out_specs=[
            pl.BlockSpec((1, H, W, C), lambda b: (b, 0, 0, 0)),
            pl.BlockSpec((1, H, W), lambda b: (b, 0, 0)),
        ],
        scratch_shapes=[pltpu.VMEM((H + 2, W + 2, C), jnp.float32)],
    )

    x_out, out = pl.pallas_call(
        reverse_attention_kernel,
        out_shape=(jax.ShapeDtypeStruct((B, H, W, C), jnp.float32),
                   jax.ShapeDtypeStruct((B, H, W), jnp.float32)),
        grid_spec=grid_spec,
        compiler_params=pltpu.CompilerParams(
            # batch elements are independent -> shard across v7x's 2 TCs.
            dimension_semantics=("parallel",),
            vmem_limit_bytes=vmem_limit),
    )(x, m, w_in_k, w_mid_k, w_out_k)

    # back to NCHW (PyTorch convention)
    return (jnp.transpose(x_out, (0, 3, 1, 2)), out[:, None, :, :])


def reverse_attention_reference(x_nchw, map_nchw, w_in, w_mid, w_out):
    """Pure-JAX reference with the same bf16-input / f32-accumulate numerics."""
    B, Cin, H, W = x_nchw.shape
    bf = lambda a: a.astype(jnp.bfloat16).astype(jnp.float32)
    hi = lax.Precision.HIGHEST
    dn = ("NHWC", "HWIO", "NHWC")

    map_r = jax.image.resize(map_nchw.astype(jnp.float32),
                             (B, map_nchw.shape[1], H, W), method="bilinear")
    m = jnp.transpose(map_r, (0, 2, 3, 1))[..., 0]
    x = bf(jnp.transpose(x_nchw, (0, 2, 3, 1)))
    x = x * (1.0 - jax.nn.sigmoid(m))[..., None]
    h = jnp.einsum("bhwc,cd->bhwd", bf(x), bf(w_in), precision=hi)
    for d in range(DEPTH):
        h = jax.nn.relu(lax.conv_general_dilated(
            bf(h), bf(w_mid[d]), (1, 1), "SAME",
            dimension_numbers=dn, precision=hi))
    out = lax.conv_general_dilated(
        h, w_out, (1, 1), "SAME", dimension_numbers=dn,
        precision=hi)[..., 0] + m
    return (jnp.transpose(h, (0, 3, 1, 2)), out[:, None, :, :])


if __name__ == "__main__":
    B, Cin, C = 2, 4, 8
    H = W = 16
    Hm = Wm = 8  # map arrives at a smaller resolution -> bilinear upsample

    key = jax.random.PRNGKey(0)
    k_x, k_m, k_w1, k_w2, k_w3 = jax.random.split(key, 5)

    x = jax.random.normal(k_x, (B, Cin, H, W), dtype=jnp.float32)
    saliency_map = jax.random.normal(k_m, (B, 1, Hm, Wm), dtype=jnp.float32)

    # deterministic fan-in scaled parameters, stored as HWIO
    w_in = jax.random.normal(k_w1, (Cin, C), jnp.float32) / jnp.sqrt(Cin)
    w_mid = jax.random.normal(k_w2, (DEPTH, 3, 3, C, C),
                              jnp.float32) / jnp.sqrt(9.0 * C)
    w_out = jax.random.normal(k_w3, (3, 3, C, 1),
                              jnp.float32) / jnp.sqrt(9.0 * C)

    x_feat, out = reverse_attention_forward(x, saliency_map, w_in, w_mid, w_out)
    jax.block_until_ready((x_feat, out))

    x_gold, out_gold = reverse_attention_reference(x, saliency_map, w_in,
                                                   w_mid, w_out)
    assert x_feat.shape == (B, C, H, W) and out.shape == (B, 1, H, W)
    assert jnp.allclose(x_feat, x_gold, rtol=1e-2, atol=1e-2)
    assert jnp.allclose(out, out_gold, rtol=1e-2, atol=1e-2)

    print("KERNEL_OK")
</pallas_src>

<mosaic_0001>
module attributes {stable_mosaic.version = 11 : i64} {
  func.func @reverse_attention_kernel(%arg0: i32, %arg1: memref<1x16x16x4xbf16, #tpu.memory_space<vmem>>, %arg2: memref<1x16x16xf32, #tpu.memory_space<vmem>>, %arg3: memref<4x8xbf16, #tpu.memory_space<vmem>>, %arg4: memref<3x72x8xbf16, #tpu.memory_space<vmem>>, %arg5: memref<9x8xf32, #tpu.memory_space<vmem>>, %arg6: memref<1x16x16x8xf32, #tpu.memory_space<vmem>>, %arg7: memref<1x16x16xf32, #tpu.memory_space<vmem>>, %arg8: memref<18x18x8xf32, #tpu.memory_space<vmem>>) attributes {dimension_semantics = [#tpu.dimension_semantics<parallel>], iteration_bounds = array<i64: 2>, scalar_prefetch = 0 : i64, scratch_operands = 1 : i64, tpu.core_type = #tpu.core_type<tc>, window_params = [{transform_indices = @transform_0, window_bounds = array<i64: 1, 16, 16, 4>}, {transform_indices = @transform_1, window_bounds = array<i64: 1, 16, 16>}, {pipeline_mode = #tpu.pipeline_mode<synchronous>, transform_indices = @transform_2, window_bounds = array<i64: 4, 8>}, {pipeline_mode = #tpu.pipeline_mode<synchronous>, transform_indices = @transform_3, window_bounds = array<i64: 3, 72, 8>}, {pipeline_mode = #tpu.pipeline_mode<synchronous>, transform_indices = @transform_4, window_bounds = array<i64: 9, 8>}, {transform_indices = @transform_5, window_bounds = array<i64: 1, 16, 16, 8>}, {transform_indices = @transform_6, window_bounds = array<i64: 1, 16, 16>}]} {
    %cst = arith.constant 0.000000e+00 : f32
    %0 = vector.broadcast %cst : f32 to vector<1x18x8xf32>
    %c0 = arith.constant 0 : index
    %c0_0 = arith.constant 0 : index
    %c0_1 = arith.constant 0 : index
    %1 = vector.load %arg8[%c0, %c0_0, %c0_1] : memref<18x18x8xf32, #tpu.memory_space<vmem>>, vector<1x18x8xf32>
    tpu.vector_store %arg8[%c0, %c0_0, %c0_1], %0 {strides = array<i32>} : memref<18x18x8xf32, #tpu.memory_space<vmem>>, vector<1x18x8xf32>,
    %cst_2 = arith.constant 0.000000e+00 : f32
    %2 = vector.broadcast %cst_2 : f32 to vector<1x18x8xf32>
    %c17 = arith.constant 17 : index
    %c0_3 = arith.constant 0 : index
    %c0_4 = arith.constant 0 : index
    %3 = vector.load %arg8[%c17, %c0_3, %c0_4] : memref<18x18x8xf32, #tpu.memory_space<vmem>>, vector<1x18x8xf32>
    tpu.vector_store %arg8[%c17, %c0_3, %c0_4], %2 {strides = array<i32>} : memref<18x18x8xf32, #tpu.memory_space<vmem>>, vector<1x18x8xf32>,
    %cst_5 = arith.constant 0.000000e+00 : f32
    %4 = vector.broadcast %cst_5 : f32 to vector<18x1x8xf32>
    %c0_6 = arith.constant 0 : index
    %c0_7 = arith.constant 0 : index
    %c0_8 = arith.constant 0 : index
    %5 = vector.load %arg8[%c0_6, %c0_7, %c0_8] : memref<18x18x8xf32, #tpu.memory_space<vmem>>, vector<18x1x8xf32>
    tpu.vector_store %arg8[%c0_6, %c0_7, %c0_8], %4 {strides = array<i32>} : memref<18x18x8xf32, #tpu.memory_space<vmem>>, vector<18x1x8xf32>,
    %cst_9 = arith.constant 0.000000e+00 : f32
    %6 = vector.broadcast %cst_9 : f32 to vector<18x1x8xf32>
    %c0_10 = arith.constant 0 : index
    %c17_11 = arith.constant 17 : index
    %c0_12 = arith.constant 0 : index
    %7 = vector.load %arg8[%c0_10, %c17_11, %c0_12] : memref<18x18x8xf32, #tpu.memory_space<vmem>>, vector<18x1x8xf32>
    tpu.vector_store %arg8[%c0_10, %c17_11, %c0_12], %6 {strides = array<i32>} : memref<18x18x8xf32, #tpu.memory_space<vmem>>, vector<18x1x8xf32>,
    %c0_13 = arith.constant 0 : index
    %c0_14 = arith.constant 0 : index
    %c0_15 = arith.constant 0 : index
    %8 = vector.load %arg2[%c0_13, %c0_14, %c0_15] : memref<1x16x16xf32, #tpu.memory_space<vmem>>, vector<1x16x16xf32>
    %9 = vector.shape_cast %8 : vector<1x16x16xf32> to vector<16x16xf32>
    %10 = arith.negf %9 : vector<16x16xf32>
    %11 = math.exp %10 : vector<16x16xf32>
    %cst_16 = arith.constant 1.000000e+00 : f32
    %12 = vector.broadcast %cst_16 : f32 to vector<16x16xf32>
    %13 = arith.addf %12, %11 : vector<16x16xf32>
    %14 = arith.divf %12, %13 : vector<16x16xf32>
    %cst_17 = arith.constant 1.000000e+00 : f32
    %15 = vector.broadcast %cst_17 : f32 to vector<16x16xf32>
    %16 = arith.subf %15, %14 : vector<16x16xf32>
    %c0_18 = arith.constant 0 : index
    %c0_19 = arith.constant 0 : index
    %c0_20 = arith.constant 0 : index
    %c0_21 = arith.constant 0 : index
    %17 = vector.load %arg1[%c0_18, %c0_19, %c0_20, %c0_21] : memref<1x16x16x4xbf16, #tpu.memory_space<vmem>>, vector<1x16x16x4xbf16>
    %18 = vector.shape_cast %17 : vector<1x16x16x4xbf16> to vector<16x16x4xbf16>
    %19 = arith.extf %18 : vector<16x16x4xbf16> to vector<16x16x4xf32>
    %20 = vector.shape_cast %16 : vector<16x16xf32> to vector<16x16x1xf32>
    %21 = vector.broadcast %20 : vector<16x16x1xf32> to vector<16x16x4xf32>
    %22 = arith.mulf %19, %21 : vector<16x16x4xf32>
    %23 = vector.shape_cast %22 : vector<16x16x4xf32> to vector<256x4xf32>
    %24 = arith.truncf %23 : vector<256x4xf32> to vector<256x4xbf16>
    %c0_22 = arith.constant 0 : index
    %c0_23 = arith.constant 0 : index
    %25 = vector.load %arg3[%c0_22, %c0_23] : memref<4x8xbf16, #tpu.memory_space<vmem>>, vector<4x8xbf16>
    %cst_24 = arith.constant dense<0.000000e+00> : vector<256x8xf32>
    %26 = tpu.matmul %24, %25, %cst_24 {dimension_numbers = #tpu.dot_dimension_numbers<[1], [0], [0], [1], [0, 0, 1, 1], [], []>} : vector<256x4xbf16>, vector<4x8xbf16>, vector<256x8xf32> -> vector<256x8xf32>
    %27 = vector.shape_cast %26 : vector<256x8xf32> to vector<16x16x8xf32>
    %c1 = arith.constant 1 : index
    %c1_25 = arith.constant 1 : index
    %c0_26 = arith.constant 0 : index
    %28 = vector.load %arg8[%c1, %c1_25, %c0_26] : memref<18x18x8xf32, #tpu.memory_space<vmem>>, vector<16x16x8xf32>
    tpu.vector_store %arg8[%c1, %c1_25, %c0_26], %27 {strides = array<i32>} : memref<18x18x8xf32, #tpu.memory_space<vmem>>, vector<16x16x8xf32>,
    %c0_27 = arith.constant 0 : index
    %c0_28 = arith.constant 0 : index
    %c0_29 = arith.constant 0 : index
    %29 = vector.load %arg8[%c0_27, %c0_28, %c0_29] : memref<18x18x8xf32, #tpu.memory_space<vmem>>, vector<16x16x8xf32>
    %c0_30 = arith.constant 0 : index
    %c1_31 = arith.constant 1 : index
    %c0_32 = arith.constant 0 : index
    %30 = vector.load %arg8[%c0_30, %c1_31, %c0_32] : memref<18x18x8xf32, #tpu.memory_space<vmem>>, vector<16x16x8xf32>
    %c0_33 = arith.constant 0 : index
    %c2 = arith.constant 2 : index
    %c0_34 = arith.constant 0 : index
    %31 = vector.load %arg8[%c0_33, %c2, %c0_34] : memref<18x18x8xf32, #tpu.memory_space<vmem>>, vector<16x16x8xf32>
    %c1_35 = arith.constant 1 : index
    %c0_36 = arith.constant 0 : index
    %c0_37 = arith.constant 0 : index
    %32 = vector.load %arg8[%c1_35, %c0_36, %c0_37] : memref<18x18x8xf32, #tpu.memory_space<vmem>>, vector<16x16x8xf32>
    %c1_38 = arith.constant 1 : index
    %c1_39 = arith.constant 1 : index
    %c0_40 = arith.constant 0 : index
    %33 = vector.load %arg8[%c1_38, %c1_39, %c0_40] : memref<18x18x8xf32, #tpu.memory_space<vmem>>, vector<16x16x8xf32>
    %c1_41 = arith.constant 1 : index
    %c2_42 = arith.constant 2 : index
    %c0_43 = arith.constant 0 : index
    %34 = vector.load %arg8[%c1_41, %c2_42, %c0_43] : memref<18x18x8xf32, #tpu.memory_space<vmem>>, vector<16x16x8xf32>
    %c2_44 = arith.constant 2 : index
    %c0_45 = arith.constant 0 : index
    %c0_46 = arith.constant 0 : index
    %35 = vector.load %arg8[%c2_44, %c0_45, %c0_46] : memref<18x18x8xf32, #tpu.memory_space<vmem>>, vector<16x16x8xf32>
    %c2_47 = arith.constant 2 : index
    %c1_48 = arith.constant 1 : index
    %c0_49 = arith.constant 0 : index
    %36 = vector.load %arg8[%c2_47, %c1_48, %c0_49] : memref<18x18x8xf32, #tpu.memory_space<vmem>>, vector<16x16x8xf32>
    %c2_50 = arith.constant 2 : index
    %c2_51 = arith.constant 2 : index
    %c0_52 = arith.constant 0 : index
    %37 = vector.load %arg8[%c2_50, %c2_51, %c0_52] : memref<18x18x8xf32, #tpu.memory_space<vmem>>, vector<16x16x8xf32>
    %38 = tpu.concatenate %29, %30, %31, %32, %33, %34, %35, %36, %37 in 2 : vector<16x16x8xf32>, vector<16x16x8xf32>, vector<16x16x8xf32>, vector<16x16x8xf32>, vector<16x16x8xf32>, vector<16x16x8xf32>, vector<16x16x8xf32>, vector<16x16x8xf32>, vector<16x16x8xf32> -> vector<16x16x72xf32>
    %39 = vector.shape_cast %38 : vector<16x16x72xf32> to vector<256x72xf32>
    %40 = arith.truncf %39 : vector<256x72xf32> to vector<256x72xbf16>
    %c0_53 = arith.constant 0 : index
    %c0_54 = arith.constant 0 : index
    %c0_55 = arith.constant 0 : index
    %41 = vector.load %arg4[%c0_53, %c0_54, %c0_55] : memref<3x72x8xbf16, #tpu.memory_space<vmem>>, vector<1x72x8xbf16>
    %42 = vector.shape_cast %41 : vector<1x72x8xbf16> to vector<72x8xbf16>
    %cst_56 = arith.constant dense<0.000000e+00> : vector<256x8xf32>
    %43 = tpu.matmul %40, %42, %cst_56 {dimension_numbers = #tpu.dot_dimension_numbers<[1], [0], [0], [1], [0, 0, 1, 1], [], []>} : vector<256x72xbf16>, vector<72x8xbf16>, vector<256x8xf32> -> vector<256x8xf32>
    %cst_57 = arith.constant 0.000000e+00 : f32
    %44 = vector.broadcast %cst_57 : f32 to vector<256x8xf32>
    %45 = arith.maximumf %43, %44 : vector<256x8xf32>
    %46 = vector.shape_cast %45 : vector<256x8xf32> to vector<16x16x8xf32>
    %c1_58 = arith.constant 1 : index
    %c1_59 = arith.constant 1 : index
    %c0_60 = arith.constant 0 : index
    %47 = vector.load %arg8[%c1_58, %c1_59, %c0_60] : memref<18x18x8xf32, #tpu.memory_space<vmem>>, vector<16x16x8xf32>
    tpu.vector_store %arg8[%c1_58, %c1_59, %c0_60], %46 {strides = array<i32>} : memref<18x18x8xf32, #tpu.memory_space<vmem>>, vector<16x16x8xf32>,
    %c0_61 = arith.constant 0 : index
    %c0_62 = arith.constant 0 : index
    %c0_63 = arith.constant 0 : index
    %48 = vector.load %arg8[%c0_61, %c0_62, %c0_63] : memref<18x18x8xf32, #tpu.memory_space<vmem>>, vector<16x16x8xf32>
    %c0_64 = arith.constant 0 : index
    %c1_65 = arith.constant 1 : index
    %c0_66 = arith.constant 0 : index
    %49 = vector.load %arg8[%c0_64, %c1_65, %c0_66] : memref<18x18x8xf32, #tpu.memory_space<vmem>>, vector<16x16x8xf32>
    %c0_67 = arith.constant 0 : index
    %c2_68 = arith.constant 2 : index
    %c0_69 = arith.constant 0 : index
    %50 = vector.load %arg8[%c0_67, %c2_68, %c0_69] : memref<18x18x8xf32, #tpu.memory_space<vmem>>, vector<16x16x8xf32>
    %c1_70 = arith.constant 1 : index
    %c0_71 = arith.constant 0 : index
    %c0_72 = arith.constant 0 : index
    %51 = vector.load %arg8[%c1_70, %c0_71, %c0_72] : memref<18x18x8xf32, #tpu.memory_space<vmem>>, vector<16x16x8xf32>
    %c1_73 = arith.constant 1 : index
    %c1_74 = arith.constant 1 : index
    %c0_75 = arith.constant 0 : index
    %52 = vector.load %arg8[%c1_73, %c1_74, %c0_75] : memref<18x18x8xf32, #tpu.memory_space<vmem>>, vector<16x16x8xf32>
    %c1_76 = arith.constant 1 : index
    %c2_77 = arith.constant 2 : index
    %c0_78 = arith.constant 0 : index
    %53 = vector.load %arg8[%c1_76, %c2_77, %c0_78] : memref<18x18x8xf32, #tpu.memory_space<vmem>>, vector<16x16x8xf32>
    %c2_79 = arith.constant 2 : index
    %c0_80 = arith.constant 0 : index
    %c0_81 = arith.constant 0 : index
    %54 = vector.load %arg8[%c2_79, %c0_80, %c0_81] : memref<18x18x8xf32, #tpu.memory_space<vmem>>, vector<16x16x8xf32>
    %c2_82 = arith.constant 2 : index
    %c1_83 = arith.constant 1 : index
    %c0_84 = arith.constant 0 : index
    %55 = vector.load %arg8[%c2_82, %c1_83, %c0_84] : memref<18x18x8xf32, #tpu.memory_space<vmem>>, vector<16x16x8xf32>
    %c2_85 = arith.constant 2 : index
    %c2_86 = arith.constant 2 : index
    %c0_87 = arith.constant 0 : index
    %56 = vector.load %arg8[%c2_85, %c2_86, %c0_87] : memref<18x18x8xf32, #tpu.memory_space<vmem>>, vector<16x16x8xf32>
    %57 = tpu.concatenate %48, %49, %50, %51, %52, %53, %54, %55, %56 in 2 : vector<16x16x8xf32>, vector<16x16x8xf32>, vector<16x16x8xf32>, vector<16x16x8xf32>, vector<16x16x8xf32>, vector<16x16x8xf32>, vector<16x16x8xf32>, vector<16x16x8xf32>, vector<16x16x8xf32> -> vector<16x16x72xf32>
    %58 = vector.shape_cast %57 : vector<16x16x72xf32> to vector<256x72xf32>
    %59 = arith.truncf %58 : vector<256x72xf32> to vector<256x72xbf16>
    %c1_88 = arith.constant 1 : index
    %c0_89 = arith.constant 0 : index
    %c0_90 = arith.constant 0 : index
    %60 = vector.load %arg4[%c1_88, %c0_89, %c0_90] : memref<3x72x8xbf16, #tpu.memory_space<vmem>>, vector<1x72x8xbf16>
    %61 = vector.shape_cast %60 : vector<1x72x8xbf16> to vector<72x8xbf16>
    %cst_91 = arith.constant dense<0.000000e+00> : vector<256x8xf32>
    %62 = tpu.matmul %59, %61, %cst_91 {dimension_numbers = #tpu.dot_dimension_numbers<[1], [0], [0], [1], [0, 0, 1, 1], [], []>} : vector<256x72xbf16>, vector<72x8xbf16>, vector<256x8xf32> -> vector<256x8xf32>
    %cst_92 = arith.constant 0.000000e+00 : f32
    %63 = vector.broadcast %cst_92 : f32 to vector<256x8xf32>
    %64 = arith.maximumf %62, %63 : vector<256x8xf32>
    %65 = vector.shape_cast %64 : vector<256x8xf32> to vector<16x16x8xf32>
    %c1_93 = arith.constant 1 : index
    %c1_94 = arith.constant 1 : index
    %c0_95 = arith.constant 0 : index
    %66 = vector.load %arg8[%c1_93, %c1_94, %c0_95] : memref<18x18x8xf32, #tpu.memory_space<vmem>>, vector<16x16x8xf32>
    tpu.vector_store %arg8[%c1_93, %c1_94, %c0_95], %65 {strides = array<i32>} : memref<18x18x8xf32, #tpu.memory_space<vmem>>, vector<16x16x8xf32>,
    %c0_96 = arith.constant 0 : index
    %c0_97 = arith.constant 0 : index
    %c0_98 = arith.constant 0 : index
    %67 = vector.load %arg8[%c0_96, %c0_97, %c0_98] : memref<18x18x8xf32, #tpu.memory_space<vmem>>, vector<16x16x8xf32>
    %c0_99 = arith.constant 0 : index
    %c1_100 = arith.constant 1 : index
    %c0_101 = arith.constant 0 : index
    %68 = vector.load %arg8[%c0_99, %c1_100, %c0_101] : memref<18x18x8xf32, #tpu.memory_space<vmem>>, vector<16x16x8xf32>
    %c0_102 = arith.constant 0 : index
    %c2_103 = arith.constant 2 : index
    %c0_104 = arith.constant 0 : index
    %69 = vector.load %arg8[%c0_102, %c2_103, %c0_104] : memref<18x18x8xf32, #tpu.memory_space<vmem>>, vector<16x16x8xf32>
    %c1_105 = arith.constant 1 : index
    %c0_106 = arith.constant 0 : index
    %c0_107 = arith.constant 0 : index
    %70 = vector.load %arg8[%c1_105, %c0_106, %c0_107] : memref<18x18x8xf32, #tpu.memory_space<vmem>>, vector<16x16x8xf32>
    %c1_108 = arith.constant 1 : index
    %c1_109 = arith.constant 1 : index
    %c0_110 = arith.constant 0 : index
    %71 = vector.load %arg8[%c1_108, %c1_109, %c0_110] : memref<18x18x8xf32, #tpu.memory_space<vmem>>, vector<16x16x8xf32>
    %c1_111 = arith.constant 1 : index
    %c2_112 = arith.constant 2 : index
    %c0_113 = arith.constant 0 : index
    %72 = vector.load %arg8[%c1_111, %c2_112, %c0_113] : memref<18x18x8xf32, #tpu.memory_space<vmem>>, vector<16x16x8xf32>
    %c2_114 = arith.constant 2 : index
    %c0_115 = arith.constant 0 : index
    %c0_116 = arith.constant 0 : index
    %73 = vector.load %arg8[%c2_114, %c0_115, %c0_116] : memref<18x18x8xf32, #tpu.memory_space<vmem>>, vector<16x16x8xf32>
    %c2_117 = arith.constant 2 : index
    %c1_118 = arith.constant 1 : index
    %c0_119 = arith.constant 0 : index
    %74 = vector.load %arg8[%c2_117, %c1_118, %c0_119] : memref<18x18x8xf32, #tpu.memory_space<vmem>>, vector<16x16x8xf32>
    %c2_120 = arith.constant 2 : index
    %c2_121 = arith.constant 2 : index
    %c0_122 = arith.constant 0 : index
    %75 = vector.load %arg8[%c2_120, %c2_121, %c0_122] : memref<18x18x8xf32, #tpu.memory_space<vmem>>, vector<16x16x8xf32>
    %76 = tpu.concatenate %67, %68, %69, %70, %71, %72, %73, %74, %75 in 2 : vector<16x16x8xf32>, vector<16x16x8xf32>, vector<16x16x8xf32>, vector<16x16x8xf32>, vector<16x16x8xf32>, vector<16x16x8xf32>, vector<16x16x8xf32>, vector<16x16x8xf32>, vector<16x16x8xf32> -> vector<16x16x72xf32>
    %77 = vector.shape_cast %76 : vector<16x16x72xf32> to vector<256x72xf32>
    %78 = arith.truncf %77 : vector<256x72xf32> to vector<256x72xbf16>
    %c2_123 = arith.constant 2 : index
    %c0_124 = arith.constant 0 : index
    %c0_125 = arith.constant 0 : index
    %79 = vector.load %arg4[%c2_123, %c0_124, %c0_125] : memref<3x72x8xbf16, #tpu.memory_space<vmem>>, vector<1x72x8xbf16>
    %80 = vector.shape_cast %79 : vector<1x72x8xbf16> to vector<72x8xbf16>
    %cst_126 = arith.constant dense<0.000000e+00> : vector<256x8xf32>
    %81 = tpu.matmul %78, %80, %cst_126 {dimension_numbers = #tpu.dot_dimension_numbers<[1], [0], [0], [1], [0, 0, 1, 1], [], []>} : vector<256x72xbf16>, vector<72x8xbf16>, vector<256x8xf32> -> vector<256x8xf32>
    %cst_127 = arith.constant 0.000000e+00 : f32
    %82 = vector.broadcast %cst_127 : f32 to vector<256x8xf32>
    %83 = arith.maximumf %81, %82 : vector<256x8xf32>
    %84 = vector.shape_cast %83 : vector<256x8xf32> to vector<16x16x8xf32>
    %85 = vector.shape_cast %84 : vector<16x16x8xf32> to vector<1x16x16x8xf32>
    %c0_128 = arith.constant 0 : index
    %c0_129 = arith.constant 0 : index
    %c0_130 = arith.constant 0 : index
    %c0_131 = arith.constant 0 : index
    %86 = vector.load %arg6[%c0_128, %c0_129, %c0_130, %c0_131] : memref<1x16x16x8xf32, #tpu.memory_space<vmem>>, vector<1x16x16x8xf32>
    tpu.vector_store %arg6[%c0_128, %c0_129, %c0_130, %c0_131], %85 {strides = array<i32>} : memref<1x16x16x8xf32, #tpu.memory_space<vmem>>, vector<1x16x16x8xf32>,
    %c1_132 = arith.constant 1 : index
    %c1_133 = arith.constant 1 : index
    %c0_134 = arith.constant 0 : index
    %87 = vector.load %arg8[%c1_132, %c1_133, %c0_134] : memref<18x18x8xf32, #tpu.memory_space<vmem>>, vector<16x16x8xf32>
    tpu.vector_store %arg8[%c1_132, %c1_133, %c0_134], %84 {strides = array<i32>} : memref<18x18x8xf32, #tpu.memory_space<vmem>>, vector<16x16x8xf32>,
    %c0_135 = arith.constant 0 : index
    %c0_136 = arith.constant 0 : index
    %88 = vector.load %arg5[%c0_135, %c0_136] : memref<9x8xf32, #tpu.memory_space<vmem>>, vector<9x8xf32>
    %cst_137 = arith.constant 0.000000e+00 : f32
    %89 = vector.broadcast %cst_137 : f32 to vector<16x16x8xf32>
    %c0_138 = arith.constant 0 : index
    %c0_139 = arith.constant 0 : index
    %c0_140 = arith.constant 0 : index
    %90 = vector.load %arg8[%c0_138, %c0_139, %c0_140] : memref<18x18x8xf32, #tpu.memory_space<vmem>>, vector<16x16x8xf32>
    %91 = vector.extract_strided_slice %88 {offsets = [0, 0], sizes = [1, 8], strides = [1, 1]} : vector<9x8xf32> to vector<1x8xf32>
    %92 = vector.shape_cast %91 : vector<1x8xf32> to vector<8xf32>
    %93 = vector.shape_cast %92 : vector<8xf32> to vector<1x1x8xf32>
    %94 = vector.broadcast %93 : vector<1x1x8xf32> to vector<16x16x8xf32>
    %95 = arith.mulf %90, %94 : vector<16x16x8xf32>
    %96 = arith.addf %89, %95 : vector<16x16x8xf32>
    %c0_141 = arith.constant 0 : index
    %c1_142 = arith.constant 1 : index
    %c0_143 = arith.constant 0 : index
    %97 = vector.load %arg8[%c0_141, %c1_142, %c0_143] : memref<18x18x8xf32, #tpu.memory_space<vmem>>, vector<16x16x8xf32>
    %98 = vector.extract_strided_slice %88 {offsets = [1, 0], sizes = [1, 8], strides = [1, 1]} : vector<9x8xf32> to vector<1x8xf32>
    %99 = vector.shape_cast %98 : vector<1x8xf32> to vector<8xf32>
    %100 = vector.shape_cast %99 : vector<8xf32> to vector<1x1x8xf32>
    %101 = vector.broadcast %100 : vector<1x1x8xf32> to vector<16x16x8xf32>
    %102 = arith.mulf %97, %101 : vector<16x16x8xf32>
    %103 = arith.addf %96, %102 : vector<16x16x8xf32>
    %c0_144 = arith.constant 0 : index
    %c2_145 = arith.constant 2 : index
    %c0_146 = arith.constant 0 : index
    %104 = vector.load %arg8[%c0_144, %c2_145, %c0_146] : memref<18x18x8xf32, #tpu.memory_space<vmem>>, vector<16x16x8xf32>
    %105 = vector.extract_strided_slice %88 {offsets = [2, 0], sizes = [1, 8], strides = [1, 1]} : vector<9x8xf32> to vector<1x8xf32>
    %106 = vector.shape_cast %105 : vector<1x8xf32> to vector<8xf32>
    %107 = vector.shape_cast %106 : vector<8xf32> to vector<1x1x8xf32>
    %108 = vector.broadcast %107 : vector<1x1x8xf32> to vector<16x16x8xf32>
    %109 = arith.mulf %104, %108 : vector<16x16x8xf32>
    %110 = arith.addf %103, %109 : vector<16x16x8xf32>
    %c1_147 = arith.constant 1 : index
    %c0_148 = arith.constant 0 : index
    %c0_149 = arith.constant 0 : index
    %111 = vector.load %arg8[%c1_147, %c0_148, %c0_149] : memref<18x18x8xf32, #tpu.memory_space<vmem>>, vector<16x16x8xf32>
    %112 = vector.extract_strided_slice %88 {offsets = [3, 0], sizes = [1, 8], strides = [1, 1]} : vector<9x8xf32> to vector<1x8xf32>
    %113 = vector.shape_cast %112 : vector<1x8xf32> to vector<8xf32>
    %114 = vector.shape_cast %113 : vector<8xf32> to vector<1x1x8xf32>
    %115 = vector.broadcast %114 : vector<1x1x8xf32> to vector<16x16x8xf32>
    %116 = arith.mulf %111, %115 : vector<16x16x8xf32>
    %117 = arith.addf %110, %116 : vector<16x16x8xf32>
    %c1_150 = arith.constant 1 : index
    %c1_151 = arith.constant 1 : index
    %c0_152 = arith.constant 0 : index
    %118 = vector.load %arg8[%c1_150, %c1_151, %c0_152] : memref<18x18x8xf32, #tpu.memory_space<vmem>>, vector<16x16x8xf32>
    %119 = vector.extract_strided_slice %88 {offsets = [4, 0], sizes = [1, 8], strides = [1, 1]} : vector<9x8xf32> to vector<1x8xf32>
    %120 = vector.shape_cast %119 : vector<1x8xf32> to vector<8xf32>
    %121 = vector.shape_cast %120 : vector<8xf32> to vector<1x1x8xf32>
    %122 = vector.broadcast %121 : vector<1x1x8xf32> to vector<16x16x8xf32>
    %123 = arith.mulf %118, %122 : vector<16x16x8xf32>
    %124 = arith.addf %117, %123 : vector<16x16x8xf32>
    %c1_153 = arith.constant 1 : index
    %c2_154 = arith.constant 2 : index
    %c0_155 = arith.constant 0 : index
    %125 = vector.load %arg8[%c1_153, %c2_154, %c0_155] : memref<18x18x8xf32, #tpu.memory_space<vmem>>, vector<16x16x8xf32>
    %126 = vector.extract_strided_slice %88 {offsets = [5, 0], sizes = [1, 8], strides = [1, 1]} : vector<9x8xf32> to vector<1x8xf32>
    %127 = vector.shape_cast %126 : vector<1x8xf32> to vector<8xf32>
    %128 = vector.shape_cast %127 : vector<8xf32> to vector<1x1x8xf32>
    %129 = vector.broadcast %128 : vector<1x1x8xf32> to vector<16x16x8xf32>
    %130 = arith.mulf %125, %129 : vector<16x16x8xf32>
    %131 = arith.addf %124, %130 : vector<16x16x8xf32>
    %c2_156 = arith.constant 2 : index
    %c0_157 = arith.constant 0 : index
    %c0_158 = arith.constant 0 : index
    %132 = vector.load %arg8[%c2_156, %c0_157, %c0_158] : memref<18x18x8xf32, #tpu.memory_space<vmem>>, vector<16x16x8xf32>
    %133 = vector.extract_strided_slice %88 {offsets = [6, 0], sizes = [1, 8], strides = [1, 1]} : vector<9x8xf32> to vector<1x8xf32>
    %134 = vector.shape_cast %133 : vector<1x8xf32> to vector<8xf32>
    %135 = vector.shape_cast %134 : vector<8xf32> to vector<1x1x8xf32>
    %136 = vector.broadcast %135 : vector<1x1x8xf32> to vector<16x16x8xf32>
    %137 = arith.mulf %132, %136 : vector<16x16x8xf32>
    %138 = arith.addf %131, %137 : vector<16x16x8xf32>
    %c2_159 = arith.constant 2 : index
    %c1_160 = arith.constant 1 : index
    %c0_161 = arith.constant 0 : index
    %139 = vector.load %arg8[%c2_159, %c1_160, %c0_161] : memref<18x18x8xf32, #tpu.memory_space<vmem>>, vector<16x16x8xf32>
    %140 = vector.extract_strided_slice %88 {offsets = [7, 0], sizes = [1, 8], strides = [1, 1]} : vector<9x8xf32> to vector<1x8xf32>
    %141 = vector.shape_cast %140 : vector<1x8xf32> to vector<8xf32>
    %142 = vector.shape_cast %141 : vector<8xf32> to vector<1x1x8xf32>
    %143 = vector.broadcast %142 : vector<1x1x8xf32> to vector<16x16x8xf32>
    %144 = arith.mulf %139, %143 : vector<16x16x8xf32>
    %145 = arith.addf %138, %144 : vector<16x16x8xf32>
    %c2_162 = arith.constant 2 : index
    %c2_163 = arith.constant 2 : index
    %c0_164 = arith.constant 0 : index
    %146 = vector.load %arg8[%c2_162, %c2_163, %c0_164] : memref<18x18x8xf32, #tpu.memory_space<vmem>>, vector<16x16x8xf32>
    %147 = vector.extract_strided_slice %88 {offsets = [8, 0], sizes = [1, 8], strides = [1, 1]} : vector<9x8xf32> to vector<1x8xf32>
    %148 = vector.shape_cast %147 : vector<1x8xf32> to vector<8xf32>
    %149 = vector.shape_cast %148 : vector<8xf32> to vector<1x1x8xf32>
    %150 = vector.broadcast %149 : vector<1x1x8xf32> to vector<16x16x8xf32>
    %151 = arith.mulf %146, %150 : vector<16x16x8xf32>
    %152 = arith.addf %145, %151 : vector<16x16x8xf32>
    %cst_165 = arith.constant dense<0.000000e+00> : vector<16x16xf32>
    %153 = vector.multi_reduction <add>, %152, %cst_165 [2] : vector<16x16x8xf32> to vector<16x16xf32>
    %154 = arith.addf %153, %9 : vector<16x16xf32>
    %155 = vector.shape_cast %154 : vector<16x16xf32> to vector<1x16x16xf32>
    %c0_166 = arith.constant 0 : index
    %c0_167 = arith.constant 0 : index
    %c0_168 = arith.constant 0 : index
    %156 = vector.load %arg7[%c0_166, %c0_167, %c0_168] : memref<1x16x16xf32, #tpu.memory_space<vmem>>, vector<1x16x16xf32>
    tpu.vector_store %arg7[%c0_166, %c0_167, %c0_168], %155 {strides = array<i32>} : memref<1x16x16xf32, #tpu.memory_space<vmem>>, vector<1x16x16xf32>,
    return
  }
  func.func @transform_0(%arg0: i32) -> (i32, i32, i32, i32) {
    %c0_i32 = arith.constant 0 : i32
    %c0_i32_0 = arith.constant 0 : i32
    %c0_i32_1 = arith.constant 0 : i32
    %c0_i32_2 = arith.constant 0 : i32
    return %arg0, %c0_i32, %c0_i32_0, %c0_i32_1 : i32, i32, i32, i32
  }
  func.func @transform_1(%arg0: i32) -> (i32, i32, i32) {
    %c0_i32 = arith.constant 0 : i32
    %c0_i32_0 = arith.constant 0 : i32
    %c0_i32_1 = arith.constant 0 : i32
    return %arg0, %c0_i32, %c0_i32_0 : i32, i32, i32
  }
  func.func @transform_2(%arg0: i32) -> (i32, i32) {
    %c0_i32 = arith.constant 0 : i32
    %c0_i32_0 = arith.constant 0 : i32
    %c0_i32_1 = arith.constant 0 : i32
    return %c0_i32, %c0_i32_0 : i32, i32
  }
  func.func @transform_3(%arg0: i32) -> (i32, i32, i32) {
    %c0_i32 = arith.constant 0 : i32
    %c0_i32_0 = arith.constant 0 : i32
    %c0_i32_1 = arith.constant 0 : i32
    %c0_i32_2 = arith.constant 0 : i32
    return %c0_i32, %c0_i32_0, %c0_i32_1 : i32, i32, i32
  }
  func.func @transform_4(%arg0: i32) -> (i32, i32) {
    %c0_i32 = arith.constant 0 : i32
    %c0_i32_0 = arith.constant 0 : i32
    %c0_i32_1 = arith.constant 0 : i32
    return %c0_i32, %c0_i32_0 : i32, i32
  }
  func.func @transform_5(%arg0: i32) -> (i32, i32, i32, i32) {
    %c0_i32 = arith.constant 0 : i32
    %c0_i32_0 = arith.constant 0 : i32
    %c0_i32_1 = arith.constant 0 : i32
    %c0_i32_2 = arith.constant 0 : i32
    return %arg0, %c0_i32, %c0_i32_0, %c0_i32_1 : i32, i32, i32, i32
  }
  func.func @transform_6(%arg0: i32) -> (i32, i32, i32) {
    %c0_i32 = arith.constant 0 : i32
    %c0_i32_0 = arith.constant 0 : i32
    %c0_i32_1 = arith.constant 0 : i32
    return %arg0, %c0_i32, %c0_i32_0 : i32, i32, i32
  }
}

</mosaic_0001>

<llo_original>
// kernel: reverse_attention_forward.1
$region0: #{reverse_attention_forward.1}
  #allocation0 [shape = 'u32[]', space=smem, size = 0x4, offset = 0x4, fixed_abs, tag = 'smem constant byte address 0x4 - core index']
  #allocation1 [shape = 'u32[144,128]{1,0:T(1,128)}', space=vmem, size = 0x12000, scoped, tag = 'internal scratch']
  #allocation2 [shape = 'f32[18,18,8]{2,1,0:T(8,128)}', space=vmem, size = 0x36000, scoped, tag = 'scratch operand']
  %s0 = inlined_call_operand.vmem [shape: bf16[2,16,16,4], index: 0, kind: input, shape index: {}]
  %s1 = inlined_call_operand.vmem [shape: f32[2,16,16], index: 1, kind: input, shape index: {}]
  %s2 = inlined_call_operand.vmem [shape: bf16[4,8], index: 2, kind: input, shape index: {}]
  %s3 = inlined_call_operand.vmem [shape: bf16[3,72,8], index: 3, kind: input, shape index: {}]
  %s4 = inlined_call_operand.vmem [shape: f32[9,8], index: 4, kind: input, shape index: {}]
  %s5 = inlined_call_operand.vmem [shape: f32[2,16,16,8], index: 5, kind: output, shape index: {0}]
  %s6 = inlined_call_operand.hbm [shape: f32[2,16,16], index: 6, kind: output, shape index: {1}]
  %7 = xla_tuple %s5, %s6
  %s8 = sld [smem:[#allocation0]]
  $region61: #{reverse_attention_forward.1} parent=0
    _
  %s10 = ssub.s32 1, %s8
  %s11 = scalar_select 0, %s10, %s8
  $region1: #{reverse_attention_forward.1} parent=0
    #allocation3 [shape = 'u8[16384]{0}', space=vmem, size = 0x4000, scoped, tag = 'output window, operand 1']
    #allocation4 [shape = 's32[2]{0}', space=sflag, size = 0x8, scoped, tag = 'scoped memory for reverse_attention_forward.1']
    %12 = vsyncpa [#allocation4], 0
    %s13 = scalar_lea.sflag [#allocation4], 1
    %14 = vsyncpa %s13, 0
    loop: start=0, step=1, limit=4
    $region2: #{reverse_attention_forward.1} parent=1 // loop_pre_header
      _
    $region3: #{reverse_attention_forward.1} parent=1 // loop_header
      %s16 = sphi 0, %s20
      %p17 = scmp.ge.s32.totalorder %s16, 4
      %s26 = sphi 0, %s28
      %s29 = sphi 0, %s26
      %s30 = sphi 0, %s29
      %s46 = sphi 0, %s30
      %s52 = sphi 0, %s54
      %s55 = sphi 0, %s52
      %s56 = sphi 0, %s55
      %s72 = sphi 0, %s56
      %s76 = sphi 0, %s76
      %s78 = sphi 0, %s76
      %s79 = sphi 0, %s78
      %s93 = sphi 0, %s79
      %s97 = sphi 0, %s97
      %s99 = sphi 0, %s97
      %s100 = sphi 0, %s99
      %s114 = sphi 0, %s100
      %s118 = sphi 0, %s118
      %s120 = sphi 0, %s118
      %s121 = sphi 0, %s120
      %s135 = sphi 0, %s121
      %s141 = sphi 0, %s143
      %s144 = sphi 0, %s141
      %s145 = sphi 0, %s144
      %s161 = sphi 0, %s145
      %s167 = sphi 0, %s169
      %s170 = sphi 0, %s167
      %s171 = sphi 0, %s170
      %s187 = sphi 0, %s171
    $region4: #{reverse_attention_forward.1} parent=1 // loop_header_branch
      %19 = sbr.rel (%p17) target = $region8
    $region5: #{reverse_attention_forward.1} parent=1 // loop_body
      %s21 = ssub.s32 %s16, 1
      %s22 = ssub.s32 %s16, 2
      %s23 = sadd.s32 %s16, 1
      %s24 = ssub.s32 %s16, %s23
      %p25 = scmp.eq.s32.totalorder %s24, 0
      %s27 = sadd.s32 %s26, 1
      %s28 = scalar_select %p25, %s26, %s27
      %p31 = pneg %p25
      %p32 = scmp.eq.s32.totalorder %s16, 1
      %p33 = por %p31, %p32
      %p34 = scmp.ne.s32.totalorder %s26, %s29
      %p35 = scmp.eq.s32.totalorder %s16, 0
      %p36 = por %p34, %p35
      %p37 = scmp.ne.s32.totalorder %s26, %s29
      %p38 = scmp.eq.s32.totalorder %s21, 1
      %p39 = por %p37, %p38
      %p40 = scmp.ne.s32.totalorder %s29, %s30
      %p41 = scmp.eq.s32.totalorder %s21, 0
      %p42 = por %p40, %p41
      %p43 = scmp.ne.s32.totalorder %s29, %s30
      %p44 = scmp.eq.s32.totalorder %s22, 1
      %p45 = por %p43, %p44
      %p47 = scmp.ne.s32.totalorder %s30, %s46
      %p48 = scmp.eq.s32.totalorder %s22, 0
      %p49 = por %p47, %p48
      %s50 = ssub.s32 %s16, %s23
      %p51 = scmp.eq.s32.totalorder %s50, 0
      %s53 = sadd.s32 %s52, 1
      %s54 = scalar_select %p51, %s52, %s53
      %p57 = pneg %p51
      %p58 = scmp.eq.s32.totalorder %s16, 1
      %p59 = por %p57, %p58
      %p60 = scmp.ne.s32.totalorder %s52, %s55
      %p61 = scmp.eq.s32.totalorder %s16, 0
      %p62 = por %p60, %p61
      %p63 = scmp.ne.s32.totalorder %s52, %s55
      %p64 = scmp.eq.s32.totalorder %s21, 1
      %p65 = por %p63, %p64
      %p66 = scmp.ne.s32.totalorder %s55, %s56
      %p67 = scmp.eq.s32.totalorder %s21, 0
      %p68 = por %p66, %p67
      %p69 = scmp.ne.s32.totalorder %s55, %s56
      %p70 = scmp.eq.s32.totalorder %s22, 1
      %p71 = por %p69, %p70
      %p73 = scmp.ne.s32.totalorder %s56, %s72
      %p74 = scmp.eq.s32.totalorder %s22, 0
      %p75 = por %p73, %p74
      %s77 = sadd.s32 %s76, 1
      %p80 = scmp.eq.s32.totalorder %s16, 1
      %p81 = scmp.ne.s32.totalorder %s76, %s78
      %p82 = scmp.eq.s32.totalorder %s16, 0
      %p83 = por %p81, %p82
      %p84 = scmp.ne.s32.totalorder %s76, %s78
      %p85 = scmp.eq.s32.totalorder %s21, 1
      %p86 = por %p84, %p85
      %p87 = scmp.ne.s32.totalorder %s78, %s79
      %p88 = scmp.eq.s32.totalorder %s21, 0
      %p89 = por %p87, %p88
      %p90 = scmp.ne.s32.totalorder %s78, %s79
      %p91 = scmp.eq.s32.totalorder %s22, 1
      %p92 = por %p90, %p91
      %p94 = scmp.ne.s32.totalorder %s79, %s93
      %p95 = scmp.eq.s32.totalorder %s22, 0
      %p96 = por %p94, %p95
      %s98 = sadd.s32 %s97, 1
      %p101 = scmp.eq.s32.totalorder %s16, 1
      %p102 = scmp.ne.s32.totalorder %s97, %s99
      %p103 = scmp.eq.s32.totalorder %s16, 0
      %p104 = por %p102, %p103
      %p105 = scmp.ne.s32.totalorder %s97, %s99
      %p106 = scmp.eq.s32.totalorder %s21, 1
      %p107 = por %p105, %p106
      %p108 = scmp.ne.s32.totalorder %s99, %s100
      %p109 = scmp.eq.s32.totalorder %s21, 0
      %p110 = por %p108, %p109
      %p111 = scmp.ne.s32.totalorder %s99, %s100
      %p112 = scmp.eq.s32.totalorder %s22, 1
      %p113 = por %p111, %p112
      %p115 = scmp.ne.s32.totalorder %s100, %s114
      %p116 = scmp.eq.s32.totalorder %s22, 0
      %p117 = por %p115, %p116
      %s119 = sadd.s32 %s118, 1
      %p122 = scmp.eq.s32.totalorder %s16, 1
      %p123 = scmp.ne.s32.totalorder %s118, %s120
      %p124 = scmp.eq.s32.totalorder %s16, 0
      %p125 = por %p123, %p124
      %p126 = scmp.ne.s32.totalorder %s118, %s120
      %p127 = scmp.eq.s32.totalorder %s21, 1
      %p128 = por %p126, %p127
      %p129 = scmp.ne.s32.totalorder %s120, %s121
      %p130 = scmp.eq.s32.totalorder %s21, 0
      %p131 = por %p129, %p130
      %p132 = scmp.ne.s32.totalorder %s120, %s121
      %p133 = scmp.eq.s32.totalorder %s22, 1
      %p134 = por %p132, %p133
      %p136 = scmp.ne.s32.totalorder %s121, %s135
      %p137 = scmp.eq.s32.totalorder %s22, 0
      %p138 = por %p136, %p137
      %s139 = ssub.s32 %s16, %s23
      %p140 = scmp.eq.s32.totalorder %s139, 0
      %s142 = sadd.s32 %s141, 1
      %s143 = scalar_select %p140, %s141, %s142
      %p146 = pneg %p140
      %p147 = scmp.eq.s32.totalorder %s16, 1
      %p148 = por %p146, %p147
      %p149 = scmp.ne.s32.totalorder %s141, %s144
      %p150 = scmp.eq.s32.totalorder %s16, 0
      %p151 = por %p149, %p150
      %p152 = scmp.ne.s32.totalorder %s141, %s144
      %p153 = scmp.eq.s32.totalorder %s21, 1
      %p154 = por %p152, %p153
      %p155 = scmp.ne.s32.totalorder %s144, %s145
      %p156 = scmp.eq.s32.totalorder %s21, 0
      %p157 = por %p155, %p156
      %p158 = scmp.ne.s32.totalorder %s144, %s145
      %p159 = scmp.eq.s32.totalorder %s22, 1
      %p160 = por %p158, %p159
      %p162 = scmp.ne.s32.totalorder %s145, %s161
      %p163 = scmp.eq.s32.totalorder %s22, 0
      %p164 = por %p162, %p163
      %s165 = ssub.s32 %s16, %s23
      %p166 = scmp.eq.s32.totalorder %s165, 0
      %s168 = sadd.s32 %s167, 1
      %s169 = scalar_select %p166, %s167, %s168
      %p172 = pneg %p166
      %p173 = scmp.eq.s32.totalorder %s16, 1
      %p174 = por %p172, %p173
      %p175 = scmp.ne.s32.totalorder %s167, %s170
      %p176 = scmp.eq.s32.totalorder %s16, 0
      %p177 = por %p175, %p176
      %p178 = scmp.ne.s32.totalorder %s167, %s170
      %p179 = scmp.eq.s32.totalorder %s21, 1
      %p180 = por %p178, %p179
      %p181 = scmp.ne.s32.totalorder %s170, %s171
      %p182 = scmp.eq.s32.totalorder %s21, 0
      %p183 = por %p181, %p182
      %p184 = scmp.ne.s32.totalorder %s170, %s171
      %p185 = scmp.eq.s32.totalorder %s22, 1
      %p186 = por %p184, %p185
      %p188 = scmp.ne.s32.totalorder %s171, %s187
      %p189 = scmp.eq.s32.totalorder %s22, 0
      %p190 = por %p188, %p189
      %p191 = scmp.le.s32.totalorder 1, %s16
      %p192 = scmp.lt.s32.totalorder %s16, 3
      %p193 = pnand %p191, %p192
      %p194 = pneg %p193
      // Predicated region
      $region9: #{reverse_attention_forward.1} parent=5 // pred_check
        _
      $region10: #{reverse_attention_forward.1} parent=5 // pred_check_branch
        %196 = sbr.rel (%p193) target = $region12
      $region11: #{reverse_attention_forward.1} parent=5 // pred_region
        %s197 = ssub.s32 %s16, 1
        // Predicated region
        $region13: #{reverse_attention_forward.1} parent=11 // pred_check
          %p198 = pneg %p89
        $region14: #{reverse_attention_forward.1} parent=11 // pred_check_branch
          %200 = sbr.rel (%p198) target = $region16
        $region15: #{reverse_attention_forward.1} parent=11 // pred_region
          _
        $region16: #{reverse_attention_forward.1} parent=11 // pred_fallthru
          _
        // Predicated region
        $region17: #{reverse_attention_forward.1} parent=11 // pred_check
          %p201 = pneg %p110
        $region18: #{reverse_attention_forward.1} parent=11 // pred_check_branch
          %203 = sbr.rel (%p201) target = $region20
        $region19: #{reverse_attention_forward.1} parent=11 // pred_region
          _
        $region20: #{reverse_attention_forward.1} parent=11 // pred_fallthru
          _
        // Predicated region
        $region21: #{reverse_attention_forward.1} parent=11 // pred_check
          %p204 = pneg %p131
        $region22: #{reverse_attention_forward.1} parent=11 // pred_check_branch
          %206 = sbr.rel (%p204) target = $region24
        $region23: #{reverse_attention_forward.1} parent=11 // pred_region
          _
        $region24: #{reverse_attention_forward.1} parent=11 // pred_fallthru
          _
      $region12: #{reverse_attention_forward.1} parent=5 // pred_fallthru
        _
      %p207 = scmp.lt.s32.totalorder %s16, 2
      // Predicated region
      $region25: #{reverse_attention_forward.1} parent=5 // pred_check
        %p208 = pneg %p207
      $region26: #{reverse_attention_forward.1} parent=5 // pred_check_branch
        %210 = sbr.rel (%p208) target = $region28
      $region27: #{reverse_attention_forward.1} parent=5 // pred_region
        // Predicated region
        $region29: #{reverse_attention_forward.1} parent=27 // pred_check
          %p211 = pneg %p36
        $region30: #{reverse_attention_forward.1} parent=27 // pred_check_branch
          %213 = sbr.rel (%p211) target = $region32
        $region31: #{reverse_attention_forward.1} parent=27 // pred_region
          %p214 = scmp.lt.s32.totalorder %s16, 1
          %s215 = scalar_select %p214, %s16, 1
          %s216 = smul.addr %s215, 32
          %s217 = smul.addr %s216, 4
          %s218 = scalar_lea.vmem %s0, %s217
        $region32: #{reverse_attention_forward.1} parent=27 // pred_fallthru
          _
        // Predicated region
        $region33: #{reverse_attention_forward.1} parent=27 // pred_check
          %p219 = pneg %p62
        $region34: #{reverse_attention_forward.1} parent=27 // pred_check_branch
          %221 = sbr.rel (%p219) target = $region36
        $region35: #{reverse_attention_forward.1} parent=27 // pred_region
          %p222 = scmp.lt.s32.totalorder %s16, 1
          %s223 = scalar_select %p222, %s16, 1
          %s224 = smul.addr %s223, 2
          %s225 = smul.addr %s224, 8
          %s226 = scalar_lea.vmem %s1, %s225
        $region36: #{reverse_attention_forward.1} parent=27 // pred_fallthru
          _
      $region28: #{reverse_attention_forward.1} parent=5 // pred_fallthru
        _
      %p227 = scmp.le.s32.totalorder 1, %s16
      %p228 = scmp.lt.s32.totalorder %s16, 3
      %p229 = pnand %p227, %p228
      %p230 = pneg %p229
      // Predicated region
      $region37: #{reverse_attention_forward.1} parent=5 // pred_check
        _
      $region38: #{reverse_attention_forward.1} parent=5 // pred_check_branch
        %232 = sbr.rel (%p229) target = $region40
      $region39: #{reverse_attention_forward.1} parent=5 // pred_region
        %s233 = ssub.s32 %s16, 1
        %p234 = scmp.lt.s32.totalorder %s21, 1
        %s235 = scalar_select %p234, %s21, 1
        %s236 = smul.addr %s235, 32
        %s237 = smul.addr %s236, 4
        %s238 = scalar_lea.vmem %s0, %s237
        %p239 = pneg %p42
        %p240 = pneg %p39
        %p241 = scmp.lt.s32.totalorder %s21, 1
        %s242 = scalar_select %p241, %s21, 1
        %s243 = smul.addr %s242, 2
        %s244 = smul.addr %s243, 8
        %s245 = scalar_lea.vmem %s1, %s244
        %p246 = pneg %p68
        %p247 = pneg %p65
        %p248 = pneg %p89
        %p249 = pneg %p86
        %p250 = pneg %p110
        %p251 = pneg %p107
        %p252 = pneg %p131
        %p253 = pneg %p128
        %p254 = pneg %p157
        %p255 = pneg %p154
        %p256 = scmp.lt.s32.totalorder %s21, 1
        %s257 = scalar_select %p256, %s21, 1
        %s258 = smul.addr %s257, 32
        %s259 = smul.addr %s258, 8
        %s260 = scalar_lea.vmem %s5, %s259
        %p261 = pneg %p183
        %p262 = pneg %p180
        %s263 = sand.u32 %s170, 1
        %s264 = scalar_lea.sflag [#allocation4], %s263
        %s265 = sand.u32 %s170, 1
        %s266 = smul.addr %s265, 16
        %s267 = scalar_lea.vmem [#allocation3], %s266
        %p268 = scmp.lt.s32.totalorder %s21, 1
        %s269 = scalar_select %p268, %s21, 1
        %s270 = smul.addr %s269, 32
        %s271 = smul.addr %s270, 4
        %s272 = scalar_lea.vmem %s0, %s271
        %p273 = scmp.lt.s32.totalorder %s21, 1
        %s274 = scalar_select %p273, %s21, 1
        %s275 = smul.addr %s274, 2
        %s276 = smul.addr %s275, 8
        %s277 = scalar_lea.vmem %s1, %s276
        %p278 = scmp.lt.s32.totalorder %s21, 1
        %s279 = scalar_select %p278, %s21, 1
        %s280 = smul.addr %s279, 32
        %s281 = smul.addr %s280, 8
        %s282 = scalar_lea.vmem %s5, %s281
        %vm284 = vcmask 64512
        %285 = vst.msk [vmem:[#allocation2] sm:$0xff] %vm284, 0.0
        %286 = vst.msk [vmem:[#allocation2 + $0x8] sm:$0xff] %vm284, 0.0
        %vm287 = vcmask 58368
        %288 = vst.msk [vmem:[#allocation2 + $0x10] sm:$0x3] %vm287, 0.0
        %s289 = scalar_lea.vmem [#allocation2], 408
        %290 = vst.msk [vmem:[%s289] sm:$0xff] %vm284, 0.0
        %291 = vst.msk [vmem:[%s289 + $0x8] sm:$0xff] %vm284, 0.0
        %292 = vst.msk [vmem:[%s289 + $0x10] sm:$0x3] %vm287, 0.0
        %vm293 = vcmask 57344
        %294 = vst.msk [vmem:[#allocation2] sm:$0x1] %vm293, 0.0
        %295 = vst.msk [vmem:[#allocation2 + $0x18] sm:$0x1] %vm293, 0.0
        %296 = vst.msk [vmem:[#allocation2 + $0x30] sm:$0x1] %vm293, 0.0
        %297 = vst.msk [vmem:[#allocation2 + $0x48] sm:$0x1] %vm293, 0.0
        %298 = vst.msk [vmem:[#allocation2 + $0x60] sm:$0x1] %vm293, 0.0
        %299 = vst.msk [vmem:[#allocation2 + $0x78] sm:$0x1] %vm293, 0.0
        %300 = vst.msk [vmem:[#allocation2 + $0x90] sm:$0x1] %vm293, 0.0
        %301 = vst.msk [vmem:[#allocation2 + $0xa8] sm:$0x1] %vm293, 0.0
        %302 = vst.msk [vmem:[#allocation2 + $0xc0] sm:$0x1] %vm293, 0.0
        %303 = vst.msk [vmem:[#allocation2 + $0xd8] sm:$0x1] %vm293, 0.0
        %304 = vst.msk [vmem:[#allocation2 + $0xf0] sm:$0x1] %vm293, 0.0
        %305 = vst.msk [vmem:[#allocation2 + $0x108] sm:$0x1] %vm293, 0.0
        %306 = vst.msk [vmem:[#allocation2 + $0x120] sm:$0x1] %vm293, 0.0
        %307 = vst.msk [vmem:[#allocation2 + $0x138] sm:$0x1] %vm293, 0.0
        %308 = vst.msk [vmem:[#allocation2 + $0x150] sm:$0x1] %vm293, 0.0
        %309 = vst.msk [vmem:[#allocation2 + $0x168] sm:$0x1] %vm293, 0.0
        %310 = vst.msk [vmem:[#allocation2 + $0x180] sm:$0x1] %vm293, 0.0
        %311 = vst.msk [vmem:[#allocation2 + $0x198] sm:$0x1] %vm293, 0.0
        %312 = vst.msk [vmem:[#allocation2 + $0x11] sm:$0x1] %vm293, 0.0
        %313 = vst.msk [vmem:[#allocation2 + $0x29] sm:$0x1] %vm293, 0.0
        %314 = vst.msk [vmem:[#allocation2 + $0x41] sm:$0x1] %vm293, 0.0
        %315 = vst.msk [vmem:[#allocation2 + $0x59] sm:$0x1] %vm293, 0.0
        %316 = vst.msk [vmem:[#allocation2 + $0x71] sm:$0x1] %vm293, 0.0
        %317 = vst.msk [vmem:[#allocation2 + $0x89] sm:$0x1] %vm293, 0.0
        %318 = vst.msk [vmem:[#allocation2 + $0xa1] sm:$0x1] %vm293, 0.0
        %319 = vst.msk [vmem:[#allocation2 + $0xb9] sm:$0x1] %vm293, 0.0
        %320 = vst.msk [vmem:[#allocation2 + $0xd1] sm:$0x1] %vm293, 0.0
        %321 = vst.msk [vmem:[#allocation2 + $0xe9] sm:$0x1] %vm293, 0.0
        %322 = vst.msk [vmem:[#allocation2 + $0x101] sm:$0x1] %vm293, 0.0
        %323 = vst.msk [vmem:[#allocation2 + $0x119] sm:$0x1] %vm293, 0.0
        %324 = vst.msk [vmem:[#allocation2 + $0x131] sm:$0x1] %vm293, 0.0
        %325 = vst.msk [vmem:[#allocation2 + $0x149] sm:$0x1] %vm293, 0.0
        %326 = vst.msk [vmem:[#allocation2 + $0x161] sm:$0x1] %vm293, 0.0
        %327 = vst.msk [vmem:[#allocation2 + $0x179] sm:$0x1] %vm293, 0.0
        %328 = vst.msk [vmem:[#allocation2 + $0x191] sm:$0x1] %vm293, 0.0
        %329 = vst.msk [vmem:[#allocation2 + $0x1a9] sm:$0x1] %vm293, 0.0
        %v330 = vld [vmem:[%s277] sm:$0xff]
        %v331 = vld [vmem:[%s277 + $0x8] sm:$0xff]
        %v332 = vxor.u32 %v330, 2147483648
        %v333 = vxor.u32 %v331, 2147483648
        %v334 = vmul.f32 %v332, 1.442695
        %v335 = vpow.pop %v334
        %v336 = vmul.f32 %v333, 1.442695
        %v337 = vpow.pop %v336
        %v338 = vadd.f32 %v335, 1.0
        %v339 = vadd.f32 %v337, 1.0
        %v340 = vrcp.pop %v338
        %v341 = vmul.f32 1.0, %v340
        %v342 = vrcp.pop %v339
        %v343 = vmul.f32 1.0, %v342
        %v344 = vsub.f32 1.0, %v341
        %v345 = vsub.f32 1.0, %v343
        %v346 = vld [vmem:[%s272] sm:$0xf]
        %v347 = vld [vmem:[%s272 + $0x4] sm:$0xf]
        %v348 = vld [vmem:[%s272 + $0x8] sm:$0xf]
        %v349 = vld [vmem:[%s272 + $0xc] sm:$0xf]
        %v350 = vld [vmem:[%s272 + $0x10] sm:$0xf]
        %v351 = vld [vmem:[%s272 + $0x14] sm:$0xf]
        %v352 = vld [vmem:[%s272 + $0x18] sm:$0xf]
        %v353 = vld [vmem:[%s272 + $0x1c] sm:$0xf]
        %v354 = vld [vmem:[%s272 + $0x20] sm:$0xf]
        %v355 = vld [vmem:[%s272 + $0x24] sm:$0xf]
        %v356 = vld [vmem:[%s272 + $0x28] sm:$0xf]
        %v357 = vld [vmem:[%s272 + $0x2c] sm:$0xf]
        %v358 = vld [vmem:[%s272 + $0x30] sm:$0xf]
        %v359 = vld [vmem:[%s272 + $0x34] sm:$0xf]
        %v360 = vld [vmem:[%s272 + $0x38] sm:$0xf]
        %v361 = vld [vmem:[%s272 + $0x3c] sm:$0xf]
        %v362 = vld [vmem:[%s272 + $0x40] sm:$0xf]
        %v363 = vld [vmem:[%s272 + $0x44] sm:$0xf]
        %v364 = vld [vmem:[%s272 + $0x48] sm:$0xf]
        %v365 = vld [vmem:[%s272 + $0x4c] sm:$0xf]
        %v366 = vld [vmem:[%s272 + $0x50] sm:$0xf]
        %v367 = vld [vmem:[%s272 + $0x54] sm:$0xf]
        %v368 = vld [vmem:[%s272 + $0x58] sm:$0xf]
        %v369 = vld [vmem:[%s272 + $0x5c] sm:$0xf]
        %v370 = vld [vmem:[%s272 + $0x60] sm:$0xf]
        %v371 = vld [vmem:[%s272 + $0x64] sm:$0xf]
        %v372 = vld [vmem:[%s272 + $0x68] sm:$0xf]
        %v373 = vld [vmem:[%s272 + $0x6c] sm:$0xf]
        %v374 = vld [vmem:[%s272 + $0x70] sm:$0xf]
        %v375 = vld [vmem:[%s272 + $0x74] sm:$0xf]
        %v376 = vld [vmem:[%s272 + $0x78] sm:$0xf]
        %v377 = vld [vmem:[%s272 + $0x7c] sm:$0xf]
        %v378 = vunpack.c.l.bf16 %v346
        %v379 = vunpack.c.l.bf16 %v347
        %v380 = vunpack.c.l.bf16 %v348
        %v381 = vunpack.c.l.bf16 %v349
        %v382 = vunpack.c.l.bf16 %v350
        %v383 = vunpack.c.l.bf16 %v351
        %v384 = vunpack.c.l.bf16 %v352
        %v385 = vunpack.c.l.bf16 %v353
        %v386 = vunpack.c.l.bf16 %v354
        %v387 = vunpack.c.l.bf16 %v355
        %v388 = vunpack.c.l.bf16 %v356
        %v389 = vunpack.c.l.bf16 %v357
        %v390 = vunpack.c.l.bf16 %v358
        %v391 = vunpack.c.l.bf16 %v359
        %v392 = vunpack.c.l.bf16 %v360
        %v393 = vunpack.c.l.bf16 %v361
        %v394 = vunpack.c.l.bf16 %v362
        %v395 = vunpack.c.l.bf16 %v363
        %v396 = vunpack.c.l.bf16 %v364
        %v397 = vunpack.c.l.bf16 %v365
        %v398 = vunpack.c.l.bf16 %v366
        %v399 = vunpack.c.l.bf16 %v367
        %v400 = vunpack.c.l.bf16 %v368
        %v401 = vunpack.c.l.bf16 %v369
        %v402 = vunpack.c.l.bf16 %v370
        %v403 = vunpack.c.l.bf16 %v371
        %v404 = vunpack.c.l.bf16 %v372
        %v405 = vunpack.c.l.bf16 %v373
        %v406 = vunpack.c.l.bf16 %v374
        %v407 = vunpack.c.l.bf16 %v375
        %v408 = vunpack.c.l.bf16 %v376
        %v409 = vunpack.c.l.bf16 %v377
        %v410 = vlaneseq
        %v411 = vshrl.u32 %v410, 7
        %v412 = vsub.s32 0, %v411
        %v413 = vrot.slane %v344, %v412
        %415 = vbcast.lane.b32.xlu0 %v413, 256
        %v416 = vpop.permute.xlu0 %415
        %s418 = sor.u32 256, 8
        %419 = vbcast.lane.b32.xlu0 %v413, %s418
        %v420 = vpop.permute.xlu0 %419
        %v421 = vlaneseq
        %v422 = vshrl.u32 %v421, 7
        %v423 = vsub.s32 1, %v422
        %v424 = vrot.slane %v344, %v423
        %426 = vbcast.lane.b32.xlu0 %v424, 256
        %v427 = vpop.permute.xlu0 %426
        %s429 = sor.u32 256, 8
        %430 = vbcast.lane.b32.xlu0 %v424, %s429
        %v431 = vpop.permute.xlu0 %430
        %v432 = vlaneseq
        %v433 = vshrl.u32 %v432, 7
        %v434 = vsub.s32 2, %v433
        %v435 = vrot.slane %v344, %v434
        %437 = vbcast.lane.b32.xlu0 %v435, 256
        %v438 = vpop.permute.xlu0 %437
        %s440 = sor.u32 256, 8
        %441 = vbcast.lane.b32.xlu0 %v435, %s440
        %v442 = vpop.permute.xlu0 %441
        %v443 = vlaneseq
        %v444 = vshrl.u32 %v443, 7
        %v445 = vsub.s32 3, %v444
        %v446 = vrot.slane %v344, %v445
        %448 = vbcast.lane.b32.xlu0 %v446, 256
        %v449 = vpop.permute.xlu0 %448
        %s451 = sor.u32 256, 8
        %452 = vbcast.lane.b32.xlu0 %v446, %s451
        %v453 = vpop.permute.xlu0 %452
        %v454 = vlaneseq
        %v455 = vshrl.u32 %v454, 7
        %v456 = vsub.s32 4, %v455
        %v457 = vrot.slane %v344, %v456
        %459 = vbcast.lane.b32.xlu0 %v457, 256
        %v460 = vpop.permute.xlu0 %459
        %s462 = sor.u32 256, 8
        %463 = vbcast.lane.b32.xlu0 %v457, %s462
        %v464 = vpop.permute.xlu0 %463
        %v465 = vlaneseq
        %v466 = vshrl.u32 %v465, 7
        %v467 = vsub.s32 5, %v466
        %v468 = vrot.slane %v344, %v467
        %470 = vbcast.lane.b32.xlu0 %v468, 256
        %v471 = vpop.permute.xlu0 %470
        %s473 = sor.u32 256, 8
        %474 = vbcast.lane.b32.xlu0 %v468, %s473
        %v475 = vpop.permute.xlu0 %474
        %v476 = vlaneseq
        %v477 = vshrl.u32 %v476, 7
        %v478 = vsub.s32 6, %v477
        %v479 = vrot.slane %v344, %v478
        %481 = vbcast.lane.b32.xlu0 %v479, 256
        %v482 = vpop.permute.xlu0 %481
        %s484 = sor.u32 256, 8
        %485 = vbcast.lane.b32.xlu0 %v479, %s484
        %v486 = vpop.permute.xlu0 %485
        %v487 = vlaneseq
        %v488 = vshrl.u32 %v487, 7
        %v489 = vsub.s32 7, %v488
        %v490 = vrot.slane %v344, %v489
        %492 = vbcast.lane.b32.xlu0 %v490, 256
        %v493 = vpop.permute.xlu0 %492
        %s495 = sor.u32 256, 8
        %496 = vbcast.lane.b32.xlu0 %v490, %s495
        %v497 = vpop.permute.xlu0 %496
        %v498 = vlaneseq
        %v499 = vshrl.u32 %v498, 7
        %v500 = vsub.s32 0, %v499
        %v501 = vrot.slane %v345, %v500
        %503 = vbcast.lane.b32.xlu0 %v501, 256
        %v504 = vpop.permute.xlu0 %503
        %s506 = sor.u32 256, 8
        %507 = vbcast.lane.b32.xlu0 %v501, %s506
        %v508 = vpop.permute.xlu0 %507
        %v509 = vlaneseq
        %v510 = vshrl.u32 %v509, 7
        %v511 = vsub.s32 1, %v510
        %v512 = vrot.slane %v345, %v511
        %514 = vbcast.lane.b32.xlu0 %v512, 256
        %v515 = vpop.permute.xlu0 %514
        %s517 = sor.u32 256, 8
        %518 = vbcast.lane.b32.xlu0 %v512, %s517
        %v519 = vpop.permute.xlu0 %518
        %v520 = vlaneseq
        %v521 = vshrl.u32 %v520, 7
        %v522 = vsub.s32 2, %v521
        %v523 = vrot.slane %v345, %v522
        %525 = vbcast.lane.b32.xlu0 %v523, 256
        %v526 = vpop.permute.xlu0 %525
        %s528 = sor.u32 256, 8
        %529 = vbcast.lane.b32.xlu0 %v523, %s528
        %v530 = vpop.permute.xlu0 %529
        %v531 = vlaneseq
        %v532 = vshrl.u32 %v531, 7
        %v533 = vsub.s32 3, %v532
        %v534 = vrot.slane %v345, %v533
        %536 = vbcast.lane.b32.xlu0 %v534, 256
        %v537 = vpop.permute.xlu0 %536
        %s539 = sor.u32 256, 8
        %540 = vbcast.lane.b32.xlu0 %v534, %s539
        %v541 = vpop.permute.xlu0 %540
        %v542 = vlaneseq
        %v543 = vshrl.u32 %v542, 7
        %v544 = vsub.s32 4, %v543
        %v545 = vrot.slane %v345, %v544
        %547 = vbcast.lane.b32.xlu0 %v545, 256
        %v548 = vpop.permute.xlu0 %547
        %s550 = sor.u32 256, 8
        %551 = vbcast.lane.b32.xlu0 %v545, %s550
        %v552 = vpop.permute.xlu0 %551
        %v553 = vlaneseq
        %v554 = vshrl.u32 %v553, 7
        %v555 = vsub.s32 5, %v554
        %v556 = vrot.slane %v345, %v555
        %558 = vbcast.lane.b32.xlu0 %v556, 256
        %v559 = vpop.permute.xlu0 %558
        %s561 = sor.u32 256, 8
        %562 = vbcast.lane.b32.xlu0 %v556, %s561
        %v563 = vpop.permute.xlu0 %562
        %v564 = vlaneseq
        %v565 = vshrl.u32 %v564, 7
        %v566 = vsub.s32 6, %v565
        %v567 = vrot.slane %v345, %v566
        %569 = vbcast.lane.b32.xlu0 %v567, 256
        %v570 = vpop.permute.xlu0 %569
        %s572 = sor.u32 256, 8
        %573 = vbcast.lane.b32.xlu0 %v567, %s572
        %v574 = vpop.permute.xlu0 %573
        %v575 = vlaneseq
        %v576 = vshrl.u32 %v575, 7
        %v577 = vsub.s32 7, %v576
        %v578 = vrot.slane %v345, %v577
        %580 = vbcast.lane.b32.xlu0 %v578, 256
        %v581 = vpop.permute.xlu0 %580
        %s583 = sor.u32 256, 8
        %584 = vbcast.lane.b32.xlu0 %v578, %s583
        %v585 = vpop.permute.xlu0 %584
        %v586 = vmul.f32 %v378, %v416
        %v587 = vmul.f32 %v379, %v420
        %v588 = vmul.f32 %v380, %v427
        %v589 = vmul.f32 %v381, %v431
        %v590 = vmul.f32 %v382, %v438
        %v591 = vmul.f32 %v383, %v442
        %v592 = vmul.f32 %v384, %v449
        %v593 = vmul.f32 %v385, %v453
        %v594 = vmul.f32 %v386, %v460
        %v595 = vmul.f32 %v387, %v464
        %v596 = vmul.f32 %v388, %v471
        %v597 = vmul.f32 %v389, %v475
        %v598 = vmul.f32 %v390, %v482
        %v599 = vmul.f32 %v391, %v486
        %v600 = vmul.f32 %v392, %v493
        %v601 = vmul.f32 %v393, %v497
        %v602 = vmul.f32 %v394, %v504
        %v603 = vmul.f32 %v395, %v508
        %v604 = vmul.f32 %v396, %v515
        %v605 = vmul.f32 %v397, %v519
        %v606 = vmul.f32 %v398, %v526
        %v607 = vmul.f32 %v399, %v530
        %v608 = vmul.f32 %v400, %v537
        %v609 = vmul.f32 %v401, %v541
        %v610 = vmul.f32 %v402, %v548
        %v611 = vmul.f32 %v403, %v552
        %v612 = vmul.f32 %v404, %v559
        %v613 = vmul.f32 %v405, %v563
        %v614 = vmul.f32 %v406, %v570
        %v615 = vmul.f32 %v407, %v574
        %v616 = vmul.f32 %v408, %v581
        %v617 = vmul.f32 %v409, %v585
        %v618 = vpack.c.bf16 %v587, %v586
        %v619 = vpack.c.bf16 %v589, %v588
        %v620 = vpack.c.bf16 %v591, %v590
        %v621 = vpack.c.bf16 %v593, %v592
        %v622 = vpack.c.bf16 %v595, %v594
        %v623 = vpack.c.bf16 %v597, %v596
        %v624 = vpack.c.bf16 %v599, %v598
        %v625 = vpack.c.bf16 %v601, %v600
        %v626 = vpack.c.bf16 %v603, %v602
        %v627 = vpack.c.bf16 %v605, %v604
        %v628 = vpack.c.bf16 %v607, %v606
        %v629 = vpack.c.bf16 %v609, %v608
        %v630 = vpack.c.bf16 %v611, %v610
        %v631 = vpack.c.bf16 %v613, %v612
        %v632 = vpack.c.bf16 %v615, %v614
        %v633 = vpack.c.bf16 %v617, %v616
        %v634 = vld [vmem:[%s2] sm:$0x3]
        %vm635 = vcmask 31744
        %v637 = vsel %vm635, %v618, 0
        %v640 = vsel %vm635, %v619, 0
        %v643 = vsel %vm635, %v620, 0
        %v646 = vsel %vm635, %v621, 0
        %v649 = vsel %vm635, %v622, 0
        %v652 = vsel %vm635, %v623, 0
        %v655 = vsel %vm635, %v624, 0
        %v658 = vsel %vm635, %v625, 0
        %v661 = vsel %vm635, %v626, 0
        %v664 = vsel %vm635, %v627, 0
        %v667 = vsel %vm635, %v628, 0
        %v670 = vsel %vm635, %v629, 0
        %v673 = vsel %vm635, %v630, 0
        %v676 = vsel %vm635, %v631, 0
        %v679 = vsel %vm635, %v632, 0
        %v682 = vsel %vm635, %v633, 0
        %vm684 = vcmask 1041408
        %v686 = vsel %vm684, %v634, 0
        %688 = vmatprep.subr.bf16.mxu0 0
        %689 = vmatpush1.bf16.msra.mxu0 %v686
        %690 = vmatprep.subr.bf16.mxu0 0
        %691 = vmatpush1.bf16.msra.mxu0 0
        %692 = vmatprep.subr.bf16.mxu0 0
        %693 = vmatpush1.bf16.msra.mxu0 0
        %694 = vmatprep.subr.bf16.mxu0 0
        %695 = vmatpush1.bf16.msra.mxu0 0
        %696 = vmatprep.subr.bf16.mxu0 0
        %697 = vmatpush1.bf16.msra.mxu0 0
        %698 = vmatprep.subr.bf16.mxu0 0
        %699 = vmatpush1.bf16.msra.mxu0 0
        %700 = vmatprep.subr.bf16.mxu0 0
        %701 = vmatpush1.bf16.msra.mxu0 0
        %702 = vmatprep.subr.bf16.mxu0 0
        %703 = vmatpush1.bf16.msra.mxu0 0
        %704 = vmatprep.subr.bf16.mxu0 0
        %705 = vmatpush1.bf16.msra.mxu0 0
        %706 = vmatprep.subr.bf16.mxu0 0
        %707 = vmatpush1.bf16.msra.mxu0 0
        %708 = vmatprep.subr.bf16.mxu0 0
        %709 = vmatpush1.bf16.msra.mxu0 0
        %710 = vmatprep.subr.bf16.mxu0 0
        %711 = vmatpush1.bf16.msra.mxu0 0
        %712 = vmatprep.subr.bf16.mxu0 0
        %713 = vmatpush1.bf16.msra.mxu0 0
        %714 = vmatprep.subr.bf16.mxu0 0
        %715 = vmatpush1.bf16.msra.mxu0 0
        %716 = vmatprep.subr.bf16.mxu0 0
        %717 = vmatpush1.bf16.msra.mxu0 0
        %718 = vmatprep.subr.bf16.mxu0 0
        %719 = vmatpush1.bf16.msra.mxu0 0
        %720 = vmatprep.mubr.bf16.mxu0 0
        %721 = vmatmul.mubr.bf16.gmra.mrb[0].mxu0 %v637
        %v722 = vpop.f32.mrb[0].mxu0
        %v723 = vadd.f32 0.0, %v722
        %v724 = vpop.f32.mrb[0].mxu0
        %v725 = vpop.f32.mrb[0].mxu0
        %v726 = vadd.f32 0.0, %v725
        %v727 = vpop.f32.mrb[0].mxu0
        %728 = vmatprep.mubr.bf16.mxu0 0
        %729 = vmatmul.mubr.bf16.gmra.mrb[0].mxu0 %v640
        %v730 = vpop.f32.mrb[0].mxu0
        %v731 = vadd.f32 0.0, %v730
        %v732 = vpop.f32.mrb[0].mxu0
        %v733 = vpop.f32.mrb[0].mxu0
        %v734 = vadd.f32 0.0, %v733
        %v735 = vpop.f32.mrb[0].mxu0
        %736 = vmatprep.mubr.bf16.mxu0 0
        %737 = vmatmul.mubr.bf16.gmra.mrb[0].mxu0 %v643
        %v738 = vpop.f32.mrb[0].mxu0
        %v739 = vadd.f32 0.0, %v738
        %v740 = vpop.f32.mrb[0].mxu0
        %v741 = vpop.f32.mrb[0].mxu0
        %v742 = vadd.f32 0.0, %v741
        %v743 = vpop.f32.mrb[0].mxu0
        %744 = vmatprep.mubr.bf16.mxu0 0
        %745 = vmatmul.mubr.bf16.gmra.mrb[0].mxu0 %v646
        %v746 = vpop.f32.mrb[0].mxu0
        %v747 = vadd.f32 0.0, %v746
        %v748 = vpop.f32.mrb[0].mxu0
        %v749 = vpop.f32.mrb[0].mxu0
        %v750 = vadd.f32 0.0, %v749
        %v751 = vpop.f32.mrb[0].mxu0
        %752 = vmatprep.mubr.bf16.mxu0 0
        %753 = vmatmul.mubr.bf16.gmra.mrb[0].mxu0 %v649
        %v754 = vpop.f32.mrb[0].mxu0
        %v755 = vadd.f32 0.0, %v754
        %v756 = vpop.f32.mrb[0].mxu0
        %v757 = vpop.f32.mrb[0].mxu0
        %v758 = vadd.f32 0.0, %v757
        %v759 = vpop.f32.mrb[0].mxu0
        %760 = vmatprep.mubr.bf16.mxu0 0
        %761 = vmatmul.mubr.bf16.gmra.mrb[0].mxu0 %v652
        %v762 = vpop.f32.mrb[0].mxu0
        %v763 = vadd.f32 0.0, %v762
        %v764 = vpop.f32.mrb[0].mxu0
        %v765 = vpop.f32.mrb[0].mxu0
        %v766 = vadd.f32 0.0, %v765
        %v767 = vpop.f32.mrb[0].mxu0
        %768 = vmatprep.mubr.bf16.mxu0 0
        %769 = vmatmul.mubr.bf16.gmra.mrb[0].mxu0 %v655
        %v770 = vpop.f32.mrb[0].mxu0
        %v771 = vadd.f32 0.0, %v770
        %v772 = vpop.f32.mrb[0].mxu0
        %v773 = vpop.f32.mrb[0].mxu0
        %v774 = vadd.f32 0.0, %v773
        %v775 = vpop.f32.mrb[0].mxu0
        %776 = vmatprep.mubr.bf16.mxu0 0
        %777 = vmatmul.mubr.bf16.gmra.mrb[0].mxu0 %v658
        %v778 = vpop.f32.mrb[0].mxu0
        %v779 = vadd.f32 0.0, %v778
        %v780 = vpop.f32.mrb[0].mxu0
        %v781 = vpop.f32.mrb[0].mxu0
        %v782 = vadd.f32 0.0, %v781
        %v783 = vpop.f32.mrb[0].mxu0
        %784 = vmatprep.mubr.bf16.mxu0 0
        %785 = vmatmul.mubr.bf16.gmra.mrb[0].mxu0 %v661
        %v786 = vpop.f32.mrb[0].mxu0
        %v787 = vadd.f32 0.0, %v786
        %v788 = vpop.f32.mrb[0].mxu0
        %v789 = vpop.f32.mrb[0].mxu0
        %v790 = vadd.f32 0.0, %v789
        %v791 = vpop.f32.mrb[0].mxu0
        %792 = vmatprep.mubr.bf16.mxu0 0
        %793 = vmatmul.mubr.bf16.gmra.mrb[0].mxu0 %v664
        %v794 = vpop.f32.mrb[0].mxu0
        %v795 = vadd.f32 0.0, %v794
        %v796 = vpop.f32.mrb[0].mxu0
        %v797 = vpop.f32.mrb[0].mxu0
        %v798 = vadd.f32 0.0, %v797
        %v799 = vpop.f32.mrb[0].mxu0
        %800 = vmatprep.mubr.bf16.mxu0 0
        %801 = vmatmul.mubr.bf16.gmra.mrb[0].mxu0 %v667
        %v802 = vpop.f32.mrb[0].mxu0
        %v803 = vadd.f32 0.0, %v802
        %v804 = vpop.f32.mrb[0].mxu0
        %v805 = vpop.f32.mrb[0].mxu0
        %v806 = vadd.f32 0.0, %v805
        %v807 = vpop.f32.mrb[0].mxu0
        %808 = vmatprep.mubr.bf16.mxu0 0
        %809 = vmatmul.mubr.bf16.gmra.mrb[0].mxu0 %v670
        %v810 = vpop.f32.mrb[0].mxu0
        %v811 = vadd.f32 0.0, %v810
        %v812 = vpop.f32.mrb[0].mxu0
        %v813 = vpop.f32.mrb[0].mxu0
        %v814 = vadd.f32 0.0, %v813
        %v815 = vpop.f32.mrb[0].mxu0
        %816 = vmatprep.mubr.bf16.mxu0 0
        %817 = vmatmul.mubr.bf16.gmra.mrb[0].mxu0 %v673
        %v818 = vpop.f32.mrb[0].mxu0
        %v819 = vadd.f32 0.0, %v818
        %v820 = vpop.f32.mrb[0].mxu0
        %v821 = vpop.f32.mrb[0].mxu0
        %v822 = vadd.f32 0.0, %v821
        %v823 = vpop.f32.mrb[0].mxu0
        %824 = vmatprep.mubr.bf16.mxu0 0
        %825 = vmatmul.mubr.bf16.gmra.mrb[0].mxu0 %v676
        %v826 = vpop.f32.mrb[0].mxu0
        %v827 = vadd.f32 0.0, %v826
        %v828 = vpop.f32.mrb[0].mxu0
        %v829 = vpop.f32.mrb[0].mxu0
        %v830 = vadd.f32 0.0, %v829
        %v831 = vpop.f32.mrb[0].mxu0
        %832 = vmatprep.mubr.bf16.mxu0 0
        %833 = vmatmul.mubr.bf16.gmra.mrb[0].mxu0 %v679
        %v834 = vpop.f32.mrb[0].mxu0
        %v835 = vadd.f32 0.0, %v834
        %v836 = vpop.f32.mrb[0].mxu0
        %v837 = vpop.f32.mrb[0].mxu0
        %v838 = vadd.f32 0.0, %v837
        %v839 = vpop.f32.mrb[0].mxu0
        %840 = vmatprep.mubr.bf16.mxu0 0
        %841 = vmatmul.mubr.bf16.gmra.mrb[0].mxu0 %v682
        %v842 = vpop.f32.mrb[0].mxu0
        %v843 = vadd.f32 0.0, %v842
        %v844 = vpop.f32.mrb[0].mxu0
        %v845 = vpop.f32.mrb[0].mxu0
        %v846 = vadd.f32 0.0, %v845
        %v847 = vpop.f32.mrb[0].mxu0
        %848 = vdwg.mxu0
        %s849 = scalar_lea.vmem [#allocation2], 24
        %850 = vst.msk [vmem:[%s849 + $0x1] sm:$0xff] %vm284, %v723
        %851 = vst.msk [vmem:[%s849 + $0x9] sm:$0xff] %vm284, %v726
        %852 = vst.msk [vmem:[%s849 + $0x19] sm:$0xff] %vm284, %v731
        %853 = vst.msk [vmem:[%s849 + $0x21] sm:$0xff] %vm284, %v734
        %854 = vst.msk [vmem:[%s849 + $0x31] sm:$0xff] %vm284, %v739
        %855 = vst.msk [vmem:[%s849 + $0x39] sm:$0xff] %vm284, %v742
        %856 = vst.msk [vmem:[%s849 + $0x49] sm:$0xff] %vm284, %v747
        %857 = vst.msk [vmem:[%s849 + $0x51] sm:$0xff] %vm284, %v750
        %858 = vst.msk [vmem:[%s849 + $0x61] sm:$0xff] %vm284, %v755
        %859 = vst.msk [vmem:[%s849 + $0x69] sm:$0xff] %vm284, %v758
        %860 = vst.msk [vmem:[%s849 + $0x79] sm:$0xff] %vm284, %v763
        %861 = vst.msk [vmem:[%s849 + $0x81] sm:$0xff] %vm284, %v766
        %862 = vst.msk [vmem:[%s849 + $0x91] sm:$0xff] %vm284, %v771
        %863 = vst.msk [vmem:[%s849 + $0x99] sm:$0xff] %vm284, %v774
        %864 = vst.msk [vmem:[%s849 + $0xa9] sm:$0xff] %vm284, %v779
        %865 = vst.msk [vmem:[%s849 + $0xb1] sm:$0xff] %vm284, %v782
        %866 = vst.msk [vmem:[%s849 + $0xc1] sm:$0xff] %vm284, %v787
        %867 = vst.msk [vmem:[%s849 + $0xc9] sm:$0xff] %vm284, %v790
        %868 = vst.msk [vmem:[%s849 + $0xd9] sm:$0xff] %vm284, %v795
        %869 = vst.msk [vmem:[%s849 + $0xe1] sm:$0xff] %vm284, %v798
        %870 = vst.msk [vmem:[%s849 + $0xf1] sm:$0xff] %vm284, %v803
        %871 = vst.msk [vmem:[%s849 + $0xf9] sm:$0xff] %vm284, %v806
        %872 = vst.msk [vmem:[%s849 + $0x109] sm:$0xff] %vm284, %v811
        %873 = vst.msk [vmem:[%s849 + $0x111] sm:$0xff] %vm284, %v814
        %874 = vst.msk [vmem:[%s849 + $0x121] sm:$0xff] %vm284, %v819
        %875 = vst.msk [vmem:[%s849 + $0x129] sm:$0xff] %vm284, %v822
        %876 = vst.msk [vmem:[%s849 + $0x139] sm:$0xff] %vm284, %v827
        %877 = vst.msk [vmem:[%s849 + $0x141] sm:$0xff] %vm284, %v830
        %878 = vst.msk [vmem:[%s849 + $0x151] sm:$0xff] %vm284, %v835
        %879 = vst.msk [vmem:[%s849 + $0x159] sm:$0xff] %vm284, %v838
        %880 = vst.msk [vmem:[%s849 + $0x169] sm:$0xff] %vm284, %v843
        %881 = vst.msk [vmem:[%s849 + $0x171] sm:$0xff] %vm284, %v846
        %v882 = vld [vmem:[#allocation2] sm:$0xff]
        %v883 = vld [vmem:[#allocation2 + $0x8] sm:$0xff]
        %v884 = vld [vmem:[#allocation2 + $0x18] sm:$0xff]
        %v885 = vld [vmem:[#allocation2 + $0x20] sm:$0xff]
        %v886 = vld [vmem:[#allocation2 + $0x30] sm:$0xff]
        %v887 = vld [vmem:[#allocation2 + $0x38] sm:$0xff]
        %v888 = vld [vmem:[#allocation2 + $0x48] sm:$0xff]
        %v889 = vld [vmem:[#allocation2 + $0x50] sm:$0xff]
        %v890 = vld [vmem:[#allocation2 + $0x60] sm:$0xff]
        %v891 = vld [vmem:[#allocation2 + $0x68] sm:$0xff]
        %v892 = vld [vmem:[#allocation2 + $0x78] sm:$0xff]
        %v893 = vld [vmem:[#allocation2 + $0x80] sm:$0xff]
        %v894 = vld [vmem:[#allocation2 + $0x90] sm:$0xff]
        %v895 = vld [vmem:[#allocation2 + $0x98] sm:$0xff]
        %v896 = vld [vmem:[#allocation2 + $0xa8] sm:$0xff]
        %v897 = vld [vmem:[#allocation2 + $0xb0] sm:$0xff]
        %v898 = vld [vmem:[#allocation2 + $0xc0] sm:$0xff]
        %v899 = vld [vmem:[#allocation2 + $0xc8] sm:$0xff]
        %v900 = vld [vmem:[#allocation2 + $0xd8] sm:$0xff]
        %v901 = vld [vmem:[#allocation2 + $0xe0] sm:$0xff]
        %v902 = vld [vmem:[#allocation2 + $0xf0] sm:$0xff]
        %v903 = vld [vmem:[#allocation2 + $0xf8] sm:$0xff]
        %v904 = vld [vmem:[#allocation2 + $0x108] sm:$0xff]
        %v905 = vld [vmem:[#allocation2 + $0x110] sm:$0xff]
        %v906 = vld [vmem:[#allocation2 + $0x120] sm:$0xff]
        %v907 = vld [vmem:[#allocation2 + $0x128] sm:$0xff]
        %v908 = vld [vmem:[#allocation2 + $0x138] sm:$0xff]
        %v909 = vld [vmem:[#allocation2 + $0x140] sm:$0xff]
        %v910 = vld [vmem:[#allocation2 + $0x150] sm:$0xff]
        %v911 = vld [vmem:[#allocation2 + $0x158] sm:$0xff]
        %v912 = vld [vmem:[#allocation2 + $0x168] sm:$0xff]
        %v913 = vld [vmem:[#allocation2 + $0x170] sm:$0xff]
        %v914 = vld [vmem:[#allocation2 + $0x1] sm:$0xff]
        %v915 = vld [vmem:[#allocation2 + $0x9] sm:$0xff]
        %v916 = vld [vmem:[#allocation2 + $0x19] sm:$0xff]
        %v917 = vld [vmem:[#allocation2 + $0x21] sm:$0xff]
        %v918 = vld [vmem:[#allocation2 + $0x31] sm:$0xff]
        %v919 = vld [vmem:[#allocation2 + $0x39] sm:$0xff]
        %v920 = vld [vmem:[#allocation2 + $0x49] sm:$0xff]
        %v921 = vld [vmem:[#allocation2 + $0x51] sm:$0xff]
        %v922 = vld [vmem:[#allocation2 + $0x61] sm:$0xff]
        %v923 = vld [vmem:[#allocation2 + $0x69] sm:$0xff]
        %v924 = vld [vmem:[#allocation2 + $0x79] sm:$0xff]
        %v925 = vld [vmem:[#allocation2 + $0x81] sm:$0xff]
        %v926 = vld [vmem:[#allocation2 + $0x91] sm:$0xff]
        %v927 = vld [vmem:[#allocation2 + $0x99] sm:$0xff]
        %v928 = vld [vmem:[#allocation2 + $0xa9] sm:$0xff]
        %v929 = vld [vmem:[#allocation2 + $0xb1] sm:$0xff]
        %v930 = vld [vmem:[#allocation2 + $0xc1] sm:$0xff]
        %v931 = vld [vmem:[#allocation2 + $0xc9] sm:$0xff]
        %v932 = vld [vmem:[#allocation2 + $0xd9] sm:$0xff]
        %v933 = vld [vmem:[#allocation2 + $0xe1] sm:$0xff]
        %v934 = vld [vmem:[#allocation2 + $0xf1] sm:$0xff]
        %v935 = vld [vmem:[#allocation2 + $0xf9] sm:$0xff]
        %v936 = vld [vmem:[#allocation2 + $0x109] sm:$0xff]
        %v937 = vld [vmem:[#allocation2 + $0x111] sm:$0xff]
        %v938 = vld [vmem:[#allocation2 + $0x121] sm:$0xff]
        %v939 = vld [vmem:[#allocation2 + $0x129] sm:$0xff]
        %v940 = vld [vmem:[#allocation2 + $0x139] sm:$0xff]
        %v941 = vld [vmem:[#allocation2 + $0x141] sm:$0xff]
        %v942 = vld [vmem:[#allocation2 + $0x151] sm:$0xff]
        %v943 = vld [vmem:[#allocation2 + $0x159] sm:$0xff]
        %v944 = vld [vmem:[#allocation2 + $0x169] sm:$0xff]
        %v945 = vld [vmem:[#allocation2 + $0x171] sm:$0xff]
        %v946 = vld [vmem:[#allocation2 + $0x2] sm:$0xff]
        %v947 = vld [vmem:[#allocation2 + $0xa] sm:$0xff]
        %v948 = vld [vmem:[#allocation2 + $0x1a] sm:$0xff]
        %v949 = vld [vmem:[#allocation2 + $0x22] sm:$0xff]
        %v950 = vld [vmem:[#allocation2 + $0x32] sm:$0xff]
        %v951 = vld [vmem:[#allocation2 + $0x3a] sm:$0xff]
        %v952 = vld [vmem:[#allocation2 + $0x4a] sm:$0xff]
        %v953 = vld [vmem:[#allocation2 + $0x52] sm:$0xff]
        %v954 = vld [vmem:[#allocation2 + $0x62] sm:$0xff]
        %v955 = vld [vmem:[#allocation2 + $0x6a] sm:$0xff]
        %v956 = vld [vmem:[#allocation2 + $0x7a] sm:$0xff]
        %v957 = vld [vmem:[#allocation2 + $0x82] sm:$0xff]
        %v958 = vld [vmem:[#allocation2 + $0x92] sm:$0xff]
        %v959 = vld [vmem:[#allocation2 + $0x9a] sm:$0xff]
        %v960 = vld [vmem:[#allocation2 + $0xaa] sm:$0xff]
        %v961 = vld [vmem:[#allocation2 + $0xb2] sm:$0xff]
        %v962 = vld [vmem:[#allocation2 + $0xc2] sm:$0xff]
        %v963 = vld [vmem:[#allocation2 + $0xca] sm:$0xff]
        %v964 = vld [vmem:[#allocation2 + $0xda] sm:$0xff]
        %v965 = vld [vmem:[#allocation2 + $0xe2] sm:$0xff]
        %v966 = vld [vmem:[#allocation2 + $0xf2] sm:$0xff]
        %v967 = vld [vmem:[#allocation2 + $0xfa] sm:$0xff]
        %v968 = vld [vmem:[#allocation2 + $0x10a] sm:$0xff]
        %v969 = vld [vmem:[#allocation2 + $0x112] sm:$0xff]
        %v970 = vld [vmem:[#allocation2 + $0x122] sm:$0xff]
        %v971 = vld [vmem:[#allocation2 + $0x12a] sm:$0xff]
        %v972 = vld [vmem:[#allocation2 + $0x13a] sm:$0xff]
        %v973 = vld [vmem:[#allocation2 + $0x142] sm:$0xff]
        %v974 = vld [vmem:[#allocation2 + $0x152] sm:$0xff]
        %v975 = vld [vmem:[#allocation2 + $0x15a] sm:$0xff]
        %v976 = vld [vmem:[#allocation2 + $0x16a] sm:$0xff]
        %v977 = vld [vmem:[#allocation2 + $0x172] sm:$0xff]
        %v978 = vld [vmem:[%s849] sm:$0xff]
        %v979 = vld [vmem:[%s849 + $0x8] sm:$0xff]
        %v980 = vld [vmem:[%s849 + $0x18] sm:$0xff]
        %v981 = vld [vmem:[%s849 + $0x20] sm:$0xff]
        %v982 = vld [vmem:[%s849 + $0x30] sm:$0xff]
        %v983 = vld [vmem:[%s849 + $0x38] sm:$0xff]
        %v984 = vld [vmem:[%s849 + $0x48] sm:$0xff]
        %v985 = vld [vmem:[%s849 + $0x50] sm:$0xff]
        %v986 = vld [vmem:[%s849 + $0x60] sm:$0xff]
        %v987 = vld [vmem:[%s849 + $0x68] sm:$0xff]
        %v988 = vld [vmem:[%s849 + $0x78] sm:$0xff]
        %v989 = vld [vmem:[%s849 + $0x80] sm:$0xff]
        %v990 = vld [vmem:[%s849 + $0x90] sm:$0xff]
        %v991 = vld [vmem:[%s849 + $0x98] sm:$0xff]
        %v992 = vld [vmem:[%s849 + $0xa8] sm:$0xff]
        %v993 = vld [vmem:[%s849 + $0xb0] sm:$0xff]
        %v994 = vld [vmem:[%s849 + $0xc0] sm:$0xff]
        %v995 = vld [vmem:[%s849 + $0xc8] sm:$0xff]
        %v996 = vld [vmem:[%s849 + $0xd8] sm:$0xff]
        %v997 = vld [vmem:[%s849 + $0xe0] sm:$0xff]
        %v998 = vld [vmem:[%s849 + $0xf0] sm:$0xff]
        %v999 = vld [vmem:[%s849 + $0xf8] sm:$0xff]
        %v1000 = vld [vmem:[%s849 + $0x108] sm:$0xff]
        %v1001 = vld [vmem:[%s849 + $0x110] sm:$0xff]
        %v1002 = vld [vmem:[%s849 + $0x120] sm:$0xff]
        %v1003 = vld [vmem:[%s849 + $0x128] sm:$0xff]
        %v1004 = vld [vmem:[%s849 + $0x138] sm:$0xff]
        %v1005 = vld [vmem:[%s849 + $0x140] sm:$0xff]
        %v1006 = vld [vmem:[%s849 + $0x150] sm:$0xff]
        %v1007 = vld [vmem:[%s849 + $0x158] sm:$0xff]
        %v1008 = vld [vmem:[%s849 + $0x168] sm:$0xff]
        %v1009 = vld [vmem:[%s849 + $0x170] sm:$0xff]
        %v1010 = vld [vmem:[%s849 + $0x1] sm:$0xff]
        %v1011 = vld [vmem:[%s849 + $0x9] sm:$0xff]
        %v1012 = vld [vmem:[%s849 + $0x19] sm:$0xff]
        %v1013 = vld [vmem:[%s849 + $0x21] sm:$0xff]
        %v1014 = vld [vmem:[%s849 + $0x31] sm:$0xff]
        %v1015 = vld [vmem:[%s849 + $0x39] sm:$0xff]
        %v1016 = vld [vmem:[%s849 + $0x49] sm:$0xff]
        %v1017 = vld [vmem:[%s849 + $0x51] sm:$0xff]
        %v1018 = vld [vmem:[%s849 + $0x61] sm:$0xff]
        %v1019 = vld [vmem:[%s849 + $0x69] sm:$0xff]
        %v1020 = vld [vmem:[%s849 + $0x79] sm:$0xff]
        %v1021 = vld [vmem:[%s849 + $0x81] sm:$0xff]
        %v1022 = vld [vmem:[%s849 + $0x91] sm:$0xff]
        %v1023 = vld [vmem:[%s849 + $0x99] sm:$0xff]
        %v1024 = vld [vmem:[%s849 + $0xa9] sm:$0xff]
        %v1025 = vld [vmem:[%s849 + $0xb1] sm:$0xff]
        %v1026 = vld [vmem:[%s849 + $0xc1] sm:$0xff]
        %v1027 = vld [vmem:[%s849 + $0xc9] sm:$0xff]
        %v1028 = vld [vmem:[%s849 + $0xd9] sm:$0xff]
        %v1029 = vld [vmem:[%s849 + $0xe1] sm:$0xff]
        %v1030 = vld [vmem:[%s849 + $0xf1] sm:$0xff]
        %v1031 = vld [vmem:[%s849 + $0xf9] sm:$0xff]
        %v1032 = vld [vmem:[%s849 + $0x109] sm:$0xff]
        %v1033 = vld [vmem:[%s849 + $0x111] sm:$0xff]
        %v1034 = vld [vmem:[%s849 + $0x121] sm:$0xff]
        %v1035 = vld [vmem:[%s849 + $0x129] sm:$0xff]
        %v1036 = vld [vmem:[%s849 + $0x139] sm:$0xff]
        %v1037 = vld [vmem:[%s849 + $0x141] sm:$0xff]
        %v1038 = vld [vmem:[%s849 + $0x151] sm:$0xff]
        %v1039 = vld [vmem:[%s849 + $0x159] sm:$0xff]
        %v1040 = vld [vmem:[%s849 + $0x169] sm:$0xff]
        %v1041 = vld [vmem:[%s849 + $0x171] sm:$0xff]
        %v1042 = vld [vmem:[%s849 + $0x2] sm:$0xff]
        %v1043 = vld [vmem:[%s849 + $0xa] sm:$0xff]
        %v1044 = vld [vmem:[%s849 + $0x1a] sm:$0xff]
        %v1045 = vld [vmem:[%s849 + $0x22] sm:$0xff]
        %v1046 = vld [vmem:[%s849 + $0x32] sm:$0xff]
        %v1047 = vld [vmem:[%s849 + $0x3a] sm:$0xff]
        %v1048 = vld [vmem:[%s849 + $0x4a] sm:$0xff]
        %v1049 = vld [vmem:[%s849 + $0x52] sm:$0xff]
        %v1050 = vld [vmem:[%s849 + $0x62] sm:$0xff]
        %v1051 = vld [vmem:[%s849 + $0x6a] sm:$0xff]
        %v1052 = vld [vmem:[%s849 + $0x7a] sm:$0xff]
        %v1053 = vld [vmem:[%s849 + $0x82] sm:$0xff]
        %v1054 = vld [vmem:[%s849 + $0x92] sm:$0xff]
        %v1055 = vld [vmem:[%s849 + $0x9a] sm:$0xff]
        %v1056 = vld [vmem:[%s849 + $0xaa] sm:$0xff]
        %v1057 = vld [vmem:[%s849 + $0xb2] sm:$0xff]
        %v1058 = vld [vmem:[%s849 + $0xc2] sm:$0xff]
        %v1059 = vld [vmem:[%s849 + $0xca] sm:$0xff]
        %v1060 = vld [vmem:[%s849 + $0xda] sm:$0xff]
        %v1061 = vld [vmem:[%s849 + $0xe2] sm:$0xff]
        %v1062 = vld [vmem:[%s849 + $0xf2] sm:$0xff]
        %v1063 = vld [vmem:[%s849 + $0xfa] sm:$0xff]
        %v1064 = vld [vmem:[%s849 + $0x10a] sm:$0xff]
        %v1065 = vld [vmem:[%s849 + $0x112] sm:$0xff]
        %v1066 = vld [vmem:[%s849 + $0x122] sm:$0xff]
        %v1067 = vld [vmem:[%s849 + $0x12a] sm:$0xff]
        %v1068 = vld [vmem:[%s849 + $0x13a] sm:$0xff]
        %v1069 = vld [vmem:[%s849 + $0x142] sm:$0xff]
        %v1070 = vld [vmem:[%s849 + $0x152] sm:$0xff]
        %v1071 = vld [vmem:[%s849 + $0x15a] sm:$0xff]
        %v1072 = vld [vmem:[%s849 + $0x16a] sm:$0xff]
        %v1073 = vld [vmem:[%s849 + $0x172] sm:$0xff]
        %s1074 = scalar_lea.vmem [#allocation2], 48
        %v1075 = vld [vmem:[%s1074] sm:$0xff]
        %v1076 = vld [vmem:[%s1074 + $0x8] sm:$0xff]
        %v1077 = vld [vmem:[%s1074 + $0x18] sm:$0xff]
        %v1078 = vld [vmem:[%s1074 + $0x20] sm:$0xff]
        %v1079 = vld [vmem:[%s1074 + $0x30] sm:$0xff]
        %v1080 = vld [vmem:[%s1074 + $0x38] sm:$0xff]
        %v1081 = vld [vmem:[%s1074 + $0x48] sm:$0xff]
        %v1082 = vld [vmem:[%s1074 + $0x50] sm:$0xff]
        %v1083 = vld [vmem:[%s1074 + $0x60] sm:$0xff]
        %v1084 = vld [vmem:[%s1074 + $0x68] sm:$0xff]
        %v1085 = vld [vmem:[%s1074 + $0x78] sm:$0xff]
        %v1086 = vld [vmem:[%s1074 + $0x80] sm:$0xff]
        %v1087 = vld [vmem:[%s1074 + $0x90] sm:$0xff]
        %v1088 = vld [vmem:[%s1074 + $0x98] sm:$0xff]
        %v1089 = vld [vmem:[%s1074 + $0xa8] sm:$0xff]
        %v1090 = vld [vmem:[%s1074 + $0xb0] sm:$0xff]
        %v1091 = vld [vmem:[%s1074 + $0xc0] sm:$0xff]
        %v1092 = vld [vmem:[%s1074 + $0xc8] sm:$0xff]
        %v1093 = vld [vmem:[%s1074 + $0xd8] sm:$0xff]
        %v1094 = vld [vmem:[%s1074 + $0xe0] sm:$0xff]
        %v1095 = vld [vmem:[%s1074 + $0xf0] sm:$0xff]
        %v1096 = vld [vmem:[%s1074 + $0xf8] sm:$0xff]
        %v1097 = vld [vmem:[%s1074 + $0x108] sm:$0xff]
        %v1098 = vld [vmem:[%s1074 + $0x110] sm:$0xff]
        %v1099 = vld [vmem:[%s1074 + $0x120] sm:$0xff]
        %v1100 = vld [vmem:[%s1074 + $0x128] sm:$0xff]
        %v1101 = vld [vmem:[%s1074 + $0x138] sm:$0xff]
        %v1102 = vld [vmem:[%s1074 + $0x140] sm:$0xff]
        %v1103 = vld [vmem:[%s1074 + $0x150] sm:$0xff]
        %v1104 = vld [vmem:[%s1074 + $0x158] sm:$0xff]
        %v1105 = vld [vmem:[%s1074 + $0x168] sm:$0xff]
        %v1106 = vld [vmem:[%s1074 + $0x170] sm:$0xff]
        %v1107 = vld [vmem:[%s1074 + $0x1] sm:$0xff]
        %v1108 = vld [vmem:[%s1074 + $0x9] sm:$0xff]
        %v1109 = vld [vmem:[%s1074 + $0x19] sm:$0xff]
        %v1110 = vld [vmem:[%s1074 + $0x21] sm:$0xff]
        %v1111 = vld [vmem:[%s1074 + $0x31] sm:$0xff]
        %v1112 = vld [vmem:[%s1074 + $0x39] sm:$0xff]
        %v1113 = vld [vmem:[%s1074 + $0x49] sm:$0xff]
        %v1114 = vld [vmem:[%s1074 + $0x51] sm:$0xff]
        %v1115 = vld [vmem:[%s1074 + $0x61] sm:$0xff]
        %v1116 = vld [vmem:[%s1074 + $0x69] sm:$0xff]
        %v1117 = vld [vmem:[%s1074 + $0x79] sm:$0xff]
        %v1118 = vld [vmem:[%s1074 + $0x81] sm:$0xff]
        %v1119 = vld [vmem:[%s1074 + $0x91] sm:$0xff]
        %v1120 = vld [vmem:[%s1074 + $0x99] sm:$0xff]
        %v1121 = vld [vmem:[%s1074 + $0xa9] sm:$0xff]
        %v1122 = vld [vmem:[%s1074 + $0xb1] sm:$0xff]
        %v1123 = vld [vmem:[%s1074 + $0xc1] sm:$0xff]
        %v1124 = vld [vmem:[%s1074 + $0xc9] sm:$0xff]
        %v1125 = vld [vmem:[%s1074 + $0xd9] sm:$0xff]
        %v1126 = vld [vmem:[%s1074 + $0xe1] sm:$0xff]
        %v1127 = vld [vmem:[%s1074 + $0xf1] sm:$0xff]
        %v1128 = vld [vmem:[%s1074 + $0xf9] sm:$0xff]
        %v1129 = vld [vmem:[%s1074 + $0x109] sm:$0xff]
        %v1130 = vld [vmem:[%s1074 + $0x111] sm:$0xff]
        %v1131 = vld [vmem:[%s1074 + $0x121] sm:$0xff]
        %v1132 = vld [vmem:[%s1074 + $0x129] sm:$0xff]
        %v1133 = vld [vmem:[%s1074 + $0x139] sm:$0xff]
        %v1134 = vld [vmem:[%s1074 + $0x141] sm:$0xff]
        %v1135 = vld [vmem:[%s1074 + $0x151] sm:$0xff]
        %v1136 = vld [vmem:[%s1074 + $0x159] sm:$0xff]
        %v1137 = vld [vmem:[%s1074 + $0x169] sm:$0xff]
        %v1138 = vld [vmem:[%s1074 + $0x171] sm:$0xff]
        %v1139 = vld [vmem:[%s1074 + $0x2] sm:$0xff]
        %v1140 = vld [vmem:[%s1074 + $0xa] sm:$0xff]
        %v1141 = vld [vmem:[%s1074 + $0x1a] sm:$0xff]
        %v1142 = vld [vmem:[%s1074 + $0x22] sm:$0xff]
        %v1143 = vld [vmem:[%s1074 + $0x32] sm:$0xff]
        %v1144 = vld [vmem:[%s1074 + $0x3a] sm:$0xff]
        %v1145 = vld [vmem:[%s1074 + $0x4a] sm:$0xff]
        %v1146 = vld [vmem:[%s1074 + $0x52] sm:$0xff]
        %v1147 = vld [vmem:[%s1074 + $0x62] sm:$0xff]
        %v1148 = vld [vmem:[%s1074 + $0x6a] sm:$0xff]
        %v1149 = vld [vmem:[%s1074 + $0x7a] sm:$0xff]
        %v1150 = vld [vmem:[%s1074 + $0x82] sm:$0xff]
        %v1151 = vld [vmem:[%s1074 + $0x92] sm:$0xff]
        %v1152 = vld [vmem:[%s1074 + $0x9a] sm:$0xff]
        %v1153 = vld [vmem:[%s1074 + $0xaa] sm:$0xff]
        %v1154 = vld [vmem:[%s1074 + $0xb2] sm:$0xff]
        %v1155 = vld [vmem:[%s1074 + $0xc2] sm:$0xff]
        %v1156 = vld [vmem:[%s1074 + $0xca] sm:$0xff]
        %v1157 = vld [vmem:[%s1074 + $0xda] sm:$0xff]
        %v1158 = vld [vmem:[%s1074 + $0xe2] sm:$0xff]
        %v1159 = vld [vmem:[%s1074 + $0xf2] sm:$0xff]
        %v1160 = vld [vmem:[%s1074 + $0xfa] sm:$0xff]
        %v1161 = vld [vmem:[%s1074 + $0x10a] sm:$0xff]
        %v1162 = vld [vmem:[%s1074 + $0x112] sm:$0xff]
        %v1163 = vld [vmem:[%s1074 + $0x122] sm:$0xff]
        %v1164 = vld [vmem:[%s1074 + $0x12a] sm:$0xff]
        %v1165 = vld [vmem:[%s1074 + $0x13a] sm:$0xff]
        %v1166 = vld [vmem:[%s1074 + $0x142] sm:$0xff]
        %v1167 = vld [vmem:[%s1074 + $0x152] sm:$0xff]
        %v1168 = vld [vmem:[%s1074 + $0x15a] sm:$0xff]
        %v1169 = vld [vmem:[%s1074 + $0x16a] sm:$0xff]
        %v1170 = vld [vmem:[%s1074 + $0x172] sm:$0xff]
        %1203 = vrot.lane.b32.xlu0 %v914, 8
        %v1204 = vpop.permute.xlu0 %1203
        %1205 = vrot.lane.b32.xlu0 %v915, 8
        %v1206 = vpop.permute.xlu0 %1205
        %1207 = vrot.lane.b32.xlu0 %v916, 8
        %v1208 = vpop.permute.xlu0 %1207
        %1209 = vrot.lane.b32.xlu0 %v917, 8
        %v1210 = vpop.permute.xlu0 %1209
        %1211 = vrot.lane.b32.xlu0 %v918, 8
        %v1212 = vpop.permute.xlu0 %1211
        %1213 = vrot.lane.b32.xlu0 %v919, 8
        %v1214 = vpop.permute.xlu0 %1213
        %1215 = vrot.lane.b32.xlu0 %v920, 8
        %v1216 = vpop.permute.xlu0 %1215
        %1217 = vrot.lane.b32.xlu0 %v921, 8
        %v1218 = vpop.permute.xlu0 %1217
        %1219 = vrot.lane.b32.xlu0 %v922, 8
        %v1220 = vpop.permute.xlu0 %1219
        %1221 = vrot.lane.b32.xlu0 %v923, 8
        %v1222 = vpop.permute.xlu0 %1221
        %1223 = vrot.lane.b32.xlu0 %v924, 8
        %v1224 = vpop.permute.xlu0 %1223
        %1225 = vrot.lane.b32.xlu0 %v925, 8
        %v1226 = vpop.permute.xlu0 %1225
        %1227 = vrot.lane.b32.xlu0 %v926, 8
        %v1228 = vpop.permute.xlu0 %1227
        %1229 = vrot.lane.b32.xlu0 %v927, 8
        %v1230 = vpop.permute.xlu0 %1229
        %1231 = vrot.lane.b32.xlu0 %v928, 8
        %v1232 = vpop.permute.xlu0 %1231
        %1233 = vrot.lane.b32.xlu0 %v929, 8
        %v1234 = vpop.permute.xlu0 %1233
        %1235 = vrot.lane.b32.xlu0 %v930, 8
        %v1236 = vpop.permute.xlu0 %1235
        %1237 = vrot.lane.b32.xlu0 %v931, 8
        %v1238 = vpop.permute.xlu0 %1237
        %1239 = vrot.lane.b32.xlu0 %v932, 8
        %v1240 = vpop.permute.xlu0 %1239
        %1241 = vrot.lane.b32.xlu0 %v933, 8
        %v1242 = vpop.permute.xlu0 %1241
        %1243 = vrot.lane.b32.xlu0 %v934, 8
        %v1244 = vpop.permute.xlu0 %1243
        %1245 = vrot.lane.b32.xlu0 %v935, 8
        %v1246 = vpop.permute.xlu0 %1245
        %1247 = vrot.lane.b32.xlu0 %v936, 8
        %v1248 = vpop.permute.xlu0 %1247
        %1249 = vrot.lane.b32.xlu0 %v937, 8
        %v1250 = vpop.permute.xlu0 %1249
        %1251 = vrot.lane.b32.xlu0 %v938, 8
        %v1252 = vpop.permute.xlu0 %1251
        %1253 = vrot.lane.b32.xlu0 %v939, 8
        %v1254 = vpop.permute.xlu0 %1253
        %1255 = vrot.lane.b32.xlu0 %v940, 8
        %v1256 = vpop.permute.xlu0 %1255
        %1257 = vrot.lane.b32.xlu0 %v941, 8
        %v1258 = vpop.permute.xlu0 %1257
        %1259 = vrot.lane.b32.xlu0 %v942, 8
        %v1260 = vpop.permute.xlu0 %1259
        %1261 = vrot.lane.b32.xlu0 %v943, 8
        %v1262 = vpop.permute.xlu0 %1261
        %1263 = vrot.lane.b32.xlu0 %v944, 8
        %v1264 = vpop.permute.xlu0 %1263
        %1265 = vrot.lane.b32.xlu0 %v945, 8
        %v1266 = vpop.permute.xlu0 %1265
        %1331 = vrot.lane.b32.xlu0 %v946, 16
        %v1332 = vpop.permute.xlu0 %1331
        %1333 = vrot.lane.b32.xlu0 %v947, 16
        %v1334 = vpop.permute.xlu0 %1333
        %1335 = vrot.lane.b32.xlu0 %v948, 16
        %v1336 = vpop.permute.xlu0 %1335
        %1337 = vrot.lane.b32.xlu0 %v949, 16
        %v1338 = vpop.permute.xlu0 %1337
        %1339 = vrot.lane.b32.xlu0 %v950, 16
        %v1340 = vpop.permute.xlu0 %1339
        %1341 = vrot.lane.b32.xlu0 %v951, 16
        %v1342 = vpop.permute.xlu0 %1341
        %1343 = vrot.lane.b32.xlu0 %v952, 16
        %v1344 = vpop.permute.xlu0 %1343
        %1345 = vrot.lane.b32.xlu0 %v953, 16
        %v1346 = vpop.permute.xlu0 %1345
        %1347 = vrot.lane.b32.xlu0 %v954, 16
        %v1348 = vpop.permute.xlu0 %1347
        %1349 = vrot.lane.b32.xlu0 %v955, 16
        %v1350 = vpop.permute.xlu0 %1349
        %1351 = vrot.lane.b32.xlu0 %v956, 16
        %v1352 = vpop.permute.xlu0 %1351
        %1353 = vrot.lane.b32.xlu0 %v957, 16
        %v1354 = vpop.permute.xlu0 %1353
        %1355 = vrot.lane.b32.xlu0 %v958, 16
        %v1356 = vpop.permute.xlu0 %1355
        %1357 = vrot.lane.b32.xlu0 %v959, 16
        %v1358 = vpop.permute.xlu0 %1357
        %1359 = vrot.lane.b32.xlu0 %v960, 16
        %v1360 = vpop.permute.xlu0 %1359
        %1361 = vrot.lane.b32.xlu0 %v961, 16
        %v1362 = vpop.permute.xlu0 %1361
        %1363 = vrot.lane.b32.xlu0 %v962, 16
        %v1364 = vpop.permute.xlu0 %1363
        %1365 = vrot.lane.b32.xlu0 %v963, 16
        %v1366 = vpop.permute.xlu0 %1365
        %1367 = vrot.lane.b32.xlu0 %v964, 16
        %v1368 = vpop.permute.xlu0 %1367
        %1369 = vrot.lane.b32.xlu0 %v965, 16
        %v1370 = vpop.permute.xlu0 %1369
        %1371 = vrot.lane.b32.xlu0 %v966, 16
        %v1372 = vpop.permute.xlu0 %1371
        %1373 = vrot.lane.b32.xlu0 %v967, 16
        %v1374 = vpop.permute.xlu0 %1373
        %1375 = vrot.lane.b32.xlu0 %v968, 16
        %v1376 = vpop.permute.xlu0 %1375
        %1377 = vrot.lane.b32.xlu0 %v969, 16
        %v1378 = vpop.permute.xlu0 %1377
        %1379 = vrot.lane.b32.xlu0 %v970, 16
        %v1380 = vpop.permute.xlu0 %1379
        %1381 = vrot.lane.b32.xlu0 %v971, 16
        %v1382 = vpop.permute.xlu0 %1381
        %1383 = vrot.lane.b32.xlu0 %v972, 16
        %v1384 = vpop.permute.xlu0 %1383
        %1385 = vrot.lane.b32.xlu0 %v973, 16
        %v1386 = vpop.permute.xlu0 %1385
        %1387 = vrot.lane.b32.xlu0 %v974, 16
        %v1388 = vpop.permute.xlu0 %1387
        %1389 = vrot.lane.b32.xlu0 %v975, 16
        %v1390 = vpop.permute.xlu0 %1389
        %1391 = vrot.lane.b32.xlu0 %v976, 16
        %v1392 = vpop.permute.xlu0 %1391
        %1393 = vrot.lane.b32.xlu0 %v977, 16
        %v1394 = vpop.permute.xlu0 %1393
        %1459 = vrot.lane.b32.xlu0 %v978, 24
        %v1460 = vpop.permute.xlu0 %1459
        %1461 = vrot.lane.b32.xlu0 %v979, 24
        %v1462 = vpop.permute.xlu0 %1461
        %1463 = vrot.lane.b32.xlu0 %v980, 24
        %v1464 = vpop.permute.xlu0 %1463
        %1465 = vrot.lane.b32.xlu0 %v981, 24
        %v1466 = vpop.permute.xlu0 %1465
        %1467 = vrot.lane.b32.xlu0 %v982, 24
        %v1468 = vpop.permute.xlu0 %1467
        %1469 = vrot.lane.b32.xlu0 %v983, 24
        %v1470 = vpop.permute.xlu0 %1469
        %1471 = vrot.lane.b32.xlu0 %v984, 24
        %v1472 = vpop.permute.xlu0 %1471
        %1473 = vrot.lane.b32.xlu0 %v985, 24
        %v1474 = vpop.permute.xlu0 %1473
        %1475 = vrot.lane.b32.xlu0 %v986, 24
        %v1476 = vpop.permute.xlu0 %1475
        %1477 = vrot.lane.b32.xlu0 %v987, 24
        %v1478 = vpop.permute.xlu0 %1477
        %1479 = vrot.lane.b32.xlu0 %v988, 24
        %v1480 = vpop.permute.xlu0 %1479
        %1481 = vrot.lane.b32.xlu0 %v989, 24
        %v1482 = vpop.permute.xlu0 %1481
        %1483 = vrot.lane.b32.xlu0 %v990, 24
        %v1484 = vpop.permute.xlu0 %1483
        %1485 = vrot.lane.b32.xlu0 %v991, 24
        %v1486 = vpop.permute.xlu0 %1485
        %1487 = vrot.lane.b32.xlu0 %v992, 24
        %v1488 = vpop.permute.xlu0 %1487
        %1489 = vrot.lane.b32.xlu0 %v993, 24
        %v1490 = vpop.permute.xlu0 %1489
        %1491 = vrot.lane.b32.xlu0 %v994, 24
        %v1492 = vpop.permute.xlu0 %1491
        %1493 = vrot.lane.b32.xlu0 %v995, 24
        %v1494 = vpop.permute.xlu0 %1493
        %1495 = vrot.lane.b32.xlu0 %v996, 24
        %v1496 = vpop.permute.xlu0 %1495
        %1497 = vrot.lane.b32.xlu0 %v997, 24
        %v1498 = vpop.permute.xlu0 %1497
        %1499 = vrot.lane.b32.xlu0 %v998, 24
        %v1500 = vpop.permute.xlu0 %1499
        %1501 = vrot.lane.b32.xlu0 %v999, 24
        %v1502 = vpop.permute.xlu0 %1501
        %1503 = vrot.lane.b32.xlu0 %v1000, 24
        %v1504 = vpop.permute.xlu0 %1503
        %1505 = vrot.lane.b32.xlu0 %v1001, 24
        %v1506 = vpop.permute.xlu0 %1505
        %1507 = vrot.lane.b32.xlu0 %v1002, 24
        %v1508 = vpop.permute.xlu0 %1507
        %1509 = vrot.lane.b32.xlu0 %v1003, 24
        %v1510 = vpop.permute.xlu0 %1509
        %1511 = vrot.lane.b32.xlu0 %v1004, 24
        %v1512 = vpop.permute.xlu0 %1511
        %1513 = vrot.lane.b32.xlu0 %v1005, 24
        %v1514 = vpop.permute.xlu0 %1513
        %1515 = vrot.lane.b32.xlu0 %v1006, 24
        %v1516 = vpop.permute.xlu0 %1515
        %1517 = vrot.lane.b32.xlu0 %v1007, 24
        %v1518 = vpop.permute.xlu0 %1517
        %1519 = vrot.lane.b32.xlu0 %v1008, 24
        %v1520 = vpop.permute.xlu0 %1519
        %1521 = vrot.lane.b32.xlu0 %v1009, 24
        %v1522 = vpop.permute.xlu0 %1521
        %1587 = vrot.lane.b32.xlu0 %v1010, 32
        %v1588 = vpop.permute.xlu0 %1587
        %1589 = vrot.lane.b32.xlu0 %v1011, 32
        %v1590 = vpop.permute.xlu0 %1589
        %1591 = vrot.lane.b32.xlu0 %v1012, 32
        %v1592 = vpop.permute.xlu0 %1591
        %1593 = vrot.lane.b32.xlu0 %v1013, 32
        %v1594 = vpop.permute.xlu0 %1593
        %1595 = vrot.lane.b32.xlu0 %v1014, 32
        %v1596 = vpop.permute.xlu0 %1595
        %1597 = vrot.lane.b32.xlu0 %v1015, 32
        %v1598 = vpop.permute.xlu0 %1597
        %1599 = vrot.lane.b32.xlu0 %v1016, 32
        %v1600 = vpop.permute.xlu0 %1599
        %1601 = vrot.lane.b32.xlu0 %v1017, 32
        %v1602 = vpop.permute.xlu0 %1601
        %1603 = vrot.lane.b32.xlu0 %v1018, 32
        %v1604 = vpop.permute.xlu0 %1603
        %1605 = vrot.lane.b32.xlu0 %v1019, 32
        %v1606 = vpop.permute.xlu0 %1605
        %1607 = vrot.lane.b32.xlu0 %v1020, 32
        %v1608 = vpop.permute.xlu0 %1607
        %1609 = vrot.lane.b32.xlu0 %v1021, 32
        %v1610 = vpop.permute.xlu0 %1609
        %1611 = vrot.lane.b32.xlu0 %v1022, 32
        %v1612 = vpop.permute.xlu0 %1611
        %1613 = vrot.lane.b32.xlu0 %v1023, 32
        %v1614 = vpop.permute.xlu0 %1613
        %1615 = vrot.lane.b32.xlu0 %v1024, 32
        %v1616 = vpop.permute.xlu0 %1615
        %1617 = vrot.lane.b32.xlu0 %v1025, 32
        %v1618 = vpop.permute.xlu0 %1617
        %1619 = vrot.lane.b32.xlu0 %v1026, 32
        %v1620 = vpop.permute.xlu0 %1619
        %1621 = vrot.lane.b32.xlu0 %v1027, 32
        %v1622 = vpop.permute.xlu0 %1621
        %1623 = vrot.lane.b32.xlu0 %v1028, 32
        %v1624 = vpop.permute.xlu0 %1623
        %1625 = vrot.lane.b32.xlu0 %v1029, 32
        %v1626 = vpop.permute.xlu0 %1625
        %1627 = vrot.lane.b32.xlu0 %v1030, 32
        %v1628 = vpop.permute.xlu0 %1627
        %1629 = vrot.lane.b32.xlu0 %v1031, 32
        %v1630 = vpop.permute.xlu0 %1629
        %1631 = vrot.lane.b32.xlu0 %v1032, 32
        %v1632 = vpop.permute.xlu0 %1631
        %1633 = vrot.lane.b32.xlu0 %v1033, 32
        %v1634 = vpop.permute.xlu0 %1633
        %1635 = vrot.lane.b32.xlu0 %v1034, 32
        %v1636 = vpop.permute.xlu0 %1635
        %1637 = vrot.lane.b32.xlu0 %v1035, 32
        %v1638 = vpop.permute.xlu0 %1637
        %1639 = vrot.lane.b32.xlu0 %v1036, 32
        %v1640 = vpop.permute.xlu0 %1639
        %1641 = vrot.lane.b32.xlu0 %v1037, 32
        %v1642 = vpop.permute.xlu0 %1641
        %1643 = vrot.lane.b32.xlu0 %v1038, 32
        %v1644 = vpop.permute.xlu0 %1643
        %1645 = vrot.lane.b32.xlu0 %v1039, 32
        %v1646 = vpop.permute.xlu0 %1645
        %1647 = vrot.lane.b32.xlu0 %v1040, 32
        %v1648 = vpop.permute.xlu0 %1647
        %1649 = vrot.lane.b32.xlu0 %v1041, 32
        %v1650 = vpop.permute.xlu0 %1649
        %1715 = vrot.lane.b32.xlu0 %v1042, 40
        %v1716 = vpop.permute.xlu0 %1715
        %1717 = vrot.lane.b32.xlu0 %v1043, 40
        %v1718 = vpop.permute.xlu0 %1717
        %1719 = vrot.lane.b32.xlu0 %v1044, 40
        %v1720 = vpop.permute.xlu0 %1719
        %1721 = vrot.lane.b32.xlu0 %v1045, 40
        %v1722 = vpop.permute.xlu0 %1721
        %1723 = vrot.lane.b32.xlu0 %v1046, 40
        %v1724 = vpop.permute.xlu0 %1723
        %1725 = vrot.lane.b32.xlu0 %v1047, 40
        %v1726 = vpop.permute.xlu0 %1725
        %1727 = vrot.lane.b32.xlu0 %v1048, 40
        %v1728 = vpop.permute.xlu0 %1727
        %1729 = vrot.lane.b32.xlu0 %v1049, 40
        %v1730 = vpop.permute.xlu0 %1729
        %1731 = vrot.lane.b32.xlu0 %v1050, 40
        %v1732 = vpop.permute.xlu0 %1731
        %1733 = vrot.lane.b32.xlu0 %v1051, 40
        %v1734 = vpop.permute.xlu0 %1733
        %1735 = vrot.lane.b32.xlu0 %v1052, 40
        %v1736 = vpop.permute.xlu0 %1735
        %1737 = vrot.lane.b32.xlu0 %v1053, 40
        %v1738 = vpop.permute.xlu0 %1737
        %1739 = vrot.lane.b32.xlu0 %v1054, 40
        %v1740 = vpop.permute.xlu0 %1739
        %1741 = vrot.lane.b32.xlu0 %v1055, 40
        %v1742 = vpop.permute.xlu0 %1741
        %1743 = vrot.lane.b32.xlu0 %v1056, 40
        %v1744 = vpop.permute.xlu0 %1743
        %1745 = vrot.lane.b32.xlu0 %v1057, 40
        %v1746 = vpop.permute.xlu0 %1745
        %1747 = vrot.lane.b32.xlu0 %v1058, 40
        %v1748 = vpop.permute.xlu0 %1747
        %1749 = vrot.lane.b32.xlu0 %v1059, 40
        %v1750 = vpop.permute.xlu0 %1749
        %1751 = vrot.lane.b32.xlu0 %v1060, 40
        %v1752 = vpop.permute.xlu0 %1751
        %1753 = vrot.lane.b32.xlu0 %v1061, 40
        %v1754 = vpop.permute.xlu0 %1753
        %1755 = vrot.lane.b32.xlu0 %v1062, 40
        %v1756 = vpop.permute.xlu0 %1755
        %1757 = vrot.lane.b32.xlu0 %v1063, 40
        %v1758 = vpop.permute.xlu0 %1757
        %1759 = vrot.lane.b32.xlu0 %v1064, 40
        %v1760 = vpop.permute.xlu0 %1759
        %1761 = vrot.lane.b32.xlu0 %v1065, 40
        %v1762 = vpop.permute.xlu0 %1761
        %1763 = vrot.lane.b32.xlu0 %v1066, 40
        %v1764 = vpop.permute.xlu0 %1763
        %1765 = vrot.lane.b32.xlu0 %v1067, 40
        %v1766 = vpop.permute.xlu0 %1765
        %1767 = vrot.lane.b32.xlu0 %v1068, 40
        %v1768 = vpop.permute.xlu0 %1767
        %1769 = vrot.lane.b32.xlu0 %v1069, 40
        %v1770 = vpop.permute.xlu0 %1769
        %1771 = vrot.lane.b32.xlu0 %v1070, 40
        %v1772 = vpop.permute.xlu0 %1771
        %1773 = vrot.lane.b32.xlu0 %v1071, 40
        %v1774 = vpop.permute.xlu0 %1773
        %1775 = vrot.lane.b32.xlu0 %v1072, 40
        %v1776 = vpop.permute.xlu0 %1775
        %1777 = vrot.lane.b32.xlu0 %v1073, 40
        %v1778 = vpop.permute.xlu0 %1777
        %1843 = vrot.lane.b32.xlu0 %v1075, 48
        %v1844 = vpop.permute.xlu0 %1843
        %1845 = vrot.lane.b32.xlu0 %v1076, 48
        %v1846 = vpop.permute.xlu0 %1845
        %1847 = vrot.lane.b32.xlu0 %v1077, 48
        %v1848 = vpop.permute.xlu0 %1847
        %1849 = vrot.lane.b32.xlu0 %v1078, 48
        %v1850 = vpop.permute.xlu0 %1849
        %1851 = vrot.lane.b32.xlu0 %v1079, 48
        %v1852 = vpop.permute.xlu0 %1851
        %1853 = vrot.lane.b32.xlu0 %v1080, 48
        %v1854 = vpop.permute.xlu0 %1853
        %1855 = vrot.lane.b32.xlu0 %v1081, 48
        %v1856 = vpop.permute.xlu0 %1855
        %1857 = vrot.lane.b32.xlu0 %v1082, 48
        %v1858 = vpop.permute.xlu0 %1857
        %1859 = vrot.lane.b32.xlu0 %v1083, 48
        %v1860 = vpop.permute.xlu0 %1859
        %1861 = vrot.lane.b32.xlu0 %v1084, 48
        %v1862 = vpop.permute.xlu0 %1861
        %1863 = vrot.lane.b32.xlu0 %v1085, 48
        %v1864 = vpop.permute.xlu0 %1863
        %1865 = vrot.lane.b32.xlu0 %v1086, 48
        %v1866 = vpop.permute.xlu0 %1865
        %1867 = vrot.lane.b32.xlu0 %v1087, 48
        %v1868 = vpop.permute.xlu0 %1867
        %1869 = vrot.lane.b32.xlu0 %v1088, 48
        %v1870 = vpop.permute.xlu0 %1869
        %1871 = vrot.lane.b32.xlu0 %v1089, 48
        %v1872 = vpop.permute.xlu0 %1871
        %1873 = vrot.lane.b32.xlu0 %v1090, 48
        %v1874 = vpop.permute.xlu0 %1873
        %1875 = vrot.lane.b32.xlu0 %v1091, 48
        %v1876 = vpop.permute.xlu0 %1875
        %1877 = vrot.lane.b32.xlu0 %v1092, 48
        %v1878 = vpop.permute.xlu0 %1877
        %1879 = vrot.lane.b32.xlu0 %v1093, 48
        %v1880 = vpop.permute.xlu0 %1879
        %1881 = vrot.lane.b32.xlu0 %v1094, 48
        %v1882 = vpop.permute.xlu0 %1881
        %1883 = vrot.lane.b32.xlu0 %v1095, 48
        %v1884 = vpop.permute.xlu0 %1883
        %1885 = vrot.lane.b32.xlu0 %v1096, 48
        %v1886 = vpop.permute.xlu0 %1885
        %1887 = vrot.lane.b32.xlu0 %v1097, 48
        %v1888 = vpop.permute.xlu0 %1887
        %1889 = vrot.lane.b32.xlu0 %v1098, 48
        %v1890 = vpop.permute.xlu0 %1889
        %1891 = vrot.lane.b32.xlu0 %v1099, 48
        %v1892 = vpop.permute.xlu0 %1891
        %1893 = vrot.lane.b32.xlu0 %v1100, 48
        %v1894 = vpop.permute.xlu0 %1893
        %1895 = vrot.lane.b32.xlu0 %v1101, 48
        %v1896 = vpop.permute.xlu0 %1895
        %1897 = vrot.lane.b32.xlu0 %v1102, 48
        %v1898 = vpop.permute.xlu0 %1897
        %1899 = vrot.lane.b32.xlu0 %v1103, 48
        %v1900 = vpop.permute.xlu0 %1899
        %1901 = vrot.lane.b32.xlu0 %v1104, 48
        %v1902 = vpop.permute.xlu0 %1901
        %1903 = vrot.lane.b32.xlu0 %v1105, 48
        %v1904 = vpop.permute.xlu0 %1903
        %1905 = vrot.lane.b32.xlu0 %v1106, 48
        %v1906 = vpop.permute.xlu0 %1905
        %1971 = vrot.lane.b32.xlu0 %v1107, 56
        %v1972 = vpop.permute.xlu0 %1971
        %1973 = vrot.lane.b32.xlu0 %v1108, 56
        %v1974 = vpop.permute.xlu0 %1973
        %1975 = vrot.lane.b32.xlu0 %v1109, 56
        %v1976 = vpop.permute.xlu0 %1975
        %1977 = vrot.lane.b32.xlu0 %v1110, 56
        %v1978 = vpop.permute.xlu0 %1977
        %1979 = vrot.lane.b32.xlu0 %v1111, 56
        %v1980 = vpop.permute.xlu0 %1979
        %1981 = vrot.lane.b32.xlu0 %v1112, 56
        %v1982 = vpop.permute.xlu0 %1981
        %1983 = vrot.lane.b32.xlu0 %v1113, 56
        %v1984 = vpop.permute.xlu0 %1983
        %1985 = vrot.lane.b32.xlu0 %v1114, 56
        %v1986 = vpop.permute.xlu0 %1985
        %1987 = vrot.lane.b32.xlu0 %v1115, 56
        %v1988 = vpop.permute.xlu0 %1987
        %1989 = vrot.lane.b32.xlu0 %v1116, 56
        %v1990 = vpop.permute.xlu0 %1989
        %1991 = vrot.lane.b32.xlu0 %v1117, 56
        %v1992 = vpop.permute.xlu0 %1991
        %1993 = vrot.lane.b32.xlu0 %v1118, 56
        %v1994 = vpop.permute.xlu0 %1993
        %1995 = vrot.lane.b32.xlu0 %v1119, 56
        %v1996 = vpop.permute.xlu0 %1995
        %1997 = vrot.lane.b32.xlu0 %v1120, 56
        %v1998 = vpop.permute.xlu0 %1997
        %1999 = vrot.lane.b32.xlu0 %v1121, 56
        %v2000 = vpop.permute.xlu0 %1999
        %2001 = vrot.lane.b32.xlu0 %v1122, 56
        %v2002 = vpop.permute.xlu0 %2001
        %2003 = vrot.lane.b32.xlu0 %v1123, 56
        %v2004 = vpop.permute.xlu0 %2003
        %2005 = vrot.lane.b32.xlu0 %v1124, 56
        %v2006 = vpop.permute.xlu0 %2005
        %2007 = vrot.lane.b32.xlu0 %v1125, 56
        %v2008 = vpop.permute.xlu0 %2007
        %2009 = vrot.lane.b32.xlu0 %v1126, 56
        %v2010 = vpop.permute.xlu0 %2009
        %2011 = vrot.lane.b32.xlu0 %v1127, 56
        %v2012 = vpop.permute.xlu0 %2011
        %2013 = vrot.lane.b32.xlu0 %v1128, 56
        %v2014 = vpop.permute.xlu0 %2013
        %2015 = vrot.lane.b32.xlu0 %v1129, 56
        %v2016 = vpop.permute.xlu0 %2015
        %2017 = vrot.lane.b32.xlu0 %v1130, 56
        %v2018 = vpop.permute.xlu0 %2017
        %2019 = vrot.lane.b32.xlu0 %v1131, 56
        %v2020 = vpop.permute.xlu0 %2019
        %2021 = vrot.lane.b32.xlu0 %v1132, 56
        %v2022 = vpop.permute.xlu0 %2021
        %2023 = vrot.lane.b32.xlu0 %v1133, 56
        %v2024 = vpop.permute.xlu0 %2023
        %2025 = vrot.lane.b32.xlu0 %v1134, 56
        %v2026 = vpop.permute.xlu0 %2025
        %2027 = vrot.lane.b32.xlu0 %v1135, 56
        %v2028 = vpop.permute.xlu0 %2027
        %2029 = vrot.lane.b32.xlu0 %v1136, 56
        %v2030 = vpop.permute.xlu0 %2029
        %2031 = vrot.lane.b32.xlu0 %v1137, 56
        %v2032 = vpop.permute.xlu0 %2031
        %2033 = vrot.lane.b32.xlu0 %v1138, 56
        %v2034 = vpop.permute.xlu0 %2033
        %2099 = vrot.lane.b32.xlu0 %v1139, 64
        %v2100 = vpop.permute.xlu0 %2099
        %2101 = vrot.lane.b32.xlu0 %v1140, 64
        %v2102 = vpop.permute.xlu0 %2101
        %2103 = vrot.lane.b32.xlu0 %v1141, 64
        %v2104 = vpop.permute.xlu0 %2103
        %2105 = vrot.lane.b32.xlu0 %v1142, 64
        %v2106 = vpop.permute.xlu0 %2105
        %2107 = vrot.lane.b32.xlu0 %v1143, 64
        %v2108 = vpop.permute.xlu0 %2107
        %2109 = vrot.lane.b32.xlu0 %v1144, 64
        %v2110 = vpop.permute.xlu0 %2109
        %2111 = vrot.lane.b32.xlu0 %v1145, 64
        %v2112 = vpop.permute.xlu0 %2111
        %2113 = vrot.lane.b32.xlu0 %v1146, 64
        %v2114 = vpop.permute.xlu0 %2113
        %2115 = vrot.lane.b32.xlu0 %v1147, 64
        %v2116 = vpop.permute.xlu0 %2115
        %2117 = vrot.lane.b32.xlu0 %v1148, 64
        %v2118 = vpop.permute.xlu0 %2117
        %2119 = vrot.lane.b32.xlu0 %v1149, 64
        %v2120 = vpop.permute.xlu0 %2119
        %2121 = vrot.lane.b32.xlu0 %v1150, 64
        %v2122 = vpop.permute.xlu0 %2121
        %2123 = vrot.lane.b32.xlu0 %v1151, 64
        %v2124 = vpop.permute.xlu0 %2123
        %2125 = vrot.lane.b32.xlu0 %v1152, 64
        %v2126 = vpop.permute.xlu0 %2125
        %2127 = vrot.lane.b32.xlu0 %v1153, 64
        %v2128 = vpop.permute.xlu0 %2127
        %2129 = vrot.lane.b32.xlu0 %v1154, 64
        %v2130 = vpop.permute.xlu0 %2129
        %2131 = vrot.lane.b32.xlu0 %v1155, 64
        %v2132 = vpop.permute.xlu0 %2131
        %2133 = vrot.lane.b32.xlu0 %v1156, 64
        %v2134 = vpop.permute.xlu0 %2133
        %2135 = vrot.lane.b32.xlu0 %v1157, 64
        %v2136 = vpop.permute.xlu0 %2135
        %2137 = vrot.lane.b32.xlu0 %v1158, 64
        %v2138 = vpop.permute.xlu0 %2137
        %2139 = vrot.lane.b32.xlu0 %v1159, 64
        %v2140 = vpop.permute.xlu0 %2139
        %2141 = vrot.lane.b32.xlu0 %v1160, 64
        %v2142 = vpop.permute.xlu0 %2141
        %2143 = vrot.lane.b32.xlu0 %v1161, 64
        %v2144 = vpop.permute.xlu0 %2143
        %2145 = vrot.lane.b32.xlu0 %v1162, 64
        %v2146 = vpop.permute.xlu0 %2145
        %2147 = vrot.lane.b32.xlu0 %v1163, 64
        %v2148 = vpop.permute.xlu0 %2147
        %2149 = vrot.lane.b32.xlu0 %v1164, 64
        %v2150 = vpop.permute.xlu0 %2149
        %2151 = vrot.lane.b32.xlu0 %v1165, 64
        %v2152 = vpop.permute.xlu0 %2151
        %2153 = vrot.lane.b32.xlu0 %v1166, 64
        %v2154 = vpop.permute.xlu0 %2153
        %2155 = vrot.lane.b32.xlu0 %v1167, 64
        %v2156 = vpop.permute.xlu0 %2155
        %2157 = vrot.lane.b32.xlu0 %v1168, 64
        %v2158 = vpop.permute.xlu0 %2157
        %2159 = vrot.lane.b32.xlu0 %v1169, 64
        %v2160 = vpop.permute.xlu0 %2159
        %2161 = vrot.lane.b32.xlu0 %v1170, 64
        %v2162 = vpop.permute.xlu0 %2161
        %v2195 = vsel %vm284, %v882, %v1204
        %v2196 = vsel %vm284, %v883, %v1206
        %v2197 = vsel %vm284, %v884, %v1208
        %v2198 = vsel %vm284, %v885, %v1210
        %v2199 = vsel %vm284, %v886, %v1212
        %v2200 = vsel %vm284, %v887, %v1214
        %v2201 = vsel %vm284, %v888, %v1216
        %v2202 = vsel %vm284, %v889, %v1218
        %v2203 = vsel %vm284, %v890, %v1220
        %v2204 = vsel %vm284, %v891, %v1222
        %v2205 = vsel %vm284, %v892, %v1224
        %v2206 = vsel %vm284, %v893, %v1226
        %v2207 = vsel %vm284, %v894, %v1228
        %v2208 = vsel %vm284, %v895, %v1230
        %v2209 = vsel %vm284, %v896, %v1232
        %v2210 = vsel %vm284, %v897, %v1234
        %v2211 = vsel %vm284, %v898, %v1236
        %v2212 = vsel %vm284, %v899, %v1238
        %v2213 = vsel %vm284, %v900, %v1240
        %v2214 = vsel %vm284, %v901, %v1242
        %v2215 = vsel %vm284, %v902, %v1244
        %v2216 = vsel %vm284, %v903, %v1246
        %v2217 = vsel %vm284, %v904, %v1248
        %v2218 = vsel %vm284, %v905, %v1250
        %v2219 = vsel %vm284, %v906, %v1252
        %v2220 = vsel %vm284, %v907, %v1254
        %v2221 = vsel %vm284, %v908, %v1256
        %v2222 = vsel %vm284, %v909, %v1258
        %v2223 = vsel %vm284, %v910, %v1260
        %v2224 = vsel %vm284, %v911, %v1262
        %v2225 = vsel %vm284, %v912, %v1264
        %v2226 = vsel %vm284, %v913, %v1266
        %vm2227 = vcmask 130048
        %v2228 = vsel %vm2227, %v2195, %v1332
        %v2229 = vsel %vm2227, %v2196, %v1334
        %v2230 = vsel %vm2227, %v2197, %v1336
        %v2231 = vsel %vm2227, %v2198, %v1338
        %v2232 = vsel %vm2227, %v2199, %v1340
        %v2233 = vsel %vm2227, %v2200, %v1342
        %v2234 = vsel %vm2227, %v2201, %v1344
        %v2235 = vsel %vm2227, %v2202, %v1346
        %v2236 = vsel %vm2227, %v2203, %v1348
        %v2237 = vsel %vm2227, %v2204, %v1350
        %v2238 = vsel %vm2227, %v2205, %v1352
        %v2239 = vsel %vm2227, %v2206, %v1354
        %v2240 = vsel %vm2227, %v2207, %v1356
        %v2241 = vsel %vm2227, %v2208, %v1358
        %v2242 = vsel %vm2227, %v2209, %v1360
        %v2243 = vsel %vm2227, %v2210, %v1362
        %v2244 = vsel %vm2227, %v2211, %v1364
        %v2245 = vsel %vm2227, %v2212, %v1366
        %v2246 = vsel %vm2227, %v2213, %v1368
        %v2247 = vsel %vm2227, %v2214, %v1370
        %v2248 = vsel %vm2227, %v2215, %v1372
        %v2249 = vsel %vm2227, %v2216, %v1374
        %v2250 = vsel %vm2227, %v2217, %v1376
        %v2251 = vsel %vm2227, %v2218, %v1378
        %v2252 = vsel %vm2227, %v2219, %v1380
        %v2253 = vsel %vm2227, %v2220, %v1382
        %v2254 = vsel %vm2227, %v2221, %v1384
        %v2255 = vsel %vm2227, %v2222, %v1386
        %v2256 = vsel %vm2227, %v2223, %v1388
        %v2257 = vsel %vm2227, %v2224, %v1390
        %v2258 = vsel %vm2227, %v2225, %v1392
        %v2259 = vsel %vm2227, %v2226, %v1394
        %vm2260 = vcmask 195584
        %v2261 = vsel %vm2260, %v2228, %v1460
        %v2262 = vsel %vm2260, %v2229, %v1462
        %v2263 = vsel %vm2260, %v2230, %v1464
        %v2264 = vsel %vm2260, %v2231, %v1466
        %v2265 = vsel %vm2260, %v2232, %v1468
        %v2266 = vsel %vm2260, %v2233, %v1470
        %v2267 = vsel %vm2260, %v2234, %v1472
        %v2268 = vsel %vm2260, %v2235, %v1474
        %v2269 = vsel %vm2260, %v2236, %v1476
        %v2270 = vsel %vm2260, %v2237, %v1478
        %v2271 = vsel %vm2260, %v2238, %v1480
        %v2272 = vsel %vm2260, %v2239, %v1482
        %v2273 = vsel %vm2260, %v2240, %v1484
        %v2274 = vsel %vm2260, %v2241, %v1486
        %v2275 = vsel %vm2260, %v2242, %v1488
        %v2276 = vsel %vm2260, %v2243, %v1490
        %v2277 = vsel %vm2260, %v2244, %v1492
        %v2278 = vsel %vm2260, %v2245, %v1494
        %v2279 = vsel %vm2260, %v2246, %v1496
        %v2280 = vsel %vm2260, %v2247, %v1498
        %v2281 = vsel %vm2260, %v2248, %v1500
        %v2282 = vsel %vm2260, %v2249, %v1502
        %v2283 = vsel %vm2260, %v2250, %v1504
        %v2284 = vsel %vm2260, %v2251, %v1506
        %v2285 = vsel %vm2260, %v2252, %v1508
        %v2286 = vsel %vm2260, %v2253, %v1510
        %v2287 = vsel %vm2260, %v2254, %v1512
        %v2288 = vsel %vm2260, %v2255, %v1514
        %v2289 = vsel %vm2260, %v2256, %v1516
        %v2290 = vsel %vm2260, %v2257, %v1518
        %v2291 = vsel %vm2260, %v2258, %v1520
        %v2292 = vsel %vm2260, %v2259, %v1522
        %vm2293 = vcmask 261120
        %v2294 = vsel %vm2293, %v2261, %v1588
        %v2295 = vsel %vm2293, %v2262, %v1590
        %v2296 = vsel %vm2293, %v2263, %v1592
        %v2297 = vsel %vm2293, %v2264, %v1594
        %v2298 = vsel %vm2293, %v2265, %v1596
        %v2299 = vsel %vm2293, %v2266, %v1598
        %v2300 = vsel %vm2293, %v2267, %v1600
        %v2301 = vsel %vm2293, %v2268, %v1602
        %v2302 = vsel %vm2293, %v2269, %v1604
        %v2303 = vsel %vm2293, %v2270, %v1606
        %v2304 = vsel %vm2293, %v2271, %v1608
        %v2305 = vsel %vm2293, %v2272, %v1610
        %v2306 = vsel %vm2293, %v2273, %v1612
        %v2307 = vsel %vm2293, %v2274, %v1614
        %v2308 = vsel %vm2293, %v2275, %v1616
        %v2309 = vsel %vm2293, %v2276, %v1618
        %v2310 = vsel %vm2293, %v2277, %v1620
        %v2311 = vsel %vm2293, %v2278, %v1622
        %v2312 = vsel %vm2293, %v2279, %v1624
        %v2313 = vsel %vm2293, %v2280, %v1626
        %v2314 = vsel %vm2293, %v2281, %v1628
        %v2315 = vsel %vm2293, %v2282, %v1630
        %v2316 = vsel %vm2293, %v2283, %v1632
        %v2317 = vsel %vm2293, %v2284, %v1634
        %v2318 = vsel %vm2293, %v2285, %v1636
        %v2319 = vsel %vm2293, %v2286, %v1638
        %v2320 = vsel %vm2293, %v2287, %v1640
        %v2321 = vsel %vm2293, %v2288, %v1642
        %v2322 = vsel %vm2293, %v2289, %v1644
        %v2323 = vsel %vm2293, %v2290, %v1646
        %v2324 = vsel %vm2293, %v2291, %v1648
        %v2325 = vsel %vm2293, %v2292, %v1650
        %vm2326 = vcmask 326656
        %v2327 = vsel %vm2326, %v2294, %v1716
        %v2328 = vsel %vm2326, %v2295, %v1718
        %v2329 = vsel %vm2326, %v2296, %v1720
        %v2330 = vsel %vm2326, %v2297, %v1722
        %v2331 = vsel %vm2326, %v2298, %v1724
        %v2332 = vsel %vm2326, %v2299, %v1726
        %v2333 = vsel %vm2326, %v2300, %v1728
        %v2334 = vsel %vm2326, %v2301, %v1730
        %v2335 = vsel %vm2326, %v2302, %v1732
        %v2336 = vsel %vm2326, %v2303, %v1734
        %v2337 = vsel %vm2326, %v2304, %v1736
        %v2338 = vsel %vm2326, %v2305, %v1738
        %v2339 = vsel %vm2326, %v2306, %v1740
        %v2340 = vsel %vm2326, %v2307, %v1742
        %v2341 = vsel %vm2326, %v2308, %v1744
        %v2342 = vsel %vm2326, %v2309, %v1746
        %v2343 = vsel %vm2326, %v2310, %v1748
        %v2344 = vsel %vm2326, %v2311, %v1750
        %v2345 = vsel %vm2326, %v2312, %v1752
        %v2346 = vsel %vm2326, %v2313, %v1754
        %v2347 = vsel %vm2326, %v2314, %v1756
        %v2348 = vsel %vm2326, %v2315, %v1758
        %v2349 = vsel %vm2326, %v2316, %v1760
        %v2350 = vsel %vm2326, %v2317, %v1762
        %v2351 = vsel %vm2326, %v2318, %v1764
        %v2352 = vsel %vm2326, %v2319, %v1766
        %v2353 = vsel %vm2326, %v2320, %v1768
        %v2354 = vsel %vm2326, %v2321, %v1770
        %v2355 = vsel %vm2326, %v2322, %v1772
        %v2356 = vsel %vm2326, %v2323, %v1774
        %v2357 = vsel %vm2326, %v2324, %v1776
        %v2358 = vsel %vm2326, %v2325, %v1778
        %vm2359 = vcmask 392192
        %v2360 = vsel %vm2359, %v2327, %v1844
        %v2361 = vsel %vm2359, %v2328, %v1846
        %v2362 = vsel %vm2359, %v2329, %v1848
        %v2363 = vsel %vm2359, %v2330, %v1850
        %v2364 = vsel %vm2359, %v2331, %v1852
        %v2365 = vsel %vm2359, %v2332, %v1854
        %v2366 = vsel %vm2359, %v2333, %v1856
        %v2367 = vsel %vm2359, %v2334, %v1858
        %v2368 = vsel %vm2359, %v2335, %v1860
        %v2369 = vsel %vm2359, %v2336, %v1862
        %v2370 = vsel %vm2359, %v2337, %v1864
        %v2371 = vsel %vm2359, %v2338, %v1866
        %v2372 = vsel %vm2359, %v2339, %v1868
        %v2373 = vsel %vm2359, %v2340, %v1870
        %v2374 = vsel %vm2359, %v2341, %v1872
        %v2375 = vsel %vm2359, %v2342, %v1874
        %v2376 = vsel %vm2359, %v2343, %v1876
        %v2377 = vsel %vm2359, %v2344, %v1878
        %v2378 = vsel %vm2359, %v2345, %v1880
        %v2379 = vsel %vm2359, %v2346, %v1882
        %v2380 = vsel %vm2359, %v2347, %v1884
        %v2381 = vsel %vm2359, %v2348, %v1886
        %v2382 = vsel %vm2359, %v2349, %v1888
        %v2383 = vsel %vm2359, %v2350, %v1890
        %v2384 = vsel %vm2359, %v2351, %v1892
        %v2385 = vsel %vm2359, %v2352, %v1894
        %v2386 = vsel %vm2359, %v2353, %v1896
        %v2387 = vsel %vm2359, %v2354, %v1898
        %v2388 = vsel %vm2359, %v2355, %v1900
        %v2389 = vsel %vm2359, %v2356, %v1902
        %v2390 = vsel %vm2359, %v2357, %v1904
        %v2391 = vsel %vm2359, %v2358, %v1906
        %vm2392 = vcmask 457728
        %v2393 = vsel %vm2392, %v2360, %v1972
        %v2394 = vsel %vm2392, %v2361, %v1974
        %v2395 = vsel %vm2392, %v2362, %v1976
        %v2396 = vsel %vm2392, %v2363, %v1978
        %v2397 = vsel %vm2392, %v2364, %v1980
        %v2398 = vsel %vm2392, %v2365, %v1982
        %v2399 = vsel %vm2392, %v2366, %v1984
        %v2400 = vsel %vm2392, %v2367, %v1986
        %v2401 = vsel %vm2392, %v2368, %v1988
        %v2402 = vsel %vm2392, %v2369, %v1990
        %v2403 = vsel %vm2392, %v2370, %v1992
        %v2404 = vsel %vm2392, %v2371, %v1994
        %v2405 = vsel %vm2392, %v2372, %v1996
        %v2406 = vsel %vm2392, %v2373, %v1998
        %v2407 = vsel %vm2392, %v2374, %v2000
        %v2408 = vsel %vm2392, %v2375, %v2002
        %v2409 = vsel %vm2392, %v2376, %v2004
        %v2410 = vsel %vm2392, %v2377, %v2006
        %v2411 = vsel %vm2392, %v2378, %v2008
        %v2412 = vsel %vm2392, %v2379, %v2010
        %v2413 = vsel %vm2392, %v2380, %v2012
        %v2414 = vsel %vm2392, %v2381, %v2014
        %v2415 = vsel %vm2392, %v2382, %v2016
        %v2416 = vsel %vm2392, %v2383, %v2018
        %v2417 = vsel %vm2392, %v2384, %v2020
        %v2418 = vsel %vm2392, %v2385, %v2022
        %v2419 = vsel %vm2392, %v2386, %v2024
        %v2420 = vsel %vm2392, %v2387, %v2026
        %v2421 = vsel %vm2392, %v2388, %v2028
        %v2422 = vsel %vm2392, %v2389, %v2030
        %v2423 = vsel %vm2392, %v2390, %v2032
        %v2424 = vsel %vm2392, %v2391, %v2034
        %vm2425 = vcmask 523264
        %v2426 = vsel %vm2425, %v2393, %v2100
        %v2427 = vsel %vm2425, %v2394, %v2102
        %v2428 = vsel %vm2425, %v2395, %v2104
        %v2429 = vsel %vm2425, %v2396, %v2106
        %v2430 = vsel %vm2425, %v2397, %v2108
        %v2431 = vsel %vm2425, %v2398, %v2110
        %v2432 = vsel %vm2425, %v2399, %v2112
        %v2433 = vsel %vm2425, %v2400, %v2114
        %v2434 = vsel %vm2425, %v2401, %v2116
        %v2435 = vsel %vm2425, %v2402, %v2118
        %v2436 = vsel %vm2425, %v2403, %v2120
        %v2437 = vsel %vm2425, %v2404, %v2122
        %v2438 = vsel %vm2425, %v2405, %v2124
        %v2439 = vsel %vm2425, %v2406, %v2126
        %v2440 = vsel %vm2425, %v2407, %v2128
        %v2441 = vsel %vm2425, %v2408, %v2130
        %v2442 = vsel %vm2425, %v2409, %v2132
        %v2443 = vsel %vm2425, %v2410, %v2134
        %v2444 = vsel %vm2425, %v2411, %v2136
        %v2445 = vsel %vm2425, %v2412, %v2138
        %v2446 = vsel %vm2425, %v2413, %v2140
        %v2447 = vsel %vm2425, %v2414, %v2142
        %v2448 = vsel %vm2425, %v2415, %v2144
        %v2449 = vsel %vm2425, %v2416, %v2146
        %v2450 = vsel %vm2425, %v2417, %v2148
        %v2451 = vsel %vm2425, %v2418, %v2150
        %v2452 = vsel %vm2425, %v2419, %v2152
        %v2453 = vsel %vm2425, %v2420, %v2154
        %v2454 = vsel %vm2425, %v2421, %v2156
        %v2455 = vsel %vm2425, %v2422, %v2158
        %v2456 = vsel %vm2425, %v2423, %v2160
        %v2457 = vsel %vm2425, %v2424, %v2162
        %v2458 = vpack.c.bf16 %v2427, %v2426
        %v2459 = vpack.c.bf16 %v2429, %v2428
        %v2460 = vpack.c.bf16 %v2431, %v2430
        %v2461 = vpack.c.bf16 %v2433, %v2432
        %v2462 = vpack.c.bf16 %v2435, %v2434
        %v2463 = vpack.c.bf16 %v2437, %v2436
        %v2464 = vpack.c.bf16 %v2439, %v2438
        %v2465 = vpack.c.bf16 %v2441, %v2440
        %v2466 = vpack.c.bf16 %v2443, %v2442
        %v2467 = vpack.c.bf16 %v2445, %v2444
        %v2468 = vpack.c.bf16 %v2447, %v2446
        %v2469 = vpack.c.bf16 %v2449, %v2448
        %v2470 = vpack.c.bf16 %v2451, %v2450
        %v2471 = vpack.c.bf16 %v2453, %v2452
        %v2472 = vpack.c.bf16 %v2455, %v2454
        %v2473 = vpack.c.bf16 %v2457, %v2456
        %v2474 = vld [vmem:[%s3] sm:$0xf]
        %v2475 = vld [vmem:[%s3 + $0x4] sm:$0xf]
        %v2476 = vld [vmem:[%s3 + $0x8] sm:$0xf]
        %v2477 = vld [vmem:[%s3 + $0xc] sm:$0xf]
        %v2478 = vld [vmem:[%s3 + $0x10] sm:$0xf]
        %v2479 = vld [vmem:[%s3 + $0x14] sm:$0xf]
        %v2480 = vld [vmem:[%s3 + $0x18] sm:$0xf]
        %v2481 = vld [vmem:[%s3 + $0x1c] sm:$0xf]
        %v2482 = vld [vmem:[%s3 + $0x20] sm:$0xf]
        %v2492 = vunpack.c.l.b16 %v2474
        %v2493 = vunpack.c.l.b16 %v2475
        %v2494 = vunpack.c.l.b16 %v2476
        %v2495 = vunpack.c.l.b16 %v2477
        %v2496 = vunpack.c.l.b16 %v2478
        %v2497 = vunpack.c.l.b16 %v2479
        %v2498 = vunpack.c.l.b16 %v2480
        %v2499 = vunpack.c.l.b16 %v2481
        %v2500 = vunpack.c.l.b16 %v2482
        %v2501 = vpack.c.b16 %v2493, %v2492
        %v2502 = vpack.c.b16 %v2495, %v2494
        %v2503 = vpack.c.b16 %v2497, %v2496
        %v2504 = vpack.c.b16 %v2499, %v2498
        %v2505 = vpack.c.b16 %v2500, %v2500
        %vm2510 = vcmask 588800
        %v2512 = vsel %vm2510, %v2458, 0
        %v2515 = vsel %vm2510, %v2459, 0
        %v2518 = vsel %vm2510, %v2460, 0
        %v2521 = vsel %vm2510, %v2461, 0
        %v2524 = vsel %vm2510, %v2462, 0
        %v2527 = vsel %vm2510, %v2463, 0
        %v2530 = vsel %vm2510, %v2464, 0
        %v2533 = vsel %vm2510, %v2465, 0
        %v2536 = vsel %vm2510, %v2466, 0
        %v2539 = vsel %vm2510, %v2467, 0
        %v2542 = vsel %vm2510, %v2468, 0
        %v2545 = vsel %vm2510, %v2469, 0
        %v2548 = vsel %vm2510, %v2470, 0
        %v2551 = vsel %vm2510, %v2471, 0
        %v2554 = vsel %vm2510, %v2472, 0
        %v2557 = vsel %vm2510, %v2473, 0
        %vm2559 = vcmask 1043456
        %v2561 = vsel %vm2559, %v2505, 0
        %2563 = vmatprep.subr.bf16.mxu0 0
        %2564 = vmatpush1.bf16.msra.mxu0 %v2501
        %2565 = vmatprep.subr.bf16.mxu0 0
        %2566 = vmatpush1.bf16.msra.mxu0 %v2502
        %2567 = vmatprep.subr.bf16.mxu0 0
        %2568 = vmatpush1.bf16.msra.mxu0 %v2503
        %2569 = vmatprep.subr.bf16.mxu0 0
        %2570 = vmatpush1.bf16.msra.mxu0 %v2504
        %2571 = vmatprep.subr.bf16.mxu0 0
        %2572 = vmatpush1.bf16.msra.mxu0 %v2561
        %2573 = vmatprep.subr.bf16.mxu0 0
        %2574 = vmatpush1.bf16.msra.mxu0 0
        %2575 = vmatprep.subr.bf16.mxu0 0
        %2576 = vmatpush1.bf16.msra.mxu0 0
        %2577 = vmatprep.subr.bf16.mxu0 0
        %2578 = vmatpush1.bf16.msra.mxu0 0
        %2579 = vmatprep.subr.bf16.mxu0 0
        %2580 = vmatpush1.bf16.msra.mxu0 0
        %2581 = vmatprep.subr.bf16.mxu0 0
        %2582 = vmatpush1.bf16.msra.mxu0 0
        %2583 = vmatprep.subr.bf16.mxu0 0
        %2584 = vmatpush1.bf16.msra.mxu0 0
        %2585 = vmatprep.subr.bf16.mxu0 0
        %2586 = vmatpush1.bf16.msra.mxu0 0
        %2587 = vmatprep.subr.bf16.mxu0 0
        %2588 = vmatpush1.bf16.msra.mxu0 0
        %2589 = vmatprep.subr.bf16.mxu0 0
        %2590 = vmatpush1.bf16.msra.mxu0 0
        %2591 = vmatprep.subr.bf16.mxu0 0
        %2592 = vmatpush1.bf16.msra.mxu0 0
        %2593 = vmatprep.subr.bf16.mxu0 0
        %2594 = vmatpush1.bf16.msra.mxu0 0
        %2595 = vmatprep.mubr.bf16.mxu0 0
        %2596 = vmatmul.mubr.bf16.gmra.mrb[0].mxu0 %v2512
        %v2597 = vpop.f32.mrb[0].mxu0
        %v2598 = vadd.f32 0.0, %v2597
        %v2599 = vpop.f32.mrb[0].mxu0
        %v2600 = vpop.f32.mrb[0].mxu0
        %v2601 = vadd.f32 0.0, %v2600
        %v2602 = vpop.f32.mrb[0].mxu0
        %2603 = vmatprep.mubr.bf16.mxu0 0
        %2604 = vmatmul.mubr.bf16.gmra.mrb[0].mxu0 %v2515
        %v2605 = vpop.f32.mrb[0].mxu0
        %v2606 = vadd.f32 0.0, %v2605
        %v2607 = vpop.f32.mrb[0].mxu0
        %v2608 = vpop.f32.mrb[0].mxu0
        %v2609 = vadd.f32 0.0, %v2608
        %v2610 = vpop.f32.mrb[0].mxu0
        %2611 = vmatprep.mubr.bf16.mxu0 0
        %2612 = vmatmul.mubr.bf16.gmra.mrb[0].mxu0 %v2518
        %v2613 = vpop.f32.mrb[0].mxu0
        %v2614 = vadd.f32 0.0, %v2613
        %v2615 = vpop.f32.mrb[0].mxu0
        %v2616 = vpop.f32.mrb[0].mxu0
        %v2617 = vadd.f32 0.0, %v2616
        %v2618 = vpop.f32.mrb[0].mxu0
        %2619 = vmatprep.mubr.bf16.mxu0 0
        %2620 = vmatmul.mubr.bf16.gmra.mrb[0].mxu0 %v2521
        %v2621 = vpop.f32.mrb[0].mxu0
        %v2622 = vadd.f32 0.0, %v2621
        %v2623 = vpop.f32.mrb[0].mxu0
        %v2624 = vpop.f32.mrb[0].mxu0
        %v2625 = vadd.f32 0.0, %v2624
        %v2626 = vpop.f32.mrb[0].mxu0
        %2627 = vmatprep.mubr.bf16.mxu0 0
        %2628 = vmatmul.mubr.bf16.gmra.mrb[0].mxu0 %v2524
        %v2629 = vpop.f32.mrb[0].mxu0
        %v2630 = vadd.f32 0.0, %v2629
        %v2631 = vpop.f32.mrb[0].mxu0
        %v2632 = vpop.f32.mrb[0].mxu0
        %v2633 = vadd.f32 0.0, %v2632
        %v2634 = vpop.f32.mrb[0].mxu0
        %2635 = vmatprep.mubr.bf16.mxu0 0
        %2636 = vmatmul.mubr.bf16.gmra.mrb[0].mxu0 %v2527
        %v2637 = vpop.f32.mrb[0].mxu0
        %v2638 = vadd.f32 0.0, %v2637
        %v2639 = vpop.f32.mrb[0].mxu0
        %v2640 = vpop.f32.mrb[0].mxu0
        %v2641 = vadd.f32 0.0, %v2640
        %v2642 = vpop.f32.mrb[0].mxu0
        %2643 = vmatprep.mubr.bf16.mxu0 0
        %2644 = vmatmul.mubr.bf16.gmra.mrb[0].mxu0 %v2530
        %v2645 = vpop.f32.mrb[0].mxu0
        %v2646 = vadd.f32 0.0, %v2645
        %v2647 = vpop.f32.mrb[0].mxu0
        %v2648 = vpop.f32.mrb[0].mxu0
        %v2649 = vadd.f32 0.0, %v2648
        %v2650 = vpop.f32.mrb[0].mxu0
        %2651 = vmatprep.mubr.bf16.mxu0 0
        %2652 = vmatmul.mubr.bf16.gmra.mrb[0].mxu0 %v2533
        %v2653 = vpop.f32.mrb[0].mxu0
        %v2654 = vadd.f32 0.0, %v2653
        %v2655 = vpop.f32.mrb[0].mxu0
        %v2656 = vpop.f32.mrb[0].mxu0
        %v2657 = vadd.f32 0.0, %v2656
        %v2658 = vpop.f32.mrb[0].mxu0
        %2659 = vmatprep.mubr.bf16.mxu0 0
        %2660 = vmatmul.mubr.bf16.gmra.mrb[0].mxu0 %v2536
        %v2661 = vpop.f32.mrb[0].mxu0
        %v2662 = vadd.f32 0.0, %v2661
        %v2663 = vpop.f32.mrb[0].mxu0
        %v2664 = vpop.f32.mrb[0].mxu0
        %v2665 = vadd.f32 0.0, %v2664
        %v2666 = vpop.f32.mrb[0].mxu0
        %2667 = vmatprep.mubr.bf16.mxu0 0
        %2668 = vmatmul.mubr.bf16.gmra.mrb[0].mxu0 %v2539
        %v2669 = vpop.f32.mrb[0].mxu0
        %v2670 = vadd.f32 0.0, %v2669
        %v2671 = vpop.f32.mrb[0].mxu0
        %v2672 = vpop.f32.mrb[0].mxu0
        %v2673 = vadd.f32 0.0, %v2672
        %v2674 = vpop.f32.mrb[0].mxu0
        %2675 = vmatprep.mubr.bf16.mxu0 0
        %2676 = vmatmul.mubr.bf16.gmra.mrb[0].mxu0 %v2542
        %v2677 = vpop.f32.mrb[0].mxu0
        %v2678 = vadd.f32 0.0, %v2677
        %v2679 = vpop.f32.mrb[0].mxu0
        %v2680 = vpop.f32.mrb[0].mxu0
        %v2681 = vadd.f32 0.0, %v2680
        %v2682 = vpop.f32.mrb[0].mxu0
        %2683 = vmatprep.mubr.bf16.mxu0 0
        %2684 = vmatmul.mubr.bf16.gmra.mrb[0].mxu0 %v2545
        %v2685 = vpop.f32.mrb[0].mxu0
        %v2686 = vadd.f32 0.0, %v2685
        %v2687 = vpop.f32.mrb[0].mxu0
        %v2688 = vpop.f32.mrb[0].mxu0
        %v2689 = vadd.f32 0.0, %v2688
        %v2690 = vpop.f32.mrb[0].mxu0
        %2691 = vmatprep.mubr.bf16.mxu0 0
        %2692 = vmatmul.mubr.bf16.gmra.mrb[0].mxu0 %v2548
        %v2693 = vpop.f32.mrb[0].mxu0
        %v2694 = vadd.f32 0.0, %v2693
        %v2695 = vpop.f32.mrb[0].mxu0
        %v2696 = vpop.f32.mrb[0].mxu0
        %v2697 = vadd.f32 0.0, %v2696
        %v2698 = vpop.f32.mrb[0].mxu0
        %2699 = vmatprep.mubr.bf16.mxu0 0
        %2700 = vmatmul.mubr.bf16.gmra.mrb[0].mxu0 %v2551
        %v2701 = vpop.f32.mrb[0].mxu0
        %v2702 = vadd.f32 0.0, %v2701
        %v2703 = vpop.f32.mrb[0].mxu0
        %v2704 = vpop.f32.mrb[0].mxu0
        %v2705 = vadd.f32 0.0, %v2704
        %v2706 = vpop.f32.mrb[0].mxu0
        %2707 = vmatprep.mubr.bf16.mxu0 0
        %2708 = vmatmul.mubr.bf16.gmra.mrb[0].mxu0 %v2554
        %v2709 = vpop.f32.mrb[0].mxu0
        %v2710 = vadd.f32 0.0, %v2709
        %v2711 = vpop.f32.mrb[0].mxu0
        %v2712 = vpop.f32.mrb[0].mxu0
        %v2713 = vadd.f32 0.0, %v2712
        %v2714 = vpop.f32.mrb[0].mxu0
        %2715 = vmatprep.mubr.bf16.mxu0 0
        %2716 = vmatmul.mubr.bf16.gmra.mrb[0].mxu0 %v2557
        %v2717 = vpop.f32.mrb[0].mxu0
        %v2718 = vadd.f32 0.0, %v2717
        %v2719 = vpop.f32.mrb[0].mxu0
        %v2720 = vpop.f32.mrb[0].mxu0
        %v2721 = vadd.f32 0.0, %v2720
        %v2722 = vpop.f32.mrb[0].mxu0
        %2723 = vdwg.mxu0
        %v2724 = vmax.f32 %v2598, 0.0
        %v2725 = vmax.f32 %v2601, 0.0
        %v2726 = vmax.f32 %v2606, 0.0
        %v2727 = vmax.f32 %v2609, 0.0
        %v2728 = vmax.f32 %v2614, 0.0
        %v2729 = vmax.f32 %v2617, 0.0
        %v2730 = vmax.f32 %v2622, 0.0
        %v2731 = vmax.f32 %v2625, 0.0
        %v2732 = vmax.f32 %v2630, 0.0
        %v2733 = vmax.f32 %v2633, 0.0
        %v2734 = vmax.f32 %v2638, 0.0
        %v2735 = vmax.f32 %v2641, 0.0
        %v2736 = vmax.f32 %v2646, 0.0
        %v2737 = vmax.f32 %v2649, 0.0
        %v2738 = vmax.f32 %v2654, 0.0
        %v2739 = vmax.f32 %v2657, 0.0
        %v2740 = vmax.f32 %v2662, 0.0
        %v2741 = vmax.f32 %v2665, 0.0
        %v2742 = vmax.f32 %v2670, 0.0
        %v2743 = vmax.f32 %v2673, 0.0
        %v2744 = vmax.f32 %v2678, 0.0
        %v2745 = vmax.f32 %v2681, 0.0
        %v2746 = vmax.f32 %v2686, 0.0
        %v2747 = vmax.f32 %v2689, 0.0
        %v2748 = vmax.f32 %v2694, 0.0
        %v2749 = vmax.f32 %v2697, 0.0
        %v2750 = vmax.f32 %v2702, 0.0
        %v2751 = vmax.f32 %v2705, 0.0
        %v2752 = vmax.f32 %v2710, 0.0
        %v2753 = vmax.f32 %v2713, 0.0
        %v2754 = vmax.f32 %v2718, 0.0
        %v2755 = vmax.f32 %v2721, 0.0
        %2756 = vst.msk [vmem:[%s849 + $0x1] sm:$0xff] %vm284, %v2724
        %2757 = vst.msk [vmem:[%s849 + $0x9] sm:$0xff] %vm284, %v2725
        %2758 = vst.msk [vmem:[%s849 + $0x19] sm:$0xff] %vm284, %v2726
        %2759 = vst.msk [vmem:[%s849 + $0x21] sm:$0xff] %vm284, %v2727
        %2760 = vst.msk [vmem:[%s849 + $0x31] sm:$0xff] %vm284, %v2728
        %2761 = vst.msk [vmem:[%s849 + $0x39] sm:$0xff] %vm284, %v2729
        %2762 = vst.msk [vmem:[%s849 + $0x49] sm:$0xff] %vm284, %v2730
        %2763 = vst.msk [vmem:[%s849 + $0x51] sm:$0xff] %vm284, %v2731
        %2764 = vst.msk [vmem:[%s849 + $0x61] sm:$0xff] %vm284, %v2732
        %2765 = vst.msk [vmem:[%s849 + $0x69] sm:$0xff] %vm284, %v2733
        %2766 = vst.msk [vmem:[%s849 + $0x79] sm:$0xff] %vm284, %v2734
        %2767 = vst.msk [vmem:[%s849 + $0x81] sm:$0xff] %vm284, %v2735
        %2768 = vst.msk [vmem:[%s849 + $0x91] sm:$0xff] %vm284, %v2736
        %2769 = vst.msk [vmem:[%s849 + $0x99] sm:$0xff] %vm284, %v2737
        %2770 = vst.msk [vmem:[%s849 + $0xa9] sm:$0xff] %vm284, %v2738
        %2771 = vst.msk [vmem:[%s849 + $0xb1] sm:$0xff] %vm284, %v2739
        %2772 = vst.msk [vmem:[%s849 + $0xc1] sm:$0xff] %vm284, %v2740
        %2773 = vst.msk [vmem:[%s849 + $0xc9] sm:$0xff] %vm284, %v2741
        %2774 = vst.msk [vmem:[%s849 + $0xd9] sm:$0xff] %vm284, %v2742
        %2775 = vst.msk [vmem:[%s849 + $0xe1] sm:$0xff] %vm284, %v2743
        %2776 = vst.msk [vmem:[%s849 + $0xf1] sm:$0xff] %vm284, %v2744
        %2777 = vst.msk [vmem:[%s849 + $0xf9] sm:$0xff] %vm284, %v2745
        %2778 = vst.msk [vmem:[%s849 + $0x109] sm:$0xff] %vm284, %v2746
        %2779 = vst.msk [vmem:[%s849 + $0x111] sm:$0xff] %vm284, %v2747
        %2780 = vst.msk [vmem:[%s849 + $0x121] sm:$0xff] %vm284, %v2748
        %2781 = vst.msk [vmem:[%s849 + $0x129] sm:$0xff] %vm284, %v2749
        %2782 = vst.msk [vmem:[%s849 + $0x139] sm:$0xff] %vm284, %v2750
        %2783 = vst.msk [vmem:[%s849 + $0x141] sm:$0xff] %vm284, %v2751
        %2784 = vst.msk [vmem:[%s849 + $0x151] sm:$0xff] %vm284, %v2752
        %2785 = vst.msk [vmem:[%s849 + $0x159] sm:$0xff] %vm284, %v2753
        %2786 = vst.msk [vmem:[%s849 + $0x169] sm:$0xff] %vm284, %v2754
        %2787 = vst.msk [vmem:[%s849 + $0x171] sm:$0xff] %vm284, %v2755
        %v2788 = vld [vmem:[#allocation2] sm:$0xff]
        %v2789 = vld [vmem:[#allocation2 + $0x8] sm:$0xff]
        %v2790 = vld [vmem:[#allocation2 + $0x18] sm:$0xff]
        %v2791 = vld [vmem:[#allocation2 + $0x20] sm:$0xff]
        %v2792 = vld [vmem:[#allocation2 + $0x30] sm:$0xff]
        %v2793 = vld [vmem:[#allocation2 + $0x38] sm:$0xff]
        %v2794 = vld [vmem:[#allocation2 + $0x48] sm:$0xff]
        %v2795 = vld [vmem:[#allocation2 + $0x50] sm:$0xff]
        %v2796 = vld [vmem:[#allocation2 + $0x60] sm:$0xff]
        %v2797 = vld [vmem:[#allocation2 + $0x68] sm:$0xff]
        %v2798 = vld [vmem:[#allocation2 + $0x78] sm:$0xff]
        %v2799 = vld [vmem:[#allocation2 + $0x80] sm:$0xff]
        %v2800 = vld [vmem:[#allocation2 + $0x90] sm:$0xff]
        %v2801 = vld [vmem:[#allocation2 + $0x98] sm:$0xff]
        %v2802 = vld [vmem:[#allocation2 + $0xa8] sm:$0xff]
        %v2803 = vld [vmem:[#allocation2 + $0xb0] sm:$0xff]
        %v2804 = vld [vmem:[#allocation2 + $0xc0] sm:$0xff]
        %v2805 = vld [vmem:[#allocation2 + $0xc8] sm:$0xff]
        %v2806 = vld [vmem:[#allocation2 + $0xd8] sm:$0xff]
        %v2807 = vld [vmem:[#allocation2 + $0xe0] sm:$0xff]
        %v2808 = vld [vmem:[#allocation2 + $0xf0] sm:$0xff]
        %v2809 = vld [vmem:[#allocation2 + $0xf8] sm:$0xff]
        %v2810 = vld [vmem:[#allocation2 + $0x108] sm:$0xff]
        %v2811 = vld [vmem:[#allocation2 + $0x110] sm:$0xff]
        %v2812 = vld [vmem:[#allocation2 + $0x120] sm:$0xff]
        %v2813 = vld [vmem:[#allocation2 + $0x128] sm:$0xff]
        %v2814 = vld [vmem:[#allocation2 + $0x138] sm:$0xff]
        %v2815 = vld [vmem:[#allocation2 + $0x140] sm:$0xff]
        %v2816 = vld [vmem:[#allocation2 + $0x150] sm:$0xff]
        %v2817 = vld [vmem:[#allocation2 + $0x158] sm:$0xff]
        %v2818 = vld [vmem:[#allocation2 + $0x168] sm:$0xff]
        %v2819 = vld [vmem:[#allocation2 + $0x170] sm:$0xff]
        %v2820 = vld [vmem:[#allocation2 + $0x1] sm:$0xff]
        %v2821 = vld [vmem:[#allocation2 + $0x9] sm:$0xff]
        %v2822 = vld [vmem:[#allocation2 + $0x19] sm:$0xff]
        %v2823 = vld [vmem:[#allocation2 + $0x21] sm:$0xff]
        %v2824 = vld [vmem:[#allocation2 + $0x31] sm:$0xff]
        %v2825 = vld [vmem:[#allocation2 + $0x39] sm:$0xff]
        %v2826 = vld [vmem:[#allocation2 + $0x49] sm:$0xff]
        %v2827 = vld [vmem:[#allocation2 + $0x51] sm:$0xff]
        %v2828 = vld [vmem:[#allocation2 + $0x61] sm:$0xff]
        %v2829 = vld [vmem:[#allocation2 + $0x69] sm:$0xff]
        %v2830 = vld [vmem:[#allocation2 + $0x79] sm:$0xff]
        %v2831 = vld [vmem:[#allocation2 + $0x81] sm:$0xff]
        %v2832 = vld [vmem:[#allocation2 + $0x91] sm:$0xff]
        %v2833 = vld [vmem:[#allocation2 + $0x99] sm:$0xff]
        %v2834 = vld [vmem:[#allocation2 + $0xa9] sm:$0xff]
        %v2835 = vld [vmem:[#allocation2 + $0xb1] sm:$0xff]
        %v2836 = vld [vmem:[#allocation2 + $0xc1] sm:$0xff]
        %v2837 = vld [vmem:[#allocation2 + $0xc9] sm:$0xff]
        %v2838 = vld [vmem:[#allocation2 + $0xd9] sm:$0xff]
        %v2839 = vld [vmem:[#allocation2 + $0xe1] sm:$0xff]
        %v2840 = vld [vmem:[#allocation2 + $0xf1] sm:$0xff]
        %v2841 = vld [vmem:[#allocation2 + $0xf9] sm:$0xff]
        %v2842 = vld [vmem:[#allocation2 + $0x109] sm:$0xff]
        %v2843 = vld [vmem:[#allocation2 + $0x111] sm:$0xff]
        %v2844 = vld [vmem:[#allocation2 + $0x121] sm:$0xff]
        %v2845 = vld [vmem:[#allocation2 + $0x129] sm:$0xff]
        %v2846 = vld [vmem:[#allocation2 + $0x139] sm:$0xff]
        %v2847 = vld [vmem:[#allocation2 + $0x141] sm:$0xff]
        %v2848 = vld [vmem:[#allocation2 + $0x151] sm:$0xff]
        %v2849 = vld [vmem:[#allocation2 + $0x159] sm:$0xff]
        %v2850 = vld [vmem:[#allocation2 + $0x169] sm:$0xff]
        %v2851 = vld [vmem:[#allocation2 + $0x171] sm:$0xff]
        %v2852 = vld [vmem:[#allocation2 + $0x2] sm:$0xff]
        %v2853 = vld [vmem:[#allocation2 + $0xa] sm:$0xff]
        %v2854 = vld [vmem:[#allocation2 + $0x1a] sm:$0xff]
        %v2855 = vld [vmem:[#allocation2 + $0x22] sm:$0xff]
        %v2856 = vld [vmem:[#allocation2 + $0x32] sm:$0xff]
        %v2857 = vld [vmem:[#allocation2 + $0x3a] sm:$0xff]
        %v2858 = vld [vmem:[#allocation2 + $0x4a] sm:$0xff]
        %v2859 = vld [vmem:[#allocation2 + $0x52] sm:$0xff]
        %v2860 = vld [vmem:[#allocation2 + $0x62] sm:$0xff]
        %v2861 = vld [vmem:[#allocation2 + $0x6a] sm:$0xff]
        %v2862 = vld [vmem:[#allocation2 + $0x7a] sm:$0xff]
        %v2863 = vld [vmem:[#allocation2 + $0x82] sm:$0xff]
        %v2864 = vld [vmem:[#allocation2 + $0x92] sm:$0xff]
        %v2865 = vld [vmem:[#allocation2 + $0x9a] sm:$0xff]
        %v2866 = vld [vmem:[#allocation2 + $0xaa] sm:$0xff]
        %v2867 = vld [vmem:[#allocation2 + $0xb2] sm:$0xff]
        %v2868 = vld [vmem:[#allocation2 + $0xc2] sm:$0xff]
        %v2869 = vld [vmem:[#allocation2 + $0xca] sm:$0xff]
        %v2870 = vld [vmem:[#allocation2 + $0xda] sm:$0xff]
        %v2871 = vld [vmem:[#allocation2 + $0xe2] sm:$0xff]
        %v2872 = vld [vmem:[#allocation2 + $0xf2] sm:$0xff]
        %v2873 = vld [vmem:[#allocation2 + $0xfa] sm:$0xff]
        %v2874 = vld [vmem:[#allocation2 + $0x10a] sm:$0xff]
        %v2875 = vld [vmem:[#allocation2 + $0x112] sm:$0xff]
        %v2876 = vld [vmem:[#allocation2 + $0x122] sm:$0xff]
        %v2877 = vld [vmem:[#allocation2 + $0x12a] sm:$0xff]
        %v2878 = vld [vmem:[#allocation2 + $0x13a] sm:$0xff]
        %v2879 = vld [vmem:[#allocation2 + $0x142] sm:$0xff]
        %v2880 = vld [vmem:[#allocation2 + $0x152] sm:$0xff]
        %v2881 = vld [vmem:[#allocation2 + $0x15a] sm:$0xff]
        %v2882 = vld [vmem:[#allocation2 + $0x16a] sm:$0xff]
        %v2883 = vld [vmem:[#allocation2 + $0x172] sm:$0xff]
        %v2884 = vld [vmem:[%s849] sm:$0xff]
        %v2885 = vld [vmem:[%s849 + $0x8] sm:$0xff]
        %v2886 = vld [vmem:[%s849 + $0x18] sm:$0xff]
        %v2887 = vld [vmem:[%s849 + $0x20] sm:$0xff]
        %v2888 = vld [vmem:[%s849 + $0x30] sm:$0xff]
        %v2889 = vld [vmem:[%s849 + $0x38] sm:$0xff]
        %v2890 = vld [vmem:[%s849 + $0x48] sm:$0xff]
        %v2891 = vld [vmem:[%s849 + $0x50] sm:$0xff]
        %v2892 = vld [vmem:[%s849 + $0x60] sm:$0xff]
        %v2893 = vld [vmem:[%s849 + $0x68] sm:$0xff]
        %v2894 = vld [vmem:[%s849 + $0x78] sm:$0xff]
        %v2895 = vld [vmem:[%s849 + $0x80] sm:$0xff]
        %v2896 = vld [vmem:[%s849 + $0x90] sm:$0xff]
        %v2897 = vld [vmem:[%s849 + $0x98] sm:$0xff]
        %v2898 = vld [vmem:[%s849 + $0xa8] sm:$0xff]
        %v2899 = vld [vmem:[%s849 + $0xb0] sm:$0xff]
        %v2900 = vld [vmem:[%s849 + $0xc0] sm:$0xff]
        %v2901 = vld [vmem:[%s849 + $0xc8] sm:$0xff]
        %v2902 = vld [vmem:[%s849 + $0xd8] sm:$0xff]
        %v2903 = vld [vmem:[%s849 + $0xe0] sm:$0xff]
        %v2904 = vld [vmem:[%s849 + $0xf0] sm:$0xff]
        %v2905 = vld [vmem:[%s849 + $0xf8] sm:$0xff]
        %v2906 = vld [vmem:[%s849 + $0x108] sm:$0xff]
        %v2907 = vld [vmem:[%s849 + $0x110] sm:$0xff]
        %v2908 = vld [vmem:[%s849 + $0x120] sm:$0xff]
        %v2909 = vld [vmem:[%s849 + $0x128] sm:$0xff]
        %v2910 = vld [vmem:[%s849 + $0x138] sm:$0xff]
        %v2911 = vld [vmem:[%s849 + $0x140] sm:$0xff]
        %v2912 = vld [vmem:[%s849 + $0x150] sm:$0xff]
        %v2913 = vld [vmem:[%s849 + $0x158] sm:$0xff]
        %v2914 = vld [vmem:[%s849 + $0x168] sm:$0xff]
        %v2915 = vld [vmem:[%s849 + $0x170] sm:$0xff]
        %v2916 = vld [vmem:[%s849 + $0x1] sm:$0xff]
        %v2917 = vld [vmem:[%s849 + $0x9] sm:$0xff]
        %v2918 = vld [vmem:[%s849 + $0x19] sm:$0xff]
        %v2919 = vld [vmem:[%s849 + $0x21] sm:$0xff]
        %v2920 = vld [vmem:[%s849 + $0x31] sm:$0xff]
        %v2921 = vld [vmem:[%s849 + $0x39] sm:$0xff]
        %v2922 = vld [vmem:[%s849 + $0x49] sm:$0xff]
        %v2923 = vld [vmem:[%s849 + $0x51] sm:$0xff]
        %v2924 = vld [vmem:[%s849 + $0x61] sm:$0xff]
        %v2925 = vld [vmem:[%s849 + $0x69] sm:$0xff]
        %v2926 = vld [vmem:[%s849 + $0x79] sm:$0xff]
        %v2927 = vld [vmem:[%s849 + $0x81] sm:$0xff]
        %v2928 = vld [vmem:[%s849 + $0x91] sm:$0xff]
        %v2929 = vld [vmem:[%s849 + $0x99] sm:$0xff]
        %v2930 = vld [vmem:[%s849 + $0xa9] sm:$0xff]
        %v2931 = vld [vmem:[%s849 + $0xb1] sm:$0xff]
        %v2932 = vld [vmem:[%s849 + $0xc1] sm:$0xff]
        %v2933 = vld [vmem:[%s849 + $0xc9] sm:$0xff]
        %v2934 = vld [vmem:[%s849 + $0xd9] sm:$0xff]
        %v2935 = vld [vmem:[%s849 + $0xe1] sm:$0xff]
        %v2936 = vld [vmem:[%s849 + $0xf1] sm:$0xff]
        %v2937 = vld [vmem:[%s849 + $0xf9] sm:$0xff]
        %v2938 = vld [vmem:[%s849 + $0x109] sm:$0xff]
        %v2939 = vld [vmem:[%s849 + $0x111] sm:$0xff]
        %v2940 = vld [vmem:[%s849 + $0x121] sm:$0xff]
        %v2941 = vld [vmem:[%s849 + $0x129] sm:$0xff]
        %v2942 = vld [vmem:[%s849 + $0x139] sm:$0xff]
        %v2943 = vld [vmem:[%s849 + $0x141] sm:$0xff]
        %v2944 = vld [vmem:[%s849 + $0x151] sm:$0xff]
        %v2945 = vld [vmem:[%s849 + $0x159] sm:$0xff]
        %v2946 = vld [vmem:[%s849 + $0x169] sm:$0xff]
        %v2947 = vld [vmem:[%s849 + $0x171] sm:$0xff]
        %v2948 = vld [vmem:[%s849 + $0x2] sm:$0xff]
        %v2949 = vld [vmem:[%s849 + $0xa] sm:$0xff]
        %v2950 = vld [vmem:[%s849 + $0x1a] sm:$0xff]
        %v2951 = vld [vmem:[%s849 + $0x22] sm:$0xff]
        %v2952 = vld [vmem:[%s849 + $0x32] sm:$0xff]
        %v2953 = vld [vmem:[%s849 + $0x3a] sm:$0xff]
        %v2954 = vld [vmem:[%s849 + $0x4a] sm:$0xff]
        %v2955 = vld [vmem:[%s849 + $0x52] sm:$0xff]
        %v2956 = vld [vmem:[%s849 + $0x62] sm:$0xff]
        %v2957 = vld [vmem:[%s849 + $0x6a] sm:$0xff]
        %v2958 = vld [vmem:[%s849 + $0x7a] sm:$0xff]
        %v2959 = vld [vmem:[%s849 + $0x82] sm:$0xff]
        %v2960 = vld [vmem:[%s849 + $0x92] sm:$0xff]
        %v2961 = vld [vmem:[%s849 + $0x9a] sm:$0xff]
        %v2962 = vld [vmem:[%s849 + $0xaa] sm:$0xff]
        %v2963 = vld [vmem:[%s849 + $0xb2] sm:$0xff]
        %v2964 = vld [vmem:[%s849 + $0xc2] sm:$0xff]
        %v2965 = vld [vmem:[%s849 + $0xca] sm:$0xff]
        %v2966 = vld [vmem:[%s849 + $0xda] sm:$0xff]
        %v2967 = vld [vmem:[%s849 + $0xe2] sm:$0xff]
        %v2968 = vld [vmem:[%s849 + $0xf2] sm:$0xff]
        %v2969 = vld [vmem:[%s849 + $0xfa] sm:$0xff]
        %v2970 = vld [vmem:[%s849 + $0x10a] sm:$0xff]
        %v2971 = vld [vmem:[%s849 + $0x112] sm:$0xff]
        %v2972 = vld [vmem:[%s849 + $0x122] sm:$0xff]
        %v2973 = vld [vmem:[%s849 + $0x12a] sm:$0xff]
        %v2974 = vld [vmem:[%s849 + $0x13a] sm:$0xff]
        %v2975 = vld [vmem:[%s849 + $0x142] sm:$0xff]
        %v2976 = vld [vmem:[%s849 + $0x152] sm:$0xff]
        %v2977 = vld [vmem:[%s849 + $0x15a] sm:$0xff]
        %v2978 = vld [vmem:[%s849 + $0x16a] sm:$0xff]
        %v2979 = vld [vmem:[%s849 + $0x172] sm:$0xff]
        %v2980 = vld [vmem:[%s1074] sm:$0xff]
        %v2981 = vld [vmem:[%s1074 + $0x8] sm:$0xff]
        %v2982 = vld [vmem:[%s1074 + $0x18] sm:$0xff]
        %v2983 = vld [vmem:[%s1074 + $0x20] sm:$0xff]
        %v2984 = vld [vmem:[%s1074 + $0x30] sm:$0xff]
        %v2985 = vld [vmem:[%s1074 + $0x38] sm:$0xff]
        %v2986 = vld [vmem:[%s1074 + $0x48] sm:$0xff]
        %v2987 = vld [vmem:[%s1074 + $0x50] sm:$0xff]
        %v2988 = vld [vmem:[%s1074 + $0x60] sm:$0xff]
        %v2989 = vld [vmem:[%s1074 + $0x68] sm:$0xff]
        %v2990 = vld [vmem:[%s1074 + $0x78] sm:$0xff]
        %v2991 = vld [vmem:[%s1074 + $0x80] sm:$0xff]
        %v2992 = vld [vmem:[%s1074 + $0x90] sm:$0xff]
        %v2993 = vld [vmem:[%s1074 + $0x98] sm:$0xff]
        %v2994 = vld [vmem:[%s1074 + $0xa8] sm:$0xff]
        %v2995 = vld [vmem:[%s1074 + $0xb0] sm:$0xff]
        %v2996 = vld [vmem:[%s1074 + $0xc0] sm:$0xff]
        %v2997 = vld [vmem:[%s1074 + $0xc8] sm:$0xff]
        %v2998 = vld [vmem:[%s1074 + $0xd8] sm:$0xff]
        %v2999 = vld [vmem:[%s1074 + $0xe0] sm:$0xff]
        %v3000 = vld [vmem:[%s1074 + $0xf0] sm:$0xff]
        %v3001 = vld [vmem:[%s1074 + $0xf8] sm:$0xff]
        %v3002 = vld [vmem:[%s1074 + $0x108] sm:$0xff]
        %v3003 = vld [vmem:[%s1074 + $0x110] sm:$0xff]
        %v3004 = vld [vmem:[%s1074 + $0x120] sm:$0xff]
        %v3005 = vld [vmem:[%s1074 + $0x128] sm:$0xff]
        %v3006 = vld [vmem:[%s1074 + $0x138] sm:$0xff]
        %v3007 = vld [vmem:[%s1074 + $0x140] sm:$0xff]
        %v3008 = vld [vmem:[%s1074 + $0x150] sm:$0xff]
        %v3009 = vld [vmem:[%s1074 + $0x158] sm:$0xff]
        %v3010 = vld [vmem:[%s1074 + $0x168] sm:$0xff]
        %v3011 = vld [vmem:[%s1074 + $0x170] sm:$0xff]
        %v3012 = vld [vmem:[%s1074 + $0x1] sm:$0xff]
        %v3013 = vld [vmem:[%s1074 + $0x9] sm:$0xff]
        %v3014 = vld [vmem:[%s1074 + $0x19] sm:$0xff]
        %v3015 = vld [vmem:[%s1074 + $0x21] sm:$0xff]
        %v3016 = vld [vmem:[%s1074 + $0x31] sm:$0xff]
        %v3017 = vld [vmem:[%s1074 + $0x39] sm:$0xff]
        %v3018 = vld [vmem:[%s1074 + $0x49] sm:$0xff]
        %v3019 = vld [vmem:[%s1074 + $0x51] sm:$0xff]
        %v3020 = vld [vmem:[%s1074 + $0x61] sm:$0xff]
        %v3021 = vld [vmem:[%s1074 + $0x69] sm:$0xff]
        %v3022 = vld [vmem:[%s1074 + $0x79] sm:$0xff]
        %v3023 = vld [vmem:[%s1074 + $0x81] sm:$0xff]
        %v3024 = vld [vmem:[%s1074 + $0x91] sm:$0xff]
        %v3025 = vld [vmem:[%s1074 + $0x99] sm:$0xff]
        %v3026 = vld [vmem:[%s1074 + $0xa9] sm:$0xff]
        %v3027 = vld [vmem:[%s1074 + $0xb1] sm:$0xff]
        %v3028 = vld [vmem:[%s1074 + $0xc1] sm:$0xff]
        %v3029 = vld [vmem:[%s1074 + $0xc9] sm:$0xff]
        %v3030 = vld [vmem:[%s1074 + $0xd9] sm:$0xff]
        %v3031 = vld [vmem:[%s1074 + $0xe1] sm:$0xff]
        %v3032 = vld [vmem:[%s1074 + $0xf1] sm:$0xff]
        %v3033 = vld [vmem:[%s1074 + $0xf9] sm:$0xff]
        %v3034 = vld [vmem:[%s1074 + $0x109] sm:$0xff]
        %v3035 = vld [vmem:[%s1074 + $0x111] sm:$0xff]
        %v3036 = vld [vmem:[%s1074 + $0x121] sm:$0xff]
        %v3037 = vld [vmem:[%s1074 + $0x129] sm:$0xff]
        %v3038 = vld [vmem:[%s1074 + $0x139] sm:$0xff]
        %v3039 = vld [vmem:[%s1074 + $0x141] sm:$0xff]
        %v3040 = vld [vmem:[%s1074 + $0x151] sm:$0xff]
        %v3041 = vld [vmem:[%s1074 + $0x159] sm:$0xff]
        %v3042 = vld [vmem:[%s1074 + $0x169] sm:$0xff]
        %v3043 = vld [vmem:[%s1074 + $0x171] sm:$0xff]
        %v3044 = vld [vmem:[%s1074 + $0x2] sm:$0xff]
        %v3045 = vld [vmem:[%s1074 + $0xa] sm:$0xff]
        %v3046 = vld [vmem:[%s1074 + $0x1a] sm:$0xff]
        %v3047 = vld [vmem:[%s1074 + $0x22] sm:$0xff]
        %v3048 = vld [vmem:[%s1074 + $0x32] sm:$0xff]
        %v3049 = vld [vmem:[%s1074 + $0x3a] sm:$0xff]
        %v3050 = vld [vmem:[%s1074 + $0x4a] sm:$0xff]
        %v3051 = vld [vmem:[%s1074 + $0x52] sm:$0xff]
        %v3052 = vld [vmem:[%s1074 + $0x62] sm:$0xff]
        %v3053 = vld [vmem:[%s1074 + $0x6a] sm:$0xff]
        %v3054 = vld [vmem:[%s1074 + $0x7a] sm:$0xff]
        %v3055 = vld [vmem:[%s1074 + $0x82] sm:$0xff]
        %v3056 = vld [vmem:[%s1074 + $0x92] sm:$0xff]
        %v3057 = vld [vmem:[%s1074 + $0x9a] sm:$0xff]
        %v3058 = vld [vmem:[%s1074 + $0xaa] sm:$0xff]
        %v3059 = vld [vmem:[%s1074 + $0xb2] sm:$0xff]
        %v3060 = vld [vmem:[%s1074 + $0xc2] sm:$0xff]
        %v3061 = vld [vmem:[%s1074 + $0xca] sm:$0xff]
        %v3062 = vld [vmem:[%s1074 + $0xda] sm:$0xff]
        %v3063 = vld [vmem:[%s1074 + $0xe2] sm:$0xff]
        %v3064 = vld [vmem:[%s1074 + $0xf2] sm:$0xff]
        %v3065 = vld [vmem:[%s1074 + $0xfa] sm:$0xff]
        %v3066 = vld [vmem:[%s1074 + $0x10a] sm:$0xff]
        %v3067 = vld [vmem:[%s1074 + $0x112] sm:$0xff]
        %v3068 = vld [vmem:[%s1074 + $0x122] sm:$0xff]
        %v3069 = vld [vmem:[%s1074 + $0x12a] sm:$0xff]
        %v3070 = vld [vmem:[%s1074 + $0x13a] sm:$0xff]
        %v3071 = vld [vmem:[%s1074 + $0x142] sm:$0xff]
        %v3072 = vld [vmem:[%s1074 + $0x152] sm:$0xff]
        %v3073 = vld [vmem:[%s1074 + $0x15a] sm:$0xff]
        %v3074 = vld [vmem:[%s1074 + $0x16a] sm:$0xff]
        %v3075 = vld [vmem:[%s1074 + $0x172] sm:$0xff]
        %3108 = vrot.lane.b32.xlu0 %v2820, 8
        %v3109 = vpop.permute.xlu0 %3108
        %3110 = vrot.lane.b32.xlu0 %v2821, 8
        %v3111 = vpop.permute.xlu0 %3110
        %3112 = vrot.lane.b32.xlu0 %v2822, 8
        %v3113 = vpop.permute.xlu0 %3112
        %3114 = vrot.lane.b32.xlu0 %v2823, 8
        %v3115 = vpop.permute.xlu0 %3114
        %3116 = vrot.lane.b32.xlu0 %v2824, 8
        %v3117 = vpop.permute.xlu0 %3116
        %3118 = vrot.lane.b32.xlu0 %v2825, 8
        %v3119 = vpop.permute.xlu0 %3118
        %3120 = vrot.lane.b32.xlu0 %v2826, 8
        %v3121 = vpop.permute.xlu0 %3120
        %3122 = vrot.lane.b32.xlu0 %v2827, 8
        %v3123 = vpop.permute.xlu0 %3122
        %3124 = vrot.lane.b32.xlu0 %v2828, 8
        %v3125 = vpop.permute.xlu0 %3124
        %3126 = vrot.lane.b32.xlu0 %v2829, 8
        %v3127 = vpop.permute.xlu0 %3126
        %3128 = vrot.lane.b32.xlu0 %v2830, 8
        %v3129 = vpop.permute.xlu0 %3128
        %3130 = vrot.lane.b32.xlu0 %v2831, 8
        %v3131 = vpop.permute.xlu0 %3130
        %3132 = vrot.lane.b32.xlu0 %v2832, 8
        %v3133 = vpop.permute.xlu0 %3132
        %3134 = vrot.lane.b32.xlu0 %v2833, 8
        %v3135 = vpop.permute.xlu0 %3134
        %3136 = vrot.lane.b32.xlu0 %v2834, 8
        %v3137 = vpop.permute.xlu0 %3136
        %3138 = vrot.lane.b32.xlu0 %v2835, 8
        %v3139 = vpop.permute.xlu0 %3138
        %3140 = vrot.lane.b32.xlu0 %v2836, 8
        %v3141 = vpop.permute.xlu0 %3140
        %3142 = vrot.lane.b32.xlu0 %v2837, 8
        %v3143 = vpop.permute.xlu0 %3142
        %3144 = vrot.lane.b32.xlu0 %v2838, 8
        %v3145 = vpop.permute.xlu0 %3144
        %3146 = vrot.lane.b32.xlu0 %v2839, 8
        %v3147 = vpop.permute.xlu0 %3146
        %3148 = vrot.lane.b32.xlu0 %v2840, 8
        %v3149 = vpop.permute.xlu0 %3148
        %3150 = vrot.lane.b32.xlu0 %v2841, 8
        %v3151 = vpop.permute.xlu0 %3150
        %3152 = vrot.lane.b32.xlu0 %v2842, 8
        %v3153 = vpop.permute.xlu0 %3152
        %3154 = vrot.lane.b32.xlu0 %v2843, 8
        %v3155 = vpop.permute.xlu0 %3154
        %3156 = vrot.lane.b32.xlu0 %v2844, 8
        %v3157 = vpop.permute.xlu0 %3156
        %3158 = vrot.lane.b32.xlu0 %v2845, 8
        %v3159 = vpop.permute.xlu0 %3158
        %3160 = vrot.lane.b32.xlu0 %v2846, 8
        %v3161 = vpop.permute.xlu0 %3160
        %3162 = vrot.lane.b32.xlu0 %v2847, 8
        %v3163 = vpop.permute.xlu0 %3162
        %3164 = vrot.lane.b32.xlu0 %v2848, 8
        %v3165 = vpop.permute.xlu0 %3164
        %3166 = vrot.lane.b32.xlu0 %v2849, 8
        %v3167 = vpop.permute.xlu0 %3166
        %3168 = vrot.lane.b32.xlu0 %v2850, 8
        %v3169 = vpop.permute.xlu0 %3168
        %3170 = vrot.lane.b32.xlu0 %v2851, 8
        %v3171 = vpop.permute.xlu0 %3170
        %3236 = vrot.lane.b32.xlu0 %v2852, 16
        %v3237 = vpop.permute.xlu0 %3236
        %3238 = vrot.lane.b32.xlu0 %v2853, 16
        %v3239 = vpop.permute.xlu0 %3238
        %3240 = vrot.lane.b32.xlu0 %v2854, 16
        %v3241 = vpop.permute.xlu0 %3240
        %3242 = vrot.lane.b32.xlu0 %v2855, 16
        %v3243 = vpop.permute.xlu0 %3242
        %3244 = vrot.lane.b32.xlu0 %v2856, 16
        %v3245 = vpop.permute.xlu0 %3244
        %3246 = vrot.lane.b32.xlu0 %v2857, 16
        %v3247 = vpop.permute.xlu0 %3246
        %3248 = vrot.lane.b32.xlu0 %v2858, 16
        %v3249 = vpop.permute.xlu0 %3248
        %3250 = vrot.lane.b32.xlu0 %v2859, 16
        %v3251 = vpop.permute.xlu0 %3250
        %3252 = vrot.lane.b32.xlu0 %v2860, 16
        %v3253 = vpop.permute.xlu0 %3252
        %3254 = vrot.lane.b32.xlu0 %v2861, 16
        %v3255 = vpop.permute.xlu0 %3254
        %3256 = vrot.lane.b32.xlu0 %v2862, 16
        %v3257 = vpop.permute.xlu0 %3256
        %3258 = vrot.lane.b32.xlu0 %v2863, 16
        %v3259 = vpop.permute.xlu0 %3258
        %3260 = vrot.lane.b32.xlu0 %v2864, 16
        %v3261 = vpop.permute.xlu0 %3260
        %3262 = vrot.lane.b32.xlu0 %v2865, 16
        %v3263 = vpop.permute.xlu0 %3262
        %3264 = vrot.lane.b32.xlu0 %v2866, 16
        %v3265 = vpop.permute.xlu0 %3264
        %3266 = vrot.lane.b32.xlu0 %v2867, 16
        %v3267 = vpop.permute.xlu0 %3266
        %3268 = vrot.lane.b32.xlu0 %v2868, 16
        %v3269 = vpop.permute.xlu0 %3268
        %3270 = vrot.lane.b32.xlu0 %v2869, 16
        %v3271 = vpop.permute.xlu0 %3270
        %3272 = vrot.lane.b32.xlu0 %v2870, 16
        %v3273 = vpop.permute.xlu0 %3272
        %3274 = vrot.lane.b32.xlu0 %v2871, 16
        %v3275 = vpop.permute.xlu0 %3274
        %3276 = vrot.lane.b32.xlu0 %v2872, 16
        %v3277 = vpop.permute.xlu0 %3276
        %3278 = vrot.lane.b32.xlu0 %v2873, 16
        %v3279 = vpop.permute.xlu0 %3278
        %3280 = vrot.lane.b32.xlu0 %v2874, 16
        %v3281 = vpop.permute.xlu0 %3280
        %3282 = vrot.lane.b32.xlu0 %v2875, 16
        %v3283 = vpop.permute.xlu0 %3282
        %3284 = vrot.lane.b32.xlu0 %v2876, 16
        %v3285 = vpop.permute.xlu0 %3284
        %3286 = vrot.lane.b32.xlu0 %v2877, 16
        %v3287 = vpop.permute.xlu0 %3286
        %3288 = vrot.lane.b32.xlu0 %v2878, 16
        %v3289 = vpop.permute.xlu0 %3288
        %3290 = vrot.lane.b32.xlu0 %v2879, 16
        %v3291 = vpop.permute.xlu0 %3290
        %3292 = vrot.lane.b32.xlu0 %v2880, 16
        %v3293 = vpop.permute.xlu0 %3292
        %3294 = vrot.lane.b32.xlu0 %v2881, 16
        %v3295 = vpop.permute.xlu0 %3294
        %3296 = vrot.lane.b32.xlu0 %v2882, 16
        %v3297 = vpop.permute.xlu0 %3296
        %3298 = vrot.lane.b32.xlu0 %v2883, 16
        %v3299 = vpop.permute.xlu0 %3298
        %3364 = vrot.lane.b32.xlu0 %v2884, 24
        %v3365 = vpop.permute.xlu0 %3364
        %3366 = vrot.lane.b32.xlu0 %v2885, 24
        %v3367 = vpop.permute.xlu0 %3366
        %3368 = vrot.lane.b32.xlu0 %v2886, 24
        %v3369 = vpop.permute.xlu0 %3368
        %3370 = vrot.lane.b32.xlu0 %v2887, 24
        %v3371 = vpop.permute.xlu0 %3370
        %3372 = vrot.lane.b32.xlu0 %v2888, 24
        %v3373 = vpop.permute.xlu0 %3372
        %3374 = vrot.lane.b32.xlu0 %v2889, 24
        %v3375 = vpop.permute.xlu0 %3374
        %3376 = vrot.lane.b32.xlu0 %v2890, 24
        %v3377 = vpop.permute.xlu0 %3376
        %3378 = vrot.lane.b32.xlu0 %v2891, 24
        %v3379 = vpop.permute.xlu0 %3378
        %3380 = vrot.lane.b32.xlu0 %v2892, 24
        %v3381 = vpop.permute.xlu0 %3380
        %3382 = vrot.lane.b32.xlu0 %v2893, 24
        %v3383 = vpop.permute.xlu0 %3382
        %3384 = vrot.lane.b32.xlu0 %v2894, 24
        %v3385 = vpop.permute.xlu0 %3384
        %3386 = vrot.lane.b32.xlu0 %v2895, 24
        %v3387 = vpop.permute.xlu0 %3386
        %3388 = vrot.lane.b32.xlu0 %v2896, 24
        %v3389 = vpop.permute.xlu0 %3388
        %3390 = vrot.lane.b32.xlu0 %v2897, 24
        %v3391 = vpop.permute.xlu0 %3390
        %3392 = vrot.lane.b32.xlu0 %v2898, 24
        %v3393 = vpop.permute.xlu0 %3392
        %3394 = vrot.lane.b32.xlu0 %v2899, 24
        %v3395 = vpop.permute.xlu0 %3394
        %3396 = vrot.lane.b32.xlu0 %v2900, 24
        %v3397 = vpop.permute.xlu0 %3396
        %3398 = vrot.lane.b32.xlu0 %v2901, 24
        %v3399 = vpop.permute.xlu0 %3398
        %3400 = vrot.lane.b32.xlu0 %v2902, 24
        %v3401 = vpop.permute.xlu0 %3400
        %3402 = vrot.lane.b32.xlu0 %v2903, 24
        %v3403 = vpop.permute.xlu0 %3402
        %3404 = vrot.lane.b32.xlu0 %v2904, 24
        %v3405 = vpop.permute.xlu0 %3404
        %3406 = vrot.lane.b32.xlu0 %v2905, 24
        %v3407 = vpop.permute.xlu0 %3406
        %3408 = vrot.lane.b32.xlu0 %v2906, 24
        %v3409 = vpop.permute.xlu0 %3408
        %3410 = vrot.lane.b32.xlu0 %v2907, 24
        %v3411 = vpop.permute.xlu0 %3410
        %3412 = vrot.lane.b32.xlu0 %v2908, 24
        %v3413 = vpop.permute.xlu0 %3412
        %3414 = vrot.lane.b32.xlu0 %v2909, 24
        %v3415 = vpop.permute.xlu0 %3414
        %3416 = vrot.lane.b32.xlu0 %v2910, 24
        %v3417 = vpop.permute.xlu0 %3416
        %3418 = vrot.lane.b32.xlu0 %v2911, 24
        %v3419 = vpop.permute.xlu0 %3418
        %3420 = vrot.lane.b32.xlu0 %v2912, 24
        %v3421 = vpop.permute.xlu0 %3420
        %3422 = vrot.lane.b32.xlu0 %v2913, 24
        %v3423 = vpop.permute.xlu0 %3422
        %3424 = vrot.lane.b32.xlu0 %v2914, 24
        %v3425 = vpop.permute.xlu0 %3424
        %3426 = vrot.lane.b32.xlu0 %v2915, 24
        %v3427 = vpop.permute.xlu0 %3426
        %3492 = vrot.lane.b32.xlu0 %v2916, 32
        %v3493 = vpop.permute.xlu0 %3492
        %3494 = vrot.lane.b32.xlu0 %v2917, 32
        %v3495 = vpop.permute.xlu0 %3494
        %3496 = vrot.lane.b32.xlu0 %v2918, 32
        %v3497 = vpop.permute.xlu0 %3496
        %3498 = vrot.lane.b32.xlu0 %v2919, 32
        %v3499 = vpop.permute.xlu0 %3498
        %3500 = vrot.lane.b32.xlu0 %v2920, 32
        %v3501 = vpop.permute.xlu0 %3500
        %3502 = vrot.lane.b32.xlu0 %v2921, 32
        %v3503 = vpop.permute.xlu0 %3502
        %3504 = vrot.lane.b32.xlu0 %v2922, 32
        %v3505 = vpop.permute.xlu0 %3504
        %3506 = vrot.lane.b32.xlu0 %v2923, 32
        %v3507 = vpop.permute.xlu0 %3506
        %3508 = vrot.lane.b32.xlu0 %v2924, 32
        %v3509 = vpop.permute.xlu0 %3508
        %3510 = vrot.lane.b32.xlu0 %v2925, 32
        %v3511 = vpop.permute.xlu0 %3510
        %3512 = vrot.lane.b32.xlu0 %v2926, 32
        %v3513 = vpop.permute.xlu0 %3512
        %3514 = vrot.lane.b32.xlu0 %v2927, 32
        %v3515 = vpop.permute.xlu0 %3514
        %3516 = vrot.lane.b32.xlu0 %v2928, 32
        %v3517 = vpop.permute.xlu0 %3516
        %3518 = vrot.lane.b32.xlu0 %v2929, 32
        %v3519 = vpop.permute.xlu0 %3518
        %3520 = vrot.lane.b32.xlu0 %v2930, 32
        %v3521 = vpop.permute.xlu0 %3520
        %3522 = vrot.lane.b32.xlu0 %v2931, 32
        %v3523 = vpop.permute.xlu0 %3522
        %3524 = vrot.lane.b32.xlu0 %v2932, 32
        %v3525 = vpop.permute.xlu0 %3524
        %3526 = vrot.lane.b32.xlu0 %v2933, 32
        %v3527 = vpop.permute.xlu0 %3526
        %3528 = vrot.lane.b32.xlu0 %v2934, 32
        %v3529 = vpop.permute.xlu0 %3528
        %3530 = vrot.lane.b32.xlu0 %v2935, 32
        %v3531 = vpop.permute.xlu0 %3530
        %3532 = vrot.lane.b32.xlu0 %v2936, 32
        %v3533 = vpop.permute.xlu0 %3532
        %3534 = vrot.lane.b32.xlu0 %v2937, 32
        %v3535 = vpop.permute.xlu0 %3534
        %3536 = vrot.lane.b32.xlu0 %v2938, 32
        %v3537 = vpop.permute.xlu0 %3536
        %3538 = vrot.lane.b32.xlu0 %v2939, 32
        %v3539 = vpop.permute.xlu0 %3538
        %3540 = vrot.lane.b32.xlu0 %v2940, 32
        %v3541 = vpop.permute.xlu0 %3540
        %3542 = vrot.lane.b32.xlu0 %v2941, 32
        %v3543 = vpop.permute.xlu0 %3542
        %3544 = vrot.lane.b32.xlu0 %v2942, 32
        %v3545 = vpop.permute.xlu0 %3544
        %3546 = vrot.lane.b32.xlu0 %v2943, 32
        %v3547 = vpop.permute.xlu0 %3546
        %3548 = vrot.lane.b32.xlu0 %v2944, 32
        %v3549 = vpop.permute.xlu0 %3548
        %3550 = vrot.lane.b32.xlu0 %v2945, 32
        %v3551 = vpop.permute.xlu0 %3550
        %3552 = vrot.lane.b32.xlu0 %v2946, 32
        %v3553 = vpop.permute.xlu0 %3552
        %3554 = vrot.lane.b32.xlu0 %v2947, 32
        %v3555 = vpop.permute.xlu0 %3554
        %3620 = vrot.lane.b32.xlu0 %v2948, 40
        %v3621 = vpop.permute.xlu0 %3620
        %3622 = vrot.lane.b32.xlu0 %v2949, 40
        %v3623 = vpop.permute.xlu0 %3622
        %3624 = vrot.lane.b32.xlu0 %v2950, 40
        %v3625 = vpop.permute.xlu0 %3624
        %3626 = vrot.lane.b32.xlu0 %v2951, 40
        %v3627 = vpop.permute.xlu0 %3626
        %3628 = vrot.lane.b32.xlu0 %v2952, 40
        %v3629 = vpop.permute.xlu0 %3628
        %3630 = vrot.lane.b32.xlu0 %v2953, 40
        %v3631 = vpop.permute.xlu0 %3630
        %3632 = vrot.lane.b32.xlu0 %v2954, 40
        %v3633 = vpop.permute.xlu0 %3632
        %3634 = vrot.lane.b32.xlu0 %v2955, 40
        %v3635 = vpop.permute.xlu0 %3634
        %3636 = vrot.lane.b32.xlu0 %v2956, 40
        %v3637 = vpop.permute.xlu0 %3636
        %3638 = vrot.lane.b32.xlu0 %v2957, 40
        %v3639 = vpop.permute.xlu0 %3638
        %3640 = vrot.lane.b32.xlu0 %v2958, 40
        %v3641 = vpop.permute.xlu0 %3640
        %3642 = vrot.lane.b32.xlu0 %v2959, 40
        %v3643 = vpop.permute.xlu0 %3642
        %3644 = vrot.lane.b32.xlu0 %v2960, 40
        %v3645 = vpop.permute.xlu0 %3644
        %3646 = vrot.lane.b32.xlu0 %v2961, 40
        %v3647 = vpop.permute.xlu0 %3646
        %3648 = vrot.lane.b32.xlu0 %v2962, 40
        %v3649 = vpop.permute.xlu0 %3648
        %3650 = vrot.lane.b32.xlu0 %v2963, 40
        %v3651 = vpop.permute.xlu0 %3650
        %3652 = vrot.lane.b32.xlu0 %v2964, 40
        %v3653 = vpop.permute.xlu0 %3652
        %3654 = vrot.lane.b32.xlu0 %v2965, 40
        %v3655 = vpop.permute.xlu0 %3654
        %3656 = vrot.lane.b32.xlu0 %v2966, 40
        %v3657 = vpop.permute.xlu0 %3656
        %3658 = vrot.lane.b32.xlu0 %v2967, 40
        %v3659 = vpop.permute.xlu0 %3658
        %3660 = vrot.lane.b32.xlu0 %v2968, 40
        %v3661 = vpop.permute.xlu0 %3660
        %3662 = vrot.lane.b32.xlu0 %v2969, 40
        %v3663 = vpop.permute.xlu0 %3662
        %3664 = vrot.lane.b32.xlu0 %v2970, 40
        %v3665 = vpop.permute.xlu0 %3664
        %3666 = vrot.lane.b32.xlu0 %v2971, 40
        %v3667 = vpop.permute.xlu0 %3666
        %3668 = vrot.lane.b32.xlu0 %v2972, 40
        %v3669 = vpop.permute.xlu0 %3668
        %3670 = vrot.lane.b32.xlu0 %v2973, 40
        %v3671 = vpop.permute.xlu0 %3670
        %3672 = vrot.lane.b32.xlu0 %v2974, 40
        %v3673 = vpop.permute.xlu0 %3672
        %3674 = vrot.lane.b32.xlu0 %v2975, 40
        %v3675 = vpop.permute.xlu0 %3674
        %3676 = vrot.lane.b32.xlu0 %v2976, 40
        %v3677 = vpop.permute.xlu0 %3676
        %3678 = vrot.lane.b32.xlu0 %v2977, 40
        %v3679 = vpop.permute.xlu0 %3678
        %3680 = vrot.lane.b32.xlu0 %v2978, 40
        %v3681 = vpop.permute.xlu0 %3680
        %3682 = vrot.lane.b32.xlu0 %v2979, 40
        %v3683 = vpop.permute.xlu0 %3682
        %3748 = vrot.lane.b32.xlu0 %v2980, 48
        %v3749 = vpop.permute.xlu0 %3748
        %3750 = vrot.lane.b32.xlu0 %v2981, 48
        %v3751 = vpop.permute.xlu0 %3750
        %3752 = vrot.lane.b32.xlu0 %v2982, 48
        %v3753 = vpop.permute.xlu0 %3752
        %3754 = vrot.lane.b32.xlu0 %v2983, 48
        %v3755 = vpop.permute.xlu0 %3754
        %3756 = vrot.lane.b32.xlu0 %v2984, 48
        %v3757 = vpop.permute.xlu0 %3756
        %3758 = vrot.lane.b32.xlu0 %v2985, 48
        %v3759 = vpop.permute.xlu0 %3758
        %3760 = vrot.lane.b32.xlu0 %v2986, 48
        %v3761 = vpop.permute.xlu0 %3760
        %3762 = vrot.lane.b32.xlu0 %v2987, 48
        %v3763 = vpop.permute.xlu0 %3762
        %3764 = vrot.lane.b32.xlu0 %v2988, 48
        %v3765 = vpop.permute.xlu0 %3764
        %3766 = vrot.lane.b32.xlu0 %v2989, 48
        %v3767 = vpop.permute.xlu0 %3766
        %3768 = vrot.lane.b32.xlu0 %v2990, 48
        %v3769 = vpop.permute.xlu0 %3768
        %3770 = vrot.lane.b32.xlu0 %v2991, 48
        %v3771 = vpop.permute.xlu0 %3770
        %3772 = vrot.lane.b32.xlu0 %v2992, 48
        %v3773 = vpop.permute.xlu0 %3772
        %3774 = vrot.lane.b32.xlu0 %v2993, 48
        %v3775 = vpop.permute.xlu0 %3774
        %3776 = vrot.lane.b32.xlu0 %v2994, 48
        %v3777 = vpop.permute.xlu0 %3776
        %3778 = vrot.lane.b32.xlu0 %v2995, 48
        %v3779 = vpop.permute.xlu0 %3778
        %3780 = vrot.lane.b32.xlu0 %v2996, 48
        %v3781 = vpop.permute.xlu0 %3780
        %3782 = vrot.lane.b32.xlu0 %v2997, 48
        %v3783 = vpop.permute.xlu0 %3782
        %3784 = vrot.lane.b32.xlu0 %v2998, 48
        %v3785 = vpop.permute.xlu0 %3784
        %3786 = vrot.lane.b32.xlu0 %v2999, 48
        %v3787 = vpop.permute.xlu0 %3786
        %3788 = vrot.lane.b32.xlu0 %v3000, 48
        %v3789 = vpop.permute.xlu0 %3788
        %3790 = vrot.lane.b32.xlu0 %v3001, 48
        %v3791 = vpop.permute.xlu0 %3790
        %3792 = vrot.lane.b32.xlu0 %v3002, 48
        %v3793 = vpop.permute.xlu0 %3792
        %3794 = vrot.lane.b32.xlu0 %v3003, 48
        %v3795 = vpop.permute.xlu0 %3794
        %3796 = vrot.lane.b32.xlu0 %v3004, 48
        %v3797 = vpop.permute.xlu0 %3796
        %3798 = vrot.lane.b32.xlu0 %v3005, 48
        %v3799 = vpop.permute.xlu0 %3798
        %3800 = vrot.lane.b32.xlu0 %v3006, 48
        %v3801 = vpop.permute.xlu0 %3800
        %3802 = vrot.lane.b32.xlu0 %v3007, 48
        %v3803 = vpop.permute.xlu0 %3802
        %3804 = vrot.lane.b32.xlu0 %v3008, 48
        %v3805 = vpop.permute.xlu0 %3804
        %3806 = vrot.lane.b32.xlu0 %v3009, 48
        %v3807 = vpop.permute.xlu0 %3806
        %3808 = vrot.lane.b32.xlu0 %v3010, 48
        %v3809 = vpop.permute.xlu0 %3808
        %3810 = vrot.lane.b32.xlu0 %v3011, 48
        %v3811 = vpop.permute.xlu0 %3810
        %3876 = vrot.lane.b32.xlu0 %v3012, 56
        %v3877 = vpop.permute.xlu0 %3876
        %3878 = vrot.lane.b32.xlu0 %v3013, 56
        %v3879 = vpop.permute.xlu0 %3878
        %3880 = vrot.lane.b32.xlu0 %v3014, 56
        %v3881 = vpop.permute.xlu0 %3880
        %3882 = vrot.lane.b32.xlu0 %v3015, 56
        %v3883 = vpop.permute.xlu0 %3882
        %3884 = vrot.lane.b32.xlu0 %v3016, 56
        %v3885 = vpop.permute.xlu0 %3884
        %3886 = vrot.lane.b32.xlu0 %v3017, 56
        %v3887 = vpop.permute.xlu0 %3886
        %3888 = vrot.lane.b32.xlu0 %v3018, 56
        %v3889 = vpop.permute.xlu0 %3888
        %3890 = vrot.lane.b32.xlu0 %v3019, 56
        %v3891 = vpop.permute.xlu0 %3890
        %3892 = vrot.lane.b32.xlu0 %v3020, 56
        %v3893 = vpop.permute.xlu0 %3892
        %3894 = vrot.lane.b32.xlu0 %v3021, 56
        %v3895 = vpop.permute.xlu0 %3894
        %3896 = vrot.lane.b32.xlu0 %v3022, 56
        %v3897 = vpop.permute.xlu0 %3896
        %3898 = vrot.lane.b32.xlu0 %v3023, 56
        %v3899 = vpop.permute.xlu0 %3898
        %3900 = vrot.lane.b32.xlu0 %v3024, 56
        %v3901 = vpop.permute.xlu0 %3900
        %3902 = vrot.lane.b32.xlu0 %v3025, 56
        %v3903 = vpop.permute.xlu0 %3902
        %3904 = vrot.lane.b32.xlu0 %v3026, 56
        %v3905 = vpop.permute.xlu0 %3904
        %3906 = vrot.lane.b32.xlu0 %v3027, 56
        %v3907 = vpop.permute.xlu0 %3906
        %3908 = vrot.lane.b32.xlu0 %v3028, 56
        %v3909 = vpop.permute.xlu0 %3908
        %3910 = vrot.lane.b32.xlu0 %v3029, 56
        %v3911 = vpop.permute.xlu0 %3910
        %3912 = vrot.lane.b32.xlu0 %v3030, 56
        %v3913 = vpop.permute.xlu0 %3912
        %3914 = vrot.lane.b32.xlu0 %v3031, 56
        %v3915 = vpop.permute.xlu0 %3914
        %3916 = vrot.lane.b32.xlu0 %v3032, 56
        %v3917 = vpop.permute.xlu0 %3916
        %3918 = vrot.lane.b32.xlu0 %v3033, 56
        %v3919 = vpop.permute.xlu0 %3918
        %3920 = vrot.lane.b32.xlu0 %v3034, 56
        %v3921 = vpop.permute.xlu0 %3920
        %3922 = vrot.lane.b32.xlu0 %v3035, 56
        %v3923 = vpop.permute.xlu0 %3922
        %3924 = vrot.lane.b32.xlu0 %v3036, 56
        %v3925 = vpop.permute.xlu0 %3924
        %3926 = vrot.lane.b32.xlu0 %v3037, 56
        %v3927 = vpop.permute.xlu0 %3926
        %3928 = vrot.lane.b32.xlu0 %v3038, 56
        %v3929 = vpop.permute.xlu0 %3928
        %3930 = vrot.lane.b32.xlu0 %v3039, 56
        %v3931 = vpop.permute.xlu0 %3930
        %3932 = vrot.lane.b32.xlu0 %v3040, 56
        %v3933 = vpop.permute.xlu0 %3932
        %3934 = vrot.lane.b32.xlu0 %v3041, 56
        %v3935 = vpop.permute.xlu0 %3934
        %3936 = vrot.lane.b32.xlu0 %v3042, 56
        %v3937 = vpop.permute.xlu0 %3936
        %3938 = vrot.lane.b32.xlu0 %v3043, 56
        %v3939 = vpop.permute.xlu0 %3938
        %4004 = vrot.lane.b32.xlu0 %v3044, 64
        %v4005 = vpop.permute.xlu0 %4004
        %4006 = vrot.lane.b32.xlu0 %v3045, 64
        %v4007 = vpop.permute.xlu0 %4006
        %4008 = vrot.lane.b32.xlu0 %v3046, 64
        %v4009 = vpop.permute.xlu0 %4008
        %4010 = vrot.lane.b32.xlu0 %v3047, 64
        %v4011 = vpop.permute.xlu0 %4010
        %4012 = vrot.lane.b32.xlu0 %v3048, 64
        %v4013 = vpop.permute.xlu0 %4012
        %4014 = vrot.lane.b32.xlu0 %v3049, 64
        %v4015 = vpop.permute.xlu0 %4014
        %4016 = vrot.lane.b32.xlu0 %v3050, 64
        %v4017 = vpop.permute.xlu0 %4016
        %4018 = vrot.lane.b32.xlu0 %v3051, 64
        %v4019 = vpop.permute.xlu0 %4018
        %4020 = vrot.lane.b32.xlu0 %v3052, 64
        %v4021 = vpop.permute.xlu0 %4020
        %4022 = vrot.lane.b32.xlu0 %v3053, 64
        %v4023 = vpop.permute.xlu0 %4022
        %4024 = vrot.lane.b32.xlu0 %v3054, 64
        %v4025 = vpop.permute.xlu0 %4024
        %4026 = vrot.lane.b32.xlu0 %v3055, 64
        %v4027 = vpop.permute.xlu0 %4026
        %4028 = vrot.lane.b32.xlu0 %v3056, 64
        %v4029 = vpop.permute.xlu0 %4028
        %4030 = vrot.lane.b32.xlu0 %v3057, 64
        %v4031 = vpop.permute.xlu0 %4030
        %4032 = vrot.lane.b32.xlu0 %v3058, 64
        %v4033 = vpop.permute.xlu0 %4032
        %4034 = vrot.lane.b32.xlu0 %v3059, 64
        %v4035 = vpop.permute.xlu0 %4034
        %4036 = vrot.lane.b32.xlu0 %v3060, 64
        %v4037 = vpop.permute.xlu0 %4036
        %4038 = vrot.lane.b32.xlu0 %v3061, 64
        %v4039 = vpop.permute.xlu0 %4038
        %4040 = vrot.lane.b32.xlu0 %v3062, 64
        %v4041 = vpop.permute.xlu0 %4040
        %4042 = vrot.lane.b32.xlu0 %v3063, 64
        %v4043 = vpop.permute.xlu0 %4042
        %4044 = vrot.lane.b32.xlu0 %v3064, 64
        %v4045 = vpop.permute.xlu0 %4044
        %4046 = vrot.lane.b32.xlu0 %v3065, 64
        %v4047 = vpop.permute.xlu0 %4046
        %4048 = vrot.lane.b32.xlu0 %v3066, 64
        %v4049 = vpop.permute.xlu0 %4048
        %4050 = vrot.lane.b32.xlu0 %v3067, 64
        %v4051 = vpop.permute.xlu0 %4050
        %4052 = vrot.lane.b32.xlu0 %v3068, 64
        %v4053 = vpop.permute.xlu0 %4052
        %4054 = vrot.lane.b32.xlu0 %v3069, 64
        %v4055 = vpop.permute.xlu0 %4054
        %4056 = vrot.lane.b32.xlu0 %v3070, 64
        %v4057 = vpop.permute.xlu0 %4056
        %4058 = vrot.lane.b32.xlu0 %v3071, 64
        %v4059 = vpop.permute.xlu0 %4058
        %4060 = vrot.lane.b32.xlu0 %v3072, 64
        %v4061 = vpop.permute.xlu0 %4060
        %4062 = vrot.lane.b32.xlu0 %v3073, 64
        %v4063 = vpop.permute.xlu0 %4062
        %4064 = vrot.lane.b32.xlu0 %v3074, 64
        %v4065 = vpop.permute.xlu0 %4064
        %4066 = vrot.lane.b32.xlu0 %v3075, 64
        %v4067 = vpop.permute.xlu0 %4066
        %v4100 = vsel %vm284, %v2788, %v3109
        %v4101 = vsel %vm284, %v2789, %v3111
        %v4102 = vsel %vm284, %v2790, %v3113
        %v4103 = vsel %vm284, %v2791, %v3115
        %v4104 = vsel %vm284, %v2792, %v3117
        %v4105 = vsel %vm284, %v2793, %v3119
        %v4106 = vsel %vm284, %v2794, %v3121
        %v4107 = vsel %vm284, %v2795, %v3123
        %v4108 = vsel %vm284, %v2796, %v3125
        %v4109 = vsel %vm284, %v2797, %v3127
        %v4110 = vsel %vm284, %v2798, %v3129
        %v4111 = vsel %vm284, %v2799, %v3131
        %v4112 = vsel %vm284, %v2800, %v3133
        %v4113 = vsel %vm284, %v2801, %v3135
        %v4114 = vsel %vm284, %v2802, %v3137
        %v4115 = vsel %vm284, %v2803, %v3139
        %v4116 = vsel %vm284, %v2804, %v3141
        %v4117 = vsel %vm284, %v2805, %v3143
        %v4118 = vsel %vm284, %v2806, %v3145
        %v4119 = vsel %vm284, %v2807, %v3147
        %v4120 = vsel %vm284, %v2808, %v3149
        %v4121 = vsel %vm284, %v2809, %v3151
        %v4122 = vsel %vm284, %v2810, %v3153
        %v4123 = vsel %vm284, %v2811, %v3155
        %v4124 = vsel %vm284, %v2812, %v3157
        %v4125 = vsel %vm284, %v2813, %v3159
        %v4126 = vsel %vm284, %v2814, %v3161
        %v4127 = vsel %vm284, %v2815, %v3163
        %v4128 = vsel %vm284, %v2816, %v3165
        %v4129 = vsel %vm284, %v2817, %v3167
        %v4130 = vsel %vm284, %v2818, %v3169
        %v4131 = vsel %vm284, %v2819, %v3171
        %v4132 = vsel %vm2227, %v4100, %v3237
        %v4133 = vsel %vm2227, %v4101, %v3239
        %v4134 = vsel %vm2227, %v4102, %v3241
        %v4135 = vsel %vm2227, %v4103, %v3243
        %v4136 = vsel %vm2227, %v4104, %v3245
        %v4137 = vsel %vm2227, %v4105, %v3247
        %v4138 = vsel %vm2227, %v4106, %v3249
        %v4139 = vsel %vm2227, %v4107, %v3251
        %v4140 = vsel %vm2227, %v4108, %v3253
        %v4141 = vsel %vm2227, %v4109, %v3255
        %v4142 = vsel %vm2227, %v4110, %v3257
        %v4143 = vsel %vm2227, %v4111, %v3259
        %v4144 = vsel %vm2227, %v4112, %v3261
        %v4145 = vsel %vm2227, %v4113, %v3263
        %v4146 = vsel %vm2227, %v4114, %v3265
        %v4147 = vsel %vm2227, %v4115, %v3267
        %v4148 = vsel %vm2227, %v4116, %v3269
        %v4149 = vsel %vm2227, %v4117, %v3271
        %v4150 = vsel %vm2227, %v4118, %v3273
        %v4151 = vsel %vm2227, %v4119, %v3275
        %v4152 = vsel %vm2227, %v4120, %v3277
        %v4153 = vsel %vm2227, %v4121, %v3279
        %v4154 = vsel %vm2227, %v4122, %v3281
        %v4155 = vsel %vm2227, %v4123, %v3283
        %v4156 = vsel %vm2227, %v4124, %v3285
        %v4157 = vsel %vm2227, %v4125, %v3287
        %v4158 = vsel %vm2227, %v4126, %v3289
        %v4159 = vsel %vm2227, %v4127, %v3291
        %v4160 = vsel %vm2227, %v4128, %v3293
        %v4161 = vsel %vm2227, %v4129, %v3295
        %v4162 = vsel %vm2227, %v4130, %v3297
        %v4163 = vsel %vm2227, %v4131, %v3299
        %v4164 = vsel %vm2260, %v4132, %v3365
        %v4165 = vsel %vm2260, %v4133, %v3367
        %v4166 = vsel %vm2260, %v4134, %v3369
        %v4167 = vsel %vm2260, %v4135, %v3371
        %v4168 = vsel %vm2260, %v4136, %v3373
        %v4169 = vsel %vm2260, %v4137, %v3375
        %v4170 = vsel %vm2260, %v4138, %v3377
        %v4171 = vsel %vm2260, %v4139, %v3379
        %v4172 = vsel %vm2260, %v4140, %v3381
        %v4173 = vsel %vm2260, %v4141, %v3383
        %v4174 = vsel %vm2260, %v4142, %v3385
        %v4175 = vsel %vm2260, %v4143, %v3387
        %v4176 = vsel %vm2260, %v4144, %v3389
        %v4177 = vsel %vm2260, %v4145, %v3391
        %v4178 = vsel %vm2260, %v4146, %v3393
        %v4179 = vsel %vm2260, %v4147, %v3395
        %v4180 = vsel %vm2260, %v4148, %v3397
        %v4181 = vsel %vm2260, %v4149, %v3399
        %v4182 = vsel %vm2260, %v4150, %v3401
        %v4183 = vsel %vm2260, %v4151, %v3403
        %v4184 = vsel %vm2260, %v4152, %v3405
        %v4185 = vsel %vm2260, %v4153, %v3407
        %v4186 = vsel %vm2260, %v4154, %v3409
        %v4187 = vsel %vm2260, %v4155, %v3411
        %v4188 = vsel %vm2260, %v4156, %v3413
        %v4189 = vsel %vm2260, %v4157, %v3415
        %v4190 = vsel %vm2260, %v4158, %v3417
        %v4191 = vsel %vm2260, %v4159, %v3419
        %v4192 = vsel %vm2260, %v4160, %v3421
        %v4193 = vsel %vm2260, %v4161, %v3423
        %v4194 = vsel %vm2260, %v4162, %v3425
        %v4195 = vsel %vm2260, %v4163, %v3427
        %v4196 = vsel %vm2293, %v4164, %v3493
        %v4197 = vsel %vm2293, %v4165, %v3495
        %v4198 = vsel %vm2293, %v4166, %v3497
        %v4199 = vsel %vm2293, %v4167, %v3499
        %v4200 = vsel %vm2293, %v4168, %v3501
        %v4201 = vsel %vm2293, %v4169, %v3503
        %v4202 = vsel %vm2293, %v4170, %v3505
        %v4203 = vsel %vm2293, %v4171, %v3507
        %v4204 = vsel %vm2293, %v4172, %v3509
        %v4205 = vsel %vm2293, %v4173, %v3511
        %v4206 = vsel %vm2293, %v4174, %v3513
        %v4207 = vsel %vm2293, %v4175, %v3515
        %v4208 = vsel %vm2293, %v4176, %v3517
        %v4209 = vsel %vm2293, %v4177, %v3519
        %v4210 = vsel %vm2293, %v4178, %v3521
        %v4211 = vsel %vm2293, %v4179, %v3523
        %v4212 = vsel %vm2293, %v4180, %v3525
        %v4213 = vsel %vm2293, %v4181, %v3527
        %v4214 = vsel %vm2293, %v4182, %v3529
        %v4215 = vsel %vm2293, %v4183, %v3531
        %v4216 = vsel %vm2293, %v4184, %v3533
        %v4217 = vsel %vm2293, %v4185, %v3535
        %v4218 = vsel %vm2293, %v4186, %v3537
        %v4219 = vsel %vm2293, %v4187, %v3539
        %v4220 = vsel %vm2293, %v4188, %v3541
        %v4221 = vsel %vm2293, %v4189, %v3543
        %v4222 = vsel %vm2293, %v4190, %v3545
        %v4223 = vsel %vm2293, %v4191, %v3547
        %v4224 = vsel %vm2293, %v4192, %v3549
        %v4225 = vsel %vm2293, %v4193, %v3551
        %v4226 = vsel %vm2293, %v4194, %v3553
        %v4227 = vsel %vm2293, %v4195, %v3555
        %v4228 = vsel %vm2326, %v4196, %v3621
        %v4229 = vsel %vm2326, %v4197, %v3623
        %v4230 = vsel %vm2326, %v4198, %v3625
        %v4231 = vsel %vm2326, %v4199, %v3627
        %v4232 = vsel %vm2326, %v4200, %v3629
        %v4233 = vsel %vm2326, %v4201, %v3631
        %v4234 = vsel %vm2326, %v4202, %v3633
        %v4235 = vsel %vm2326, %v4203, %v3635
        %v4236 = vsel %vm2326, %v4204, %v3637
        %v4237 = vsel %vm2326, %v4205, %v3639
        %v4238 = vsel %vm2326, %v4206, %v3641
        %v4239 = vsel %vm2326, %v4207, %v3643
        %v4240 = vsel %vm2326, %v4208, %v3645
        %v4241 = vsel %vm2326, %v4209, %v3647
        %v4242 = vsel %vm2326, %v4210, %v3649
        %v4243 = vsel %vm2326, %v4211, %v3651
        %v4244 = vsel %vm2326, %v4212, %v3653
        %v4245 = vsel %vm2326, %v4213, %v3655
        %v4246 = vsel %vm2326, %v4214, %v3657
        %v4247 = vsel %vm2326, %v4215, %v3659
        %v4248 = vsel %vm2326, %v4216, %v3661
        %v4249 = vsel %vm2326, %v4217, %v3663
        %v4250 = vsel %vm2326, %v4218, %v3665
        %v4251 = vsel %vm2326, %v4219, %v3667
        %v4252 = vsel %vm2326, %v4220, %v3669
        %v4253 = vsel %vm2326, %v4221, %v3671
        %v4254 = vsel %vm2326, %v4222, %v3673
        %v4255 = vsel %vm2326, %v4223, %v3675
        %v4256 = vsel %vm2326, %v4224, %v3677
        %v4257 = vsel %vm2326, %v4225, %v3679
        %v4258 = vsel %vm2326, %v4226, %v3681
        %v4259 = vsel %vm2326, %v4227, %v3683
        %v4260 = vsel %vm2359, %v4228, %v3749
        %v4261 = vsel %vm2359, %v4229, %v3751
        %v4262 = vsel %vm2359, %v4230, %v3753
        %v4263 = vsel %vm2359, %v4231, %v3755
        %v4264 = vsel %vm2359, %v4232, %v3757
        %v4265 = vsel %vm2359, %v4233, %v3759
        %v4266 = vsel %vm2359, %v4234, %v3761
        %v4267 = vsel %vm2359, %v4235, %v3763
        %v4268 = vsel %vm2359, %v4236, %v3765
        %v4269 = vsel %vm2359, %v4237, %v3767
        %v4270 = vsel %vm2359, %v4238, %v3769
        %v4271 = vsel %vm2359, %v4239, %v3771
        %v4272 = vsel %vm2359, %v4240, %v3773
        %v4273 = vsel %vm2359, %v4241, %v3775
        %v4274 = vsel %vm2359, %v4242, %v3777
        %v4275 = vsel %vm2359, %v4243, %v3779
        %v4276 = vsel %vm2359, %v4244, %v3781
        %v4277 = vsel %vm2359, %v4245, %v3783
        %v4278 = vsel %vm2359, %v4246, %v3785
        %v4279 = vsel %vm2359, %v4247, %v3787
        %v4280 = vsel %vm2359, %v4248, %v3789
        %v4281 = vsel %vm2359, %v4249, %v3791
        %v4282 = vsel %vm2359, %v4250, %v3793
        %v4283 = vsel %vm2359, %v4251, %v3795
        %v4284 = vsel %vm2359, %v4252, %v3797
        %v4285 = vsel %vm2359, %v4253, %v3799
        %v4286 = vsel %vm2359, %v4254, %v3801
        %v4287 = vsel %vm2359, %v4255, %v3803
        %v4288 = vsel %vm2359, %v4256, %v3805
        %v4289 = vsel %vm2359, %v4257, %v3807
        %v4290 = vsel %vm2359, %v4258, %v3809
        %v4291 = vsel %vm2359, %v4259, %v3811
        %v4292 = vsel %vm2392, %v4260, %v3877
        %v4293 = vsel %vm2392, %v4261, %v3879
        %v4294 = vsel %vm2392, %v4262, %v3881
        %v4295 = vsel %vm2392, %v4263, %v3883
        %v4296 = vsel %vm2392, %v4264, %v3885
        %v4297 = vsel %vm2392, %v4265, %v3887
        %v4298 = vsel %vm2392, %v4266, %v3889
        %v4299 = vsel %vm2392, %v4267, %v3891
        %v4300 = vsel %vm2392, %v4268, %v3893
        %v4301 = vsel %vm2392, %v4269, %v3895
        %v4302 = vsel %vm2392, %v4270, %v3897
        %v4303 = vsel %vm2392, %v4271, %v3899
        %v4304 = vsel %vm2392, %v4272, %v3901
        %v4305 = vsel %vm2392, %v4273, %v3903
        %v4306 = vsel %vm2392, %v4274, %v3905
        %v4307 = vsel %vm2392, %v4275, %v3907
        %v4308 = vsel %vm2392, %v4276, %v3909
        %v4309 = vsel %vm2392, %v4277, %v3911
        %v4310 = vsel %vm2392, %v4278, %v3913
        %v4311 = vsel %vm2392, %v4279, %v3915
        %v4312 = vsel %vm2392, %v4280, %v3917
        %v4313 = vsel %vm2392, %v4281, %v3919
        %v4314 = vsel %vm2392, %v4282, %v3921
        %v4315 = vsel %vm2392, %v4283, %v3923
        %v4316 = vsel %vm2392, %v4284, %v3925
        %v4317 = vsel %vm2392, %v4285, %v3927
        %v4318 = vsel %vm2392, %v4286, %v3929
        %v4319 = vsel %vm2392, %v4287, %v3931
        %v4320 = vsel %vm2392, %v4288, %v3933
        %v4321 = vsel %vm2392, %v4289, %v3935
        %v4322 = vsel %vm2392, %v4290, %v3937
        %v4323 = vsel %vm2392, %v4291, %v3939
        %v4324 = vsel %vm2425, %v4292, %v4005
        %v4325 = vsel %vm2425, %v4293, %v4007
        %v4326 = vsel %vm2425, %v4294, %v4009
        %v4327 = vsel %vm2425, %v4295, %v4011
        %v4328 = vsel %vm2425, %v4296, %v4013
        %v4329 = vsel %vm2425, %v4297, %v4015
        %v4330 = vsel %vm2425, %v4298, %v4017
        %v4331 = vsel %vm2425, %v4299, %v4019
        %v4332 = vsel %vm2425, %v4300, %v4021
        %v4333 = vsel %vm2425, %v4301, %v4023
        %v4334 = vsel %vm2425, %v4302, %v4025
        %v4335 = vsel %vm2425, %v4303, %v4027
        %v4336 = vsel %vm2425, %v4304, %v4029
        %v4337 = vsel %vm2425, %v4305, %v4031
        %v4338 = vsel %vm2425, %v4306, %v4033
        %v4339 = vsel %vm2425, %v4307, %v4035
        %v4340 = vsel %vm2425, %v4308, %v4037
        %v4341 = vsel %vm2425, %v4309, %v4039
        %v4342 = vsel %vm2425, %v4310, %v4041
        %v4343 = vsel %vm2425, %v4311, %v4043
        %v4344 = vsel %vm2425, %v4312, %v4045
        %v4345 = vsel %vm2425, %v4313, %v4047
        %v4346 = vsel %vm2425, %v4314, %v4049
        %v4347 = vsel %vm2425, %v4315, %v4051
        %v4348 = vsel %vm2425, %v4316, %v4053
        %v4349 = vsel %vm2425, %v4317, %v4055
        %v4350 = vsel %vm2425, %v4318, %v4057
        %v4351 = vsel %vm2425, %v4319, %v4059
        %v4352 = vsel %vm2425, %v4320, %v4061
        %v4353 = vsel %vm2425, %v4321, %v4063
        %v4354 = vsel %vm2425, %v4322, %v4065
        %v4355 = vsel %vm2425, %v4323, %v4067
        %v4356 = vpack.c.bf16 %v4325, %v4324
        %v4357 = vpack.c.bf16 %v4327, %v4326
        %v4358 = vpack.c.bf16 %v4329, %v4328
        %v4359 = vpack.c.bf16 %v4331, %v4330
        %v4360 = vpack.c.bf16 %v4333, %v4332
        %v4361 = vpack.c.bf16 %v4335, %v4334
        %v4362 = vpack.c.bf16 %v4337, %v4336
        %v4363 = vpack.c.bf16 %v4339, %v4338
        %v4364 = vpack.c.bf16 %v4341, %v4340
        %v4365 = vpack.c.bf16 %v4343, %v4342
        %v4366 = vpack.c.bf16 %v4345, %v4344
        %v4367 = vpack.c.bf16 %v4347, %v4346
        %v4368 = vpack.c.bf16 %v4349, %v4348
        %v4369 = vpack.c.bf16 %v4351, %v4350
        %v4370 = vpack.c.bf16 %v4353, %v4352
        %v4371 = vpack.c.bf16 %v4355, %v4354
        %s4372 = scalar_lea.vmem %s3, 36
        %v4373 = vld [vmem:[%s4372] sm:$0xf]
        %v4374 = vld [vmem:[%s4372 + $0x4] sm:$0xf]
        %v4375 = vld [vmem:[%s4372 + $0x8] sm:$0xf]
        %v4376 = vld [vmem:[%s4372 + $0xc] sm:$0xf]
        %v4377 = vld [vmem:[%s4372 + $0x10] sm:$0xf]
        %v4378 = vld [vmem:[%s4372 + $0x14] sm:$0xf]
        %v4379 = vld [vmem:[%s4372 + $0x18] sm:$0xf]
        %v4380 = vld [vmem:[%s4372 + $0x1c] sm:$0xf]
        %v4381 = vld [vmem:[%s4372 + $0x20] sm:$0xf]
        %v4391 = vunpack.c.l.b16 %v4373
        %v4392 = vunpack.c.l.b16 %v4374
        %v4393 = vunpack.c.l.b16 %v4375
        %v4394 = vunpack.c.l.b16 %v4376
        %v4395 = vunpack.c.l.b16 %v4377
        %v4396 = vunpack.c.l.b16 %v4378
        %v4397 = vunpack.c.l.b16 %v4379
        %v4398 = vunpack.c.l.b16 %v4380
        %v4399 = vunpack.c.l.b16 %v4381
        %v4400 = vpack.c.b16 %v4392, %v4391
        %v4401 = vpack.c.b16 %v4394, %v4393
        %v4402 = vpack.c.b16 %v4396, %v4395
        %v4403 = vpack.c.b16 %v4398, %v4397
        %v4404 = vpack.c.b16 %v4399, %v4399
        %v4410 = vsel %vm2510, %v4356, 0
        %v4413 = vsel %vm2510, %v4357, 0
        %v4416 = vsel %vm2510, %v4358, 0
        %v4419 = vsel %vm2510, %v4359, 0
        %v4422 = vsel %vm2510, %v4360, 0
        %v4425 = vsel %vm2510, %v4361, 0
        %v4428 = vsel %vm2510, %v4362, 0
        %v4431 = vsel %vm2510, %v4363, 0
        %v4434 = vsel %vm2510, %v4364, 0
        %v4437 = vsel %vm2510, %v4365, 0
        %v4440 = vsel %vm2510, %v4366, 0
        %v4443 = vsel %vm2510, %v4367, 0
        %v4446 = vsel %vm2510, %v4368, 0
        %v4449 = vsel %vm2510, %v4369, 0
        %v4452 = vsel %vm2510, %v4370, 0
        %v4455 = vsel %vm2510, %v4371, 0
        %v4458 = vsel %vm2559, %v4404, 0
        %4460 = vmatprep.subr.bf16.mxu0 0
        %4461 = vmatpush1.bf16.msra.mxu0 %v4400
        %4462 = vmatprep.subr.bf16.mxu0 0
        %4463 = vmatpush1.bf16.msra.mxu0 %v4401
        %4464 = vmatprep.subr.bf16.mxu0 0
        %4465 = vmatpush1.bf16.msra.mxu0 %v4402
        %4466 = vmatprep.subr.bf16.mxu0 0
        %4467 = vmatpush1.bf16.msra.mxu0 %v4403
        %4468 = vmatprep.subr.bf16.mxu0 0
        %4469 = vmatpush1.bf16.msra.mxu0 %v4458
        %4470 = vmatprep.subr.bf16.mxu0 0
        %4471 = vmatpush1.bf16.msra.mxu0 0
        %4472 = vmatprep.subr.bf16.mxu0 0
        %4473 = vmatpush1.bf16.msra.mxu0 0
        %4474 = vmatprep.subr.bf16.mxu0 0
        %4475 = vmatpush1.bf16.msra.mxu0 0
        %4476 = vmatprep.subr.bf16.mxu0 0
        %4477 = vmatpush1.bf16.msra.mxu0 0
        %4478 = vmatprep.subr.bf16.mxu0 0
        %4479 = vmatpush1.bf16.msra.mxu0 0
        %4480 = vmatprep.subr.bf16.mxu0 0
        %4481 = vmatpush1.bf16.msra.mxu0 0
        %4482 = vmatprep.subr.bf16.mxu0 0
        %4483 = vmatpush1.bf16.msra.mxu0 0
        %4484 = vmatprep.subr.bf16.mxu0 0
        %4485 = vmatpush1.bf16.msra.mxu0 0
        %4486 = vmatprep.subr.bf16.mxu0 0
        %4487 = vmatpush1.bf16.msra.mxu0 0
        %4488 = vmatprep.subr.bf16.mxu0 0
        %4489 = vmatpush1.bf16.msra.mxu0 0
        %4490 = vmatprep.subr.bf16.mxu0 0
        %4491 = vmatpush1.bf16.msra.mxu0 0
        %4492 = vmatprep.mubr.bf16.mxu0 0
        %4493 = vmatmul.mubr.bf16.gmra.mrb[0].mxu0 %v4410
        %v4494 = vpop.f32.mrb[0].mxu0
        %v4495 = vadd.f32 0.0, %v4494
        %v4496 = vpop.f32.mrb[0].mxu0
        %v4497 = vpop.f32.mrb[0].mxu0
        %v4498 = vadd.f32 0.0, %v4497
        %v4499 = vpop.f32.mrb[0].mxu0
        %4500 = vmatprep.mubr.bf16.mxu0 0
        %4501 = vmatmul.mubr.bf16.gmra.mrb[0].mxu0 %v4413
        %v4502 = vpop.f32.mrb[0].mxu0
        %v4503 = vadd.f32 0.0, %v4502
        %v4504 = vpop.f32.mrb[0].mxu0
        %v4505 = vpop.f32.mrb[0].mxu0
        %v4506 = vadd.f32 0.0, %v4505
        %v4507 = vpop.f32.mrb[0].mxu0
        %4508 = vmatprep.mubr.bf16.mxu0 0
        %4509 = vmatmul.mubr.bf16.gmra.mrb[0].mxu0 %v4416
        %v4510 = vpop.f32.mrb[0].mxu0
        %v4511 = vadd.f32 0.0, %v4510
        %v4512 = vpop.f32.mrb[0].mxu0
        %v4513 = vpop.f32.mrb[0].mxu0
        %v4514 = vadd.f32 0.0, %v4513
        %v4515 = vpop.f32.mrb[0].mxu0
        %4516 = vmatprep.mubr.bf16.mxu0 0
        %4517 = vmatmul.mubr.bf16.gmra.mrb[0].mxu0 %v4419
        %v4518 = vpop.f32.mrb[0].mxu0
        %v4519 = vadd.f32 0.0, %v4518
        %v4520 = vpop.f32.mrb[0].mxu0
        %v4521 = vpop.f32.mrb[0].mxu0
        %v4522 = vadd.f32 0.0, %v4521
        %v4523 = vpop.f32.mrb[0].mxu0
        %4524 = vmatprep.mubr.bf16.mxu0 0
        %4525 = vmatmul.mubr.bf16.gmra.mrb[0].mxu0 %v4422
        %v4526 = vpop.f32.mrb[0].mxu0
        %v4527 = vadd.f32 0.0, %v4526
        %v4528 = vpop.f32.mrb[0].mxu0
        %v4529 = vpop.f32.mrb[0].mxu0
        %v4530 = vadd.f32 0.0, %v4529
        %v4531 = vpop.f32.mrb[0].mxu0
        %4532 = vmatprep.mubr.bf16.mxu0 0
        %4533 = vmatmul.mubr.bf16.gmra.mrb[0].mxu0 %v4425
        %v4534 = vpop.f32.mrb[0].mxu0
        %v4535 = vadd.f32 0.0, %v4534
        %v4536 = vpop.f32.mrb[0].mxu0
        %v4537 = vpop.f32.mrb[0].mxu0
        %v4538 = vadd.f32 0.0, %v4537
        %v4539 = vpop.f32.mrb[0].mxu0
        %4540 = vmatprep.mubr.bf16.mxu0 0
        %4541 = vmatmul.mubr.bf16.gmra.mrb[0].mxu0 %v4428
        %v4542 = vpop.f32.mrb[0].mxu0
        %v4543 = vadd.f32 0.0, %v4542
        %v4544 = vpop.f32.mrb[0].mxu0
        %v4545 = vpop.f32.mrb[0].mxu0
        %v4546 = vadd.f32 0.0, %v4545
        %v4547 = vpop.f32.mrb[0].mxu0
        %4548 = vmatprep.mubr.bf16.mxu0 0
        %4549 = vmatmul.mubr.bf16.gmra.mrb[0].mxu0 %v4431
        %v4550 = vpop.f32.mrb[0].mxu0
        %v4551 = vadd.f32 0.0, %v4550
        %v4552 = vpop.f32.mrb[0].mxu0
        %v4553 = vpop.f32.mrb[0].mxu0
        %v4554 = vadd.f32 0.0, %v4553
        %v4555 = vpop.f32.mrb[0].mxu0
        %4556 = vmatprep.mubr.bf16.mxu0 0
        %4557 = vmatmul.mubr.bf16.gmra.mrb[0].mxu0 %v4434
        %v4558 = vpop.f32.mrb[0].mxu0
        %v4559 = vadd.f32 0.0, %v4558
        %v4560 = vpop.f32.mrb[0].mxu0
        %v4561 = vpop.f32.mrb[0].mxu0
        %v4562 = vadd.f32 0.0, %v4561
        %v4563 = vpop.f32.mrb[0].mxu0
        %4564 = vmatprep.mubr.bf16.mxu0 0
        %4565 = vmatmul.mubr.bf16.gmra.mrb[0].mxu0 %v4437
        %v4566 = vpop.f32.mrb[0].mxu0
        %v4567 = vadd.f32 0.0, %v4566
        %v4568 = vpop.f32.mrb[0].mxu0
        %v4569 = vpop.f32.mrb[0].mxu0
        %v4570 = vadd.f32 0.0, %v4569
        %v4571 = vpop.f32.mrb[0].mxu0
        %4572 = vmatprep.mubr.bf16.mxu0 0
        %4573 = vmatmul.mubr.bf16.gmra.mrb[0].mxu0 %v4440
        %v4574 = vpop.f32.mrb[0].mxu0
        %v4575 = vadd.f32 0.0, %v4574
        %v4576 = vpop.f32.mrb[0].mxu0
        %v4577 = vpop.f32.mrb[0].mxu0
        %v4578 = vadd.f32 0.0, %v4577
        %v4579 = vpop.f32.mrb[0].mxu0
        %4580 = vmatprep.mubr.bf16.mxu0 0
        %4581 = vmatmul.mubr.bf16.gmra.mrb[0].mxu0 %v4443
        %v4582 = vpop.f32.mrb[0].mxu0
        %v4583 = vadd.f32 0.0, %v4582
        %v4584 = vpop.f32.mrb[0].mxu0
        %v4585 = vpop.f32.mrb[0].mxu0
        %v4586 = vadd.f32 0.0, %v4585
        %v4587 = vpop.f32.mrb[0].mxu0
        %4588 = vmatprep.mubr.bf16.mxu0 0
        %4589 = vmatmul.mubr.bf16.gmra.mrb[0].mxu0 %v4446
        %v4590 = vpop.f32.mrb[0].mxu0
        %v4591 = vadd.f32 0.0, %v4590
        %v4592 = vpop.f32.mrb[0].mxu0
        %v4593 = vpop.f32.mrb[0].mxu0
        %v4594 = vadd.f32 0.0, %v4593
        %v4595 = vpop.f32.mrb[0].mxu0
        %4596 = vmatprep.mubr.bf16.mxu0 0
        %4597 = vmatmul.mubr.bf16.gmra.mrb[0].mxu0 %v4449
        %v4598 = vpop.f32.mrb[0].mxu0
        %v4599 = vadd.f32 0.0, %v4598
        %v4600 = vpop.f32.mrb[0].mxu0
        %v4601 = vpop.f32.mrb[0].mxu0
        %v4602 = vadd.f32 0.0, %v4601
        %v4603 = vpop.f32.mrb[0].mxu0
        %4604 = vmatprep.mubr.bf16.mxu0 0
        %4605 = vmatmul.mubr.bf16.gmra.mrb[0].mxu0 %v4452
        %v4606 = vpop.f32.mrb[0].mxu0
        %v4607 = vadd.f32 0.0, %v4606
        %v4608 = vpop.f32.mrb[0].mxu0
        %v4609 = vpop.f32.mrb[0].mxu0
        %v4610 = vadd.f32 0.0, %v4609
        %v4611 = vpop.f32.mrb[0].mxu0
        %4612 = vmatprep.mubr.bf16.mxu0 0
        %4613 = vmatmul.mubr.bf16.gmra.mrb[0].mxu0 %v4455
        %v4614 = vpop.f32.mrb[0].mxu0
        %v4615 = vadd.f32 0.0, %v4614
        %v4616 = vpop.f32.mrb[0].mxu0
        %v4617 = vpop.f32.mrb[0].mxu0
        %v4618 = vadd.f32 0.0, %v4617
        %v4619 = vpop.f32.mrb[0].mxu0
        %4620 = vdwg.mxu0
        %v4621 = vmax.f32 %v4495, 0.0
        %v4622 = vmax.f32 %v4498, 0.0
        %v4623 = vmax.f32 %v4503, 0.0
        %v4624 = vmax.f32 %v4506, 0.0
        %v4625 = vmax.f32 %v4511, 0.0
        %v4626 = vmax.f32 %v4514, 0.0
        %v4627 = vmax.f32 %v4519, 0.0
        %v4628 = vmax.f32 %v4522, 0.0
        %v4629 = vmax.f32 %v4527, 0.0
        %v4630 = vmax.f32 %v4530, 0.0
        %v4631 = vmax.f32 %v4535, 0.0
        %v4632 = vmax.f32 %v4538, 0.0
        %v4633 = vmax.f32 %v4543, 0.0
        %v4634 = vmax.f32 %v4546, 0.0
        %v4635 = vmax.f32 %v4551, 0.0
        %v4636 = vmax.f32 %v4554, 0.0
        %v4637 = vmax.f32 %v4559, 0.0
        %v4638 = vmax.f32 %v4562, 0.0
        %v4639 = vmax.f32 %v4567, 0.0
        %v4640 = vmax.f32 %v4570, 0.0
        %v4641 = vmax.f32 %v4575, 0.0
        %v4642 = vmax.f32 %v4578, 0.0
        %v4643 = vmax.f32 %v4583, 0.0
        %v4644 = vmax.f32 %v4586, 0.0
        %v4645 = vmax.f32 %v4591, 0.0
        %v4646 = vmax.f32 %v4594, 0.0
        %v4647 = vmax.f32 %v4599, 0.0
        %v4648 = vmax.f32 %v4602, 0.0
        %v4649 = vmax.f32 %v4607, 0.0
        %v4650 = vmax.f32 %v4610, 0.0
        %v4651 = vmax.f32 %v4615, 0.0
        %v4652 = vmax.f32 %v4618, 0.0
        %4653 = vst.msk [vmem:[%s849 + $0x1] sm:$0xff] %vm284, %v4621
        %4654 = vst.msk [vmem:[%s849 + $0x9] sm:$0xff] %vm284, %v4622
        %4655 = vst.msk [vmem:[%s849 + $0x19] sm:$0xff] %vm284, %v4623
        %4656 = vst.msk [vmem:[%s849 + $0x21] sm:$0xff] %vm284, %v4624
        %4657 = vst.msk [vmem:[%s849 + $0x31] sm:$0xff] %vm284, %v4625
        %4658 = vst.msk [vmem:[%s849 + $0x39] sm:$0xff] %vm284, %v4626
        %4659 = vst.msk [vmem:[%s849 + $0x49] sm:$0xff] %vm284, %v4627
        %4660 = vst.msk [vmem:[%s849 + $0x51] sm:$0xff] %vm284, %v4628
        %4661 = vst.msk [vmem:[%s849 + $0x61] sm:$0xff] %vm284, %v4629
        %4662 = vst.msk [vmem:[%s849 + $0x69] sm:$0xff] %vm284, %v4630
        %4663 = vst.msk [vmem:[%s849 + $0x79] sm:$0xff] %vm284, %v4631
        %4664 = vst.msk [vmem:[%s849 + $0x81] sm:$0xff] %vm284, %v4632
        %4665 = vst.msk [vmem:[%s849 + $0x91] sm:$0xff] %vm284, %v4633
        %4666 = vst.msk [vmem:[%s849 + $0x99] sm:$0xff] %vm284, %v4634
        %4667 = vst.msk [vmem:[%s849 + $0xa9] sm:$0xff] %vm284, %v4635
        %4668 = vst.msk [vmem:[%s849 + $0xb1] sm:$0xff] %vm284, %v4636
        %4669 = vst.msk [vmem:[%s849 + $0xc1] sm:$0xff] %vm284, %v4637
        %4670 = vst.msk [vmem:[%s849 + $0xc9] sm:$0xff] %vm284, %v4638
        %4671 = vst.msk [vmem:[%s849 + $0xd9] sm:$0xff] %vm284, %v4639
        %4672 = vst.msk [vmem:[%s849 + $0xe1] sm:$0xff] %vm284, %v4640
        %4673 = vst.msk [vmem:[%s849 + $0xf1] sm:$0xff] %vm284, %v4641
        %4674 = vst.msk [vmem:[%s849 + $0xf9] sm:$0xff] %vm284, %v4642
        %4675 = vst.msk [vmem:[%s849 + $0x109] sm:$0xff] %vm284, %v4643
        %4676 = vst.msk [vmem:[%s849 + $0x111] sm:$0xff] %vm284, %v4644
        %4677 = vst.msk [vmem:[%s849 + $0x121] sm:$0xff] %vm284, %v4645
        %4678 = vst.msk [vmem:[%s849 + $0x129] sm:$0xff] %vm284, %v4646
        %4679 = vst.msk [vmem:[%s849 + $0x139] sm:$0xff] %vm284, %v4647
        %4680 = vst.msk [vmem:[%s849 + $0x141] sm:$0xff] %vm284, %v4648
        %4681 = vst.msk [vmem:[%s849 + $0x151] sm:$0xff] %vm284, %v4649
        %4682 = vst.msk [vmem:[%s849 + $0x159] sm:$0xff] %vm284, %v4650
        %4683 = vst.msk [vmem:[%s849 + $0x169] sm:$0xff] %vm284, %v4651
        %4684 = vst.msk [vmem:[%s849 + $0x171] sm:$0xff] %vm284, %v4652
        %v4685 = vld [vmem:[#allocation2] sm:$0xff]
        %v4686 = vld [vmem:[#allocation2 + $0x8] sm:$0xff]
        %v4687 = vld [vmem:[#allocation2 + $0x18] sm:$0xff]
        %v4688 = vld [vmem:[#allocation2 + $0x20] sm:$0xff]
        %v4689 = vld [vmem:[#allocation2 + $0x30] sm:$0xff]
        %v4690 = vld [vmem:[#allocation2 + $0x38] sm:$0xff]
        %v4691 = vld [vmem:[#allocation2 + $0x48] sm:$0xff]
        %v4692 = vld [vmem:[#allocation2 + $0x50] sm:$0xff]
        %v4693 = vld [vmem:[#allocation2 + $0x60] sm:$0xff]
        %v4694 = vld [vmem:[#allocation2 + $0x68] sm:$0xff]
        %v4695 = vld [vmem:[#allocation2 + $0x78] sm:$0xff]
        %v4696 = vld [vmem:[#allocation2 + $0x80] sm:$0xff]
        %v4697 = vld [vmem:[#allocation2 + $0x90] sm:$0xff]
        %v4698 = vld [vmem:[#allocation2 + $0x98] sm:$0xff]
        %v4699 = vld [vmem:[#allocation2 + $0xa8] sm:$0xff]
        %v4700 = vld [vmem:[#allocation2 + $0xb0] sm:$0xff]
        %v4701 = vld [vmem:[#allocation2 + $0xc0] sm:$0xff]
        %v4702 = vld [vmem:[#allocation2 + $0xc8] sm:$0xff]
        %v4703 = vld [vmem:[#allocation2 + $0xd8] sm:$0xff]
        %v4704 = vld [vmem:[#allocation2 + $0xe0] sm:$0xff]
        %v4705 = vld [vmem:[#allocation2 + $0xf0] sm:$0xff]
        %v4706 = vld [vmem:[#allocation2 + $0xf8] sm:$0xff]
        %v4707 = vld [vmem:[#allocation2 + $0x108] sm:$0xff]
        %v4708 = vld [vmem:[#allocation2 + $0x110] sm:$0xff]
        %v4709 = vld [vmem:[#allocation2 + $0x120] sm:$0xff]
        %v4710 = vld [vmem:[#allocation2 + $0x128] sm:$0xff]
        %v4711 = vld [vmem:[#allocation2 + $0x138] sm:$0xff]
        %v4712 = vld [vmem:[#allocation2 + $0x140] sm:$0xff]
        %v4713 = vld [vmem:[#allocation2 + $0x150] sm:$0xff]
        %v4714 = vld [vmem:[#allocation2 + $0x158] sm:$0xff]
        %v4715 = vld [vmem:[#allocation2 + $0x168] sm:$0xff]
        %v4716 = vld [vmem:[#allocation2 + $0x170] sm:$0xff]
        %v4717 = vld [vmem:[#allocation2 + $0x1] sm:$0xff]
        %v4718 = vld [vmem:[#allocation2 + $0x9] sm:$0xff]
        %v4719 = vld [vmem:[#allocation2 + $0x19] sm:$0xff]
        %v4720 = vld [vmem:[#allocation2 + $0x21] sm:$0xff]
        %v4721 = vld [vmem:[#allocation2 + $0x31] sm:$0xff]
        %v4722 = vld [vmem:[#allocation2 + $0x39] sm:$0xff]
        %v4723 = vld [vmem:[#allocation2 + $0x49] sm:$0xff]
        %v4724 = vld [vmem:[#allocation2 + $0x51] sm:$0xff]
        %v4725 = vld [vmem:[#allocation2 + $0x61] sm:$0xff]
        %v4726 = vld [vmem:[#allocation2 + $0x69] sm:$0xff]
        %v4727 = vld [vmem:[#allocation2 + $0x79] sm:$0xff]
        %v4728 = vld [vmem:[#allocation2 + $0x81] sm:$0xff]
        %v4729 = vld [vmem:[#allocation2 + $0x91] sm:$0xff]
        %v4730 = vld [vmem:[#allocation2 + $0x99] sm:$0xff]
        %v4731 = vld [vmem:[#allocation2 + $0xa9] sm:$0xff]
        %v4732 = vld [vmem:[#allocation2 + $0xb1] sm:$0xff]
        %v4733 = vld [vmem:[#allocation2 + $0xc1] sm:$0xff]
        %v4734 = vld [vmem:[#allocation2 + $0xc9] sm:$0xff]
        %v4735 = vld [vmem:[#allocation2 + $0xd9] sm:$0xff]
        %v4736 = vld [vmem:[#allocation2 + $0xe1] sm:$0xff]
        %v4737 = vld [vmem:[#allocation2 + $0xf1] sm:$0xff]
        %v4738 = vld [vmem:[#allocation2 + $0xf9] sm:$0xff]
        %v4739 = vld [vmem:[#allocation2 + $0x109] sm:$0xff]
        %v4740 = vld [vmem:[#allocation2 + $0x111] sm:$0xff]
        %v4741 = vld [vmem:[#allocation2 + $0x121] sm:$0xff]
        %v4742 = vld [vmem:[#allocation2 + $0x129] sm:$0xff]
        %v4743 = vld [vmem:[#allocation2 + $0x139] sm:$0xff]
        %v4744 = vld [vmem:[#allocation2 + $0x141] sm:$0xff]
        %v4745 = vld [vmem:[#allocation2 + $0x151] sm:$0xff]
        %v4746 = vld [vmem:[#allocation2 + $0x159] sm:$0xff]
        %v4747 = vld [vmem:[#allocation2 + $0x169] sm:$0xff]
        %v4748 = vld [vmem:[#allocation2 + $0x171] sm:$0xff]
        %v4749 = vld [vmem:[#allocation2 + $0x2] sm:$0xff]
        %v4750 = vld [vmem:[#allocation2 + $0xa] sm:$0xff]
        %v4751 = vld [vmem:[#allocation2 + $0x1a] sm:$0xff]
        %v4752 = vld [vmem:[#allocation2 + $0x22] sm:$0xff]
        %v4753 = vld [vmem:[#allocation2 + $0x32] sm:$0xff]
        %v4754 = vld [vmem:[#allocation2 + $0x3a] sm:$0xff]
        %v4755 = vld [vmem:[#allocation2 + $0x4a] sm:$0xff]
        %v4756 = vld [vmem:[#allocation2 + $0x52] sm:$0xff]
        %v4757 = vld [vmem:[#allocation2 + $0x62] sm:$0xff]
        %v4758 = vld [vmem:[#allocation2 + $0x6a] sm:$0xff]
        %v4759 = vld [vmem:[#allocation2 + $0x7a] sm:$0xff]
        %v4760 = vld [vmem:[#allocation2 + $0x82] sm:$0xff]
        %v4761 = vld [vmem:[#allocation2 + $0x92] sm:$0xff]
        %v4762 = vld [vmem:[#allocation2 + $0x9a] sm:$0xff]
        %v4763 = vld [vmem:[#allocation2 + $0xaa] sm:$0xff]
        %v4764 = vld [vmem:[#allocation2 + $0xb2] sm:$0xff]
        %v4765 = vld [vmem:[#allocation2 + $0xc2] sm:$0xff]
        %v4766 = vld [vmem:[#allocation2 + $0xca] sm:$0xff]
        %v4767 = vld [vmem:[#allocation2 + $0xda] sm:$0xff]
        %v4768 = vld [vmem:[#allocation2 + $0xe2] sm:$0xff]
        %v4769 = vld [vmem:[#allocation2 + $0xf2] sm:$0xff]
        %v4770 = vld [vmem:[#allocation2 + $0xfa] sm:$0xff]
        %v4771 = vld [vmem:[#allocation2 + $0x10a] sm:$0xff]
        %v4772 = vld [vmem:[#allocation2 + $0x112] sm:$0xff]
        %v4773 = vld [vmem:[#allocation2 + $0x122] sm:$0xff]
        %v4774 = vld [vmem:[#allocation2 + $0x12a] sm:$0xff]
        %v4775 = vld [vmem:[#allocation2 + $0x13a] sm:$0xff]
        %v4776 = vld [vmem:[#allocation2 + $0x142] sm:$0xff]
        %v4777 = vld [vmem:[#allocation2 + $0x152] sm:$0xff]
        %v4778 = vld [vmem:[#allocation2 + $0x15a] sm:$0xff]
        %v4779 = vld [vmem:[#allocation2 + $0x16a] sm:$0xff]
        %v4780 = vld [vmem:[#allocation2 + $0x172] sm:$0xff]
        %v4781 = vld [vmem:[%s849] sm:$0xff]
        %v4782 = vld [vmem:[%s849 + $0x8] sm:$0xff]
        %v4783 = vld [vmem:[%s849 + $0x18] sm:$0xff]
        %v4784 = vld [vmem:[%s849 + $0x20] sm:$0xff]
        %v4785 = vld [vmem:[%s849 + $0x30] sm:$0xff]
        %v4786 = vld [vmem:[%s849 + $0x38] sm:$0xff]
        %v4787 = vld [vmem:[%s849 + $0x48] sm:$0xff]
        %v4788 = vld [vmem:[%s849 + $0x50] sm:$0xff]
        %v4789 = vld [vmem:[%s849 + $0x60] sm:$0xff]
        %v4790 = vld [vmem:[%s849 + $0x68] sm:$0xff]
        %v4791 = vld [vmem:[%s849 + $0x78] sm:$0xff]
        %v4792 = vld [vmem:[%s849 + $0x80] sm:$0xff]
        %v4793 = vld [vmem:[%s849 + $0x90] sm:$0xff]
        %v4794 = vld [vmem:[%s849 + $0x98] sm:$0xff]
        %v4795 = vld [vmem:[%s849 + $0xa8] sm:$0xff]
        %v4796 = vld [vmem:[%s849 + $0xb0] sm:$0xff]
        %v4797 = vld [vmem:[%s849 + $0xc0] sm:$0xff]
        %v4798 = vld [vmem:[%s849 + $0xc8] sm:$0xff]
        %v4799 = vld [vmem:[%s849 + $0xd8] sm:$0xff]
        %v4800 = vld [vmem:[%s849 + $0xe0] sm:$0xff]
        %v4801 = vld [vmem:[%s849 + $0xf0] sm:$0xff]
        %v4802 = vld [vmem:[%s849 + $0xf8] sm:$0xff]
        %v4803 = vld [vmem:[%s849 + $0x108] sm:$0xff]
        %v4804 = vld [vmem:[%s849 + $0x110] sm:$0xff]
        %v4805 = vld [vmem:[%s849 + $0x120] sm:$0xff]
        %v4806 = vld [vmem:[%s849 + $0x128] sm:$0xff]
        %v4807 = vld [vmem:[%s849 + $0x138] sm:$0xff]
        %v4808 = vld [vmem:[%s849 + $0x140] sm:$0xff]
        %v4809 = vld [vmem:[%s849 + $0x150] sm:$0xff]
        %v4810 = vld [vmem:[%s849 + $0x158] sm:$0xff]
        %v4811 = vld [vmem:[%s849 + $0x168] sm:$0xff]
        %v4812 = vld [vmem:[%s849 + $0x170] sm:$0xff]
        %v4813 = vld [vmem:[%s849 + $0x1] sm:$0xff]
        %v4814 = vld [vmem:[%s849 + $0x9] sm:$0xff]
        %v4815 = vld [vmem:[%s849 + $0x19] sm:$0xff]
        %v4816 = vld [vmem:[%s849 + $0x21] sm:$0xff]
        %v4817 = vld [vmem:[%s849 + $0x31] sm:$0xff]
        %v4818 = vld [vmem:[%s849 + $0x39] sm:$0xff]
        %v4819 = vld [vmem:[%s849 + $0x49] sm:$0xff]
        %v4820 = vld [vmem:[%s849 + $0x51] sm:$0xff]
        %v4821 = vld [vmem:[%s849 + $0x61] sm:$0xff]
        %v4822 = vld [vmem:[%s849 + $0x69] sm:$0xff]
        %v4823 = vld [vmem:[%s849 + $0x79] sm:$0xff]
        %v4824 = vld [vmem:[%s849 + $0x81] sm:$0xff]
        %v4825 = vld [vmem:[%s849 + $0x91] sm:$0xff]
        %v4826 = vld [vmem:[%s849 + $0x99] sm:$0xff]
        %v4827 = vld [vmem:[%s849 + $0xa9] sm:$0xff]
        %v4828 = vld [vmem:[%s849 + $0xb1] sm:$0xff]
        %v4829 = vld [vmem:[%s849 + $0xc1] sm:$0xff]
        %v4830 = vld [vmem:[%s849 + $0xc9] sm:$0xff]
        %v4831 = vld [vmem:[%s849 + $0xd9] sm:$0xff]
        %v4832 = vld [vmem:[%s849 + $0xe1] sm:$0xff]
        %v4833 = vld [vmem:[%s849 + $0xf1] sm:$0xff]
        %v4834 = vld [vmem:[%s849 + $0xf9] sm:$0xff]
        %v4835 = vld [vmem:[%s849 + $0x109] sm:$0xff]
        %v4836 = vld [vmem:[%s849 + $0x111] sm:$0xff]
        %v4837 = vld [vmem:[%s849 + $0x121] sm:$0xff]
        %v4838 = vld [vmem:[%s849 + $0x129] sm:$0xff]
        %v4839 = vld [vmem:[%s849 + $0x139] sm:$0xff]
        %v4840 = vld [vmem:[%s849 + $0x141] sm:$0xff]
        %v4841 = vld [vmem:[%s849 + $0x151] sm:$0xff]
        %v4842 = vld [vmem:[%s849 + $0x159] sm:$0xff]
        %v4843 = vld [vmem:[%s849 + $0x169] sm:$0xff]
        %v4844 = vld [vmem:[%s849 + $0x171] sm:$0xff]
        %v4845 = vld [vmem:[%s849 + $0x2] sm:$0xff]
        %v4846 = vld [vmem:[%s849 + $0xa] sm:$0xff]
        %v4847 = vld [vmem:[%s849 + $0x1a] sm:$0xff]
        %v4848 = vld [vmem:[%s849 + $0x22] sm:$0xff]
        %v4849 = vld [vmem:[%s849 + $0x32] sm:$0xff]
        %v4850 = vld [vmem:[%s849 + $0x3a] sm:$0xff]
        %v4851 = vld [vmem:[%s849 + $0x4a] sm:$0xff]
        %v4852 = vld [vmem:[%s849 + $0x52] sm:$0xff]
        %v4853 = vld [vmem:[%s849 + $0x62] sm:$0xff]
        %v4854 = vld [vmem:[%s849 + $0x6a] sm:$0xff]
        %v4855 = vld [vmem:[%s849 + $0x7a] sm:$0xff]
        %v4856 = vld [vmem:[%s849 + $0x82] sm:$0xff]
        %v4857 = vld [vmem:[%s849 + $0x92] sm:$0xff]
        %v4858 = vld [vmem:[%s849 + $0x9a] sm:$0xff]
        %v4859 = vld [vmem:[%s849 + $0xaa] sm:$0xff]
        %v4860 = vld [vmem:[%s849 + $0xb2] sm:$0xff]
        %v4861 = vld [vmem:[%s849 + $0xc2] sm:$0xff]
        %v4862 = vld [vmem:[%s849 + $0xca] sm:$0xff]
        %v4863 = vld [vmem:[%s849 + $0xda] sm:$0xff]
        %v4864 = vld [vmem:[%s849 + $0xe2] sm:$0xff]
        %v4865 = vld [vmem:[%s849 + $0xf2] sm:$0xff]
        %v4866 = vld [vmem:[%s849 + $0xfa] sm:$0xff]
        %v4867 = vld [vmem:[%s849 + $0x10a] sm:$0xff]
        %v4868 = vld [vmem:[%s849 + $0x112] sm:$0xff]
        %v4869 = vld [vmem:[%s849 + $0x122] sm:$0xff]
        %v4870 = vld [vmem:[%s849 + $0x12a] sm:$0xff]
        %v4871 = vld [vmem:[%s849 + $0x13a] sm:$0xff]
        %v4872 = vld [vmem:[%s849 + $0x142] sm:$0xff]
        %v4873 = vld [vmem:[%s849 + $0x152] sm:$0xff]
        %v4874 = vld [vmem:[%s849 + $0x15a] sm:$0xff]
        %v4875 = vld [vmem:[%s849 + $0x16a] sm:$0xff]
        %v4876 = vld [vmem:[%s849 + $0x172] sm:$0xff]
        %v4877 = vld [vmem:[%s1074] sm:$0xff]
        %v4878 = vld [vmem:[%s1074 + $0x8] sm:$0xff]
        %v4879 = vld [vmem:[%s1074 + $0x18] sm:$0xff]
        %v4880 = vld [vmem:[%s1074 + $0x20] sm:$0xff]
        %v4881 = vld [vmem:[%s1074 + $0x30] sm:$0xff]
        %v4882 = vld [vmem:[%s1074 + $0x38] sm:$0xff]
        %v4883 = vld [vmem:[%s1074 + $0x48] sm:$0xff]
        %v4884 = vld [vmem:[%s1074 + $0x50] sm:$0xff]
        %v4885 = vld [vmem:[%s1074 + $0x60] sm:$0xff]
        %v4886 = vld [vmem:[%s1074 + $0x68] sm:$0xff]
        %v4887 = vld [vmem:[%s1074 + $0x78] sm:$0xff]
        %v4888 = vld [vmem:[%s1074 + $0x80] sm:$0xff]
        %v4889 = vld [vmem:[%s1074 + $0x90] sm:$0xff]
        %v4890 = vld [vmem:[%s1074 + $0x98] sm:$0xff]
        %v4891 = vld [vmem:[%s1074 + $0xa8] sm:$0xff]
        %v4892 = vld [vmem:[%s1074 + $0xb0] sm:$0xff]
        %v4893 = vld [vmem:[%s1074 + $0xc0] sm:$0xff]
        %v4894 = vld [vmem:[%s1074 + $0xc8] sm:$0xff]
        %v4895 = vld [vmem:[%s1074 + $0xd8] sm:$0xff]
        %v4896 = vld [vmem:[%s1074 + $0xe0] sm:$0xff]
        %v4897 = vld [vmem:[%s1074 + $0xf0] sm:$0xff]
        %v4898 = vld [vmem:[%s1074 + $0xf8] sm:$0xff]
        %v4899 = vld [vmem:[%s1074 + $0x108] sm:$0xff]
        %v4900 = vld [vmem:[%s1074 + $0x110] sm:$0xff]
        %v4901 = vld [vmem:[%s1074 + $0x120] sm:$0xff]
        %v4902 = vld [vmem:[%s1074 + $0x128] sm:$0xff]
        %v4903 = vld [vmem:[%s1074 + $0x138] sm:$0xff]
        %v4904 = vld [vmem:[%s1074 + $0x140] sm:$0xff]
        %v4905 = vld [vmem:[%s1074 + $0x150] sm:$0xff]
        %v4906 = vld [vmem:[%s1074 + $0x158] sm:$0xff]
        %v4907 = vld [vmem:[%s1074 + $0x168] sm:$0xff]
        %v4908 = vld [vmem:[%s1074 + $0x170] sm:$0xff]
        %v4909 = vld [vmem:[%s1074 + $0x1] sm:$0xff]
        %v4910 = vld [vmem:[%s1074 + $0x9] sm:$0xff]
        %v4911 = vld [vmem:[%s1074 + $0x19] sm:$0xff]
        %v4912 = vld [vmem:[%s1074 + $0x21] sm:$0xff]
        %v4913 = vld [vmem:[%s1074 + $0x31] sm:$0xff]
        %v4914 = vld [vmem:[%s1074 + $0x39] sm:$0xff]
        %v4915 = vld [vmem:[%s1074 + $0x49] sm:$0xff]
        %v4916 = vld [vmem:[%s1074 + $0x51] sm:$0xff]
        %v4917 = vld [vmem:[%s1074 + $0x61] sm:$0xff]
        %v4918 = vld [vmem:[%s1074 + $0x69] sm:$0xff]
        %v4919 = vld [vmem:[%s1074 + $0x79] sm:$0xff]
        %v4920 = vld [vmem:[%s1074 + $0x81] sm:$0xff]
        %v4921 = vld [vmem:[%s1074 + $0x91] sm:$0xff]
        %v4922 = vld [vmem:[%s1074 + $0x99] sm:$0xff]
        %v4923 = vld [vmem:[%s1074 + $0xa9] sm:$0xff]
        %v4924 = vld [vmem:[%s1074 + $0xb1] sm:$0xff]
        %v4925 = vld [vmem:[%s1074 + $0xc1] sm:$0xff]
        %v4926 = vld [vmem:[%s1074 + $0xc9] sm:$0xff]
        %v4927 = vld [vmem:[%s1074 + $0xd9] sm:$0xff]
        %v4928 = vld [vmem:[%s1074 + $0xe1] sm:$0xff]
        %v4929 = vld [vmem:[%s1074 + $0xf1] sm:$0xff]
        %v4930 = vld [vmem:[%s1074 + $0xf9] sm:$0xff]
        %v4931 = vld [vmem:[%s1074 + $0x109] sm:$0xff]
        %v4932 = vld [vmem:[%s1074 + $0x111] sm:$0xff]
        %v4933 = vld [vmem:[%s1074 + $0x121] sm:$0xff]
        %v4934 = vld [vmem:[%s1074 + $0x129] sm:$0xff]
        %v4935 = vld [vmem:[%s1074 + $0x139] sm:$0xff]
        %v4936 = vld [vmem:[%s1074 + $0x141] sm:$0xff]
        %v4937 = vld [vmem:[%s1074 + $0x151] sm:$0xff]
        %v4938 = vld [vmem:[%s1074 + $0x159] sm:$0xff]
        %v4939 = vld [vmem:[%s1074 + $0x169] sm:$0xff]
        %v4940 = vld [vmem:[%s1074 + $0x171] sm:$0xff]
        %v4941 = vld [vmem:[%s1074 + $0x2] sm:$0xff]
        %v4942 = vld [vmem:[%s1074 + $0xa] sm:$0xff]
        %v4943 = vld [vmem:[%s1074 + $0x1a] sm:$0xff]
        %v4944 = vld [vmem:[%s1074 + $0x22] sm:$0xff]
        %v4945 = vld [vmem:[%s1074 + $0x32] sm:$0xff]
        %v4946 = vld [vmem:[%s1074 + $0x3a] sm:$0xff]
        %v4947 = vld [vmem:[%s1074 + $0x4a] sm:$0xff]
        %v4948 = vld [vmem:[%s1074 + $0x52] sm:$0xff]
        %v4949 = vld [vmem:[%s1074 + $0x62] sm:$0xff]
        %v4950 = vld [vmem:[%s1074 + $0x6a] sm:$0xff]
        %v4951 = vld [vmem:[%s1074 + $0x7a] sm:$0xff]
        %v4952 = vld [vmem:[%s1074 + $0x82] sm:$0xff]
        %v4953 = vld [vmem:[%s1074 + $0x92] sm:$0xff]
        %v4954 = vld [vmem:[%s1074 + $0x9a] sm:$0xff]
        %v4955 = vld [vmem:[%s1074 + $0xaa] sm:$0xff]
        %v4956 = vld [vmem:[%s1074 + $0xb2] sm:$0xff]
        %v4957 = vld [vmem:[%s1074 + $0xc2] sm:$0xff]
        %v4958 = vld [vmem:[%s1074 + $0xca] sm:$0xff]
        %v4959 = vld [vmem:[%s1074 + $0xda] sm:$0xff]
        %v4960 = vld [vmem:[%s1074 + $0xe2] sm:$0xff]
        %v4961 = vld [vmem:[%s1074 + $0xf2] sm:$0xff]
        %v4962 = vld [vmem:[%s1074 + $0xfa] sm:$0xff]
        %v4963 = vld [vmem:[%s1074 + $0x10a] sm:$0xff]
        %v4964 = vld [vmem:[%s1074 + $0x112] sm:$0xff]
        %v4965 = vld [vmem:[%s1074 + $0x122] sm:$0xff]
        %v4966 = vld [vmem:[%s1074 + $0x12a] sm:$0xff]
        %v4967 = vld [vmem:[%s1074 + $0x13a] sm:$0xff]
        %v4968 = vld [vmem:[%s1074 + $0x142] sm:$0xff]
        %v4969 = vld [vmem:[%s1074 + $0x152] sm:$0xff]
        %v4970 = vld [vmem:[%s1074 + $0x15a] sm:$0xff]
        %v4971 = vld [vmem:[%s1074 + $0x16a] sm:$0xff]
        %v4972 = vld [vmem:[%s1074 + $0x172] sm:$0xff]
        %5005 = vrot.lane.b32.xlu0 %v4717, 8
        %v5006 = vpop.permute.xlu0 %5005
        %5007 = vrot.lane.b32.xlu0 %v4718, 8
        %v5008 = vpop.permute.xlu0 %5007
        %5009 = vrot.lane.b32.xlu0 %v4719, 8
        %v5010 = vpop.permute.xlu0 %5009
        %5011 = vrot.lane.b32.xlu0 %v4720, 8
        %v5012 = vpop.permute.xlu0 %5011
        %5013 = vrot.lane.b32.xlu0 %v4721, 8
        %v5014 = vpop.permute.xlu0 %5013
        %5015 = vrot.lane.b32.xlu0 %v4722, 8
        %v5016 = vpop.permute.xlu0 %5015
        %5017 = vrot.lane.b32.xlu0 %v4723, 8
        %v5018 = vpop.permute.xlu0 %5017
        %5019 = vrot.lane.b32.xlu0 %v4724, 8
        %v5020 = vpop.permute.xlu0 %5019
        %5021 = vrot.lane.b32.xlu0 %v4725, 8
        %v5022 = vpop.permute.xlu0 %5021
        %5023 = vrot.lane.b32.xlu0 %v4726, 8
        %v5024 = vpop.permute.xlu0 %5023
        %5025 = vrot.lane.b32.xlu0 %v4727, 8
        %v5026 = vpop.permute.xlu0 %5025
        %5027 = vrot.lane.b32.xlu0 %v4728, 8
        %v5028 = vpop.permute.xlu0 %5027
        %5029 = vrot.lane.b32.xlu0 %v4729, 8
        %v5030 = vpop.permute.xlu0 %5029
        %5031 = vrot.lane.b32.xlu0 %v4730, 8
        %v5032 = vpop.permute.xlu0 %5031
        %5033 = vrot.lane.b32.xlu0 %v4731, 8
        %v5034 = vpop.permute.xlu0 %5033
        %5035 = vrot.lane.b32.xlu0 %v4732, 8
        %v5036 = vpop.permute.xlu0 %5035
        %5037 = vrot.lane.b32.xlu0 %v4733, 8
        %v5038 = vpop.permute.xlu0 %5037
        %5039 = vrot.lane.b32.xlu0 %v4734, 8
        %v5040 = vpop.permute.xlu0 %5039
        %5041 = vrot.lane.b32.xlu0 %v4735, 8
        %v5042 = vpop.permute.xlu0 %5041
        %5043 = vrot.lane.b32.xlu0 %v4736, 8
        %v5044 = vpop.permute.xlu0 %5043
        %5045 = vrot.lane.b32.xlu0 %v4737, 8
        %v5046 = vpop.permute.xlu0 %5045
        %5047 = vrot.lane.b32.xlu0 %v4738, 8
        %v5048 = vpop.permute.xlu0 %5047
        %5049 = vrot.lane.b32.xlu0 %v4739, 8
        %v5050 = vpop.permute.xlu0 %5049
        %5051 = vrot.lane.b32.xlu0 %v4740, 8
        %v5052 = vpop.permute.xlu0 %5051
        %5053 = vrot.lane.b32.xlu0 %v4741, 8
        %v5054 = vpop.permute.xlu0 %5053
        %5055 = vrot.lane.b32.xlu0 %v4742, 8
        %v5056 = vpop.permute.xlu0 %5055
        %5057 = vrot.lane.b32.xlu0 %v4743, 8
        %v5058 = vpop.permute.xlu0 %5057
        %5059 = vrot.lane.b32.xlu0 %v4744, 8
        %v5060 = vpop.permute.xlu0 %5059
        %5061 = vrot.lane.b32.xlu0 %v4745, 8
        %v5062 = vpop.permute.xlu0 %5061
        %5063 = vrot.lane.b32.xlu0 %v4746, 8
        %v5064 = vpop.permute.xlu0 %5063
        %5065 = vrot.lane.b32.xlu0 %v4747, 8
        %v5066 = vpop.permute.xlu0 %5065
        %5067 = vrot.lane.b32.xlu0 %v4748, 8
        %v5068 = vpop.permute.xlu0 %5067
        %5133 = vrot.lane.b32.xlu0 %v4749, 16
        %v5134 = vpop.permute.xlu0 %5133
        %5135 = vrot.lane.b32.xlu0 %v4750, 16
        %v5136 = vpop.permute.xlu0 %5135
        %5137 = vrot.lane.b32.xlu0 %v4751, 16
        %v5138 = vpop.permute.xlu0 %5137
        %5139 = vrot.lane.b32.xlu0 %v4752, 16
        %v5140 = vpop.permute.xlu0 %5139
        %5141 = vrot.lane.b32.xlu0 %v4753, 16
        %v5142 = vpop.permute.xlu0 %5141
        %5143 = vrot.lane.b32.xlu0 %v4754, 16
        %v5144 = vpop.permute.xlu0 %5143
        %5145 = vrot.lane.b32.xlu0 %v4755, 16
        %v5146 = vpop.permute.xlu0 %5145
        %5147 = vrot.lane.b32.xlu0 %v4756, 16
        %v5148 = vpop.permute.xlu0 %5147
        %5149 = vrot.lane.b32.xlu0 %v4757, 16
        %v5150 = vpop.permute.xlu0 %5149
        %5151 = vrot.lane.b32.xlu0 %v4758, 16
        %v5152 = vpop.permute.xlu0 %5151
        %5153 = vrot.lane.b32.xlu0 %v4759, 16
        %v5154 = vpop.permute.xlu0 %5153
        %5155 = vrot.lane.b32.xlu0 %v4760, 16
        %v5156 = vpop.permute.xlu0 %5155
        %5157 = vrot.lane.b32.xlu0 %v4761, 16
        %v5158 = vpop.permute.xlu0 %5157
        %5159 = vrot.lane.b32.xlu0 %v4762, 16
        %v5160 = vpop.permute.xlu0 %5159
        %5161 = vrot.lane.b32.xlu0 %v4763, 16
        %v5162 = vpop.permute.xlu0 %5161
        %5163 = vrot.lane.b32.xlu0 %v4764, 16
        %v5164 = vpop.permute.xlu0 %5163
        %5165 = vrot.lane.b32.xlu0 %v4765, 16
        %v5166 = vpop.permute.xlu0 %5165
        %5167 = vrot.lane.b32.xlu0 %v4766, 16
        %v5168 = vpop.permute.xlu0 %5167
        %5169 = vrot.lane.b32.xlu0 %v4767, 16
        %v5170 = vpop.permute.xlu0 %5169
        %5171 = vrot.lane.b32.xlu0 %v4768, 16
        %v5172 = vpop.permute.xlu0 %5171
        %5173 = vrot.lane.b32.xlu0 %v4769, 16
        %v5174 = vpop.permute.xlu0 %5173
        %5175 = vrot.lane.b32.xlu0 %v4770, 16
        %v5176 = vpop.permute.xlu0 %5175
        %5177 = vrot.lane.b32.xlu0 %v4771, 16
        %v5178 = vpop.permute.xlu0 %5177
        %5179 = vrot.lane.b32.xlu0 %v4772, 16
        %v5180 = vpop.permute.xlu0 %5179
        %5181 = vrot.lane.b32.xlu0 %v4773, 16
        %v5182 = vpop.permute.xlu0 %5181
        %5183 = vrot.lane.b32.xlu0 %v4774, 16
        %v5184 = vpop.permute.xlu0 %5183
        %5185 = vrot.lane.b32.xlu0 %v4775, 16
        %v5186 = vpop.permute.xlu0 %5185
        %5187 = vrot.lane.b32.xlu0 %v4776, 16
        %v5188 = vpop.permute.xlu0 %5187
        %5189 = vrot.lane.b32.xlu0 %v4777, 16
        %v5190 = vpop.permute.xlu0 %5189
        %5191 = vrot.lane.b32.xlu0 %v4778, 16
        %v5192 = vpop.permute.xlu0 %5191
        %5193 = vrot.lane.b32.xlu0 %v4779, 16
        %v5194 = vpop.permute.xlu0 %5193
        %5195 = vrot.lane.b32.xlu0 %v4780, 16
        %v5196 = vpop.permute.xlu0 %5195
        %5261 = vrot.lane.b32.xlu0 %v4781, 24
        %v5262 = vpop.permute.xlu0 %5261
        %5263 = vrot.lane.b32.xlu0 %v4782, 24
        %v5264 = vpop.permute.xlu0 %5263
        %5265 = vrot.lane.b32.xlu0 %v4783, 24
        %v5266 = vpop.permute.xlu0 %5265
        %5267 = vrot.lane.b32.xlu0 %v4784, 24
        %v5268 = vpop.permute.xlu0 %5267
        %5269 = vrot.lane.b32.xlu0 %v4785, 24
        %v5270 = vpop.permute.xlu0 %5269
        %5271 = vrot.lane.b32.xlu0 %v4786, 24
        %v5272 = vpop.permute.xlu0 %5271
        %5273 = vrot.lane.b32.xlu0 %v4787, 24
        %v5274 = vpop.permute.xlu0 %5273
        %5275 = vrot.lane.b32.xlu0 %v4788, 24
        %v5276 = vpop.permute.xlu0 %5275
        %5277 = vrot.lane.b32.xlu0 %v4789, 24
        %v5278 = vpop.permute.xlu0 %5277
        %5279 = vrot.lane.b32.xlu0 %v4790, 24
        %v5280 = vpop.permute.xlu0 %5279
        %5281 = vrot.lane.b32.xlu0 %v4791, 24
        %v5282 = vpop.permute.xlu0 %5281
        %5283 = vrot.lane.b32.xlu0 %v4792, 24
        %v5284 = vpop.permute.xlu0 %5283
        %5285 = vrot.lane.b32.xlu0 %v4793, 24
        %v5286 = vpop.permute.xlu0 %5285
        %5287 = vrot.lane.b32.xlu0 %v4794, 24
        %v5288 = vpop.permute.xlu0 %5287
        %5289 = vrot.lane.b32.xlu0 %v4795, 24
        %v5290 = vpop.permute.xlu0 %5289
        %5291 = vrot.lane.b32.xlu0 %v4796, 24
        %v5292 = vpop.permute.xlu0 %5291
        %5293 = vrot.lane.b32.xlu0 %v4797, 24
        %v5294 = vpop.permute.xlu0 %5293
        %5295 = vrot.lane.b32.xlu0 %v4798, 24
        %v5296 = vpop.permute.xlu0 %5295
        %5297 = vrot.lane.b32.xlu0 %v4799, 24
        %v5298 = vpop.permute.xlu0 %5297
        %5299 = vrot.lane.b32.xlu0 %v4800, 24
        %v5300 = vpop.permute.xlu0 %5299
        %5301 = vrot.lane.b32.xlu0 %v4801, 24
        %v5302 = vpop.permute.xlu0 %5301
        %5303 = vrot.lane.b32.xlu0 %v4802, 24
        %v5304 = vpop.permute.xlu0 %5303
        %5305 = vrot.lane.b32.xlu0 %v4803, 24
        %v5306 = vpop.permute.xlu0 %5305
        %5307 = vrot.lane.b32.xlu0 %v4804, 24
        %v5308 = vpop.permute.xlu0 %5307
        %5309 = vrot.lane.b32.xlu0 %v4805, 24
        %v5310 = vpop.permute.xlu0 %5309
        %5311 = vrot.lane.b32.xlu0 %v4806, 24
        %v5312 = vpop.permute.xlu0 %5311
        %5313 = vrot.lane.b32.xlu0 %v4807, 24
        %v5314 = vpop.permute.xlu0 %5313
        %5315 = vrot.lane.b32.xlu0 %v4808, 24
        %v5316 = vpop.permute.xlu0 %5315
        %5317 = vrot.lane.b32.xlu0 %v4809, 24
        %v5318 = vpop.permute.xlu0 %5317
        %5319 = vrot.lane.b32.xlu0 %v4810, 24
        %v5320 = vpop.permute.xlu0 %5319
        %5321 = vrot.lane.b32.xlu0 %v4811, 24
        %v5322 = vpop.permute.xlu0 %5321
        %5323 = vrot.lane.b32.xlu0 %v4812, 24
        %v5324 = vpop.permute.xlu0 %5323
        %5389 = vrot.lane.b32.xlu0 %v4813, 32
        %v5390 = vpop.permute.xlu0 %5389
        %5391 = vrot.lane.b32.xlu0 %v4814, 32
        %v5392 = vpop.permute.xlu0 %5391
        %5393 = vrot.lane.b32.xlu0 %v4815, 32
        %v5394 = vpop.permute.xlu0 %5393
        %5395 = vrot.lane.b32.xlu0 %v4816, 32
        %v5396 = vpop.permute.xlu0 %5395
        %5397 = vrot.lane.b32.xlu0 %v4817, 32
        %v5398 = vpop.permute.xlu0 %5397
        %5399 = vrot.lane.b32.xlu0 %v4818, 32
        %v5400 = vpop.permute.xlu0 %5399
        %5401 = vrot.lane.b32.xlu0 %v4819, 32
        %v5402 = vpop.permute.xlu0 %5401
        %5403 = vrot.lane.b32.xlu0 %v4820, 32
        %v5404 = vpop.permute.xlu0 %5403
        %5405 = vrot.lane.b32.xlu0 %v4821, 32
        %v5406 = vpop.permute.xlu0 %5405
        %5407 = vrot.lane.b32.xlu0 %v4822, 32
        %v5408 = vpop.permute.xlu0 %5407
        %5409 = vrot.lane.b32.xlu0 %v4823, 32
        %v5410 = vpop.permute.xlu0 %5409
        %5411 = vrot.lane.b32.xlu0 %v4824, 32
        %v5412 = vpop.permute.xlu0 %5411
        %5413 = vrot.lane.b32.xlu0 %v4825, 32
        %v5414 = vpop.permute.xlu0 %5413
        %5415 = vrot.lane.b32.xlu0 %v4826, 32
        %v5416 = vpop.permute.xlu0 %5415
        %5417 = vrot.lane.b32.xlu0 %v4827, 32
        %v5418 = vpop.permute.xlu0 %5417
        %5419 = vrot.lane.b32.xlu0 %v4828, 32
        %v5420 = vpop.permute.xlu0 %5419
        %5421 = vrot.lane.b32.xlu0 %v4829, 32
        %v5422 = vpop.permute.xlu0 %5421
        %5423 = vrot.lane.b32.xlu0 %v4830, 32
        %v5424 = vpop.permute.xlu0 %5423
        %5425 = vrot.lane.b32.xlu0 %v4831, 32
        %v5426 = vpop.permute.xlu0 %5425
        %5427 = vrot.lane.b32.xlu0 %v4832, 32
        %v5428 = vpop.permute.xlu0 %5427
        %5429 = vrot.lane.b32.xlu0 %v4833, 32
        %v5430 = vpop.permute.xlu0 %5429
        %5431 = vrot.lane.b32.xlu0 %v4834, 32
        %v5432 = vpop.permute.xlu0 %5431
        %5433 = vrot.lane.b32.xlu0 %v4835, 32
        %v5434 = vpop.permute.xlu0 %5433
        %5435 = vrot.lane.b32.xlu0 %v4836, 32
        %v5436 = vpop.permute.xlu0 %5435
        %5437 = vrot.lane.b32.xlu0 %v4837, 32
        %v5438 = vpop.permute.xlu0 %5437
        %5439 = vrot.lane.b32.xlu0 %v4838, 32
        %v5440 = vpop.permute.xlu0 %5439
        %5441 = vrot.lane.b32.xlu0 %v4839, 32
        %v5442 = vpop.permute.xlu0 %5441
        %5443 = vrot.lane.b32.xlu0 %v4840, 32
        %v5444 = vpop.permute.xlu0 %5443
        %5445 = vrot.lane.b32.xlu0 %v4841, 32
        %v5446 = vpop.permute.xlu0 %5445
        %5447 = vrot.lane.b32.xlu0 %v4842, 32
        %v5448 = vpop.permute.xlu0 %5447
        %5449 = vrot.lane.b32.xlu0 %v4843, 32
        %v5450 = vpop.permute.xlu0 %5449
        %5451 = vrot.lane.b32.xlu0 %v4844, 32
        %v5452 = vpop.permute.xlu0 %5451
        %5517 = vrot.lane.b32.xlu0 %v4845, 40
        %v5518 = vpop.permute.xlu0 %5517
        %5519 = vrot.lane.b32.xlu0 %v4846, 40
        %v5520 = vpop.permute.xlu0 %5519
        %5521 = vrot.lane.b32.xlu0 %v4847, 40
        %v5522 = vpop.permute.xlu0 %5521
        %5523 = vrot.lane.b32.xlu0 %v4848, 40
        %v5524 = vpop.permute.xlu0 %5523
        %5525 = vrot.lane.b32.xlu0 %v4849, 40
        %v5526 = vpop.permute.xlu0 %5525
        %5527 = vrot.lane.b32.xlu0 %v4850, 40
        %v5528 = vpop.permute.xlu0 %5527
        %5529 = vrot.lane.b32.xlu0 %v4851, 40
        %v5530 = vpop.permute.xlu0 %5529
        %5531 = vrot.lane.b32.xlu0 %v4852, 40
        %v5532 = vpop.permute.xlu0 %5531
        %5533 = vrot.lane.b32.xlu0 %v4853, 40
        %v5534 = vpop.permute.xlu0 %5533
        %5535 = vrot.lane.b32.xlu0 %v4854, 40
        %v5536 = vpop.permute.xlu0 %5535
        %5537 = vrot.lane.b32.xlu0 %v4855, 40
        %v5538 = vpop.permute.xlu0 %5537
        %5539 = vrot.lane.b32.xlu0 %v4856, 40
        %v5540 = vpop.permute.xlu0 %5539
        %5541 = vrot.lane.b32.xlu0 %v4857, 40
        %v5542 = vpop.permute.xlu0 %5541
        %5543 = vrot.lane.b32.xlu0 %v4858, 40
        %v5544 = vpop.permute.xlu0 %5543
        %5545 = vrot.lane.b32.xlu0 %v4859, 40
        %v5546 = vpop.permute.xlu0 %5545
        %5547 = vrot.lane.b32.xlu0 %v4860, 40
        %v5548 = vpop.permute.xlu0 %5547
        %5549 = vrot.lane.b32.xlu0 %v4861, 40
        %v5550 = vpop.permute.xlu0 %5549
        %5551 = vrot.lane.b32.xlu0 %v4862, 40
        %v5552 = vpop.permute.xlu0 %5551
        %5553 = vrot.lane.b32.xlu0 %v4863, 40
        %v5554 = vpop.permute.xlu0 %5553
        %5555 = vrot.lane.b32.xlu0 %v4864, 40
        %v5556 = vpop.permute.xlu0 %5555
        %5557 = vrot.lane.b32.xlu0 %v4865, 40
        %v5558 = vpop.permute.xlu0 %5557
        %5559 = vrot.lane.b32.xlu0 %v4866, 40
        %v5560 = vpop.permute.xlu0 %5559
        %5561 = vrot.lane.b32.xlu0 %v4867, 40
        %v5562 = vpop.permute.xlu0 %5561
        %5563 = vrot.lane.b32.xlu0 %v4868, 40
        %v5564 = vpop.permute.xlu0 %5563
        %5565 = vrot.lane.b32.xlu0 %v4869, 40
        %v5566 = vpop.permute.xlu0 %5565
        %5567 = vrot.lane.b32.xlu0 %v4870, 40
        %v5568 = vpop.permute.xlu0 %5567
        %5569 = vrot.lane.b32.xlu0 %v4871, 40
        %v5570 = vpop.permute.xlu0 %5569
        %5571 = vrot.lane.b32.xlu0 %v4872, 40
        %v5572 = vpop.permute.xlu0 %5571
        %5573 = vrot.lane.b32.xlu0 %v4873, 40
        %v5574 = vpop.permute.xlu0 %5573
        %5575 = vrot.lane.b32.xlu0 %v4874, 40
        %v5576 = vpop.permute.xlu0 %5575
        %5577 = vrot.lane.b32.xlu0 %v4875, 40
        %v5578 = vpop.permute.xlu0 %5577
        %5579 = vrot.lane.b32.xlu0 %v4876, 40
        %v5580 = vpop.permute.xlu0 %5579
        %5645 = vrot.lane.b32.xlu0 %v4877, 48
        %v5646 = vpop.permute.xlu0 %5645
        %5647 = vrot.lane.b32.xlu0 %v4878, 48
        %v5648 = vpop.permute.xlu0 %5647
        %5649 = vrot.lane.b32.xlu0 %v4879, 48
        %v5650 = vpop.permute.xlu0 %5649
        %5651 = vrot.lane.b32.xlu0 %v4880, 48
        %v5652 = vpop.permute.xlu0 %5651
        %5653 = vrot.lane.b32.xlu0 %v4881, 48
        %v5654 = vpop.permute.xlu0 %5653
        %5655 = vrot.lane.b32.xlu0 %v4882, 48
        %v5656 = vpop.permute.xlu0 %5655
        %5657 = vrot.lane.b32.xlu0 %v4883, 48
        %v5658 = vpop.permute.xlu0 %5657
        %5659 = vrot.lane.b32.xlu0 %v4884, 48
        %v5660 = vpop.permute.xlu0 %5659
        %5661 = vrot.lane.b32.xlu0 %v4885, 48
        %v5662 = vpop.permute.xlu0 %5661
        %5663 = vrot.lane.b32.xlu0 %v4886, 48
        %v5664 = vpop.permute.xlu0 %5663
        %5665 = vrot.lane.b32.xlu0 %v4887, 48
        %v5666 = vpop.permute.xlu0 %5665
        %5667 = vrot.lane.b32.xlu0 %v4888, 48
        %v5668 = vpop.permute.xlu0 %5667
        %5669 = vrot.lane.b32.xlu0 %v4889, 48
        %v5670 = vpop.permute.xlu0 %5669
        %5671 = vrot.lane.b32.xlu0 %v4890, 48
        %v5672 = vpop.permute.xlu0 %5671
        %5673 = vrot.lane.b32.xlu0 %v4891, 48
        %v5674 = vpop.permute.xlu0 %5673
        %5675 = vrot.lane.b32.xlu0 %v4892, 48
        %v5676 = vpop.permute.xlu0 %5675
        %5677 = vrot.lane.b32.xlu0 %v4893, 48
        %v5678 = vpop.permute.xlu0 %5677
        %5679 = vrot.lane.b32.xlu0 %v4894, 48
        %v5680 = vpop.permute.xlu0 %5679
        %5681 = vrot.lane.b32.xlu0 %v4895, 48
        %v5682 = vpop.permute.xlu0 %5681
        %5683 = vrot.lane.b32.xlu0 %v4896, 48
        %v5684 = vpop.permute.xlu0 %5683
        %5685 = vrot.lane.b32.xlu0 %v4897, 48
        %v5686 = vpop.permute.xlu0 %5685
        %5687 = vrot.lane.b32.xlu0 %v4898, 48
        %v5688 = vpop.permute.xlu0 %5687
        %5689 = vrot.lane.b32.xlu0 %v4899, 48
        %v5690 = vpop.permute.xlu0 %5689
        %5691 = vrot.lane.b32.xlu0 %v4900, 48
        %v5692 = vpop.permute.xlu0 %5691
        %5693 = vrot.lane.b32.xlu0 %v4901, 48
        %v5694 = vpop.permute.xlu0 %5693
        %5695 = vrot.lane.b32.xlu0 %v4902, 48
        %v5696 = vpop.permute.xlu0 %5695
        %5697 = vrot.lane.b32.xlu0 %v4903, 48
        %v5698 = vpop.permute.xlu0 %5697
        %5699 = vrot.lane.b32.xlu0 %v4904, 48
        %v5700 = vpop.permute.xlu0 %5699
        %5701 = vrot.lane.b32.xlu0 %v4905, 48
        %v5702 = vpop.permute.xlu0 %5701
        %5703 = vrot.lane.b32.xlu0 %v4906, 48
        %v5704 = vpop.permute.xlu0 %5703
        %5705 = vrot.lane.b32.xlu0 %v4907, 48
        %v5706 = vpop.permute.xlu0 %5705
        %5707 = vrot.lane.b32.xlu0 %v4908, 48
        %v5708 = vpop.permute.xlu0 %5707
        %5773 = vrot.lane.b32.xlu0 %v4909, 56
        %v5774 = vpop.permute.xlu0 %5773
        %5775 = vrot.lane.b32.xlu0 %v4910, 56
        %v5776 = vpop.permute.xlu0 %5775
        %5777 = vrot.lane.b32.xlu0 %v4911, 56
        %v5778 = vpop.permute.xlu0 %5777
        %5779 = vrot.lane.b32.xlu0 %v4912, 56
        %v5780 = vpop.permute.xlu0 %5779
        %5781 = vrot.lane.b32.xlu0 %v4913, 56
        %v5782 = vpop.permute.xlu0 %5781
        %5783 = vrot.lane.b32.xlu0 %v4914, 56
        %v5784 = vpop.permute.xlu0 %5783
        %5785 = vrot.lane.b32.xlu0 %v4915, 56
        %v5786 = vpop.permute.xlu0 %5785
        %5787 = vrot.lane.b32.xlu0 %v4916, 56
        %v5788 = vpop.permute.xlu0 %5787
        %5789 = vrot.lane.b32.xlu0 %v4917, 56
        %v5790 = vpop.permute.xlu0 %5789
        %5791 = vrot.lane.b32.xlu0 %v4918, 56
        %v5792 = vpop.permute.xlu0 %5791
        %5793 = vrot.lane.b32.xlu0 %v4919, 56
        %v5794 = vpop.permute.xlu0 %5793
        %5795 = vrot.lane.b32.xlu0 %v4920, 56
        %v5796 = vpop.permute.xlu0 %5795
        %5797 = vrot.lane.b32.xlu0 %v4921, 56
        %v5798 = vpop.permute.xlu0 %5797
        %5799 = vrot.lane.b32.xlu0 %v4922, 56
        %v5800 = vpop.permute.xlu0 %5799
        %5801 = vrot.lane.b32.xlu0 %v4923, 56
        %v5802 = vpop.permute.xlu0 %5801
        %5803 = vrot.lane.b32.xlu0 %v4924, 56
        %v5804 = vpop.permute.xlu0 %5803
        %5805 = vrot.lane.b32.xlu0 %v4925, 56
        %v5806 = vpop.permute.xlu0 %5805
        %5807 = vrot.lane.b32.xlu0 %v4926, 56
        %v5808 = vpop.permute.xlu0 %5807
        %5809 = vrot.lane.b32.xlu0 %v4927, 56
        %v5810 = vpop.permute.xlu0 %5809
        %5811 = vrot.lane.b32.xlu0 %v4928, 56
        %v5812 = vpop.permute.xlu0 %5811
        %5813 = vrot.lane.b32.xlu0 %v4929, 56
        %v5814 = vpop.permute.xlu0 %5813
        %5815 = vrot.lane.b32.xlu0 %v4930, 56
        %v5816 = vpop.permute.xlu0 %5815
        %5817 = vrot.lane.b32.xlu0 %v4931, 56
        %v5818 = vpop.permute.xlu0 %5817
        %5819 = vrot.lane.b32.xlu0 %v4932, 56
        %v5820 = vpop.permute.xlu0 %5819
        %5821 = vrot.lane.b32.xlu0 %v4933, 56
        %v5822 = vpop.permute.xlu0 %5821
        %5823 = vrot.lane.b32.xlu0 %v4934, 56
        %v5824 = vpop.permute.xlu0 %5823
        %5825 = vrot.lane.b32.xlu0 %v4935, 56
        %v5826 = vpop.permute.xlu0 %5825
        %5827 = vrot.lane.b32.xlu0 %v4936, 56
        %v5828 = vpop.permute.xlu0 %5827
        %5829 = vrot.lane.b32.xlu0 %v4937, 56
        %v5830 = vpop.permute.xlu0 %5829
        %5831 = vrot.lane.b32.xlu0 %v4938, 56
        %v5832 = vpop.permute.xlu0 %5831
        %5833 = vrot.lane.b32.xlu0 %v4939, 56
        %v5834 = vpop.permute.xlu0 %5833
        %5835 = vrot.lane.b32.xlu0 %v4940, 56
        %v5836 = vpop.permute.xlu0 %5835
        %5901 = vrot.lane.b32.xlu0 %v4941, 64
        %v5902 = vpop.permute.xlu0 %5901
        %5903 = vrot.lane.b32.xlu0 %v4942, 64
        %v5904 = vpop.permute.xlu0 %5903
        %5905 = vrot.lane.b32.xlu0 %v4943, 64
        %v5906 = vpop.permute.xlu0 %5905
        %5907 = vrot.lane.b32.xlu0 %v4944, 64
        %v5908 = vpop.permute.xlu0 %5907
        %5909 = vrot.lane.b32.xlu0 %v4945, 64
        %v5910 = vpop.permute.xlu0 %5909
        %5911 = vrot.lane.b32.xlu0 %v4946, 64
        %v5912 = vpop.permute.xlu0 %5911
        %5913 = vrot.lane.b32.xlu0 %v4947, 64
        %v5914 = vpop.permute.xlu0 %5913
        %5915 = vrot.lane.b32.xlu0 %v4948, 64
        %v5916 = vpop.permute.xlu0 %5915
        %5917 = vrot.lane.b32.xlu0 %v4949, 64
        %v5918 = vpop.permute.xlu0 %5917
        %5919 = vrot.lane.b32.xlu0 %v4950, 64
        %v5920 = vpop.permute.xlu0 %5919
        %5921 = vrot.lane.b32.xlu0 %v4951, 64
        %v5922 = vpop.permute.xlu0 %5921
        %5923 = vrot.lane.b32.xlu0 %v4952, 64
        %v5924 = vpop.permute.xlu0 %5923
        %5925 = vrot.lane.b32.xlu0 %v4953, 64
        %v5926 = vpop.permute.xlu0 %5925
        %5927 = vrot.lane.b32.xlu0 %v4954, 64
        %v5928 = vpop.permute.xlu0 %5927
        %5929 = vrot.lane.b32.xlu0 %v4955, 64
        %v5930 = vpop.permute.xlu0 %5929
        %5931 = vrot.lane.b32.xlu0 %v4956, 64
        %v5932 = vpop.permute.xlu0 %5931
        %5933 = vrot.lane.b32.xlu0 %v4957, 64
        %v5934 = vpop.permute.xlu0 %5933
        %5935 = vrot.lane.b32.xlu0 %v4958, 64
        %v5936 = vpop.permute.xlu0 %5935
        %5937 = vrot.lane.b32.xlu0 %v4959, 64
        %v5938 = vpop.permute.xlu0 %5937
        %5939 = vrot.lane.b32.xlu0 %v4960, 64
        %v5940 = vpop.permute.xlu0 %5939
        %5941 = vrot.lane.b32.xlu0 %v4961, 64
        %v5942 = vpop.permute.xlu0 %5941
        %5943 = vrot.lane.b32.xlu0 %v4962, 64
        %v5944 = vpop.permute.xlu0 %5943
        %5945 = vrot.lane.b32.xlu0 %v4963, 64
        %v5946 = vpop.permute.xlu0 %5945
        %5947 = vrot.lane.b32.xlu0 %v4964, 64
        %v5948 = vpop.permute.xlu0 %5947
        %5949 = vrot.lane.b32.xlu0 %v4965, 64
        %v5950 = vpop.permute.xlu0 %5949
        %5951 = vrot.lane.b32.xlu0 %v4966, 64
        %v5952 = vpop.permute.xlu0 %5951
        %5953 = vrot.lane.b32.xlu0 %v4967, 64
        %v5954 = vpop.permute.xlu0 %5953
        %5955 = vrot.lane.b32.xlu0 %v4968, 64
        %v5956 = vpop.permute.xlu0 %5955
        %5957 = vrot.lane.b32.xlu0 %v4969, 64
        %v5958 = vpop.permute.xlu0 %5957
        %5959 = vrot.lane.b32.xlu0 %v4970, 64
        %v5960 = vpop.permute.xlu0 %5959
        %5961 = vrot.lane.b32.xlu0 %v4971, 64
        %v5962 = vpop.permute.xlu0 %5961
        %5963 = vrot.lane.b32.xlu0 %v4972, 64
        %v5964 = vpop.permute.xlu0 %5963
        %v5997 = vsel %vm284, %v4685, %v5006
        %v5998 = vsel %vm284, %v4686, %v5008
        %v5999 = vsel %vm284, %v4687, %v5010
        %v6000 = vsel %vm284, %v4688, %v5012
        %v6001 = vsel %vm284, %v4689, %v5014
        %v6002 = vsel %vm284, %v4690, %v5016
        %v6003 = vsel %vm284, %v4691, %v5018
        %v6004 = vsel %vm284, %v4692, %v5020
        %v6005 = vsel %vm284, %v4693, %v5022
        %v6006 = vsel %vm284, %v4694, %v5024
        %v6007 = vsel %vm284, %v4695, %v5026
        %v6008 = vsel %vm284, %v4696, %v5028
        %v6009 = vsel %vm284, %v4697, %v5030
        %v6010 = vsel %vm284, %v4698, %v5032
        %v6011 = vsel %vm284, %v4699, %v5034
        %v6012 = vsel %vm284, %v4700, %v5036
        %v6013 = vsel %vm284, %v4701, %v5038
        %v6014 = vsel %vm284, %v4702, %v5040
        %v6015 = vsel %vm284, %v4703, %v5042
        %v6016 = vsel %vm284, %v4704, %v5044
        %v6017 = vsel %vm284, %v4705, %v5046
        %v6018 = vsel %vm284, %v4706, %v5048
        %v6019 = vsel %vm284, %v4707, %v5050
        %v6020 = vsel %vm284, %v4708, %v5052
        %v6021 = vsel %vm284, %v4709, %v5054
        %v6022 = vsel %vm284, %v4710, %v5056
        %v6023 = vsel %vm284, %v4711, %v5058
        %v6024 = vsel %vm284, %v4712, %v5060
        %v6025 = vsel %vm284, %v4713, %v5062
        %v6026 = vsel %vm284, %v4714, %v5064
        %v6027 = vsel %vm284, %v4715, %v5066
        %v6028 = vsel %vm284, %v4716, %v5068
        %v6029 = vsel %vm2227, %v5997, %v5134
        %v6030 = vsel %vm2227, %v5998, %v5136
        %v6031 = vsel %vm2227, %v5999, %v5138
        %v6032 = vsel %vm2227, %v6000, %v5140
        %v6033 = vsel %vm2227, %v6001, %v5142
        %v6034 = vsel %vm2227, %v6002, %v5144
        %v6035 = vsel %vm2227, %v6003, %v5146
        %v6036 = vsel %vm2227, %v6004, %v5148
        %v6037 = vsel %vm2227, %v6005, %v5150
        %v6038 = vsel %vm2227, %v6006, %v5152
        %v6039 = vsel %vm2227, %v6007, %v5154
        %v6040 = vsel %vm2227, %v6008, %v5156
        %v6041 = vsel %vm2227, %v6009, %v5158
        %v6042 = vsel %vm2227, %v6010, %v5160
        %v6043 = vsel %vm2227, %v6011, %v5162
        %v6044 = vsel %vm2227, %v6012, %v5164
        %v6045 = vsel %vm2227, %v6013, %v5166
        %v6046 = vsel %vm2227, %v6014, %v5168
        %v6047 = vsel %vm2227, %v6015, %v5170
        %v6048 = vsel %vm2227, %v6016, %v5172
        %v6049 = vsel %vm2227, %v6017, %v5174
        %v6050 = vsel %vm2227, %v6018, %v5176
        %v6051 = vsel %vm2227, %v6019, %v5178
        %v6052 = vsel %vm2227, %v6020, %v5180
        %v6053 = vsel %vm2227, %v6021, %v5182
        %v6054 = vsel %vm2227, %v6022, %v5184
        %v6055 = vsel %vm2227, %v6023, %v5186
        %v6056 = vsel %vm2227, %v6024, %v5188
        %v6057 = vsel %vm2227, %v6025, %v5190
        %v6058 = vsel %vm2227, %v6026, %v5192
        %v6059 = vsel %vm2227, %v6027, %v5194
        %v6060 = vsel %vm2227, %v6028, %v5196
        %v6061 = vsel %vm2260, %v6029, %v5262
        %v6062 = vsel %vm2260, %v6030, %v5264
        %v6063 = vsel %vm2260, %v6031, %v5266
        %v6064 = vsel %vm2260, %v6032, %v5268
        %v6065 = vsel %vm2260, %v6033, %v5270
        %v6066 = vsel %vm2260, %v6034, %v5272
        %v6067 = vsel %vm2260, %v6035, %v5274
        %v6068 = vsel %vm2260, %v6036, %v5276
        %v6069 = vsel %vm2260, %v6037, %v5278
        %v6070 = vsel %vm2260, %v6038, %v5280
        %v6071 = vsel %vm2260, %v6039, %v5282
        %v6072 = vsel %vm2260, %v6040, %v5284
        %v6073 = vsel %vm2260, %v6041, %v5286
        %v6074 = vsel %vm2260, %v6042, %v5288
        %v6075 = vsel %vm2260, %v6043, %v5290
        %v6076 = vsel %vm2260, %v6044, %v5292
        %v6077 = vsel %vm2260, %v6045, %v5294
        %v6078 = vsel %vm2260, %v6046, %v5296
        %v6079 = vsel %vm2260, %v6047, %v5298
        %v6080 = vsel %vm2260, %v6048, %v5300
        %v6081 = vsel %vm2260, %v6049, %v5302
        %v6082 = vsel %vm2260, %v6050, %v5304
        %v6083 = vsel %vm2260, %v6051, %v5306
        %v6084 = vsel %vm2260, %v6052, %v5308
        %v6085 = vsel %vm2260, %v6053, %v5310
        %v6086 = vsel %vm2260, %v6054, %v5312
        %v6087 = vsel %vm2260, %v6055, %v5314
        %v6088 = vsel %vm2260, %v6056, %v5316
        %v6089 = vsel %vm2260, %v6057, %v5318
        %v6090 = vsel %vm2260, %v6058, %v5320
        %v6091 = vsel %vm2260, %v6059, %v5322
        %v6092 = vsel %vm2260, %v6060, %v5324
        %v6093 = vsel %vm2293, %v6061, %v5390
        %v6094 = vsel %vm2293, %v6062, %v5392
        %v6095 = vsel %vm2293, %v6063, %v5394
        %v6096 = vsel %vm2293, %v6064, %v5396
        %v6097 = vsel %vm2293, %v6065, %v5398
        %v6098 = vsel %vm2293, %v6066, %v5400
        %v6099 = vsel %vm2293, %v6067, %v5402
        %v6100 = vsel %vm2293, %v6068, %v5404
        %v6101 = vsel %vm2293, %v6069, %v5406
        %v6102 = vsel %vm2293, %v6070, %v5408
        %v6103 = vsel %vm2293, %v6071, %v5410
        %v6104 = vsel %vm2293, %v6072, %v5412
        %v6105 = vsel %vm2293, %v6073, %v5414
        %v6106 = vsel %vm2293, %v6074, %v5416
        %v6107 = vsel %vm2293, %v6075, %v5418
        %v6108 = vsel %vm2293, %v6076, %v5420
        %v6109 = vsel %vm2293, %v6077, %v5422
        %v6110 = vsel %vm2293, %v6078, %v5424
        %v6111 = vsel %vm2293, %v6079, %v5426
        %v6112 = vsel %vm2293, %v6080, %v5428
        %v6113 = vsel %vm2293, %v6081, %v5430
        %v6114 = vsel %vm2293, %v6082, %v5432
        %v6115 = vsel %vm2293, %v6083, %v5434
        %v6116 = vsel %vm2293, %v6084, %v5436
        %v6117 = vsel %vm2293, %v6085, %v5438
        %v6118 = vsel %vm2293, %v6086, %v5440
        %v6119 = vsel %vm2293, %v6087, %v5442
        %v6120 = vsel %vm2293, %v6088, %v5444
        %v6121 = vsel %vm2293, %v6089, %v5446
        %v6122 = vsel %vm2293, %v6090, %v5448
        %v6123 = vsel %vm2293, %v6091, %v5450
        %v6124 = vsel %vm2293, %v6092, %v5452
        %v6125 = vsel %vm2326, %v6093, %v5518
        %v6126 = vsel %vm2326, %v6094, %v5520
        %v6127 = vsel %vm2326, %v6095, %v5522
        %v6128 = vsel %vm2326, %v6096, %v5524
        %v6129 = vsel %vm2326, %v6097, %v5526
        %v6130 = vsel %vm2326, %v6098, %v5528
        %v6131 = vsel %vm2326, %v6099, %v5530
        %v6132 = vsel %vm2326, %v6100, %v5532
        %v6133 = vsel %vm2326, %v6101, %v5534
        %v6134 = vsel %vm2326, %v6102, %v5536
        %v6135 = vsel %vm2326, %v6103, %v5538
        %v6136 = vsel %vm2326, %v6104, %v5540
        %v6137 = vsel %vm2326, %v6105, %v5542
        %v6138 = vsel %vm2326, %v6106, %v5544
        %v6139 = vsel %vm2326, %v6107, %v5546
        %v6140 = vsel %vm2326, %v6108, %v5548
        %v6141 = vsel %vm2326, %v6109, %v5550
        %v6142 = vsel %vm2326, %v6110, %v5552
        %v6143 = vsel %vm2326, %v6111, %v5554
        %v6144 = vsel %vm2326, %v6112, %v5556
        %v6145 = vsel %vm2326, %v6113, %v5558
        %v6146 = vsel %vm2326, %v6114, %v5560
        %v6147 = vsel %vm2326, %v6115, %v5562
        %v6148 = vsel %vm2326, %v6116, %v5564
        %v6149 = vsel %vm2326, %v6117, %v5566
        %v6150 = vsel %vm2326, %v6118, %v5568
        %v6151 = vsel %vm2326, %v6119, %v5570
        %v6152 = vsel %vm2326, %v6120, %v5572
        %v6153 = vsel %vm2326, %v6121, %v5574
        %v6154 = vsel %vm2326, %v6122, %v5576
        %v6155 = vsel %vm2326, %v6123, %v5578
        %v6156 = vsel %vm2326, %v6124, %v5580
        %v6157 = vsel %vm2359, %v6125, %v5646
        %v6158 = vsel %vm2359, %v6126, %v5648
        %v6159 = vsel %vm2359, %v6127, %v5650
        %v6160 = vsel %vm2359, %v6128, %v5652
        %v6161 = vsel %vm2359, %v6129, %v5654
        %v6162 = vsel %vm2359, %v6130, %v5656
        %v6163 = vsel %vm2359, %v6131, %v5658
        %v6164 = vsel %vm2359, %v6132, %v5660
        %v6165 = vsel %vm2359, %v6133, %v5662
        %v6166 = vsel %vm2359, %v6134, %v5664
        %v6167 = vsel %vm2359, %v6135, %v5666
        %v6168 = vsel %vm2359, %v6136, %v5668
        %v6169 = vsel %vm2359, %v6137, %v5670
        %v6170 = vsel %vm2359, %v6138, %v5672
        %v6171 = vsel %vm2359, %v6139, %v5674
        %v6172 = vsel %vm2359, %v6140, %v5676
        %v6173 = vsel %vm2359, %v6141, %v5678
        %v6174 = vsel %vm2359, %v6142, %v5680
        %v6175 = vsel %vm2359, %v6143, %v5682
        %v6176 = vsel %vm2359, %v6144, %v5684
        %v6177 = vsel %vm2359, %v6145, %v5686
        %v6178 = vsel %vm2359, %v6146, %v5688
        %v6179 = vsel %vm2359, %v6147, %v5690
        %v6180 = vsel %vm2359, %v6148, %v5692
        %v6181 = vsel %vm2359, %v6149, %v5694
        %v6182 = vsel %vm2359, %v6150, %v5696
        %v6183 = vsel %vm2359, %v6151, %v5698
        %v6184 = vsel %vm2359, %v6152, %v5700
        %v6185 = vsel %vm2359, %v6153, %v5702
        %v6186 = vsel %vm2359, %v6154, %v5704
        %v6187 = vsel %vm2359, %v6155, %v5706
        %v6188 = vsel %vm2359, %v6156, %v5708
        %v6189 = vsel %vm2392, %v6157, %v5774
        %v6190 = vsel %vm2392, %v6158, %v5776
        %v6191 = vsel %vm2392, %v6159, %v5778
        %v6192 = vsel %vm2392, %v6160, %v5780
        %v6193 = vsel %vm2392, %v6161, %v5782
        %v6194 = vsel %vm2392, %v6162, %v5784
        %v6195 = vsel %vm2392, %v6163, %v5786
        %v6196 = vsel %vm2392, %v6164, %v5788
        %v6197 = vsel %vm2392, %v6165, %v5790
        %v6198 = vsel %vm2392, %v6166, %v5792
        %v6199 = vsel %vm2392, %v6167, %v5794
        %v6200 = vsel %vm2392, %v6168, %v5796
        %v6201 = vsel %vm2392, %v6169, %v5798
        %v6202 = vsel %vm2392, %v6170, %v5800
        %v6203 = vsel %vm2392, %v6171, %v5802
        %v6204 = vsel %vm2392, %v6172, %v5804
        %v6205 = vsel %vm2392, %v6173, %v5806
        %v6206 = vsel %vm2392, %v6174, %v5808
        %v6207 = vsel %vm2392, %v6175, %v5810
        %v6208 = vsel %vm2392, %v6176, %v5812
        %v6209 = vsel %vm2392, %v6177, %v5814
        %v6210 = vsel %vm2392, %v6178, %v5816
        %v6211 = vsel %vm2392, %v6179, %v5818
        %v6212 = vsel %vm2392, %v6180, %v5820
        %v6213 = vsel %vm2392, %v6181, %v5822
        %v6214 = vsel %vm2392, %v6182, %v5824
        %v6215 = vsel %vm2392, %v6183, %v5826
        %v6216 = vsel %vm2392, %v6184, %v5828
        %v6217 = vsel %vm2392, %v6185, %v5830
        %v6218 = vsel %vm2392, %v6186, %v5832
        %v6219 = vsel %vm2392, %v6187, %v5834
        %v6220 = vsel %vm2392, %v6188, %v5836
        %v6221 = vsel %vm2425, %v6189, %v5902
        %v6222 = vsel %vm2425, %v6190, %v5904
        %v6223 = vsel %vm2425, %v6191, %v5906
        %v6224 = vsel %vm2425, %v6192, %v5908
        %v6225 = vsel %vm2425, %v6193, %v5910
        %v6226 = vsel %vm2425, %v6194, %v5912
        %v6227 = vsel %vm2425, %v6195, %v5914
        %v6228 = vsel %vm2425, %v6196, %v5916
        %v6229 = vsel %vm2425, %v6197, %v5918
        %v6230 = vsel %vm2425, %v6198, %v5920
        %v6231 = vsel %vm2425, %v6199, %v5922
        %v6232 = vsel %vm2425, %v6200, %v5924
        %v6233 = vsel %vm2425, %v6201, %v5926
        %v6234 = vsel %vm2425, %v6202, %v5928
        %v6235 = vsel %vm2425, %v6203, %v5930
        %v6236 = vsel %vm2425, %v6204, %v5932
        %v6237 = vsel %vm2425, %v6205, %v5934
        %v6238 = vsel %vm2425, %v6206, %v5936
        %v6239 = vsel %vm2425, %v6207, %v5938
        %v6240 = vsel %vm2425, %v6208, %v5940
        %v6241 = vsel %vm2425, %v6209, %v5942
        %v6242 = vsel %vm2425, %v6210, %v5944
        %v6243 = vsel %vm2425, %v6211, %v5946
        %v6244 = vsel %vm2425, %v6212, %v5948
        %v6245 = vsel %vm2425, %v6213, %v5950
        %v6246 = vsel %vm2425, %v6214, %v5952
        %v6247 = vsel %vm2425, %v6215, %v5954
        %v6248 = vsel %vm2425, %v6216, %v5956
        %v6249 = vsel %vm2425, %v6217, %v5958
        %v6250 = vsel %vm2425, %v6218, %v5960
        %v6251 = vsel %vm2425, %v6219, %v5962
        %v6252 = vsel %vm2425, %v6220, %v5964
        %v6253 = vpack.c.bf16 %v6222, %v6221
        %v6254 = vpack.c.bf16 %v6224, %v6223
        %v6255 = vpack.c.bf16 %v6226, %v6225
        %v6256 = vpack.c.bf16 %v6228, %v6227
        %v6257 = vpack.c.bf16 %v6230, %v6229
        %v6258 = vpack.c.bf16 %v6232, %v6231
        %v6259 = vpack.c.bf16 %v6234, %v6233
        %v6260 = vpack.c.bf16 %v6236, %v6235
        %v6261 = vpack.c.bf16 %v6238, %v6237
        %v6262 = vpack.c.bf16 %v6240, %v6239
        %v6263 = vpack.c.bf16 %v6242, %v6241
        %v6264 = vpack.c.bf16 %v6244, %v6243
        %v6265 = vpack.c.bf16 %v6246, %v6245
        %v6266 = vpack.c.bf16 %v6248, %v6247
        %v6267 = vpack.c.bf16 %v6250, %v6249
        %v6268 = vpack.c.bf16 %v6252, %v6251
        %s6269 = scalar_lea.vmem %s3, 72
        %v6270 = vld [vmem:[%s6269] sm:$0xf]
        %v6271 = vld [vmem:[%s6269 + $0x4] sm:$0xf]
        %v6272 = vld [vmem:[%s6269 + $0x8] sm:$0xf]
        %v6273 = vld [vmem:[%s6269 + $0xc] sm:$0xf]
        %v6274 = vld [vmem:[%s6269 + $0x10] sm:$0xf]
        %v6275 = vld [vmem:[%s6269 + $0x14] sm:$0xf]
        %v6276 = vld [vmem:[%s6269 + $0x18] sm:$0xf]
        %v6277 = vld [vmem:[%s6269 + $0x1c] sm:$0xf]
        %v6278 = vld [vmem:[%s6269 + $0x20] sm:$0xf]
        %v6288 = vunpack.c.l.b16 %v6270
        %v6289 = vunpack.c.l.b16 %v6271
        %v6290 = vunpack.c.l.b16 %v6272
        %v6291 = vunpack.c.l.b16 %v6273
        %v6292 = vunpack.c.l.b16 %v6274
        %v6293 = vunpack.c.l.b16 %v6275
        %v6294 = vunpack.c.l.b16 %v6276
        %v6295 = vunpack.c.l.b16 %v6277
        %v6296 = vunpack.c.l.b16 %v6278
        %v6297 = vpack.c.b16 %v6289, %v6288
        %v6298 = vpack.c.b16 %v6291, %v6290
        %v6299 = vpack.c.b16 %v6293, %v6292
        %v6300 = vpack.c.b16 %v6295, %v6294
        %v6301 = vpack.c.b16 %v6296, %v6296
        %v6307 = vsel %vm2510, %v6253, 0
        %v6310 = vsel %vm2510, %v6254, 0
        %v6313 = vsel %vm2510, %v6255, 0
        %v6316 = vsel %vm2510, %v6256, 0
        %v6319 = vsel %vm2510, %v6257, 0
        %v6322 = vsel %vm2510, %v6258, 0
        %v6325 = vsel %vm2510, %v6259, 0
        %v6328 = vsel %vm2510, %v6260, 0
        %v6331 = vsel %vm2510, %v6261, 0
        %v6334 = vsel %vm2510, %v6262, 0
        %v6337 = vsel %vm2510, %v6263, 0
        %v6340 = vsel %vm2510, %v6264, 0
        %v6343 = vsel %vm2510, %v6265, 0
        %v6346 = vsel %vm2510, %v6266, 0
        %v6349 = vsel %vm2510, %v6267, 0
        %v6352 = vsel %vm2510, %v6268, 0
        %v6355 = vsel %vm2559, %v6301, 0
        %6357 = vmatprep.subr.bf16.mxu0 0
        %6358 = vmatpush1.bf16.msra.mxu0 %v6297
        %6359 = vmatprep.subr.bf16.mxu0 0
        %6360 = vmatpush1.bf16.msra.mxu0 %v6298
        %6361 = vmatprep.subr.bf16.mxu0 0
        %6362 = vmatpush1.bf16.msra.mxu0 %v6299
        %6363 = vmatprep.subr.bf16.mxu0 0
        %6364 = vmatpush1.bf16.msra.mxu0 %v6300
        %6365 = vmatprep.subr.bf16.mxu0 0
        %6366 = vmatpush1.bf16.msra.mxu0 %v6355
        %6367 = vmatprep.subr.bf16.mxu0 0
        %6368 = vmatpush1.bf16.msra.mxu0 0
        %6369 = vmatprep.subr.bf16.mxu0 0
        %6370 = vmatpush1.bf16.msra.mxu0 0
        %6371 = vmatprep.subr.bf16.mxu0 0
        %6372 = vmatpush1.bf16.msra.mxu0 0
        %6373 = vmatprep.subr.bf16.mxu0 0
        %6374 = vmatpush1.bf16.msra.mxu0 0
        %6375 = vmatprep.subr.bf16.mxu0 0
        %6376 = vmatpush1.bf16.msra.mxu0 0
        %6377 = vmatprep.subr.bf16.mxu0 0
        %6378 = vmatpush1.bf16.msra.mxu0 0
        %6379 = vmatprep.subr.bf16.mxu0 0
        %6380 = vmatpush1.bf16.msra.mxu0 0
        %6381 = vmatprep.subr.bf16.mxu0 0
        %6382 = vmatpush1.bf16.msra.mxu0 0
        %6383 = vmatprep.subr.bf16.mxu0 0
        %6384 = vmatpush1.bf16.msra.mxu0 0
        %6385 = vmatprep.subr.bf16.mxu0 0
        %6386 = vmatpush1.bf16.msra.mxu0 0
        %6387 = vmatprep.subr.bf16.mxu0 0
        %6388 = vmatpush1.bf16.msra.mxu0 0
        %6389 = vmatprep.mubr.bf16.mxu0 0
        %6390 = vmatmul.mubr.bf16.gmra.mrb[0].mxu0 %v6307
        %v6391 = vpop.f32.mrb[0].mxu0
        %v6392 = vadd.f32 0.0, %v6391
        %v6393 = vpop.f32.mrb[0].mxu0
        %v6394 = vpop.f32.mrb[0].mxu0
        %v6395 = vadd.f32 0.0, %v6394
        %v6396 = vpop.f32.mrb[0].mxu0
        %6397 = vmatprep.mubr.bf16.mxu0 0
        %6398 = vmatmul.mubr.bf16.gmra.mrb[0].mxu0 %v6310
        %v6399 = vpop.f32.mrb[0].mxu0
        %v6400 = vadd.f32 0.0, %v6399
        %v6401 = vpop.f32.mrb[0].mxu0
        %v6402 = vpop.f32.mrb[0].mxu0
        %v6403 = vadd.f32 0.0, %v6402
        %v6404 = vpop.f32.mrb[0].mxu0
        %6405 = vmatprep.mubr.bf16.mxu0 0
        %6406 = vmatmul.mubr.bf16.gmra.mrb[0].mxu0 %v6313
        %v6407 = vpop.f32.mrb[0].mxu0
        %v6408 = vadd.f32 0.0, %v6407
        %v6409 = vpop.f32.mrb[0].mxu0
        %v6410 = vpop.f32.mrb[0].mxu0
        %v6411 = vadd.f32 0.0, %v6410
        %v6412 = vpop.f32.mrb[0].mxu0
        %6413 = vmatprep.mubr.bf16.mxu0 0
        %6414 = vmatmul.mubr.bf16.gmra.mrb[0].mxu0 %v6316
        %v6415 = vpop.f32.mrb[0].mxu0
        %v6416 = vadd.f32 0.0, %v6415
        %v6417 = vpop.f32.mrb[0].mxu0
        %v6418 = vpop.f32.mrb[0].mxu0
        %v6419 = vadd.f32 0.0, %v6418
        %v6420 = vpop.f32.mrb[0].mxu0
        %6421 = vmatprep.mubr.bf16.mxu0 0
        %6422 = vmatmul.mubr.bf16.gmra.mrb[0].mxu0 %v6319
        %v6423 = vpop.f32.mrb[0].mxu0
        %v6424 = vadd.f32 0.0, %v6423
        %v6425 = vpop.f32.mrb[0].mxu0
        %v6426 = vpop.f32.mrb[0].mxu0
        %v6427 = vadd.f32 0.0, %v6426
        %v6428 = vpop.f32.mrb[0].mxu0
        %6429 = vmatprep.mubr.bf16.mxu0 0
        %6430 = vmatmul.mubr.bf16.gmra.mrb[0].mxu0 %v6322
        %v6431 = vpop.f32.mrb[0].mxu0
        %v6432 = vadd.f32 0.0, %v6431
        %v6433 = vpop.f32.mrb[0].mxu0
        %v6434 = vpop.f32.mrb[0].mxu0
        %v6435 = vadd.f32 0.0, %v6434
        %v6436 = vpop.f32.mrb[0].mxu0
        %6437 = vmatprep.mubr.bf16.mxu0 0
        %6438 = vmatmul.mubr.bf16.gmra.mrb[0].mxu0 %v6325
        %v6439 = vpop.f32.mrb[0].mxu0
        %v6440 = vadd.f32 0.0, %v6439
        %v6441 = vpop.f32.mrb[0].mxu0
        %v6442 = vpop.f32.mrb[0].mxu0
        %v6443 = vadd.f32 0.0, %v6442
        %v6444 = vpop.f32.mrb[0].mxu0
        %6445 = vmatprep.mubr.bf16.mxu0 0
        %6446 = vmatmul.mubr.bf16.gmra.mrb[0].mxu0 %v6328
        %v6447 = vpop.f32.mrb[0].mxu0
        %v6448 = vadd.f32 0.0, %v6447
        %v6449 = vpop.f32.mrb[0].mxu0
        %v6450 = vpop.f32.mrb[0].mxu0
        %v6451 = vadd.f32 0.0, %v6450
        %v6452 = vpop.f32.mrb[0].mxu0
        %6453 = vmatprep.mubr.bf16.mxu0 0
        %6454 = vmatmul.mubr.bf16.gmra.mrb[0].mxu0 %v6331
        %v6455 = vpop.f32.mrb[0].mxu0
        %v6456 = vadd.f32 0.0, %v6455
        %v6457 = vpop.f32.mrb[0].mxu0
        %v6458 = vpop.f32.mrb[0].mxu0
        %v6459 = vadd.f32 0.0, %v6458
        %v6460 = vpop.f32.mrb[0].mxu0
        %6461 = vmatprep.mubr.bf16.mxu0 0
        %6462 = vmatmul.mubr.bf16.gmra.mrb[0].mxu0 %v6334
        %v6463 = vpop.f32.mrb[0].mxu0
        %v6464 = vadd.f32 0.0, %v6463
        %v6465 = vpop.f32.mrb[0].mxu0
        %v6466 = vpop.f32.mrb[0].mxu0
        %v6467 = vadd.f32 0.0, %v6466
        %v6468 = vpop.f32.mrb[0].mxu0
        %6469 = vmatprep.mubr.bf16.mxu0 0
        %6470 = vmatmul.mubr.bf16.gmra.mrb[0].mxu0 %v6337
        %v6471 = vpop.f32.mrb[0].mxu0
        %v6472 = vadd.f32 0.0, %v6471
        %v6473 = vpop.f32.mrb[0].mxu0
        %v6474 = vpop.f32.mrb[0].mxu0
        %v6475 = vadd.f32 0.0, %v6474
        %v6476 = vpop.f32.mrb[0].mxu0
        %6477 = vmatprep.mubr.bf16.mxu0 0
        %6478 = vmatmul.mubr.bf16.gmra.mrb[0].mxu0 %v6340
        %v6479 = vpop.f32.mrb[0].mxu0
        %v6480 = vadd.f32 0.0, %v6479
        %v6481 = vpop.f32.mrb[0].mxu0
        %v6482 = vpop.f32.mrb[0].mxu0
        %v6483 = vadd.f32 0.0, %v6482
        %v6484 = vpop.f32.mrb[0].mxu0
        %6485 = vmatprep.mubr.bf16.mxu0 0
        %6486 = vmatmul.mubr.bf16.gmra.mrb[0].mxu0 %v6343
        %v6487 = vpop.f32.mrb[0].mxu0
        %v6488 = vadd.f32 0.0, %v6487
        %v6489 = vpop.f32.mrb[0].mxu0
        %v6490 = vpop.f32.mrb[0].mxu0
        %v6491 = vadd.f32 0.0, %v6490
        %v6492 = vpop.f32.mrb[0].mxu0
        %6493 = vmatprep.mubr.bf16.mxu0 0
        %6494 = vmatmul.mubr.bf16.gmra.mrb[0].mxu0 %v6346
        %v6495 = vpop.f32.mrb[0].mxu0
        %v6496 = vadd.f32 0.0, %v6495
        %v6497 = vpop.f32.mrb[0].mxu0
        %v6498 = vpop.f32.mrb[0].mxu0
        %v6499 = vadd.f32 0.0, %v6498
        %v6500 = vpop.f32.mrb[0].mxu0
        %6501 = vmatprep.mubr.bf16.mxu0 0
        %6502 = vmatmul.mubr.bf16.gmra.mrb[0].mxu0 %v6349
        %v6503 = vpop.f32.mrb[0].mxu0
        %v6504 = vadd.f32 0.0, %v6503
        %v6505 = vpop.f32.mrb[0].mxu0
        %v6506 = vpop.f32.mrb[0].mxu0
        %v6507 = vadd.f32 0.0, %v6506
        %v6508 = vpop.f32.mrb[0].mxu0
        %6509 = vmatprep.mubr.bf16.mxu0 0
        %6510 = vmatmul.mubr.bf16.gmra.mrb[0].mxu0 %v6352
        %v6511 = vpop.f32.mrb[0].mxu0
        %v6512 = vadd.f32 0.0, %v6511
        %v6513 = vpop.f32.mrb[0].mxu0
        %v6514 = vpop.f32.mrb[0].mxu0
        %v6515 = vadd.f32 0.0, %v6514
        %v6516 = vpop.f32.mrb[0].mxu0
        %6517 = vdwg.mxu0
        %v6518 = vmax.f32 %v6392, 0.0
        %v6519 = vmax.f32 %v6395, 0.0
        %v6520 = vmax.f32 %v6400, 0.0
        %v6521 = vmax.f32 %v6403, 0.0
        %v6522 = vmax.f32 %v6408, 0.0
        %v6523 = vmax.f32 %v6411, 0.0
        %v6524 = vmax.f32 %v6416, 0.0
        %v6525 = vmax.f32 %v6419, 0.0
        %v6526 = vmax.f32 %v6424, 0.0
        %v6527 = vmax.f32 %v6427, 0.0
        %v6528 = vmax.f32 %v6432, 0.0
        %v6529 = vmax.f32 %v6435, 0.0
        %v6530 = vmax.f32 %v6440, 0.0
        %v6531 = vmax.f32 %v6443, 0.0
        %v6532 = vmax.f32 %v6448, 0.0
        %v6533 = vmax.f32 %v6451, 0.0
        %v6534 = vmax.f32 %v6456, 0.0
        %v6535 = vmax.f32 %v6459, 0.0
        %v6536 = vmax.f32 %v6464, 0.0
        %v6537 = vmax.f32 %v6467, 0.0
        %v6538 = vmax.f32 %v6472, 0.0
        %v6539 = vmax.f32 %v6475, 0.0
        %v6540 = vmax.f32 %v6480, 0.0
        %v6541 = vmax.f32 %v6483, 0.0
        %v6542 = vmax.f32 %v6488, 0.0
        %v6543 = vmax.f32 %v6491, 0.0
        %v6544 = vmax.f32 %v6496, 0.0
        %v6545 = vmax.f32 %v6499, 0.0
        %v6546 = vmax.f32 %v6504, 0.0
        %v6547 = vmax.f32 %v6507, 0.0
        %v6548 = vmax.f32 %v6512, 0.0
        %v6549 = vmax.f32 %v6515, 0.0
        %6550 = vst.msk [vmem:[%s282] sm:$0xff] %vm284, %v6518
        %6551 = vst.msk [vmem:[%s282 + $0x8] sm:$0xff] %vm284, %v6519
        %6552 = vst.msk [vmem:[%s282 + $0x10] sm:$0xff] %vm284, %v6520
        %6553 = vst.msk [vmem:[%s282 + $0x18] sm:$0xff] %vm284, %v6521
        %6554 = vst.msk [vmem:[%s282 + $0x20] sm:$0xff] %vm284, %v6522
        %6555 = vst.msk [vmem:[%s282 + $0x28] sm:$0xff] %vm284, %v6523
        %6556 = vst.msk [vmem:[%s282 + $0x30] sm:$0xff] %vm284, %v6524
        %6557 = vst.msk [vmem:[%s282 + $0x38] sm:$0xff] %vm284, %v6525
        %6558 = vst.msk [vmem:[%s282 + $0x40] sm:$0xff] %vm284, %v6526
        %6559 = vst.msk [vmem:[%s282 + $0x48] sm:$0xff] %vm284, %v6527
        %6560 = vst.msk [vmem:[%s282 + $0x50] sm:$0xff] %vm284, %v6528
        %6561 = vst.msk [vmem:[%s282 + $0x58] sm:$0xff] %vm284, %v6529
        %6562 = vst.msk [vmem:[%s282 + $0x60] sm:$0xff] %vm284, %v6530
        %6563 = vst.msk [vmem:[%s282 + $0x68] sm:$0xff] %vm284, %v6531
        %6564 = vst.msk [vmem:[%s282 + $0x70] sm:$0xff] %vm284, %v6532
        %6565 = vst.msk [vmem:[%s282 + $0x78] sm:$0xff] %vm284, %v6533
        %6566 = vst.msk [vmem:[%s282 + $0x80] sm:$0xff] %vm284, %v6534
        %6567 = vst.msk [vmem:[%s282 + $0x88] sm:$0xff] %vm284, %v6535
        %6568 = vst.msk [vmem:[%s282 + $0x90] sm:$0xff] %vm284, %v6536
        %6569 = vst.msk [vmem:[%s282 + $0x98] sm:$0xff] %vm284, %v6537
        %6570 = vst.msk [vmem:[%s282 + $0xa0] sm:$0xff] %vm284, %v6538
        %6571 = vst.msk [vmem:[%s282 + $0xa8] sm:$0xff] %vm284, %v6539
        %6572 = vst.msk [vmem:[%s282 + $0xb0] sm:$0xff] %vm284, %v6540
        %6573 = vst.msk [vmem:[%s282 + $0xb8] sm:$0xff] %vm284, %v6541
        %6574 = vst.msk [vmem:[%s282 + $0xc0] sm:$0xff] %vm284, %v6542
        %6575 = vst.msk [vmem:[%s282 + $0xc8] sm:$0xff] %vm284, %v6543
        %6576 = vst.msk [vmem:[%s282 + $0xd0] sm:$0xff] %vm284, %v6544
        %6577 = vst.msk [vmem:[%s282 + $0xd8] sm:$0xff] %vm284, %v6545
        %6578 = vst.msk [vmem:[%s282 + $0xe0] sm:$0xff] %vm284, %v6546
        %6579 = vst.msk [vmem:[%s282 + $0xe8] sm:$0xff] %vm284, %v6547
        %6580 = vst.msk [vmem:[%s282 + $0xf0] sm:$0xff] %vm284, %v6548
        %6581 = vst.msk [vmem:[%s282 + $0xf8] sm:$0xff] %vm284, %v6549
        %6582 = vst.msk [vmem:[%s849 + $0x1] sm:$0xff] %vm284, %v6518
        %6583 = vst.msk [vmem:[%s849 + $0x9] sm:$0xff] %vm284, %v6519
        %6584 = vst.msk [vmem:[%s849 + $0x19] sm:$0xff] %vm284, %v6520
        %6585 = vst.msk [vmem:[%s849 + $0x21] sm:$0xff] %vm284, %v6521
        %6586 = vst.msk [vmem:[%s849 + $0x31] sm:$0xff] %vm284, %v6522
        %6587 = vst.msk [vmem:[%s849 + $0x39] sm:$0xff] %vm284, %v6523
        %6588 = vst.msk [vmem:[%s849 + $0x49] sm:$0xff] %vm284, %v6524
        %6589 = vst.msk [vmem:[%s849 + $0x51] sm:$0xff] %vm284, %v6525
        %6590 = vst.msk [vmem:[%s849 + $0x61] sm:$0xff] %vm284, %v6526
        %6591 = vst.msk [vmem:[%s849 + $0x69] sm:$0xff] %vm284, %v6527
        %6592 = vst.msk [vmem:[%s849 + $0x79] sm:$0xff] %vm284, %v6528
        %6593 = vst.msk [vmem:[%s849 + $0x81] sm:$0xff] %vm284, %v6529
        %6594 = vst.msk [vmem:[%s849 + $0x91] sm:$0xff] %vm284, %v6530
        %6595 = vst.msk [vmem:[%s849 + $0x99] sm:$0xff] %vm284, %v6531
        %6596 = vst.msk [vmem:[%s849 + $0xa9] sm:$0xff] %vm284, %v6532
        %6597 = vst.msk [vmem:[%s849 + $0xb1] sm:$0xff] %vm284, %v6533
        %6598 = vst.msk [vmem:[%s849 + $0xc1] sm:$0xff] %vm284, %v6534
        %6599 = vst.msk [vmem:[%s849 + $0xc9] sm:$0xff] %vm284, %v6535
        %6600 = vst.msk [vmem:[%s849 + $0xd9] sm:$0xff] %vm284, %v6536
        %6601 = vst.msk [vmem:[%s849 + $0xe1] sm:$0xff] %vm284, %v6537
        %6602 = vst.msk [vmem:[%s849 + $0xf1] sm:$0xff] %vm284, %v6538
        %6603 = vst.msk [vmem:[%s849 + $0xf9] sm:$0xff] %vm284, %v6539
        %6604 = vst.msk [vmem:[%s849 + $0x109] sm:$0xff] %vm284, %v6540
        %6605 = vst.msk [vmem:[%s849 + $0x111] sm:$0xff] %vm284, %v6541
        %6606 = vst.msk [vmem:[%s849 + $0x121] sm:$0xff] %vm284, %v6542
        %6607 = vst.msk [vmem:[%s849 + $0x129] sm:$0xff] %vm284, %v6543
        %6608 = vst.msk [vmem:[%s849 + $0x139] sm:$0xff] %vm284, %v6544
        %6609 = vst.msk [vmem:[%s849 + $0x141] sm:$0xff] %vm284, %v6545
        %6610 = vst.msk [vmem:[%s849 + $0x151] sm:$0xff] %vm284, %v6546
        %6611 = vst.msk [vmem:[%s849 + $0x159] sm:$0xff] %vm284, %v6547
        %6612 = vst.msk [vmem:[%s849 + $0x169] sm:$0xff] %vm284, %v6548
        %6613 = vst.msk [vmem:[%s849 + $0x171] sm:$0xff] %vm284, %v6549
        %v6614 = vld [vmem:[%s4] sm:$0xff]
        %v6615 = vld [vmem:[%s4 + $0x8] sm:$0x1]
        %v6616 = vld [vmem:[#allocation2] sm:$0xff]
        %v6617 = vld [vmem:[#allocation2 + $0x8] sm:$0xff]
        %v6618 = vld [vmem:[#allocation2 + $0x18] sm:$0xff]
        %v6619 = vld [vmem:[#allocation2 + $0x20] sm:$0xff]
        %v6620 = vld [vmem:[#allocation2 + $0x30] sm:$0xff]
        %v6621 = vld [vmem:[#allocation2 + $0x38] sm:$0xff]
        %v6622 = vld [vmem:[#allocation2 + $0x48] sm:$0xff]
        %v6623 = vld [vmem:[#allocation2 + $0x50] sm:$0xff]
        %v6624 = vld [vmem:[#allocation2 + $0x60] sm:$0xff]
        %v6625 = vld [vmem:[#allocation2 + $0x68] sm:$0xff]
        %v6626 = vld [vmem:[#allocation2 + $0x78] sm:$0xff]
        %v6627 = vld [vmem:[#allocation2 + $0x80] sm:$0xff]
        %v6628 = vld [vmem:[#allocation2 + $0x90] sm:$0xff]
        %v6629 = vld [vmem:[#allocation2 + $0x98] sm:$0xff]
        %v6630 = vld [vmem:[#allocation2 + $0xa8] sm:$0xff]
        %v6631 = vld [vmem:[#allocation2 + $0xb0] sm:$0xff]
        %v6632 = vld [vmem:[#allocation2 + $0xc0] sm:$0xff]
        %v6633 = vld [vmem:[#allocation2 + $0xc8] sm:$0xff]
        %v6634 = vld [vmem:[#allocation2 + $0xd8] sm:$0xff]
        %v6635 = vld [vmem:[#allocation2 + $0xe0] sm:$0xff]
        %v6636 = vld [vmem:[#allocation2 + $0xf0] sm:$0xff]
        %v6637 = vld [vmem:[#allocation2 + $0xf8] sm:$0xff]
        %v6638 = vld [vmem:[#allocation2 + $0x108] sm:$0xff]
        %v6639 = vld [vmem:[#allocation2 + $0x110] sm:$0xff]
        %v6640 = vld [vmem:[#allocation2 + $0x120] sm:$0xff]
        %v6641 = vld [vmem:[#allocation2 + $0x128] sm:$0xff]
        %v6642 = vld [vmem:[#allocation2 + $0x138] sm:$0xff]
        %v6643 = vld [vmem:[#allocation2 + $0x140] sm:$0xff]
        %v6644 = vld [vmem:[#allocation2 + $0x150] sm:$0xff]
        %v6645 = vld [vmem:[#allocation2 + $0x158] sm:$0xff]
        %v6646 = vld [vmem:[#allocation2 + $0x168] sm:$0xff]
        %v6647 = vld [vmem:[#allocation2 + $0x170] sm:$0xff]
        %v6648 = vlaneseq
        %v6649 = vshrl.u32 %v6648, 7
        %v6650 = vsub.s32 0, %v6649
        %v6651 = vrot.slane %v6614, %v6650
        %v6652 = vmul.f32 %v6616, %v6651
        %v6653 = vmul.f32 %v6617, %v6651
        %v6654 = vmul.f32 %v6618, %v6651
        %v6655 = vmul.f32 %v6619, %v6651
        %v6656 = vmul.f32 %v6620, %v6651
        %v6657 = vmul.f32 %v6621, %v6651
        %v6658 = vmul.f32 %v6622, %v6651
        %v6659 = vmul.f32 %v6623, %v6651
        %v6660 = vmul.f32 %v6624, %v6651
        %v6661 = vmul.f32 %v6625, %v6651
        %v6662 = vmul.f32 %v6626, %v6651
        %v6663 = vmul.f32 %v6627, %v6651
        %v6664 = vmul.f32 %v6628, %v6651
        %v6665 = vmul.f32 %v6629, %v6651
        %v6666 = vmul.f32 %v6630, %v6651
        %v6667 = vmul.f32 %v6631, %v6651
        %v6668 = vmul.f32 %v6632, %v6651
        %v6669 = vmul.f32 %v6633, %v6651
        %v6670 = vmul.f32 %v6634, %v6651
        %v6671 = vmul.f32 %v6635, %v6651
        %v6672 = vmul.f32 %v6636, %v6651
        %v6673 = vmul.f32 %v6637, %v6651
        %v6674 = vmul.f32 %v6638, %v6651
        %v6675 = vmul.f32 %v6639, %v6651
        %v6676 = vmul.f32 %v6640, %v6651
        %v6677 = vmul.f32 %v6641, %v6651
        %v6678 = vmul.f32 %v6642, %v6651
        %v6679 = vmul.f32 %v6643, %v6651
        %v6680 = vmul.f32 %v6644, %v6651
        %v6681 = vmul.f32 %v6645, %v6651
        %v6682 = vmul.f32 %v6646, %v6651
        %v6683 = vmul.f32 %v6647, %v6651
        %v6684 = vadd.f32 %v6652, 0.0
        %v6685 = vadd.f32 %v6653, 0.0
        %v6686 = vadd.f32 %v6654, 0.0
        %v6687 = vadd.f32 %v6655, 0.0
        %v6688 = vadd.f32 %v6656, 0.0
        %v6689 = vadd.f32 %v6657, 0.0
        %v6690 = vadd.f32 %v6658, 0.0
        %v6691 = vadd.f32 %v6659, 0.0
        %v6692 = vadd.f32 %v6660, 0.0
        %v6693 = vadd.f32 %v6661, 0.0
        %v6694 = vadd.f32 %v6662, 0.0
        %v6695 = vadd.f32 %v6663, 0.0
        %v6696 = vadd.f32 %v6664, 0.0
        %v6697 = vadd.f32 %v6665, 0.0
        %v6698 = vadd.f32 %v6666, 0.0
        %v6699 = vadd.f32 %v6667, 0.0
        %v6700 = vadd.f32 %v6668, 0.0
        %v6701 = vadd.f32 %v6669, 0.0
        %v6702 = vadd.f32 %v6670, 0.0
        %v6703 = vadd.f32 %v6671, 0.0
        %v6704 = vadd.f32 %v6672, 0.0
        %v6705 = vadd.f32 %v6673, 0.0
        %v6706 = vadd.f32 %v6674, 0.0
        %v6707 = vadd.f32 %v6675, 0.0
        %v6708 = vadd.f32 %v6676, 0.0
        %v6709 = vadd.f32 %v6677, 0.0
        %v6710 = vadd.f32 %v6678, 0.0
        %v6711 = vadd.f32 %v6679, 0.0
        %v6712 = vadd.f32 %v6680, 0.0
        %v6713 = vadd.f32 %v6681, 0.0
        %v6714 = vadd.f32 %v6682, 0.0
        %v6715 = vadd.f32 %v6683, 0.0
        %v6716 = vld [vmem:[#allocation2 + $0x1] sm:$0xff]
        %v6717 = vld [vmem:[#allocation2 + $0x9] sm:$0xff]
        %v6718 = vld [vmem:[#allocation2 + $0x19] sm:$0xff]
        %v6719 = vld [vmem:[#allocation2 + $0x21] sm:$0xff]
        %v6720 = vld [vmem:[#allocation2 + $0x31] sm:$0xff]
        %v6721 = vld [vmem:[#allocation2 + $0x39] sm:$0xff]
        %v6722 = vld [vmem:[#allocation2 + $0x49] sm:$0xff]
        %v6723 = vld [vmem:[#allocation2 + $0x51] sm:$0xff]
        %v6724 = vld [vmem:[#allocation2 + $0x61] sm:$0xff]
        %v6725 = vld [vmem:[#allocation2 + $0x69] sm:$0xff]
        %v6726 = vld [vmem:[#allocation2 + $0x79] sm:$0xff]
        %v6727 = vld [vmem:[#allocation2 + $0x81] sm:$0xff]
        %v6728 = vld [vmem:[#allocation2 + $0x91] sm:$0xff]
        %v6729 = vld [vmem:[#allocation2 + $0x99] sm:$0xff]
        %v6730 = vld [vmem:[#allocation2 + $0xa9] sm:$0xff]
        %v6731 = vld [vmem:[#allocation2 + $0xb1] sm:$0xff]
        %v6732 = vld [vmem:[#allocation2 + $0xc1] sm:$0xff]
        %v6733 = vld [vmem:[#allocation2 + $0xc9] sm:$0xff]
        %v6734 = vld [vmem:[#allocation2 + $0xd9] sm:$0xff]
        %v6735 = vld [vmem:[#allocation2 + $0xe1] sm:$0xff]
        %v6736 = vld [vmem:[#allocation2 + $0xf1] sm:$0xff]
        %v6737 = vld [vmem:[#allocation2 + $0xf9] sm:$0xff]
        %v6738 = vld [vmem:[#allocation2 + $0x109] sm:$0xff]
        %v6739 = vld [vmem:[#allocation2 + $0x111] sm:$0xff]
        %v6740 = vld [vmem:[#allocation2 + $0x121] sm:$0xff]
        %v6741 = vld [vmem:[#allocation2 + $0x129] sm:$0xff]
        %v6742 = vld [vmem:[#allocation2 + $0x139] sm:$0xff]
        %v6743 = vld [vmem:[#allocation2 + $0x141] sm:$0xff]
        %v6744 = vld [vmem:[#allocation2 + $0x151] sm:$0xff]
        %v6745 = vld [vmem:[#allocation2 + $0x159] sm:$0xff]
        %v6746 = vld [vmem:[#allocation2 + $0x169] sm:$0xff]
        %v6747 = vld [vmem:[#allocation2 + $0x171] sm:$0xff]
        %v6748 = vlaneseq
        %v6749 = vshrl.u32 %v6748, 7
        %v6750 = vsub.s32 1, %v6749
        %v6751 = vrot.slane %v6614, %v6750
        %v6752 = vmul.f32 %v6716, %v6751
        %v6753 = vmul.f32 %v6717, %v6751
        %v6754 = vmul.f32 %v6718, %v6751
        %v6755 = vmul.f32 %v6719, %v6751
        %v6756 = vmul.f32 %v6720, %v6751
        %v6757 = vmul.f32 %v6721, %v6751
        %v6758 = vmul.f32 %v6722, %v6751
        %v6759 = vmul.f32 %v6723, %v6751
        %v6760 = vmul.f32 %v6724, %v6751
        %v6761 = vmul.f32 %v6725, %v6751
        %v6762 = vmul.f32 %v6726, %v6751
        %v6763 = vmul.f32 %v6727, %v6751
        %v6764 = vmul.f32 %v6728, %v6751
        %v6765 = vmul.f32 %v6729, %v6751
        %v6766 = vmul.f32 %v6730, %v6751
        %v6767 = vmul.f32 %v6731, %v6751
        %v6768 = vmul.f32 %v6732, %v6751
        %v6769 = vmul.f32 %v6733, %v6751
        %v6770 = vmul.f32 %v6734, %v6751
        %v6771 = vmul.f32 %v6735, %v6751
        %v6772 = vmul.f32 %v6736, %v6751
        %v6773 = vmul.f32 %v6737, %v6751
        %v6774 = vmul.f32 %v6738, %v6751
        %v6775 = vmul.f32 %v6739, %v6751
        %v6776 = vmul.f32 %v6740, %v6751
        %v6777 = vmul.f32 %v6741, %v6751
        %v6778 = vmul.f32 %v6742, %v6751
        %v6779 = vmul.f32 %v6743, %v6751
        %v6780 = vmul.f32 %v6744, %v6751
        %v6781 = vmul.f32 %v6745, %v6751
        %v6782 = vmul.f32 %v6746, %v6751
        %v6783 = vmul.f32 %v6747, %v6751
        %v6784 = vadd.f32 %v6684, %v6752
        %v6785 = vadd.f32 %v6685, %v6753
        %v6786 = vadd.f32 %v6686, %v6754
        %v6787 = vadd.f32 %v6687, %v6755
        %v6788 = vadd.f32 %v6688, %v6756
        %v6789 = vadd.f32 %v6689, %v6757
        %v6790 = vadd.f32 %v6690, %v6758
        %v6791 = vadd.f32 %v6691, %v6759
        %v6792 = vadd.f32 %v6692, %v6760
        %v6793 = vadd.f32 %v6693, %v6761
        %v6794 = vadd.f32 %v6694, %v6762
        %v6795 = vadd.f32 %v6695, %v6763
        %v6796 = vadd.f32 %v6696, %v6764
        %v6797 = vadd.f32 %v6697, %v6765
        %v6798 = vadd.f32 %v6698, %v6766
        %v6799 = vadd.f32 %v6699, %v6767
        %v6800 = vadd.f32 %v6700, %v6768
        %v6801 = vadd.f32 %v6701, %v6769
        %v6802 = vadd.f32 %v6702, %v6770
        %v6803 = vadd.f32 %v6703, %v6771
        %v6804 = vadd.f32 %v6704, %v6772
        %v6805 = vadd.f32 %v6705, %v6773
        %v6806 = vadd.f32 %v6706, %v6774
        %v6807 = vadd.f32 %v6707, %v6775
        %v6808 = vadd.f32 %v6708, %v6776
        %v6809 = vadd.f32 %v6709, %v6777
        %v6810 = vadd.f32 %v6710, %v6778
        %v6811 = vadd.f32 %v6711, %v6779
        %v6812 = vadd.f32 %v6712, %v6780
        %v6813 = vadd.f32 %v6713, %v6781
        %v6814 = vadd.f32 %v6714, %v6782
        %v6815 = vadd.f32 %v6715, %v6783
        %v6816 = vld [vmem:[#allocation2 + $0x2] sm:$0xff]
        %v6817 = vld [vmem:[#allocation2 + $0xa] sm:$0xff]
        %v6818 = vld [vmem:[#allocation2 + $0x1a] sm:$0xff]
        %v6819 = vld [vmem:[#allocation2 + $0x22] sm:$0xff]
        %v6820 = vld [vmem:[#allocation2 + $0x32] sm:$0xff]
        %v6821 = vld [vmem:[#allocation2 + $0x3a] sm:$0xff]
        %v6822 = vld [vmem:[#allocation2 + $0x4a] sm:$0xff]
        %v6823 = vld [vmem:[#allocation2 + $0x52] sm:$0xff]
        %v6824 = vld [vmem:[#allocation2 + $0x62] sm:$0xff]
        %v6825 = vld [vmem:[#allocation2 + $0x6a] sm:$0xff]
        %v6826 = vld [vmem:[#allocation2 + $0x7a] sm:$0xff]
        %v6827 = vld [vmem:[#allocation2 + $0x82] sm:$0xff]
        %v6828 = vld [vmem:[#allocation2 + $0x92] sm:$0xff]
        %v6829 = vld [vmem:[#allocation2 + $0x9a] sm:$0xff]
        %v6830 = vld [vmem:[#allocation2 + $0xaa] sm:$0xff]
        %v6831 = vld [vmem:[#allocation2 + $0xb2] sm:$0xff]
        %v6832 = vld [vmem:[#allocation2 + $0xc2] sm:$0xff]
        %v6833 = vld [vmem:[#allocation2 + $0xca] sm:$0xff]
        %v6834 = vld [vmem:[#allocation2 + $0xda] sm:$0xff]
        %v6835 = vld [vmem:[#allocation2 + $0xe2] sm:$0xff]
        %v6836 = vld [vmem:[#allocation2 + $0xf2] sm:$0xff]
        %v6837 = vld [vmem:[#allocation2 + $0xfa] sm:$0xff]
        %v6838 = vld [vmem:[#allocation2 + $0x10a] sm:$0xff]
        %v6839 = vld [vmem:[#allocation2 + $0x112] sm:$0xff]
        %v6840 = vld [vmem:[#allocation2 + $0x122] sm:$0xff]
        %v6841 = vld [vmem:[#allocation2 + $0x12a] sm:$0xff]
        %v6842 = vld [vmem:[#allocation2 + $0x13a] sm:$0xff]
        %v6843 = vld [vmem:[#allocation2 + $0x142] sm:$0xff]
        %v6844 = vld [vmem:[#allocation2 + $0x152] sm:$0xff]
        %v6845 = vld [vmem:[#allocation2 + $0x15a] sm:$0xff]
        %v6846 = vld [vmem:[#allocation2 + $0x16a] sm:$0xff]
        %v6847 = vld [vmem:[#allocation2 + $0x172] sm:$0xff]
        %v6848 = vlaneseq
        %v6849 = vshrl.u32 %v6848, 7
        %v6850 = vsub.s32 2, %v6849
        %v6851 = vrot.slane %v6614, %v6850
        %v6852 = vmul.f32 %v6816, %v6851
        %v6853 = vmul.f32 %v6817, %v6851
        %v6854 = vmul.f32 %v6818, %v6851
        %v6855 = vmul.f32 %v6819, %v6851
        %v6856 = vmul.f32 %v6820, %v6851
        %v6857 = vmul.f32 %v6821, %v6851
        %v6858 = vmul.f32 %v6822, %v6851
        %v6859 = vmul.f32 %v6823, %v6851
        %v6860 = vmul.f32 %v6824, %v6851
        %v6861 = vmul.f32 %v6825, %v6851
        %v6862 = vmul.f32 %v6826, %v6851
        %v6863 = vmul.f32 %v6827, %v6851
        %v6864 = vmul.f32 %v6828, %v6851
        %v6865 = vmul.f32 %v6829, %v6851
        %v6866 = vmul.f32 %v6830, %v6851
        %v6867 = vmul.f32 %v6831, %v6851
        %v6868 = vmul.f32 %v6832, %v6851
        %v6869 = vmul.f32 %v6833, %v6851
        %v6870 = vmul.f32 %v6834, %v6851
        %v6871 = vmul.f32 %v6835, %v6851
        %v6872 = vmul.f32 %v6836, %v6851
        %v6873 = vmul.f32 %v6837, %v6851
        %v6874 = vmul.f32 %v6838, %v6851
        %v6875 = vmul.f32 %v6839, %v6851
        %v6876 = vmul.f32 %v6840, %v6851
        %v6877 = vmul.f32 %v6841, %v6851
        %v6878 = vmul.f32 %v6842, %v6851
        %v6879 = vmul.f32 %v6843, %v6851
        %v6880 = vmul.f32 %v6844, %v6851
        %v6881 = vmul.f32 %v6845, %v6851
        %v6882 = vmul.f32 %v6846, %v6851
        %v6883 = vmul.f32 %v6847, %v6851
        %v6884 = vadd.f32 %v6784, %v6852
        %v6885 = vadd.f32 %v6785, %v6853
        %v6886 = vadd.f32 %v6786, %v6854
        %v6887 = vadd.f32 %v6787, %v6855
        %v6888 = vadd.f32 %v6788, %v6856
        %v6889 = vadd.f32 %v6789, %v6857
        %v6890 = vadd.f32 %v6790, %v6858
        %v6891 = vadd.f32 %v6791, %v6859
        %v6892 = vadd.f32 %v6792, %v6860
        %v6893 = vadd.f32 %v6793, %v6861
        %v6894 = vadd.f32 %v6794, %v6862
        %v6895 = vadd.f32 %v6795, %v6863
        %v6896 = vadd.f32 %v6796, %v6864
        %v6897 = vadd.f32 %v6797, %v6865
        %v6898 = vadd.f32 %v6798, %v6866
        %v6899 = vadd.f32 %v6799, %v6867
        %v6900 = vadd.f32 %v6800, %v6868
        %v6901 = vadd.f32 %v6801, %v6869
        %v6902 = vadd.f32 %v6802, %v6870
        %v6903 = vadd.f32 %v6803, %v6871
        %v6904 = vadd.f32 %v6804, %v6872
        %v6905 = vadd.f32 %v6805, %v6873
        %v6906 = vadd.f32 %v6806, %v6874
        %v6907 = vadd.f32 %v6807, %v6875
        %v6908 = vadd.f32 %v6808, %v6876
        %v6909 = vadd.f32 %v6809, %v6877
        %v6910 = vadd.f32 %v6810, %v6878
        %v6911 = vadd.f32 %v6811, %v6879
        %v6912 = vadd.f32 %v6812, %v6880
        %v6913 = vadd.f32 %v6813, %v6881
        %v6914 = vadd.f32 %v6814, %v6882
        %v6915 = vadd.f32 %v6815, %v6883
        %v6916 = vld [vmem:[%s849] sm:$0xff]
        %v6917 = vld [vmem:[%s849 + $0x8] sm:$0xff]
        %v6918 = vld [vmem:[%s849 + $0x18] sm:$0xff]
        %v6919 = vld [vmem:[%s849 + $0x20] sm:$0xff]
        %v6920 = vld [vmem:[%s849 + $0x30] sm:$0xff]
        %v6921 = vld [vmem:[%s849 + $0x38] sm:$0xff]
        %v6922 = vld [vmem:[%s849 + $0x48] sm:$0xff]
        %v6923 = vld [vmem:[%s849 + $0x50] sm:$0xff]
        %v6924 = vld [vmem:[%s849 + $0x60] sm:$0xff]
        %v6925 = vld [vmem:[%s849 + $0x68] sm:$0xff]
        %v6926 = vld [vmem:[%s849 + $0x78] sm:$0xff]
        %v6927 = vld [vmem:[%s849 + $0x80] sm:$0xff]
        %v6928 = vld [vmem:[%s849 + $0x90] sm:$0xff]
        %v6929 = vld [vmem:[%s849 + $0x98] sm:$0xff]
        %v6930 = vld [vmem:[%s849 + $0xa8] sm:$0xff]
        %v6931 = vld [vmem:[%s849 + $0xb0] sm:$0xff]
        %v6932 = vld [vmem:[%s849 + $0xc0] sm:$0xff]
        %v6933 = vld [vmem:[%s849 + $0xc8] sm:$0xff]
        %v6934 = vld [vmem:[%s849 + $0xd8] sm:$0xff]
        %v6935 = vld [vmem:[%s849 + $0xe0] sm:$0xff]
        %v6936 = vld [vmem:[%s849 + $0xf0] sm:$0xff]
        %v6937 = vld [vmem:[%s849 + $0xf8] sm:$0xff]
        %v6938 = vld [vmem:[%s849 + $0x108] sm:$0xff]
        %v6939 = vld [vmem:[%s849 + $0x110] sm:$0xff]
        %v6940 = vld [vmem:[%s849 + $0x120] sm:$0xff]
        %v6941 = vld [vmem:[%s849 + $0x128] sm:$0xff]
        %v6942 = vld [vmem:[%s849 + $0x138] sm:$0xff]
        %v6943 = vld [vmem:[%s849 + $0x140] sm:$0xff]
        %v6944 = vld [vmem:[%s849 + $0x150] sm:$0xff]
        %v6945 = vld [vmem:[%s849 + $0x158] sm:$0xff]
        %v6946 = vld [vmem:[%s849 + $0x168] sm:$0xff]
        %v6947 = vld [vmem:[%s849 + $0x170] sm:$0xff]
        %v6948 = vlaneseq
        %v6949 = vshrl.u32 %v6948, 7
        %v6950 = vsub.s32 3, %v6949
        %v6951 = vrot.slane %v6614, %v6950
        %v6952 = vmul.f32 %v6916, %v6951
        %v6953 = vmul.f32 %v6917, %v6951
        %v6954 = vmul.f32 %v6918, %v6951
        %v6955 = vmul.f32 %v6919, %v6951
        %v6956 = vmul.f32 %v6920, %v6951
        %v6957 = vmul.f32 %v6921, %v6951
        %v6958 = vmul.f32 %v6922, %v6951
        %v6959 = vmul.f32 %v6923, %v6951
        %v6960 = vmul.f32 %v6924, %v6951
        %v6961 = vmul.f32 %v6925, %v6951
        %v6962 = vmul.f32 %v6926, %v6951
        %v6963 = vmul.f32 %v6927, %v6951
        %v6964 = vmul.f32 %v6928, %v6951
        %v6965 = vmul.f32 %v6929, %v6951
        %v6966 = vmul.f32 %v6930, %v6951
        %v6967 = vmul.f32 %v6931, %v6951
        %v6968 = vmul.f32 %v6932, %v6951
        %v6969 = vmul.f32 %v6933, %v6951
        %v6970 = vmul.f32 %v6934, %v6951
        %v6971 = vmul.f32 %v6935, %v6951
        %v6972 = vmul.f32 %v6936, %v6951
        %v6973 = vmul.f32 %v6937, %v6951
        %v6974 = vmul.f32 %v6938, %v6951
        %v6975 = vmul.f32 %v6939, %v6951
        %v6976 = vmul.f32 %v6940, %v6951
        %v6977 = vmul.f32 %v6941, %v6951
        %v6978 = vmul.f32 %v6942, %v6951
        %v6979 = vmul.f32 %v6943, %v6951
        %v6980 = vmul.f32 %v6944, %v6951
        %v6981 = vmul.f32 %v6945, %v6951
        %v6982 = vmul.f32 %v6946, %v6951
        %v6983 = vmul.f32 %v6947, %v6951
        %v6984 = vadd.f32 %v6884, %v6952
        %v6985 = vadd.f32 %v6885, %v6953
        %v6986 = vadd.f32 %v6886, %v6954
        %v6987 = vadd.f32 %v6887, %v6955
        %v6988 = vadd.f32 %v6888, %v6956
        %v6989 = vadd.f32 %v6889, %v6957
        %v6990 = vadd.f32 %v6890, %v6958
        %v6991 = vadd.f32 %v6891, %v6959
        %v6992 = vadd.f32 %v6892, %v6960
        %v6993 = vadd.f32 %v6893, %v6961
        %v6994 = vadd.f32 %v6894, %v6962
        %v6995 = vadd.f32 %v6895, %v6963
        %v6996 = vadd.f32 %v6896, %v6964
        %v6997 = vadd.f32 %v6897, %v6965
        %v6998 = vadd.f32 %v6898, %v6966
        %v6999 = vadd.f32 %v6899, %v6967
        %v7000 = vadd.f32 %v6900, %v6968
        %v7001 = vadd.f32 %v6901, %v6969
        %v7002 = vadd.f32 %v6902, %v6970
        %v7003 = vadd.f32 %v6903, %v6971
        %v7004 = vadd.f32 %v6904, %v6972
        %v7005 = vadd.f32 %v6905, %v6973
        %v7006 = vadd.f32 %v6906, %v6974
        %v7007 = vadd.f32 %v6907, %v6975
        %v7008 = vadd.f32 %v6908, %v6976
        %v7009 = vadd.f32 %v6909, %v6977
        %v7010 = vadd.f32 %v6910, %v6978
        %v7011 = vadd.f32 %v6911, %v6979
        %v7012 = vadd.f32 %v6912, %v6980
        %v7013 = vadd.f32 %v6913, %v6981
        %v7014 = vadd.f32 %v6914, %v6982
        %v7015 = vadd.f32 %v6915, %v6983
        %v7016 = vld [vmem:[%s849 + $0x1] sm:$0xff]
        %v7017 = vld [vmem:[%s849 + $0x9] sm:$0xff]
        %v7018 = vld [vmem:[%s849 + $0x19] sm:$0xff]
        %v7019 = vld [vmem:[%s849 + $0x21] sm:$0xff]
        %v7020 = vld [vmem:[%s849 + $0x31] sm:$0xff]
        %v7021 = vld [vmem:[%s849 + $0x39] sm:$0xff]
        %v7022 = vld [vmem:[%s849 + $0x49] sm:$0xff]
        %v7023 = vld [vmem:[%s849 + $0x51] sm:$0xff]
        %v7024 = vld [vmem:[%s849 + $0x61] sm:$0xff]
        %v7025 = vld [vmem:[%s849 + $0x69] sm:$0xff]
        %v7026 = vld [vmem:[%s849 + $0x79] sm:$0xff]
        %v7027 = vld [vmem:[%s849 + $0x81] sm:$0xff]
        %v7028 = vld [vmem:[%s849 + $0x91] sm:$0xff]
        %v7029 = vld [vmem:[%s849 + $0x99] sm:$0xff]
        %v7030 = vld [vmem:[%s849 + $0xa9] sm:$0xff]
        %v7031 = vld [vmem:[%s849 + $0xb1] sm:$0xff]
        %v7032 = vld [vmem:[%s849 + $0xc1] sm:$0xff]
        %v7033 = vld [vmem:[%s849 + $0xc9] sm:$0xff]
        %v7034 = vld [vmem:[%s849 + $0xd9] sm:$0xff]
        %v7035 = vld [vmem:[%s849 + $0xe1] sm:$0xff]
        %v7036 = vld [vmem:[%s849 + $0xf1] sm:$0xff]
        %v7037 = vld [vmem:[%s849 + $0xf9] sm:$0xff]
        %v7038 = vld [vmem:[%s849 + $0x109] sm:$0xff]
        %v7039 = vld [vmem:[%s849 + $0x111] sm:$0xff]
        %v7040 = vld [vmem:[%s849 + $0x121] sm:$0xff]
        %v7041 = vld [vmem:[%s849 + $0x129] sm:$0xff]
        %v7042 = vld [vmem:[%s849 + $0x139] sm:$0xff]
        %v7043 = vld [vmem:[%s849 + $0x141] sm:$0xff]
        %v7044 = vld [vmem:[%s849 + $0x151] sm:$0xff]
        %v7045 = vld [vmem:[%s849 + $0x159] sm:$0xff]
        %v7046 = vld [vmem:[%s849 + $0x169] sm:$0xff]
        %v7047 = vld [vmem:[%s849 + $0x171] sm:$0xff]
        %v7048 = vlaneseq
        %v7049 = vshrl.u32 %v7048, 7
        %v7050 = vsub.s32 4, %v7049
        %v7051 = vrot.slane %v6614, %v7050
        %v7052 = vmul.f32 %v7016, %v7051
        %v7053 = vmul.f32 %v7017, %v7051
        %v7054 = vmul.f32 %v7018, %v7051
        %v7055 = vmul.f32 %v7019, %v7051
        %v7056 = vmul.f32 %v7020, %v7051
        %v7057 = vmul.f32 %v7021, %v7051
        %v7058 = vmul.f32 %v7022, %v7051
        %v7059 = vmul.f32 %v7023, %v7051
        %v7060 = vmul.f32 %v7024, %v7051
        %v7061 = vmul.f32 %v7025, %v7051
        %v7062 = vmul.f32 %v7026, %v7051
        %v7063 = vmul.f32 %v7027, %v7051
        %v7064 = vmul.f32 %v7028, %v7051
        %v7065 = vmul.f32 %v7029, %v7051
        %v7066 = vmul.f32 %v7030, %v7051
        %v7067 = vmul.f32 %v7031, %v7051
        %v7068 = vmul.f32 %v7032, %v7051
        %v7069 = vmul.f32 %v7033, %v7051
        %v7070 = vmul.f32 %v7034, %v7051
        %v7071 = vmul.f32 %v7035, %v7051
        %v7072 = vmul.f32 %v7036, %v7051
        %v7073 = vmul.f32 %v7037, %v7051
        %v7074 = vmul.f32 %v7038, %v7051
        %v7075 = vmul.f32 %v7039, %v7051
        %v7076 = vmul.f32 %v7040, %v7051
        %v7077 = vmul.f32 %v7041, %v7051
        %v7078 = vmul.f32 %v7042, %v7051
        %v7079 = vmul.f32 %v7043, %v7051
        %v7080 = vmul.f32 %v7044, %v7051
        %v7081 = vmul.f32 %v7045, %v7051
        %v7082 = vmul.f32 %v7046, %v7051
        %v7083 = vmul.f32 %v7047, %v7051
        %v7084 = vadd.f32 %v6984, %v7052
        %v7085 = vadd.f32 %v6985, %v7053
        %v7086 = vadd.f32 %v6986, %v7054
        %v7087 = vadd.f32 %v6987, %v7055
        %v7088 = vadd.f32 %v6988, %v7056
        %v7089 = vadd.f32 %v6989, %v7057
        %v7090 = vadd.f32 %v6990, %v7058
        %v7091 = vadd.f32 %v6991, %v7059
        %v7092 = vadd.f32 %v6992, %v7060
        %v7093 = vadd.f32 %v6993, %v7061
        %v7094 = vadd.f32 %v6994, %v7062
        %v7095 = vadd.f32 %v6995, %v7063
        %v7096 = vadd.f32 %v6996, %v7064
        %v7097 = vadd.f32 %v6997, %v7065
        %v7098 = vadd.f32 %v6998, %v7066
        %v7099 = vadd.f32 %v6999, %v7067
        %v7100 = vadd.f32 %v7000, %v7068
        %v7101 = vadd.f32 %v7001, %v7069
        %v7102 = vadd.f32 %v7002, %v7070
        %v7103 = vadd.f32 %v7003, %v7071
        %v7104 = vadd.f32 %v7004, %v7072
        %v7105 = vadd.f32 %v7005, %v7073
        %v7106 = vadd.f32 %v7006, %v7074
        %v7107 = vadd.f32 %v7007, %v7075
        %v7108 = vadd.f32 %v7008, %v7076
        %v7109 = vadd.f32 %v7009, %v7077
        %v7110 = vadd.f32 %v7010, %v7078
        %v7111 = vadd.f32 %v7011, %v7079
        %v7112 = vadd.f32 %v7012, %v7080
        %v7113 = vadd.f32 %v7013, %v7081
        %v7114 = vadd.f32 %v7014, %v7082
        %v7115 = vadd.f32 %v7015, %v7083
        %v7116 = vld [vmem:[%s849 + $0x2] sm:$0xff]
        %v7117 = vld [vmem:[%s849 + $0xa] sm:$0xff]
        %v7118 = vld [vmem:[%s849 + $0x1a] sm:$0xff]
        %v7119 = vld [vmem:[%s849 + $0x22] sm:$0xff]
        %v7120 = vld [vmem:[%s849 + $0x32] sm:$0xff]
        %v7121 = vld [vmem:[%s849 + $0x3a] sm:$0xff]
        %v7122 = vld [vmem:[%s849 + $0x4a] sm:$0xff]
        %v7123 = vld [vmem:[%s849 + $0x52] sm:$0xff]
        %v7124 = vld [vmem:[%s849 + $0x62] sm:$0xff]
        %v7125 = vld [vmem:[%s849 + $0x6a] sm:$0xff]
        %v7126 = vld [vmem:[%s849 + $0x7a] sm:$0xff]
        %v7127 = vld [vmem:[%s849 + $0x82] sm:$0xff]
        %v7128 = vld [vmem:[%s849 + $0x92] sm:$0xff]
        %v7129 = vld [vmem:[%s849 + $0x9a] sm:$0xff]
        %v7130 = vld [vmem:[%s849 + $0xaa] sm:$0xff]
        %v7131 = vld [vmem:[%s849 + $0xb2] sm:$0xff]
        %v7132 = vld [vmem:[%s849 + $0xc2] sm:$0xff]
        %v7133 = vld [vmem:[%s849 + $0xca] sm:$0xff]
        %v7134 = vld [vmem:[%s849 + $0xda] sm:$0xff]
        %v7135 = vld [vmem:[%s849 + $0xe2] sm:$0xff]
        %v7136 = vld [vmem:[%s849 + $0xf2] sm:$0xff]
        %v7137 = vld [vmem:[%s849 + $0xfa] sm:$0xff]
        %v7138 = vld [vmem:[%s849 + $0x10a] sm:$0xff]
        %v7139 = vld [vmem:[%s849 + $0x112] sm:$0xff]
        %v7140 = vld [vmem:[%s849 + $0x122] sm:$0xff]
        %v7141 = vld [vmem:[%s849 + $0x12a] sm:$0xff]
        %v7142 = vld [vmem:[%s849 + $0x13a] sm:$0xff]
        %v7143 = vld [vmem:[%s849 + $0x142] sm:$0xff]
        %v7144 = vld [vmem:[%s849 + $0x152] sm:$0xff]
        %v7145 = vld [vmem:[%s849 + $0x15a] sm:$0xff]
        %v7146 = vld [vmem:[%s849 + $0x16a] sm:$0xff]
        %v7147 = vld [vmem:[%s849 + $0x172] sm:$0xff]
        %v7148 = vlaneseq
        %v7149 = vshrl.u32 %v7148, 7
        %v7150 = vsub.s32 5, %v7149
        %v7151 = vrot.slane %v6614, %v7150
        %v7152 = vmul.f32 %v7116, %v7151
        %v7153 = vmul.f32 %v7117, %v7151
        %v7154 = vmul.f32 %v7118, %v7151
        %v7155 = vmul.f32 %v7119, %v7151
        %v7156 = vmul.f32 %v7120, %v7151
        %v7157 = vmul.f32 %v7121, %v7151
        %v7158 = vmul.f32 %v7122, %v7151
        %v7159 = vmul.f32 %v7123, %v7151
        %v7160 = vmul.f32 %v7124, %v7151
        %v7161 = vmul.f32 %v7125, %v7151
        %v7162 = vmul.f32 %v7126, %v7151
        %v7163 = vmul.f32 %v7127, %v7151
        %v7164 = vmul.f32 %v7128, %v7151
        %v7165 = vmul.f32 %v7129, %v7151
        %v7166 = vmul.f32 %v7130, %v7151
        %v7167 = vmul.f32 %v7131, %v7151
        %v7168 = vmul.f32 %v7132, %v7151
        %v7169 = vmul.f32 %v7133, %v7151
        %v7170 = vmul.f32 %v7134, %v7151
        %v7171 = vmul.f32 %v7135, %v7151
        %v7172 = vmul.f32 %v7136, %v7151
        %v7173 = vmul.f32 %v7137, %v7151
        %v7174 = vmul.f32 %v7138, %v7151
        %v7175 = vmul.f32 %v7139, %v7151
        %v7176 = vmul.f32 %v7140, %v7151
        %v7177 = vmul.f32 %v7141, %v7151
        %v7178 = vmul.f32 %v7142, %v7151
        %v7179 = vmul.f32 %v7143, %v7151
        %v7180 = vmul.f32 %v7144, %v7151
        %v7181 = vmul.f32 %v7145, %v7151
        %v7182 = vmul.f32 %v7146, %v7151
        %v7183 = vmul.f32 %v7147, %v7151
        %v7184 = vadd.f32 %v7084, %v7152
        %v7185 = vadd.f32 %v7085, %v7153
        %v7186 = vadd.f32 %v7086, %v7154
        %v7187 = vadd.f32 %v7087, %v7155
        %v7188 = vadd.f32 %v7088, %v7156
        %v7189 = vadd.f32 %v7089, %v7157
        %v7190 = vadd.f32 %v7090, %v7158
        %v7191 = vadd.f32 %v7091, %v7159
        %v7192 = vadd.f32 %v7092, %v7160
        %v7193 = vadd.f32 %v7093, %v7161
        %v7194 = vadd.f32 %v7094, %v7162
        %v7195 = vadd.f32 %v7095, %v7163
        %v7196 = vadd.f32 %v7096, %v7164
        %v7197 = vadd.f32 %v7097, %v7165
        %v7198 = vadd.f32 %v7098, %v7166
        %v7199 = vadd.f32 %v7099, %v7167
        %v7200 = vadd.f32 %v7100, %v7168
        %v7201 = vadd.f32 %v7101, %v7169
        %v7202 = vadd.f32 %v7102, %v7170
        %v7203 = vadd.f32 %v7103, %v7171
        %v7204 = vadd.f32 %v7104, %v7172
        %v7205 = vadd.f32 %v7105, %v7173
        %v7206 = vadd.f32 %v7106, %v7174
        %v7207 = vadd.f32 %v7107, %v7175
        %v7208 = vadd.f32 %v7108, %v7176
        %v7209 = vadd.f32 %v7109, %v7177
        %v7210 = vadd.f32 %v7110, %v7178
        %v7211 = vadd.f32 %v7111, %v7179
        %v7212 = vadd.f32 %v7112, %v7180
        %v7213 = vadd.f32 %v7113, %v7181
        %v7214 = vadd.f32 %v7114, %v7182
        %v7215 = vadd.f32 %v7115, %v7183
        %v7216 = vld [vmem:[%s1074] sm:$0xff]
        %v7217 = vld [vmem:[%s1074 + $0x8] sm:$0xff]
        %v7218 = vld [vmem:[%s1074 + $0x18] sm:$0xff]
        %v7219 = vld [vmem:[%s1074 + $0x20] sm:$0xff]
        %v7220 = vld [vmem:[%s1074 + $0x30] sm:$0xff]
        %v7221 = vld [vmem:[%s1074 + $0x38] sm:$0xff]
        %v7222 = vld [vmem:[%s1074 + $0x48] sm:$0xff]
        %v7223 = vld [vmem:[%s1074 + $0x50] sm:$0xff]
        %v7224 = vld [vmem:[%s1074 + $0x60] sm:$0xff]
        %v7225 = vld [vmem:[%s1074 + $0x68] sm:$0xff]
        %v7226 = vld [vmem:[%s1074 + $0x78] sm:$0xff]
        %v7227 = vld [vmem:[%s1074 + $0x80] sm:$0xff]
        %v7228 = vld [vmem:[%s1074 + $0x90] sm:$0xff]
        %v7229 = vld [vmem:[%s1074 + $0x98] sm:$0xff]
        %v7230 = vld [vmem:[%s1074 + $0xa8] sm:$0xff]
        %v7231 = vld [vmem:[%s1074 + $0xb0] sm:$0xff]
        %v7232 = vld [vmem:[%s1074 + $0xc0] sm:$0xff]
        %v7233 = vld [vmem:[%s1074 + $0xc8] sm:$0xff]
        %v7234 = vld [vmem:[%s1074 + $0xd8] sm:$0xff]
        %v7235 = vld [vmem:[%s1074 + $0xe0] sm:$0xff]
        %v7236 = vld [vmem:[%s1074 + $0xf0] sm:$0xff]
        %v7237 = vld [vmem:[%s1074 + $0xf8] sm:$0xff]
        %v7238 = vld [vmem:[%s1074 + $0x108] sm:$0xff]
        %v7239 = vld [vmem:[%s1074 + $0x110] sm:$0xff]
        %v7240 = vld [vmem:[%s1074 + $0x120] sm:$0xff]
        %v7241 = vld [vmem:[%s1074 + $0x128] sm:$0xff]
        %v7242 = vld [vmem:[%s1074 + $0x138] sm:$0xff]
        %v7243 = vld [vmem:[%s1074 + $0x140] sm:$0xff]
        %v7244 = vld [vmem:[%s1074 + $0x150] sm:$0xff]
        %v7245 = vld [vmem:[%s1074 + $0x158] sm:$0xff]
        %v7246 = vld [vmem:[%s1074 + $0x168] sm:$0xff]
        %v7247 = vld [vmem:[%s1074 + $0x170] sm:$0xff]
        %v7248 = vlaneseq
        %v7249 = vshrl.u32 %v7248, 7
        %v7250 = vsub.s32 6, %v7249
        %v7251 = vrot.slane %v6614, %v7250
        %v7252 = vmul.f32 %v7216, %v7251
        %v7253 = vmul.f32 %v7217, %v7251
        %v7254 = vmul.f32 %v7218, %v7251
        %v7255 = vmul.f32 %v7219, %v7251
        %v7256 = vmul.f32 %v7220, %v7251
        %v7257 = vmul.f32 %v7221, %v7251
        %v7258 = vmul.f32 %v7222, %v7251
        %v7259 = vmul.f32 %v7223, %v7251
        %v7260 = vmul.f32 %v7224, %v7251
        %v7261 = vmul.f32 %v7225, %v7251
        %v7262 = vmul.f32 %v7226, %v7251
        %v7263 = vmul.f32 %v7227, %v7251
        %v7264 = vmul.f32 %v7228, %v7251
        %v7265 = vmul.f32 %v7229, %v7251
        %v7266 = vmul.f32 %v7230, %v7251
        %v7267 = vmul.f32 %v7231, %v7251
        %v7268 = vmul.f32 %v7232, %v7251
        %v7269 = vmul.f32 %v7233, %v7251
        %v7270 = vmul.f32 %v7234, %v7251
        %v7271 = vmul.f32 %v7235, %v7251
        %v7272 = vmul.f32 %v7236, %v7251
        %v7273 = vmul.f32 %v7237, %v7251
        %v7274 = vmul.f32 %v7238, %v7251
        %v7275 = vmul.f32 %v7239, %v7251
        %v7276 = vmul.f32 %v7240, %v7251
        %v7277 = vmul.f32 %v7241, %v7251
        %v7278 = vmul.f32 %v7242, %v7251
        %v7279 = vmul.f32 %v7243, %v7251
        %v7280 = vmul.f32 %v7244, %v7251
        %v7281 = vmul.f32 %v7245, %v7251
        %v7282 = vmul.f32 %v7246, %v7251
        %v7283 = vmul.f32 %v7247, %v7251
        %v7284 = vadd.f32 %v7184, %v7252
        %v7285 = vadd.f32 %v7185, %v7253
        %v7286 = vadd.f32 %v7186, %v7254
        %v7287 = vadd.f32 %v7187, %v7255
        %v7288 = vadd.f32 %v7188, %v7256
        %v7289 = vadd.f32 %v7189, %v7257
        %v7290 = vadd.f32 %v7190, %v7258
        %v7291 = vadd.f32 %v7191, %v7259
        %v7292 = vadd.f32 %v7192, %v7260
        %v7293 = vadd.f32 %v7193, %v7261
        %v7294 = vadd.f32 %v7194, %v7262
        %v7295 = vadd.f32 %v7195, %v7263
        %v7296 = vadd.f32 %v7196, %v7264
        %v7297 = vadd.f32 %v7197, %v7265
        %v7298 = vadd.f32 %v7198, %v7266
        %v7299 = vadd.f32 %v7199, %v7267
        %v7300 = vadd.f32 %v7200, %v7268
        %v7301 = vadd.f32 %v7201, %v7269
        %v7302 = vadd.f32 %v7202, %v7270
        %v7303 = vadd.f32 %v7203, %v7271
        %v7304 = vadd.f32 %v7204, %v7272
        %v7305 = vadd.f32 %v7205, %v7273
        %v7306 = vadd.f32 %v7206, %v7274
        %v7307 = vadd.f32 %v7207, %v7275
        %v7308 = vadd.f32 %v7208, %v7276
        %v7309 = vadd.f32 %v7209, %v7277
        %v7310 = vadd.f32 %v7210, %v7278
        %v7311 = vadd.f32 %v7211, %v7279
        %v7312 = vadd.f32 %v7212, %v7280
        %v7313 = vadd.f32 %v7213, %v7281
        %v7314 = vadd.f32 %v7214, %v7282
        %v7315 = vadd.f32 %v7215, %v7283
        %v7316 = vld [vmem:[%s1074 + $0x1] sm:$0xff]
        %v7317 = vld [vmem:[%s1074 + $0x9] sm:$0xff]
        %v7318 = vld [vmem:[%s1074 + $0x19] sm:$0xff]
        %v7319 = vld [vmem:[%s1074 + $0x21] sm:$0xff]
        %v7320 = vld [vmem:[%s1074 + $0x31] sm:$0xff]
        %v7321 = vld [vmem:[%s1074 + $0x39] sm:$0xff]
        %v7322 = vld [vmem:[%s1074 + $0x49] sm:$0xff]
        %v7323 = vld [vmem:[%s1074 + $0x51] sm:$0xff]
        %v7324 = vld [vmem:[%s1074 + $0x61] sm:$0xff]
        %v7325 = vld [vmem:[%s1074 + $0x69] sm:$0xff]
        %v7326 = vld [vmem:[%s1074 + $0x79] sm:$0xff]
        %v7327 = vld [vmem:[%s1074 + $0x81] sm:$0xff]
        %v7328 = vld [vmem:[%s1074 + $0x91] sm:$0xff]
        %v7329 = vld [vmem:[%s1074 + $0x99] sm:$0xff]
        %v7330 = vld [vmem:[%s1074 + $0xa9] sm:$0xff]
        %v7331 = vld [vmem:[%s1074 + $0xb1] sm:$0xff]
        %v7332 = vld [vmem:[%s1074 + $0xc1] sm:$0xff]
        %v7333 = vld [vmem:[%s1074 + $0xc9] sm:$0xff]
        %v7334 = vld [vmem:[%s1074 + $0xd9] sm:$0xff]
        %v7335 = vld [vmem:[%s1074 + $0xe1] sm:$0xff]
        %v7336 = vld [vmem:[%s1074 + $0xf1] sm:$0xff]
        %v7337 = vld [vmem:[%s1074 + $0xf9] sm:$0xff]
        %v7338 = vld [vmem:[%s1074 + $0x109] sm:$0xff]
        %v7339 = vld [vmem:[%s1074 + $0x111] sm:$0xff]
        %v7340 = vld [vmem:[%s1074 + $0x121] sm:$0xff]
        %v7341 = vld [vmem:[%s1074 + $0x129] sm:$0xff]
        %v7342 = vld [vmem:[%s1074 + $0x139] sm:$0xff]
        %v7343 = vld [vmem:[%s1074 + $0x141] sm:$0xff]
        %v7344 = vld [vmem:[%s1074 + $0x151] sm:$0xff]
        %v7345 = vld [vmem:[%s1074 + $0x159] sm:$0xff]
        %v7346 = vld [vmem:[%s1074 + $0x169] sm:$0xff]
        %v7347 = vld [vmem:[%s1074 + $0x171] sm:$0xff]
        %v7348 = vlaneseq
        %v7349 = vshrl.u32 %v7348, 7
        %v7350 = vsub.s32 7, %v7349
        %v7351 = vrot.slane %v6614, %v7350
        %v7352 = vmul.f32 %v7316, %v7351
        %v7353 = vmul.f32 %v7317, %v7351
        %v7354 = vmul.f32 %v7318, %v7351
        %v7355 = vmul.f32 %v7319, %v7351
        %v7356 = vmul.f32 %v7320, %v7351
        %v7357 = vmul.f32 %v7321, %v7351
        %v7358 = vmul.f32 %v7322, %v7351
        %v7359 = vmul.f32 %v7323, %v7351
        %v7360 = vmul.f32 %v7324, %v7351
        %v7361 = vmul.f32 %v7325, %v7351
        %v7362 = vmul.f32 %v7326, %v7351
        %v7363 = vmul.f32 %v7327, %v7351
        %v7364 = vmul.f32 %v7328, %v7351
        %v7365 = vmul.f32 %v7329, %v7351
        %v7366 = vmul.f32 %v7330, %v7351
        %v7367 = vmul.f32 %v7331, %v7351
        %v7368 = vmul.f32 %v7332, %v7351
        %v7369 = vmul.f32 %v7333, %v7351
        %v7370 = vmul.f32 %v7334, %v7351
        %v7371 = vmul.f32 %v7335, %v7351
        %v7372 = vmul.f32 %v7336, %v7351
        %v7373 = vmul.f32 %v7337, %v7351
        %v7374 = vmul.f32 %v7338, %v7351
        %v7375 = vmul.f32 %v7339, %v7351
        %v7376 = vmul.f32 %v7340, %v7351
        %v7377 = vmul.f32 %v7341, %v7351
        %v7378 = vmul.f32 %v7342, %v7351
        %v7379 = vmul.f32 %v7343, %v7351
        %v7380 = vmul.f32 %v7344, %v7351
        %v7381 = vmul.f32 %v7345, %v7351
        %v7382 = vmul.f32 %v7346, %v7351
        %v7383 = vmul.f32 %v7347, %v7351
        %v7384 = vadd.f32 %v7284, %v7352
        %v7385 = vadd.f32 %v7285, %v7353
        %v7386 = vadd.f32 %v7286, %v7354
        %v7387 = vadd.f32 %v7287, %v7355
        %v7388 = vadd.f32 %v7288, %v7356
        %v7389 = vadd.f32 %v7289, %v7357
        %v7390 = vadd.f32 %v7290, %v7358
        %v7391 = vadd.f32 %v7291, %v7359
        %v7392 = vadd.f32 %v7292, %v7360
        %v7393 = vadd.f32 %v7293, %v7361
        %v7394 = vadd.f32 %v7294, %v7362
        %v7395 = vadd.f32 %v7295, %v7363
        %v7396 = vadd.f32 %v7296, %v7364
        %v7397 = vadd.f32 %v7297, %v7365
        %v7398 = vadd.f32 %v7298, %v7366
        %v7399 = vadd.f32 %v7299, %v7367
        %v7400 = vadd.f32 %v7300, %v7368
        %v7401 = vadd.f32 %v7301, %v7369
        %v7402 = vadd.f32 %v7302, %v7370
        %v7403 = vadd.f32 %v7303, %v7371
        %v7404 = vadd.f32 %v7304, %v7372
        %v7405 = vadd.f32 %v7305, %v7373
        %v7406 = vadd.f32 %v7306, %v7374
        %v7407 = vadd.f32 %v7307, %v7375
        %v7408 = vadd.f32 %v7308, %v7376
        %v7409 = vadd.f32 %v7309, %v7377
        %v7410 = vadd.f32 %v7310, %v7378
        %v7411 = vadd.f32 %v7311, %v7379
        %v7412 = vadd.f32 %v7312, %v7380
        %v7413 = vadd.f32 %v7313, %v7381
        %v7414 = vadd.f32 %v7314, %v7382
        %v7415 = vadd.f32 %v7315, %v7383
        %v7416 = vld [vmem:[%s1074 + $0x2] sm:$0xff]
        %v7417 = vld [vmem:[%s1074 + $0xa] sm:$0xff]
        %v7418 = vld [vmem:[%s1074 + $0x1a] sm:$0xff]
        %v7419 = vld [vmem:[%s1074 + $0x22] sm:$0xff]
        %v7420 = vld [vmem:[%s1074 + $0x32] sm:$0xff]
        %v7421 = vld [vmem:[%s1074 + $0x3a] sm:$0xff]
        %v7422 = vld [vmem:[%s1074 + $0x4a] sm:$0xff]
        %v7423 = vld [vmem:[%s1074 + $0x52] sm:$0xff]
        %v7424 = vld [vmem:[%s1074 + $0x62] sm:$0xff]
        %v7425 = vld [vmem:[%s1074 + $0x6a] sm:$0xff]
        %v7426 = vld [vmem:[%s1074 + $0x7a] sm:$0xff]
        %v7427 = vld [vmem:[%s1074 + $0x82] sm:$0xff]
        %v7428 = vld [vmem:[%s1074 + $0x92] sm:$0xff]
        %v7429 = vld [vmem:[%s1074 + $0x9a] sm:$0xff]
        %v7430 = vld [vmem:[%s1074 + $0xaa] sm:$0xff]
        %v7431 = vld [vmem:[%s1074 + $0xb2] sm:$0xff]
        %v7432 = vld [vmem:[%s1074 + $0xc2] sm:$0xff]
        %v7433 = vld [vmem:[%s1074 + $0xca] sm:$0xff]
        %v7434 = vld [vmem:[%s1074 + $0xda] sm:$0xff]
        %v7435 = vld [vmem:[%s1074 + $0xe2] sm:$0xff]
        %v7436 = vld [vmem:[%s1074 + $0xf2] sm:$0xff]
        %v7437 = vld [vmem:[%s1074 + $0xfa] sm:$0xff]
        %v7438 = vld [vmem:[%s1074 + $0x10a] sm:$0xff]
        %v7439 = vld [vmem:[%s1074 + $0x112] sm:$0xff]
        %v7440 = vld [vmem:[%s1074 + $0x122] sm:$0xff]
        %v7441 = vld [vmem:[%s1074 + $0x12a] sm:$0xff]
        %v7442 = vld [vmem:[%s1074 + $0x13a] sm:$0xff]
        %v7443 = vld [vmem:[%s1074 + $0x142] sm:$0xff]
        %v7444 = vld [vmem:[%s1074 + $0x152] sm:$0xff]
        %v7445 = vld [vmem:[%s1074 + $0x15a] sm:$0xff]
        %v7446 = vld [vmem:[%s1074 + $0x16a] sm:$0xff]
        %v7447 = vld [vmem:[%s1074 + $0x172] sm:$0xff]
        %v7448 = vlaneseq
        %v7449 = vshrl.u32 %v7448, 7
        %v7450 = vsub.s32 0, %v7449
        %v7451 = vrot.slane %v6615, %v7450
        %v7452 = vmul.f32 %v7416, %v7451
        %v7453 = vmul.f32 %v7417, %v7451
        %v7454 = vmul.f32 %v7418, %v7451
        %v7455 = vmul.f32 %v7419, %v7451
        %v7456 = vmul.f32 %v7420, %v7451
        %v7457 = vmul.f32 %v7421, %v7451
        %v7458 = vmul.f32 %v7422, %v7451
        %v7459 = vmul.f32 %v7423, %v7451
        %v7460 = vmul.f32 %v7424, %v7451
        %v7461 = vmul.f32 %v7425, %v7451
        %v7462 = vmul.f32 %v7426, %v7451
        %v7463 = vmul.f32 %v7427, %v7451
        %v7464 = vmul.f32 %v7428, %v7451
        %v7465 = vmul.f32 %v7429, %v7451
        %v7466 = vmul.f32 %v7430, %v7451
        %v7467 = vmul.f32 %v7431, %v7451
        %v7468 = vmul.f32 %v7432, %v7451
        %v7469 = vmul.f32 %v7433, %v7451
        %v7470 = vmul.f32 %v7434, %v7451
        %v7471 = vmul.f32 %v7435, %v7451
        %v7472 = vmul.f32 %v7436, %v7451
        %v7473 = vmul.f32 %v7437, %v7451
        %v7474 = vmul.f32 %v7438, %v7451
        %v7475 = vmul.f32 %v7439, %v7451
        %v7476 = vmul.f32 %v7440, %v7451
        %v7477 = vmul.f32 %v7441, %v7451
        %v7478 = vmul.f32 %v7442, %v7451
        %v7479 = vmul.f32 %v7443, %v7451
        %v7480 = vmul.f32 %v7444, %v7451
        %v7481 = vmul.f32 %v7445, %v7451
        %v7482 = vmul.f32 %v7446, %v7451
        %v7483 = vmul.f32 %v7447, %v7451
        %v7484 = vadd.f32 %v7384, %v7452
        %v7485 = vadd.f32 %v7385, %v7453
        %v7486 = vadd.f32 %v7386, %v7454
        %v7487 = vadd.f32 %v7387, %v7455
        %v7488 = vadd.f32 %v7388, %v7456
        %v7489 = vadd.f32 %v7389, %v7457
        %v7490 = vadd.f32 %v7390, %v7458
        %v7491 = vadd.f32 %v7391, %v7459
        %v7492 = vadd.f32 %v7392, %v7460
        %v7493 = vadd.f32 %v7393, %v7461
        %v7494 = vadd.f32 %v7394, %v7462
        %v7495 = vadd.f32 %v7395, %v7463
        %v7496 = vadd.f32 %v7396, %v7464
        %v7497 = vadd.f32 %v7397, %v7465
        %v7498 = vadd.f32 %v7398, %v7466
        %v7499 = vadd.f32 %v7399, %v7467
        %v7500 = vadd.f32 %v7400, %v7468
        %v7501 = vadd.f32 %v7401, %v7469
        %v7502 = vadd.f32 %v7402, %v7470
        %v7503 = vadd.f32 %v7403, %v7471
        %v7504 = vadd.f32 %v7404, %v7472
        %v7505 = vadd.f32 %v7405, %v7473
        %v7506 = vadd.f32 %v7406, %v7474
        %v7507 = vadd.f32 %v7407, %v7475
        %v7508 = vadd.f32 %v7408, %v7476
        %v7509 = vadd.f32 %v7409, %v7477
        %v7510 = vadd.f32 %v7410, %v7478
        %v7511 = vadd.f32 %v7411, %v7479
        %v7512 = vadd.f32 %v7412, %v7480
        %v7513 = vadd.f32 %v7413, %v7481
        %v7514 = vadd.f32 %v7414, %v7482
        %v7515 = vadd.f32 %v7415, %v7483
        %v7516 = vsel %vm284, %v7484, 0.0
        %7517 = vadd.xlane.f32.xlu0 %v7516
        %v7518 = vpop.xlane.xlu0 %7517
        %v7519 = vsel %vm284, %v7485, 0.0
        %7520 = vadd.xlane.f32.xlu0 %v7519
        %v7521 = vpop.xlane.xlu0 %7520
        %v7522 = vsel %vm284, %v7486, 0.0
        %7523 = vadd.xlane.f32.xlu0 %v7522
        %v7524 = vpop.xlane.xlu0 %7523
        %v7525 = vsel %vm284, %v7487, 0.0
        %7526 = vadd.xlane.f32.xlu0 %v7525
        %v7527 = vpop.xlane.xlu0 %7526
        %v7528 = vsel %vm284, %v7488, 0.0
        %7529 = vadd.xlane.f32.xlu0 %v7528
        %v7530 = vpop.xlane.xlu0 %7529
        %v7531 = vsel %vm284, %v7489, 0.0
        %7532 = vadd.xlane.f32.xlu0 %v7531
        %v7533 = vpop.xlane.xlu0 %7532
        %v7534 = vsel %vm284, %v7490, 0.0
        %7535 = vadd.xlane.f32.xlu0 %v7534
        %v7536 = vpop.xlane.xlu0 %7535
        %v7537 = vsel %vm284, %v7491, 0.0
        %7538 = vadd.xlane.f32.xlu0 %v7537
        %v7539 = vpop.xlane.xlu0 %7538
        %v7540 = vsel %vm284, %v7492, 0.0
        %7541 = vadd.xlane.f32.xlu0 %v7540
        %v7542 = vpop.xlane.xlu0 %7541
        %v7543 = vsel %vm284, %v7493, 0.0
        %7544 = vadd.xlane.f32.xlu0 %v7543
        %v7545 = vpop.xlane.xlu0 %7544
        %v7546 = vsel %vm284, %v7494, 0.0
        %7547 = vadd.xlane.f32.xlu0 %v7546
        %v7548 = vpop.xlane.xlu0 %7547
        %v7549 = vsel %vm284, %v7495, 0.0
        %7550 = vadd.xlane.f32.xlu0 %v7549
        %v7551 = vpop.xlane.xlu0 %7550
        %v7552 = vsel %vm284, %v7496, 0.0
        %7553 = vadd.xlane.f32.xlu0 %v7552
        %v7554 = vpop.xlane.xlu0 %7553
        %v7555 = vsel %vm284, %v7497, 0.0
        %7556 = vadd.xlane.f32.xlu0 %v7555
        %v7557 = vpop.xlane.xlu0 %7556
        %v7558 = vsel %vm284, %v7498, 0.0
        %7559 = vadd.xlane.f32.xlu0 %v7558
        %v7560 = vpop.xlane.xlu0 %7559
        %v7561 = vsel %vm284, %v7499, 0.0
        %7562 = vadd.xlane.f32.xlu0 %v7561
        %v7563 = vpop.xlane.xlu0 %7562
        %v7564 = vsel %vm284, %v7500, 0.0
        %7565 = vadd.xlane.f32.xlu0 %v7564
        %v7566 = vpop.xlane.xlu0 %7565
        %v7567 = vsel %vm284, %v7501, 0.0
        %7568 = vadd.xlane.f32.xlu0 %v7567
        %v7569 = vpop.xlane.xlu0 %7568
        %v7570 = vsel %vm284, %v7502, 0.0
        %7571 = vadd.xlane.f32.xlu0 %v7570
        %v7572 = vpop.xlane.xlu0 %7571
        %v7573 = vsel %vm284, %v7503, 0.0
        %7574 = vadd.xlane.f32.xlu0 %v7573
        %v7575 = vpop.xlane.xlu0 %7574
        %v7576 = vsel %vm284, %v7504, 0.0
        %7577 = vadd.xlane.f32.xlu0 %v7576
        %v7578 = vpop.xlane.xlu0 %7577
        %v7579 = vsel %vm284, %v7505, 0.0
        %7580 = vadd.xlane.f32.xlu0 %v7579
        %v7581 = vpop.xlane.xlu0 %7580
        %v7582 = vsel %vm284, %v7506, 0.0
        %7583 = vadd.xlane.f32.xlu0 %v7582
        %v7584 = vpop.xlane.xlu0 %7583
        %v7585 = vsel %vm284, %v7507, 0.0
        %7586 = vadd.xlane.f32.xlu0 %v7585
        %v7587 = vpop.xlane.xlu0 %7586
        %v7588 = vsel %vm284, %v7508, 0.0
        %7589 = vadd.xlane.f32.xlu0 %v7588
        %v7590 = vpop.xlane.xlu0 %7589
        %v7591 = vsel %vm284, %v7509, 0.0
        %7592 = vadd.xlane.f32.xlu0 %v7591
        %v7593 = vpop.xlane.xlu0 %7592
        %v7594 = vsel %vm284, %v7510, 0.0
        %7595 = vadd.xlane.f32.xlu0 %v7594
        %v7596 = vpop.xlane.xlu0 %7595
        %v7597 = vsel %vm284, %v7511, 0.0
        %7598 = vadd.xlane.f32.xlu0 %v7597
        %v7599 = vpop.xlane.xlu0 %7598
        %v7600 = vsel %vm284, %v7512, 0.0
        %7601 = vadd.xlane.f32.xlu0 %v7600
        %v7602 = vpop.xlane.xlu0 %7601
        %v7603 = vsel %vm284, %v7513, 0.0
        %7604 = vadd.xlane.f32.xlu0 %v7603
        %v7605 = vpop.xlane.xlu0 %7604
        %v7606 = vsel %vm284, %v7514, 0.0
        %7607 = vadd.xlane.f32.xlu0 %v7606
        %v7608 = vpop.xlane.xlu0 %7607
        %v7609 = vsel %vm284, %v7515, 0.0
        %7610 = vadd.xlane.f32.xlu0 %v7609
        %v7611 = vpop.xlane.xlu0 %7610
        %v7614 = vlaneseq
        %v7615 = vshrl.u32 %v7614, 7
        %v7616 = vsub.s32 0, %v7615
        %v7617 = vrot.slane %v330, %v7616
        %7619 = vbcast.lane.b32.xlu0 %v7617, 256
        %v7620 = vpop.permute.xlu0 %7619
        %s7622 = sor.u32 256, 8
        %7623 = vbcast.lane.b32.xlu0 %v7617, %s7622
        %v7624 = vpop.permute.xlu0 %7623
        %v7625 = vlaneseq
        %v7626 = vshrl.u32 %v7625, 7
        %v7627 = vsub.s32 1, %v7626
        %v7628 = vrot.slane %v330, %v7627
        %7630 = vbcast.lane.b32.xlu0 %v7628, 256
        %v7631 = vpop.permute.xlu0 %7630
        %s7633 = sor.u32 256, 8
        %7634 = vbcast.lane.b32.xlu0 %v7628, %s7633
        %v7635 = vpop.permute.xlu0 %7634
        %v7636 = vlaneseq
        %v7637 = vshrl.u32 %v7636, 7
        %v7638 = vsub.s32 2, %v7637
        %v7639 = vrot.slane %v330, %v7638
        %7641 = vbcast.lane.b32.xlu0 %v7639, 256
        %v7642 = vpop.permute.xlu0 %7641
        %s7644 = sor.u32 256, 8
        %7645 = vbcast.lane.b32.xlu0 %v7639, %s7644
        %v7646 = vpop.permute.xlu0 %7645
        %v7647 = vlaneseq
        %v7648 = vshrl.u32 %v7647, 7
        %v7649 = vsub.s32 3, %v7648
        %v7650 = vrot.slane %v330, %v7649
        %7652 = vbcast.lane.b32.xlu0 %v7650, 256
        %v7653 = vpop.permute.xlu0 %7652
        %s7655 = sor.u32 256, 8
        %7656 = vbcast.lane.b32.xlu0 %v7650, %s7655
        %v7657 = vpop.permute.xlu0 %7656
        %v7658 = vlaneseq
        %v7659 = vshrl.u32 %v7658, 7
        %v7660 = vsub.s32 4, %v7659
        %v7661 = vrot.slane %v330, %v7660
        %7663 = vbcast.lane.b32.xlu0 %v7661, 256
        %v7664 = vpop.permute.xlu0 %7663
        %s7666 = sor.u32 256, 8
        %7667 = vbcast.lane.b32.xlu0 %v7661, %s7666
        %v7668 = vpop.permute.xlu0 %7667
        %v7669 = vlaneseq
        %v7670 = vshrl.u32 %v7669, 7
        %v7671 = vsub.s32 5, %v7670
        %v7672 = vrot.slane %v330, %v7671
        %7674 = vbcast.lane.b32.xlu0 %v7672, 256
        %v7675 = vpop.permute.xlu0 %7674
        %s7677 = sor.u32 256, 8
        %7678 = vbcast.lane.b32.xlu0 %v7672, %s7677
        %v7679 = vpop.permute.xlu0 %7678
        %v7680 = vlaneseq
        %v7681 = vshrl.u32 %v7680, 7
        %v7682 = vsub.s32 6, %v7681
        %v7683 = vrot.slane %v330, %v7682
        %7685 = vbcast.lane.b32.xlu0 %v7683, 256
        %v7686 = vpop.permute.xlu0 %7685
        %s7688 = sor.u32 256, 8
        %7689 = vbcast.lane.b32.xlu0 %v7683, %s7688
        %v7690 = vpop.permute.xlu0 %7689
        %v7691 = vlaneseq
        %v7692 = vshrl.u32 %v7691, 7
        %v7693 = vsub.s32 7, %v7692
        %v7694 = vrot.slane %v330, %v7693
        %7696 = vbcast.lane.b32.xlu0 %v7694, 256
        %v7697 = vpop.permute.xlu0 %7696
        %s7699 = sor.u32 256, 8
        %7700 = vbcast.lane.b32.xlu0 %v7694, %s7699
        %v7701 = vpop.permute.xlu0 %7700
        %v7702 = vlaneseq
        %v7703 = vshrl.u32 %v7702, 7
        %v7704 = vsub.s32 0, %v7703
        %v7705 = vrot.slane %v331, %v7704
        %7707 = vbcast.lane.b32.xlu0 %v7705, 256
        %v7708 = vpop.permute.xlu0 %7707
        %s7710 = sor.u32 256, 8
        %7711 = vbcast.lane.b32.xlu0 %v7705, %s7710
        %v7712 = vpop.permute.xlu0 %7711
        %v7713 = vlaneseq
        %v7714 = vshrl.u32 %v7713, 7
        %v7715 = vsub.s32 1, %v7714
        %v7716 = vrot.slane %v331, %v7715
        %7718 = vbcast.lane.b32.xlu0 %v7716, 256
        %v7719 = vpop.permute.xlu0 %7718
        %s7721 = sor.u32 256, 8
        %7722 = vbcast.lane.b32.xlu0 %v7716, %s7721
        %v7723 = vpop.permute.xlu0 %7722
        %v7724 = vlaneseq
        %v7725 = vshrl.u32 %v7724, 7
        %v7726 = vsub.s32 2, %v7725
        %v7727 = vrot.slane %v331, %v7726
        %7729 = vbcast.lane.b32.xlu0 %v7727, 256
        %v7730 = vpop.permute.xlu0 %7729
        %s7732 = sor.u32 256, 8
        %7733 = vbcast.lane.b32.xlu0 %v7727, %s7732
        %v7734 = vpop.permute.xlu0 %7733
        %v7735 = vlaneseq
        %v7736 = vshrl.u32 %v7735, 7
        %v7737 = vsub.s32 3, %v7736
        %v7738 = vrot.slane %v331, %v7737
        %7740 = vbcast.lane.b32.xlu0 %v7738, 256
        %v7741 = vpop.permute.xlu0 %7740
        %s7743 = sor.u32 256, 8
        %7744 = vbcast.lane.b32.xlu0 %v7738, %s7743
        %v7745 = vpop.permute.xlu0 %7744
        %v7746 = vlaneseq
        %v7747 = vshrl.u32 %v7746, 7
        %v7748 = vsub.s32 4, %v7747
        %v7749 = vrot.slane %v331, %v7748
        %7751 = vbcast.lane.b32.xlu0 %v7749, 256
        %v7752 = vpop.permute.xlu0 %7751
        %s7754 = sor.u32 256, 8
        %7755 = vbcast.lane.b32.xlu0 %v7749, %s7754
        %v7756 = vpop.permute.xlu0 %7755
        %v7757 = vlaneseq
        %v7758 = vshrl.u32 %v7757, 7
        %v7759 = vsub.s32 5, %v7758
        %v7760 = vrot.slane %v331, %v7759
        %7762 = vbcast.lane.b32.xlu0 %v7760, 256
        %v7763 = vpop.permute.xlu0 %7762
        %s7765 = sor.u32 256, 8
        %7766 = vbcast.lane.b32.xlu0 %v7760, %s7765
        %v7767 = vpop.permute.xlu0 %7766
        %v7768 = vlaneseq
        %v7769 = vshrl.u32 %v7768, 7
        %v7770 = vsub.s32 6, %v7769
        %v7771 = vrot.slane %v331, %v7770
        %7773 = vbcast.lane.b32.xlu0 %v7771, 256
        %v7774 = vpop.permute.xlu0 %7773
        %s7776 = sor.u32 256, 8
        %7777 = vbcast.lane.b32.xlu0 %v7771, %s7776
        %v7778 = vpop.permute.xlu0 %7777
        %v7779 = vlaneseq
        %v7780 = vshrl.u32 %v7779, 7
        %v7781 = vsub.s32 7, %v7780
        %v7782 = vrot.slane %v331, %v7781
        %7784 = vbcast.lane.b32.xlu0 %v7782, 256
        %v7785 = vpop.permute.xlu0 %7784
        %s7787 = sor.u32 256, 8
        %7788 = vbcast.lane.b32.xlu0 %v7782, %s7787
        %v7789 = vpop.permute.xlu0 %7788
        %v7822 = vadd.f32 %v7518, %v7620
        %v7823 = vadd.f32 %v7521, %v7624
        %v7824 = vadd.f32 %v7524, %v7631
        %v7825 = vadd.f32 %v7527, %v7635
        %v7826 = vadd.f32 %v7530, %v7642
        %v7827 = vadd.f32 %v7533, %v7646
        %v7828 = vadd.f32 %v7536, %v7653
        %v7829 = vadd.f32 %v7539, %v7657
        %v7830 = vadd.f32 %v7542, %v7664
        %v7831 = vadd.f32 %v7545, %v7668
        %v7832 = vadd.f32 %v7548, %v7675
        %v7833 = vadd.f32 %v7551, %v7679
        %v7834 = vadd.f32 %v7554, %v7686
        %v7835 = vadd.f32 %v7557, %v7690
        %v7836 = vadd.f32 %v7560, %v7697
        %v7837 = vadd.f32 %v7563, %v7701
        %v7838 = vadd.f32 %v7566, %v7708
        %v7839 = vadd.f32 %v7569, %v7712
        %v7840 = vadd.f32 %v7572, %v7719
        %v7841 = vadd.f32 %v7575, %v7723
        %v7842 = vadd.f32 %v7578, %v7730
        %v7843 = vadd.f32 %v7581, %v7734
        %v7844 = vadd.f32 %v7584, %v7741
        %v7845 = vadd.f32 %v7587, %v7745
        %v7846 = vadd.f32 %v7590, %v7752
        %v7847 = vadd.f32 %v7593, %v7756
        %v7848 = vadd.f32 %v7596, %v7763
        %v7849 = vadd.f32 %v7599, %v7767
        %v7850 = vadd.f32 %v7602, %v7774
        %v7851 = vadd.f32 %v7605, %v7778
        %v7852 = vadd.f32 %v7608, %v7785
        %v7853 = vadd.f32 %v7611, %v7789
        %7886 = vset.pattern.permute.xlu0 0
        %7887 = vperm.xlu0 %7886, %v7822
        %v7888 = vpop.permute.xlu0 %7887
        %7889 = vset.pattern.permute.xlu0 0
        %7890 = vperm.xlu0 %7889, %v7823
        %v7891 = vpop.permute.xlu0 %7890
        %7892 = vset.pattern.permute.xlu0 0
        %7893 = vperm.xlu0 %7892, %v7824
        %v7894 = vpop.permute.xlu0 %7893
        %7895 = vset.pattern.permute.xlu0 0
        %7896 = vperm.xlu0 %7895, %v7825
        %v7897 = vpop.permute.xlu0 %7896
        %7898 = vset.pattern.permute.xlu0 0
        %7899 = vperm.xlu0 %7898, %v7826
        %v7900 = vpop.permute.xlu0 %7899
        %7901 = vset.pattern.permute.xlu0 0
        %7902 = vperm.xlu0 %7901, %v7827
        %v7903 = vpop.permute.xlu0 %7902
        %7904 = vset.pattern.permute.xlu0 0
        %7905 = vperm.xlu0 %7904, %v7828
        %v7906 = vpop.permute.xlu0 %7905
        %7907 = vset.pattern.permute.xlu0 0
        %7908 = vperm.xlu0 %7907, %v7829
        %v7909 = vpop.permute.xlu0 %7908
        %7910 = vset.pattern.permute.xlu0 0
        %7911 = vperm.xlu0 %7910, %v7830
        %v7912 = vpop.permute.xlu0 %7911
        %7913 = vset.pattern.permute.xlu0 0
        %7914 = vperm.xlu0 %7913, %v7831
        %v7915 = vpop.permute.xlu0 %7914
        %7916 = vset.pattern.permute.xlu0 0
        %7917 = vperm.xlu0 %7916, %v7832
        %v7918 = vpop.permute.xlu0 %7917
        %7919 = vset.pattern.permute.xlu0 0
        %7920 = vperm.xlu0 %7919, %v7833
        %v7921 = vpop.permute.xlu0 %7920
        %7922 = vset.pattern.permute.xlu0 0
        %7923 = vperm.xlu0 %7922, %v7834
        %v7924 = vpop.permute.xlu0 %7923
        %7925 = vset.pattern.permute.xlu0 0
        %7926 = vperm.xlu0 %7925, %v7835
        %v7927 = vpop.permute.xlu0 %7926
        %7928 = vset.pattern.permute.xlu0 0
        %7929 = vperm.xlu0 %7928, %v7836
        %v7930 = vpop.permute.xlu0 %7929
        %7931 = vset.pattern.permute.xlu0 0
        %7932 = vperm.xlu0 %7931, %v7837
        %v7933 = vpop.permute.xlu0 %7932
        %7934 = vset.pattern.permute.xlu0 0
        %7935 = vperm.xlu0 %7934, %v7838
        %v7936 = vpop.permute.xlu0 %7935
        %7937 = vset.pattern.permute.xlu0 0
        %7938 = vperm.xlu0 %7937, %v7839
        %v7939 = vpop.permute.xlu0 %7938
        %7940 = vset.pattern.permute.xlu0 0
        %7941 = vperm.xlu0 %7940, %v7840
        %v7942 = vpop.permute.xlu0 %7941
        %7943 = vset.pattern.permute.xlu0 0
        %7944 = vperm.xlu0 %7943, %v7841
        %v7945 = vpop.permute.xlu0 %7944
        %7946 = vset.pattern.permute.xlu0 0
        %7947 = vperm.xlu0 %7946, %v7842
        %v7948 = vpop.permute.xlu0 %7947
        %7949 = vset.pattern.permute.xlu0 0
        %7950 = vperm.xlu0 %7949, %v7843
        %v7951 = vpop.permute.xlu0 %7950
        %7952 = vset.pattern.permute.xlu0 0
        %7953 = vperm.xlu0 %7952, %v7844
        %v7954 = vpop.permute.xlu0 %7953
        %7955 = vset.pattern.permute.xlu0 0
        %7956 = vperm.xlu0 %7955, %v7845
        %v7957 = vpop.permute.xlu0 %7956
        %7958 = vset.pattern.permute.xlu0 0
        %7959 = vperm.xlu0 %7958, %v7846
        %v7960 = vpop.permute.xlu0 %7959
        %7961 = vset.pattern.permute.xlu0 0
        %7962 = vperm.xlu0 %7961, %v7847
        %v7963 = vpop.permute.xlu0 %7962
        %7964 = vset.pattern.permute.xlu0 0
        %7965 = vperm.xlu0 %7964, %v7848
        %v7966 = vpop.permute.xlu0 %7965
        %7967 = vset.pattern.permute.xlu0 0
        %7968 = vperm.xlu0 %7967, %v7849
        %v7969 = vpop.permute.xlu0 %7968
        %7970 = vset.pattern.permute.xlu0 0
        %7971 = vperm.xlu0 %7970, %v7850
        %v7972 = vpop.permute.xlu0 %7971
        %7973 = vset.pattern.permute.xlu0 0
        %7974 = vperm.xlu0 %7973, %v7851
        %v7975 = vpop.permute.xlu0 %7974
        %7976 = vset.pattern.permute.xlu0 0
        %7977 = vperm.xlu0 %7976, %v7852
        %v7978 = vpop.permute.xlu0 %7977
        %7979 = vset.pattern.permute.xlu0 0
        %7980 = vperm.xlu0 %7979, %v7853
        %v7981 = vpop.permute.xlu0 %7980
        %v7982 = vlaneseq
        %v7983 = vand.u32 %v7982, 127
        %v7984 = vlaneseq
        %v7985 = vshrl.u32 %v7984, 7
        %v7986 = vsub.s32 %v7983, %v7985
        %v7987 = vrot.slane %v7888, %v7986
        %v7988 = vadd.s32 %v7983, 4294967288
        %v7989 = vlaneseq
        %v7990 = vshrl.u32 %v7989, 7
        %v7991 = vsub.s32 %v7988, %v7990
        %v7992 = vrot.slane %v7891, %v7991
        %vm7993 = vcmask 130112
        %v7994 = vsel %vm7993, %v7992, %v7987
        %v7995 = vlaneseq
        %v7996 = vshrl.u32 %v7995, 7
        %v7997 = vsub.s32 %v7983, %v7996
        %v7998 = vrot.slane %v7894, %v7997
        %v7999 = vlaneseq
        %v8000 = vshrl.u32 %v7999, 7
        %v8001 = vsub.s32 %v7988, %v8000
        %v8002 = vrot.slane %v7897, %v8001
        %v8003 = vsel %vm7993, %v8002, %v7998
        %v8004 = vlaneseq
        %v8005 = vshrl.u32 %v8004, 7
        %v8006 = vsub.s32 %v7983, %v8005
        %v8007 = vrot.slane %v7900, %v8006
        %v8008 = vlaneseq
        %v8009 = vshrl.u32 %v8008, 7
        %v8010 = vsub.s32 %v7988, %v8009
        %v8011 = vrot.slane %v7903, %v8010
        %v8012 = vsel %vm7993, %v8011, %v8007
        %v8013 = vlaneseq
        %v8014 = vshrl.u32 %v8013, 7
        %v8015 = vsub.s32 %v7983, %v8014
        %v8016 = vrot.slane %v7906, %v8015
        %v8017 = vlaneseq
        %v8018 = vshrl.u32 %v8017, 7
        %v8019 = vsub.s32 %v7988, %v8018
        %v8020 = vrot.slane %v7909, %v8019
        %v8021 = vsel %vm7993, %v8020, %v8016
        %v8022 = vlaneseq
        %v8023 = vshrl.u32 %v8022, 7
        %v8024 = vsub.s32 %v7983, %v8023
        %v8025 = vrot.slane %v7912, %v8024
        %v8026 = vlaneseq
        %v8027 = vshrl.u32 %v8026, 7
        %v8028 = vsub.s32 %v7988, %v8027
        %v8029 = vrot.slane %v7915, %v8028
        %v8030 = vsel %vm7993, %v8029, %v8025
        %v8031 = vlaneseq
        %v8032 = vshrl.u32 %v8031, 7
        %v8033 = vsub.s32 %v7983, %v8032
        %v8034 = vrot.slane %v7918, %v8033
        %v8035 = vlaneseq
        %v8036 = vshrl.u32 %v8035, 7
        %v8037 = vsub.s32 %v7988, %v8036
        %v8038 = vrot.slane %v7921, %v8037
        %v8039 = vsel %vm7993, %v8038, %v8034
        %v8040 = vlaneseq
        %v8041 = vshrl.u32 %v8040, 7
        %v8042 = vsub.s32 %v7983, %v8041
        %v8043 = vrot.slane %v7924, %v8042
        %v8044 = vlaneseq
        %v8045 = vshrl.u32 %v8044, 7
        %v8046 = vsub.s32 %v7988, %v8045
        %v8047 = vrot.slane %v7927, %v8046
        %v8048 = vsel %vm7993, %v8047, %v8043
        %v8049 = vlaneseq
        %v8050 = vshrl.u32 %v8049, 7
        %v8051 = vsub.s32 %v7983, %v8050
        %v8052 = vrot.slane %v7930, %v8051
        %v8053 = vlaneseq
        %v8054 = vshrl.u32 %v8053, 7
        %v8055 = vsub.s32 %v7988, %v8054
        %v8056 = vrot.slane %v7933, %v8055
        %v8057 = vsel %vm7993, %v8056, %v8052
        %v8058 = vlaneseq
        %v8059 = vshrl.u32 %v8058, 7
        %v8060 = vsub.s32 %v7983, %v8059
        %v8061 = vrot.slane %v7936, %v8060
        %v8062 = vlaneseq
        %v8063 = vshrl.u32 %v8062, 7
        %v8064 = vsub.s32 %v7988, %v8063
        %v8065 = vrot.slane %v7939, %v8064
        %v8066 = vsel %vm7993, %v8065, %v8061
        %v8067 = vlaneseq
        %v8068 = vshrl.u32 %v8067, 7
        %v8069 = vsub.s32 %v7983, %v8068
        %v8070 = vrot.slane %v7942, %v8069
        %v8071 = vlaneseq
        %v8072 = vshrl.u32 %v8071, 7
        %v8073 = vsub.s32 %v7988, %v8072
        %v8074 = vrot.slane %v7945, %v8073
        %v8075 = vsel %vm7993, %v8074, %v8070
        %v8076 = vlaneseq
        %v8077 = vshrl.u32 %v8076, 7
        %v8078 = vsub.s32 %v7983, %v8077
        %v8079 = vrot.slane %v7948, %v8078
        %v8080 = vlaneseq
        %v8081 = vshrl.u32 %v8080, 7
        %v8082 = vsub.s32 %v7988, %v8081
        %v8083 = vrot.slane %v7951, %v8082
        %v8084 = vsel %vm7993, %v8083, %v8079
        %v8085 = vlaneseq
        %v8086 = vshrl.u32 %v8085, 7
        %v8087 = vsub.s32 %v7983, %v8086
        %v8088 = vrot.slane %v7954, %v8087
        %v8089 = vlaneseq
        %v8090 = vshrl.u32 %v8089, 7
        %v8091 = vsub.s32 %v7988, %v8090
        %v8092 = vrot.slane %v7957, %v8091
        %v8093 = vsel %vm7993, %v8092, %v8088
        %v8094 = vlaneseq
        %v8095 = vshrl.u32 %v8094, 7
        %v8096 = vsub.s32 %v7983, %v8095
        %v8097 = vrot.slane %v7960, %v8096
        %v8098 = vlaneseq
        %v8099 = vshrl.u32 %v8098, 7
        %v8100 = vsub.s32 %v7988, %v8099
        %v8101 = vrot.slane %v7963, %v8100
        %v8102 = vsel %vm7993, %v8101, %v8097
        %v8103 = vlaneseq
        %v8104 = vshrl.u32 %v8103, 7
        %v8105 = vsub.s32 %v7983, %v8104
        %v8106 = vrot.slane %v7966, %v8105
        %v8107 = vlaneseq
        %v8108 = vshrl.u32 %v8107, 7
        %v8109 = vsub.s32 %v7988, %v8108
        %v8110 = vrot.slane %v7969, %v8109
        %v8111 = vsel %vm7993, %v8110, %v8106
        %v8112 = vlaneseq
        %v8113 = vshrl.u32 %v8112, 7
        %v8114 = vsub.s32 %v7983, %v8113
        %v8115 = vrot.slane %v7972, %v8114
        %v8116 = vlaneseq
        %v8117 = vshrl.u32 %v8116, 7
        %v8118 = vsub.s32 %v7988, %v8117
        %v8119 = vrot.slane %v7975, %v8118
        %v8120 = vsel %vm7993, %v8119, %v8115
        %v8121 = vlaneseq
        %v8122 = vshrl.u32 %v8121, 7
        %v8123 = vsub.s32 %v7983, %v8122
        %v8124 = vrot.slane %v7978, %v8123
        %v8125 = vlaneseq
        %v8126 = vshrl.u32 %v8125, 7
        %v8127 = vsub.s32 %v7988, %v8126
        %v8128 = vrot.slane %v7981, %v8127
        %v8129 = vsel %vm7993, %v8128, %v8124
        %vm8130 = vcmask 1041409
        %v8131 = vsel %vm8130, %v8003, %v7994
        %vm8132 = vcmask 1042434
        %v8133 = vsel %vm8132, %v8012, %v8131
        %vm8134 = vcmask 1043459
        %v8135 = vsel %vm8134, %v8021, %v8133
        %vm8136 = vcmask 1044484
        %v8137 = vsel %vm8136, %v8030, %v8135
        %vm8138 = vcmask 1045509
        %v8139 = vsel %vm8138, %v8039, %v8137
        %vm8140 = vcmask 1046534
        %v8141 = vsel %vm8140, %v8048, %v8139
        %vm8142 = vcmask 1047559
        %v8143 = vsel %vm8142, %v8057, %v8141
        %v8144 = vsel %vm8130, %v8075, %v8066
        %v8145 = vsel %vm8132, %v8084, %v8144
        %v8146 = vsel %vm8134, %v8093, %v8145
        %v8147 = vsel %vm8136, %v8102, %v8146
        %v8148 = vsel %vm8138, %v8111, %v8147
        %v8149 = vsel %vm8140, %v8120, %v8148
        %v8150 = vsel %vm8142, %v8129, %v8149
        %8153 = vst.msk [vmem:[%s267] sm:$0xff] %vm2227, %v8143
        %8154 = vst.msk [vmem:[%s267 + $0x8] sm:$0xff] %vm2227, %v8150
        %p8155 = scmp.lt.s32.totalorder %s21, 1
        %s8156 = scalar_select %p8155, %s21, 1
        %s8157 = smul.addr %s8156, 32
        %s8158 = smul.addr %s8157, 8
        %s8159 = scalar_lea.vmem %s5, %s8158
        %s8160 = sand.u32 %s170, 1
        %s8161 = scalar_lea.sflag [#allocation4], %s8160
        %s8162 = sand.u32 %s170, 1
        %s8163 = smul.addr %s8162, 16
        %s8164 = scalar_lea.vmem [#allocation3], %s8163
        // Predicated region
        $region41: #{reverse_attention_forward.1} parent=39 // pred_check
          %p8165 = pneg %p154
        $region42: #{reverse_attention_forward.1} parent=39 // pred_check_branch
          %8167 = sbr.rel (%p8165) target = $region44
        $region43: #{reverse_attention_forward.1} parent=39 // pred_region
          _
        $region44: #{reverse_attention_forward.1} parent=39 // pred_fallthru
          _
        // Predicated region
        $region45: #{reverse_attention_forward.1} parent=39 // pred_check
          %p8168 = pneg %p180
        $region46: #{reverse_attention_forward.1} parent=39 // pred_check_branch
          %8170 = sbr.rel (%p8168) target = $region48
        $region47: #{reverse_attention_forward.1} parent=39 // pred_region
          %s8172 = ssub.s32 256, 256
          %8173 = vsyncadd %s8161, %s8172
          %s8174 = smul.addr %s21, 2
          %s8175 = smul.addr %s8174, 128
          %s8176 = scalar_lea.hbm %s6, %s8175
          %s8177 = sshll.u32 %s8164, 4
          %s8178 = int_to_ptr.vmem [resolvable:$true] %s8177
          %8183 = dma.vmem_to_hbm [thread:$0]  %s8178, 256, %s8176, %s8161, 128, 128, 8
        $region48: #{reverse_attention_forward.1} parent=39 // pred_fallthru
          _
      $region40: #{reverse_attention_forward.1} parent=5 // pred_fallthru
        _
      %p8184 = scmp.le.s32.totalorder 2, %s16
      // Predicated region
      $region49: #{reverse_attention_forward.1} parent=5 // pred_check
        %p8185 = pneg %p8184
      $region50: #{reverse_attention_forward.1} parent=5 // pred_check_branch
        %8187 = sbr.rel (%p8185) target = $region52
      $region51: #{reverse_attention_forward.1} parent=5 // pred_region
        %s8188 = ssub.s32 %s16, 2
        // Predicated region
        $region53: #{reverse_attention_forward.1} parent=51 // pred_check
          %p8189 = pneg %p160
        $region54: #{reverse_attention_forward.1} parent=51 // pred_check_branch
          %8191 = sbr.rel (%p8189) target = $region56
        $region55: #{reverse_attention_forward.1} parent=51 // pred_region
          %p8192 = scmp.lt.s32.totalorder %s22, 1
          %s8193 = scalar_select %p8192, %s22, 1
          %s8194 = smul.addr %s8193, 32
          %s8195 = smul.addr %s8194, 8
          %s8196 = scalar_lea.vmem %s5, %s8195
        $region56: #{reverse_attention_forward.1} parent=51 // pred_fallthru
          _
        // Predicated region
        $region57: #{reverse_attention_forward.1} parent=51 // pred_check
          %p8197 = pneg %p186
        $region58: #{reverse_attention_forward.1} parent=51 // pred_check_branch
          %8199 = sbr.rel (%p8197) target = $region60
        $region59: #{reverse_attention_forward.1} parent=51 // pred_region
          %s8200 = sand.u32 %s171, 1
          %s8201 = scalar_lea.sflag [#allocation4], %s8200
          %s8202 = sand.u32 %s171, 1
          %s8203 = smul.addr %s8202, 16
          %s8204 = scalar_lea.vmem [#allocation3], %s8203
          %8205 = dma.done %s8201, 256
        $region60: #{reverse_attention_forward.1} parent=51 // pred_fallthru
          _
      $region52: #{reverse_attention_forward.1} parent=5 // pred_fallthru
        _
    $region6: #{reverse_attention_forward.1} parent=1 // loop_footer
      %s20 = sadd.s32 1, %s16
    $region7: #{reverse_attention_forward.1} parent=1 // loop_footer_branch
      %15 = sbr.rel target = $region3
    $region8: #{reverse_attention_forward.1} parent=1 // loop_exit
      _
    %8206 = vsyncpa [#allocation4], 1
    %s8207 = scalar_lea.sflag [#allocation4], 1
    %8208 = vsyncpa %s8207, 1

</llo_original>
